<compile_context>
chip_gen: v7x
topology: tpu7x:2x2x1
jax: 0.10.0
libtpu: 0.0.40
codegen_flags: <defaults>
</compile_context>

<pallas_src>
import functools
import numpy as np

import jax
import jax.numpy as jnp
from jax.experimental import pallas as pl
from jax.experimental.pallas import tpu as pltpu

N_FEAT = 64
DC = N_FEAT // 2          # 32 distilled channels
RC = N_FEAT // 4          # 16 remaining channels

VMEM_LIMIT = 32 * 1024 * 1024
FULL_IMAGE_MAX_PIXELS = 64 * 64   # whole-image blocks below this, row bands above


def _choose_rows(h, w):
    """Rows per grid block: whole image when small, else a divisor of h."""
    if h * w <= FULL_IMAGE_MAX_PIXELS:
        return h
    budget = 1 << 20                                   # ~1 MiB bf16 input band
    best = 1
    for d in range(1, h + 1):
        if h % d == 0 and d * (w + 2) * N_FEAT * 2 <= budget:
            best = d
    return best


# ---------------------------------------------------------------------------
# Kernel factories
# ---------------------------------------------------------------------------
def _make_pointwise_kernel(n_in, col_slices, has_scale, scale_input, act,
                           res_mode):
    """o = act(sum_k x_k[.., slice_k] (*scale) @ W_k + b) (+ res)."""

    def kernel(*refs):
        i = 0
        x_refs = refs[i:i + n_in]; i += n_in
        scale_ref = None
        if has_scale:
            scale_ref = refs[i]; i += 1
        w_refs = refs[i:i + n_in]; i += n_in
        b_ref = refs[i]; i += 1
        res_ref = None
        if res_mode != "none":
            res_ref = refs[i]; i += 1
        o_ref = refs[i]

        th, w, cout = o_ref.shape
        m = th * w
        acc = None
        for k in range(n_in):
            xk = x_refs[k][...]
            cs = col_slices[k]
            if cs is not None:
                xk = xk[:, :, cs[0]:cs[0] + cs[1]]
            xk = xk.astype(jnp.bfloat16)
            if has_scale and k == scale_input:
                xk = xk * scale_ref[...].astype(jnp.bfloat16).reshape(1, 1, -1)
            ck = xk.shape[-1]
            part = jnp.dot(xk.reshape(m, ck), w_refs[k][...],
                           preferred_element_type=jnp.float32)
            acc = part if acc is None else acc + part
        acc = acc + b_ref[...]
        if act == "relu":
            acc = jnp.maximum(acc, 0.0)
        if res_mode == "add":
            acc = acc + res_ref[...].reshape(m, cout).astype(jnp.float32)
        o_ref[...] = acc.reshape(th, w, cout).astype(o_ref.dtype)

    return kernel


def _make_conv_kernel(*, kh, kw, pt, plft, th, wout, cin_full, cout, col_slice,
                      act, res_mode, res_slice, with_ca, banded, hw_total):
    cin = col_slice[1] if col_slice is not None else cin_full
    merge_k = cin >= 16           # K-merge taps along kh (K = kh*cin) for MXU

    def kernel(*refs):
        i = 0
        x_ref = refs[i]; i += 1
        w_ref = refs[i]; i += 1
        b_ref = refs[i]; i += 1
        if with_ca:
            caw1, cab1, caw2, cab2 = refs[i:i + 4]; i += 4
        if res_mode != "none":
            res_ref = refs[i]; i += 1
        o_ref = refs[i]; i += 1
        if with_ca:
            scale_ref = refs[i]; i += 1
        xpad_ref = refs[i]; i += 1
        if banded:
            sem = refs[i]; i += 1

        hb = th + kh - 1
        wp = wout + kw - 1

        if banded:
            # Haloed row band straight from the (once-padded) HBM activation.
            b_i = pl.program_id(0)
            t_i = pl.program_id(1)
            cp = pltpu.make_async_copy(
                x_ref.at[b_i, pl.ds(t_i * th, hb)], xpad_ref, sem)
            cp.start()
            cp.wait()
        else:
            # Whole image resident: build the zero padding directly in VMEM.
            xpad_ref[...] = jnp.zeros((hb, wp, cin_full), jnp.bfloat16)
            xpad_ref[pl.ds(pt, th), pl.ds(plft, wout), :] = (
                x_ref[...].astype(jnp.bfloat16))

        xp = xpad_ref[...]
        if col_slice is not None:
            xp = xp[:, :, col_slice[0]:col_slice[0] + col_slice[1]]

        acc = None
        if merge_k:
            patch = jnp.concatenate([xp[dh:dh + th] for dh in range(kh)],
                                    axis=-1)
            pf = patch.reshape(th * wp, kh * cin)
            for dw in range(kw):
                y = jnp.dot(pf, w_ref[dw], preferred_element_type=jnp.float32)
                y = y.reshape(th, wp, cout)[:, dw:dw + wout, :]
                acc = y if acc is None else acc + y
        else:
            for dw in range(kw):
                ys = None
                for dh in range(kh):
                    part = jnp.dot(xp[dh:dh + th].reshape(th * wp, cin),
                                   w_ref[dw][dh * cin:(dh + 1) * cin, :],
                                   preferred_element_type=jnp.float32)
                    ys = part if ys is None else ys + part
                ys = ys.reshape(th, wp, cout)[:, dw:dw + wout, :]
                acc = ys if acc is None else acc + ys

        acc = acc + b_ref[...]
        if act == "relu":
            acc = jnp.maximum(acc, 0.0)
        if res_mode != "none":
            r = res_ref[...]
            if res_slice is not None:
                r = r[:, :, res_slice[0]:res_slice[0] + res_slice[1]]
            r = r.astype(jnp.float32)
            if res_mode == "add":
                acc = acc + r
            else:                       # "mul_sigmoid": conv(x) * sigmoid(res)
                acc = acc * jax.nn.sigmoid(r)
        o_ref[...] = acc.astype(o_ref.dtype)

        if with_ca:
            # Fused CALayer: pooled sum accumulated in the (batch-resident)
            # scale output across row bands, FC->ReLU->FC->Sigmoid at the end.
            t_i = pl.program_id(1)

            @pl.when(t_i == 0)
            def _init():
                scale_ref[...] = jnp.zeros_like(scale_ref)

            scale_ref[...] += jnp.sum(acc.reshape(-1, cout), axis=0,
                                      keepdims=True)

            @pl.when(t_i == pl.num_programs(1) - 1)
            def _finalize():
                mvec = scale_ref[...] * (1.0 / float(hw_total))       # (1, C)
                h1 = jnp.sum(mvec[0][:, None] * caw1[...], axis=0,
                             keepdims=True)
                h1 = jnp.maximum(h1 + cab1[...], 0.0)                 # (1, C/4)
                s = jnp.sum(h1[0][:, None] * caw2[...], axis=0,
                            keepdims=True)
                scale_ref[...] = jax.nn.sigmoid(s + cab2[...])

    return kernel


# ---------------------------------------------------------------------------
# Pallas wrappers
# ---------------------------------------------------------------------------
@functools.partial(
    jax.jit,
    static_argnames=("col_slices", "act", "res_mode", "scale_input", "rows"))
def pointwise(xs, ws, b, scale=None, res=None, *, col_slices=None, act="none",
              res_mode="none", scale_input=-1, rows=0):
    n, h, w, _ = xs[0].shape
    th = rows if rows else h
    nb = h // th
    n_in = len(xs)
    cout = ws[0].shape[-1]
    if col_slices is None:
        col_slices = (None,) * n_in
    has_scale = scale is not None

    args, in_specs = [], []
    for xk in xs:
        args.append(xk)
        in_specs.append(pl.BlockSpec((None, th, w, xk.shape[-1]),
                                     lambda b_, t_: (b_, t_, 0, 0)))
    if has_scale:
        args.append(scale)
        in_specs.append(pl.BlockSpec((None, 1, scale.shape[-1]),
                                     lambda b_, t_: (b_, 0, 0)))
    for wk in ws:
        args.append(wk)
        in_specs.append(pl.BlockSpec(wk.shape, lambda b_, t_: (0, 0)))
    args.append(b)
    in_specs.append(pl.BlockSpec((1, cout), lambda b_, t_: (0, 0)))
    if res_mode != "none":
        args.append(res)
        in_specs.append(pl.BlockSpec((None, th, w, cout),
                                     lambda b_, t_: (b_, t_, 0, 0)))

    kern = _make_pointwise_kernel(n_in, col_slices, has_scale, scale_input,
                                  act, res_mode)
    return pl.pallas_call(
        kern,
        out_shape=jax.ShapeDtypeStruct((n, h, w, cout), jnp.bfloat16),
        grid=(n, nb),
        in_specs=in_specs,
        out_specs=pl.BlockSpec((None, th, w, cout),
                               lambda b_, t_: (b_, t_, 0, 0)),
        compiler_params=pltpu.CompilerParams(
            dimension_semantics=("parallel", "parallel"),
            vmem_limit_bytes=VMEM_LIMIT),
    )(*args)


@functools.partial(
    jax.jit,
    static_argnames=("kdims", "pads", "col_slice", "act", "res_mode",
                     "res_slice", "with_ca", "rows"))
def conv(x, wt, b, res=None, ca=None, *, kdims=(3, 3), pads=(1, 1, 1, 1),
         col_slice=None, act="none", res_mode="none", res_slice=None,
         with_ca=False, rows=0):
    n, h, w, cin_full = x.shape
    kh, kw = kdims
    pt, pb, plft, pr = pads
    th = rows if rows else h
    nb = h // th
    banded = nb > 1
    cout = wt.shape[-1]
    hb = th + kh - 1
    wp = w + kw - 1

    args, in_specs = [], []
    if banded:
        xpad = jnp.pad(x, ((0, 0), (pt, pb), (plft, pr), (0, 0)))
        args.append(xpad)
        in_specs.append(pl.BlockSpec(memory_space=pl.ANY))
    else:
        args.append(x)
        in_specs.append(pl.BlockSpec((None, h, w, cin_full),
                                     lambda b_, t_: (b_, 0, 0, 0)))
    args += [wt, b]
    in_specs += [pl.BlockSpec(wt.shape, lambda b_, t_: (0, 0, 0)),
                 pl.BlockSpec((1, cout), lambda b_, t_: (0, 0))]
    if with_ca:
        args += list(ca)
        for cw in ca:
            in_specs.append(pl.BlockSpec(cw.shape, lambda b_, t_: (0, 0)))
    if res_mode != "none":
        args.append(res)
        in_specs.append(pl.BlockSpec((None, th, w, res.shape[-1]),
                                     lambda b_, t_: (b_, t_, 0, 0)))

    out_shape = jax.ShapeDtypeStruct((n, h, w, cout), jnp.bfloat16)
    out_spec = pl.BlockSpec((None, th, w, cout), lambda b_, t_: (b_, t_, 0, 0))
    if with_ca:
        out_shape = (out_shape, jax.ShapeDtypeStruct((n, 1, cout), jnp.float32))
        out_spec = (out_spec,
                    pl.BlockSpec((None, 1, cout), lambda b_, t_: (b_, 0, 0)))

    scratch = [pltpu.VMEM((hb, wp, cin_full), jnp.bfloat16)]
    if banded:
        scratch.append(pltpu.SemaphoreType.DMA(()))

    kern = _make_conv_kernel(kh=kh, kw=kw, pt=pt, plft=plft, th=th, wout=w,
                             cin_full=cin_full, cout=cout, col_slice=col_slice,
                             act=act, res_mode=res_mode, res_slice=res_slice,
                             with_ca=with_ca, banded=banded, hw_total=h * w)
    sems = ("parallel", "arbitrary" if with_ca else "parallel")
    return pl.pallas_call(
        kern,
        out_shape=out_shape,
        grid=(n, nb),
        in_specs=in_specs,
        out_specs=out_spec,
        scratch_shapes=scratch,
        compiler_params=pltpu.CompilerParams(
            dimension_semantics=sems, vmem_limit_bytes=VMEM_LIMIT),
    )(*args)


# ---------------------------------------------------------------------------
# Model blocks
# ---------------------------------------------------------------------------
def fdscb_forward(x, p, rows):
    y1 = pointwise((x,), (p["c11"]["w"],), p["c11"]["b"], rows=rows)
    # distilled branch: relu(up(x1)) kept space-to-depth packed; the stride-2
    # `down` conv becomes a 4-tap stride-1 conv on that packed layout.
    t = pointwise((y1,), (p["up"]["w"],), p["up"]["b"],
                  col_slices=((0, DC),), act="relu", rows=rows)
    y3 = conv(t, p["down"]["w"], p["down"]["b"], res=y1, kdims=(2, 2),
              pads=(1, 0, 1, 0), res_mode="add", res_slice=(0, DC), rows=rows)
    y4 = conv(y1, p["c31"]["w"], p["c31"]["b"], res=y3, col_slice=(0, DC),
              res_mode="mul_sigmoid", rows=rows)
    y5 = conv(y4, p["c32"]["w"], p["c32"]["b"], rows=rows)
    # remaining branch: dw+pc composed into one 3x3 conv, relu, c33 + fused CA.
    y6 = conv(y1, p["dwpc"]["w"], p["dwpc"]["b"], col_slice=(DC, RC),
              act="relu", rows=rows)
    y7, scale = conv(y6, p["c33"]["w"], p["c33"]["b"],
                     ca=(p["ca"]["w1"], p["ca"]["b1"],
                         p["ca"]["w2"], p["ca"]["b2"]),
                     with_ca=True, rows=rows)
    # fused c12: concat([y5, y7*scale, x3]) @ W + b + x, concat never built.
    return pointwise((y5, y7, y1),
                     (p["c12"]["w5"], p["c12"]["w7"], p["c12"]["w3"]),
                     p["c12"]["b"], scale=scale, res=x,
                     col_slices=(None, None, (DC + RC, RC)),
                     scale_input=1, res_mode="add", rows=rows)


def lffm_forward(x, p, rows):
    y1 = fdscb_forward(x, p["r1"], rows)
    y2 = fdscb_forward(y1, p["r2"], rows)
    y3 = fdscb_forward(y2, p["r3"], rows)
    y4 = fdscb_forward(y3, p["r4"], rows)
    y7 = fdscb_forward(y4, p["r5"], rows)
    y8 = fdscb_forward(y7, p["r6"], rows)
    # groups=2 1x1 conv as a 6-input matmul with block-structured weights.
    return pointwise((y1, y2, y3, y4, y7, y8), p["c13"]["w"], p["c13"]["b"],
                     res=x, res_mode="add", rows=rows)


def fdscsr_forward(x_nchw, kp):
    x = jnp.transpose(x_nchw, (0, 2, 3, 1)).astype(jnp.bfloat16)   # NCHW->NHWC
    n, h, w, _ = x.shape
    rows = _choose_rows(h, w)
    y_in = conv(x, kp["head"]["w"], kp["head"]["b"], rows=rows)
    y1 = lffm_forward(y_in, kp["r1"], rows)
    y2 = lffm_forward(y1, kp["r2"], rows)
    y3 = lffm_forward(y2, kp["r3"], rows)
    y4 = lffm_forward(y3, kp["r4"], rows)
    y5 = lffm_forward(y4, kp["r5"], rows)
    y6 = lffm_forward(y5, kp["r6"], rows)
    y7 = pointwise((y1, y2, y3, y4, y5, y6), kp["c1"]["w"], kp["c1"]["b"],
                   rows=rows)
    pre = conv(y7, kp["c2"]["w"], kp["c2"]["b"], res=y_in, res_mode="add",
               rows=rows)                              # y_input + c2(y7)
    tl = conv(pre, kp["tail"]["w"], kp["tail"]["b"], rows=rows)
    y = conv(tl, kp["out"]["w"], kp["out"]["b"], rows=rows)
    return jnp.transpose(y, (0, 3, 1, 2)).astype(jnp.float32)       # NHWC->NCHW


# ---------------------------------------------------------------------------
# Parameter init (torch layouts) + one-time kernel-layout preparation
# ---------------------------------------------------------------------------
def init_params(seed=0, nf=N_FEAT):
    rng = np.random.default_rng(seed)

    def conv_p(cout, cin, k):
        fan_in = cin * k * k
        return {"w": (rng.standard_normal((cout, cin, k, k)) * 0.1
                      / np.sqrt(fan_in)).astype(np.float32),
                "b": (rng.standard_normal((cout,)) * 0.01).astype(np.float32)}

    def convT_p(cin, cout, k):
        fan_in = cin * k * k
        return {"w": (rng.standard_normal((cin, cout, k, k)) * 0.1
                      / np.sqrt(fan_in)).astype(np.float32),
                "b": (rng.standard_normal((cout,)) * 0.01).astype(np.float32)}

    def fdscb_p():
        return {
            "c11": conv_p(nf, nf, 1), "c12": conv_p(nf, nf, 1),
            "c31": conv_p(nf // 2, nf // 2, 3),
            "c32": conv_p(nf // 2, nf // 2, 3),
            "c33": conv_p(nf // 4, nf // 4, 3),
            "up": convT_p(nf // 2, nf // 4, 2),
            "down": conv_p(nf // 2, nf // 4, 3),
            "dw": {"w": (rng.standard_normal((nf // 4, 1, 3, 3)) * 0.1
                         / 3.0).astype(np.float32)},
            "pc": conv_p(nf // 4, nf // 4, 1),
            "ca1": conv_p((nf // 4) // 4, nf // 4, 1),
            "ca2": conv_p(nf // 4, (nf // 4) // 4, 1),
        }

    def lffm_p():
        out = {"r%d" % i: fdscb_p() for i in range(1, 7)}
        out["c13"] = conv_p(nf, 3 * nf, 1)          # groups=2 torch layout
        return out

    return {
        "head": conv_p(nf, 3, 3),
        "r1": lffm_p(), "r2": lffm_p(), "r3": lffm_p(),
        "r4": lffm_p(), "r5": lffm_p(), "r6": lffm_p(),
        "c1": conv_p(nf, 6 * nf, 1),
        "c2": conv_p(nf, nf, 3),
        "tail": conv_p(4 * 4 * 3, nf, 3),
        "out": conv_p(6, 48, 3),
    }


def _conv_weight_np(w):
    """(Cout,Cin,kh,kw) -> (kw, kh*Cin, Cout); kernel does per-kw K-merged taps."""
    cout, cin, kh, kw = w.shape
    return np.transpose(w, (3, 2, 1, 0)).reshape(kw, kh * cin, cout)


def _prep_conv(w, b):
    w = np.asarray(w, np.float32)
    return {"w": jnp.asarray(_conv_weight_np(w), jnp.bfloat16),
            "b": jnp.asarray(np.asarray(b, np.float32).reshape(1, -1),
                             jnp.float32)}


def _prep_pointwise(w, b):
    w = np.asarray(w, np.float32)[:, :, 0, 0]
    return {"w": jnp.asarray(w.T, jnp.bfloat16),
            "b": jnp.asarray(np.asarray(b, np.float32).reshape(1, -1),
                             jnp.float32)}


def _up_weight_np(w):
    """ConvT(Cin,Cout,2,2,stride2) -> per-pixel matmul (Cin, 4*Cout); cols (p,q,co)."""
    cin, cout = w.shape[0], w.shape[1]
    return np.transpose(w, (0, 2, 3, 1)).reshape(cin, 4 * cout)


def _prep_up(w, b):
    w = np.asarray(w, np.float32)
    cout = w.shape[1]
    return {"w": jnp.asarray(_up_weight_np(w), jnp.bfloat16),
            "b": jnp.asarray(np.tile(np.asarray(b, np.float32), 4)
                             .reshape(1, 4 * cout), jnp.float32)}


def _down_weight_np(w):
    """Stride-2 3x3 conv rewritten as a 4-tap stride-1 conv on the packed layout."""
    cout, cin = w.shape[0], w.shape[1]
    w2 = np.zeros((2, 2, 2, 2, cin, cout), np.float32)   # (a, b, p, q, ci, co)
    for kh in range(3):
        a, pp = (0, 1) if kh == 0 else (1, kh - 1)
        for kw in range(3):
            bb, qq = (0, 1) if kw == 0 else (1, kw - 1)
            w2[a, bb, pp, qq] += w[:, :, kh, kw].T
    return np.transpose(w2, (1, 0, 2, 3, 4, 5)).reshape(2, 2 * 4 * cin, cout)


def _prep_down(w, b):
    w = np.asarray(w, np.float32)
    return {"w": jnp.asarray(_down_weight_np(w), jnp.bfloat16),
            "b": jnp.asarray(np.asarray(b, np.float32).reshape(1, -1),
                             jnp.float32)}


def _prep_dwpc(dw_w, pc_w, pc_b):
    """pc(1x1) o dw(3x3 depthwise) composed exactly into one 3x3 conv."""
    dw_w = np.asarray(dw_w, np.float32)
    pc_w = np.asarray(pc_w, np.float32)[:, :, 0, 0]
    comp = pc_w[:, :, None, None] * dw_w[None, :, 0, :, :]   # (co, ci, 3, 3)
    return _prep_conv(comp, pc_b)


def _prep_c12(w, b):
    W = np.asarray(w, np.float32)[:, :, 0, 0]                 # (64, 64)
    return {"w5": jnp.asarray(W[:, :DC].T, jnp.bfloat16),
            "w7": jnp.asarray(W[:, DC:DC + RC].T, jnp.bfloat16),
            "w3": jnp.asarray(W[:, DC + RC:].T, jnp.bfloat16),
            "b": jnp.asarray(np.asarray(b, np.float32).reshape(1, -1),
                             jnp.float32)}


def _prep_c13(w, b):
    W = np.asarray(w, np.float32)[:, :, 0, 0]                 # (64, 192) groups=2
    half = W.shape[0] // 2
    ws = []
    for k in range(6):
        wk = np.zeros((N_FEAT, N_FEAT), np.float32)
        if k < 3:
            wk[:, :half] = W[:half, k * 64:(k + 1) * 64].T
        else:
            wk[:, half:] = W[half:, (k - 3) * 64:(k - 2) * 64].T
        ws.append(jnp.asarray(wk, jnp.bfloat16))
    return {"w": tuple(ws),
            "b": jnp.asarray(np.asarray(b, np.float32).reshape(1, -1),
                             jnp.float32)}


def _prep_c1(w, b):
    W = np.asarray(w, np.float32)[:, :, 0, 0]                 # (64, 384)
    ws = tuple(jnp.asarray(W[:, k * 64:(k + 1) * 64].T, jnp.bfloat16)
               for k in range(6))
    return {"w": ws,
            "b": jnp.asarray(np.asarray(b, np.float32).reshape(1, -1),
                             jnp.float32)}


def _prep_ca(p1, p2):
    w1 = np.asarray(p1["w"], np.float32)[:, :, 0, 0].T        # (C, C//4)
    w2 = np.asarray(p2["w"], np.float32)[:, :, 0, 0].T        # (C//4, C)
    return {"w1": jnp.asarray(w1, jnp.float32),
            "b1": jnp.asarray(np.asarray(p1["b"]).reshape(1, -1), jnp.float32),
            "w2": jnp.asarray(w2, jnp.float32),
            "b2": jnp.asarray(np.asarray(p2["b"]).reshape(1, -1), jnp.float32)}


def prepare_params(raw):
    def fdscb(p):
        return {"c11": _prep_pointwise(p["c11"]["w"], p["c11"]["b"]),
                "up": _prep_up(p["up"]["w"], p["up"]["b"]),
                "down": _prep_down(p["down"]["w"], p["down"]["b"]),
                "c31": _prep_conv(p["c31"]["w"], p["c31"]["b"]),
                "c32": _prep_conv(p["c32"]["w"], p["c32"]["b"]),
                "dwpc": _prep_dwpc(p["dw"]["w"], p["pc"]["w"], p["pc"]["b"]),
                "c33": _prep_conv(p["c33"]["w"], p["c33"]["b"]),
                "ca": _prep_ca(p["ca1"], p["ca2"]),
                "c12": _prep_c12(p["c12"]["w"], p["c12"]["b"])}

    def lffm(p):
        out = {"r%d" % i: fdscb(p["r%d" % i]) for i in range(1, 7)}
        out["c13"] = _prep_c13(p["c13"]["w"], p["c13"]["b"])
        return out

    kp = {"head": _prep_conv(raw["head"]["w"], raw["head"]["b"]),
          "c1": _prep_c1(raw["c1"]["w"], raw["c1"]["b"]),
          "c2": _prep_conv(raw["c2"]["w"], raw["c2"]["b"]),
          "tail": _prep_conv(raw["tail"]["w"], raw["tail"]["b"]),
          "out": _prep_conv(raw["out"]["w"], raw["out"]["b"])}
    for i in range(1, 7):
        kp["r%d" % i] = lffm(raw["r%d" % i])
    return kp


# ---------------------------------------------------------------------------
# Numerical self-checks of the weight/layout rewrites (pure numpy, f64)
# ---------------------------------------------------------------------------
def _check_conv_rewrite():
    rng = np.random.default_rng(1)
    H, W, cin, cout = 5, 6, 3, 4
    x = rng.standard_normal((H, W, cin))
    w = rng.standard_normal((cout, cin, 3, 3))
    b = rng.standard_normal((cout,))
    xpad = np.zeros((H + 2, W + 2, cin)); xpad[1:-1, 1:-1] = x
    ref = np.zeros((H, W, cout))
    for r in range(H):
        for j in range(W):
            s = b.copy()
            for dh in range(3):
                for dw in range(3):
                    s = s + w[:, :, dh, dw] @ xpad[r + dh, j + dw]
            ref[r, j] = s
    wt = _conv_weight_np(w)
    Wp = W + 2
    patch = np.concatenate([xpad[dh:dh + H] for dh in range(3)], axis=-1)
    acc = None
    for dw in range(3):
        y = (patch.reshape(H * Wp, 3 * cin) @ wt[dw]).reshape(H, Wp, cout)
        y = y[:, dw:dw + W]
        acc = y if acc is None else acc + y
    got = acc + b
    assert np.allclose(ref, got, atol=1e-8), float(np.abs(ref - got).max())


def _check_updown_rewrite():
    rng = np.random.default_rng(2)
    H, W, cin, cmid, cout = 4, 5, 6, 4, 7
    x = rng.standard_normal((H, W, cin))
    wu = rng.standard_normal((cin, cmid, 2, 2)); bu = rng.standard_normal((cmid,))
    wd = rng.standard_normal((cout, cmid, 3, 3)); bd = rng.standard_normal((cout,))
    # reference: ConvT(k2,s2) -> ReLU -> Conv(3x3, s2, pad1)
    y2 = np.zeros((2 * H, 2 * W, cmid))
    for i in range(H):
        for j in range(W):
            for p in range(2):
                for q in range(2):
                    y2[2 * i + p, 2 * j + q] = x[i, j] @ wu[:, :, p, q] + bu
    y2 = np.maximum(y2, 0.0)
    y2p = np.zeros((2 * H + 2, 2 * W + 2, cmid)); y2p[1:-1, 1:-1] = y2
    ref = np.zeros((H, W, cout))
    for u in range(H):
        for v in range(W):
            s = bd.copy()
            for kh in range(3):
                for kw in range(3):
                    s = s + wd[:, :, kh, kw] @ y2p[2 * u + kh, 2 * v + kw]
            ref[u, v] = s
    # rewrite: packed up matmul + 4-tap stride-1 conv, emulating the kernel
    t = np.maximum(x.reshape(-1, cin) @ _up_weight_np(wu) + np.tile(bu, 4), 0.0)
    t = t.reshape(H, W, 4 * cmid)
    wt = _down_weight_np(wd)
    tp = np.zeros((H + 1, W + 1, 4 * cmid)); tp[1:, 1:] = t
    Wp = W + 1
    patch = np.concatenate([tp[dh:dh + H] for dh in range(2)], axis=-1)
    acc = None
    for dw in range(2):
        y = (patch.reshape(H * Wp, 2 * 4 * cmid) @ wt[dw]).reshape(H, Wp, cout)
        y = y[:, dw:dw + W]
        acc = y if acc is None else acc + y
    got = acc + bd
    assert np.allclose(ref, got, atol=1e-8), float(np.abs(ref - got).max())


# ---------------------------------------------------------------------------
if __name__ == "__main__":
    _check_conv_rewrite()
    _check_updown_rewrite()

    key = jax.random.PRNGKey(0)
    x = jax.random.normal(key, (2, 3, 16, 16), jnp.float32)   # NCHW like PyTorch
    params = prepare_params(init_params(seed=0))

    y = fdscsr_forward(x, params)
    y = jax.block_until_ready(y)

    assert y.shape == (2, 6, 16, 16), y.shape
    assert bool(jnp.all(jnp.isfinite(y)))
    print("KERNEL_OK")
</pallas_src>

<mosaic_0001>
module attributes {stable_mosaic.version = 11 : i64} {
  func.func @kernel(%arg0: i32, %arg1: i32, %arg2: memref<1x16x16x3xbf16, #tpu.memory_space<vmem>>, %arg3: memref<3x9x64xbf16, #tpu.memory_space<vmem>>, %arg4: memref<1x64xf32, #tpu.memory_space<vmem>>, %arg5: memref<1x16x16x64xbf16, #tpu.memory_space<vmem>>, %arg6: memref<18x18x3xbf16, #tpu.memory_space<vmem>>) attributes {dimension_semantics = [#tpu.dimension_semantics<parallel>, #tpu.dimension_semantics<parallel>], iteration_bounds = array<i64: 2, 1>, scalar_prefetch = 0 : i64, scratch_operands = 1 : i64, tpu.core_type = #tpu.core_type<tc>, window_params = [{transform_indices = @transform_0, window_bounds = array<i64: 1, 16, 16, 3>}, {pipeline_mode = #tpu.pipeline_mode<synchronous>, transform_indices = @transform_1, window_bounds = array<i64: 3, 9, 64>}, {pipeline_mode = #tpu.pipeline_mode<synchronous>, transform_indices = @transform_2, window_bounds = array<i64: 1, 64>}, {transform_indices = @transform_3, window_bounds = array<i64: 1, 16, 16, 64>}]} {
    %cst = arith.constant 0.000000e+00 : bf16
    %0 = vector.broadcast %cst : bf16 to vector<18x18x3xbf16>
    %c0 = arith.constant 0 : index
    %c0_0 = arith.constant 0 : index
    %c0_1 = arith.constant 0 : index
    %1 = vector.load %arg6[%c0, %c0_0, %c0_1] : memref<18x18x3xbf16, #tpu.memory_space<vmem>>, vector<18x18x3xbf16>
    tpu.vector_store %arg6[%c0, %c0_0, %c0_1], %0 {strides = array<i32>} : memref<18x18x3xbf16, #tpu.memory_space<vmem>>, vector<18x18x3xbf16>,
    %c0_2 = arith.constant 0 : index
    %c0_3 = arith.constant 0 : index
    %c0_4 = arith.constant 0 : index
    %c0_5 = arith.constant 0 : index
    %2 = vector.load %arg2[%c0_2, %c0_3, %c0_4, %c0_5] : memref<1x16x16x3xbf16, #tpu.memory_space<vmem>>, vector<1x16x16x3xbf16>
    %3 = vector.shape_cast %2 : vector<1x16x16x3xbf16> to vector<16x16x3xbf16>
    %c1 = arith.constant 1 : index
    %c1_6 = arith.constant 1 : index
    %c0_7 = arith.constant 0 : index
    %4 = vector.load %arg6[%c1, %c1_6, %c0_7] : memref<18x18x3xbf16, #tpu.memory_space<vmem>>, vector<16x16x3xbf16>
    tpu.vector_store %arg6[%c1, %c1_6, %c0_7], %3 {strides = array<i32>} : memref<18x18x3xbf16, #tpu.memory_space<vmem>>, vector<16x16x3xbf16>,
    %c0_8 = arith.constant 0 : index
    %c0_9 = arith.constant 0 : index
    %c0_10 = arith.constant 0 : index
    %5 = vector.load %arg6[%c0_8, %c0_9, %c0_10] : memref<18x18x3xbf16, #tpu.memory_space<vmem>>, vector<18x18x3xbf16>
    %6 = vector.extract_strided_slice %5 {offsets = [0, 0, 0], sizes = [16, 18, 3], strides = [1, 1, 1]} : vector<18x18x3xbf16> to vector<16x18x3xbf16>
    %7 = vector.shape_cast %6 : vector<16x18x3xbf16> to vector<288x3xbf16>
    %c0_11 = arith.constant 0 : index
    %c0_12 = arith.constant 0 : index
    %c0_13 = arith.constant 0 : index
    %8 = vector.load %arg3[%c0_11, %c0_12, %c0_13] : memref<3x9x64xbf16, #tpu.memory_space<vmem>>, vector<1x9x64xbf16>
    %9 = vector.shape_cast %8 : vector<1x9x64xbf16> to vector<9x64xbf16>
    %10 = vector.extract_strided_slice %9 {offsets = [0, 0], sizes = [3, 64], strides = [1, 1]} : vector<9x64xbf16> to vector<3x64xbf16>
    %cst_14 = arith.constant dense<0.000000e+00> : vector<288x64xf32>
    %11 = tpu.matmul %7, %10, %cst_14 {dimension_numbers = #tpu.dot_dimension_numbers<[1], [0], [0], [1], [0, 0, 1, 1], [], []>} : vector<288x3xbf16>, vector<3x64xbf16>, vector<288x64xf32> -> vector<288x64xf32>
    %12 = vector.extract_strided_slice %5 {offsets = [1, 0, 0], sizes = [16, 18, 3], strides = [1, 1, 1]} : vector<18x18x3xbf16> to vector<16x18x3xbf16>
    %13 = vector.shape_cast %12 : vector<16x18x3xbf16> to vector<288x3xbf16>
    %c0_15 = arith.constant 0 : index
    %c0_16 = arith.constant 0 : index
    %c0_17 = arith.constant 0 : index
    %14 = vector.load %arg3[%c0_15, %c0_16, %c0_17] : memref<3x9x64xbf16, #tpu.memory_space<vmem>>, vector<1x9x64xbf16>
    %15 = vector.shape_cast %14 : vector<1x9x64xbf16> to vector<9x64xbf16>
    %16 = vector.extract_strided_slice %15 {offsets = [3, 0], sizes = [3, 64], strides = [1, 1]} : vector<9x64xbf16> to vector<3x64xbf16>
    %cst_18 = arith.constant dense<0.000000e+00> : vector<288x64xf32>
    %17 = tpu.matmul %13, %16, %cst_18 {dimension_numbers = #tpu.dot_dimension_numbers<[1], [0], [0], [1], [0, 0, 1, 1], [], []>} : vector<288x3xbf16>, vector<3x64xbf16>, vector<288x64xf32> -> vector<288x64xf32>
    %18 = arith.addf %11, %17 : vector<288x64xf32>
    %19 = vector.extract_strided_slice %5 {offsets = [2, 0, 0], sizes = [16, 18, 3], strides = [1, 1, 1]} : vector<18x18x3xbf16> to vector<16x18x3xbf16>
    %20 = vector.shape_cast %19 : vector<16x18x3xbf16> to vector<288x3xbf16>
    %c0_19 = arith.constant 0 : index
    %c0_20 = arith.constant 0 : index
    %c0_21 = arith.constant 0 : index
    %21 = vector.load %arg3[%c0_19, %c0_20, %c0_21] : memref<3x9x64xbf16, #tpu.memory_space<vmem>>, vector<1x9x64xbf16>
    %22 = vector.shape_cast %21 : vector<1x9x64xbf16> to vector<9x64xbf16>
    %23 = vector.extract_strided_slice %22 {offsets = [6, 0], sizes = [3, 64], strides = [1, 1]} : vector<9x64xbf16> to vector<3x64xbf16>
    %cst_22 = arith.constant dense<0.000000e+00> : vector<288x64xf32>
    %24 = tpu.matmul %20, %23, %cst_22 {dimension_numbers = #tpu.dot_dimension_numbers<[1], [0], [0], [1], [0, 0, 1, 1], [], []>} : vector<288x3xbf16>, vector<3x64xbf16>, vector<288x64xf32> -> vector<288x64xf32>
    %25 = arith.addf %18, %24 : vector<288x64xf32>
    %26 = vector.shape_cast %25 : vector<288x64xf32> to vector<16x18x64xf32>
    %27 = vector.extract_strided_slice %26 {offsets = [0, 0, 0], sizes = [16, 16, 64], strides = [1, 1, 1]} : vector<16x18x64xf32> to vector<16x16x64xf32>
    %28 = vector.extract_strided_slice %5 {offsets = [0, 0, 0], sizes = [16, 18, 3], strides = [1, 1, 1]} : vector<18x18x3xbf16> to vector<16x18x3xbf16>
    %29 = vector.shape_cast %28 : vector<16x18x3xbf16> to vector<288x3xbf16>
    %c1_23 = arith.constant 1 : index
    %c0_24 = arith.constant 0 : index
    %c0_25 = arith.constant 0 : index
    %30 = vector.load %arg3[%c1_23, %c0_24, %c0_25] : memref<3x9x64xbf16, #tpu.memory_space<vmem>>, vector<1x9x64xbf16>
    %31 = vector.shape_cast %30 : vector<1x9x64xbf16> to vector<9x64xbf16>
    %32 = vector.extract_strided_slice %31 {offsets = [0, 0], sizes = [3, 64], strides = [1, 1]} : vector<9x64xbf16> to vector<3x64xbf16>
    %cst_26 = arith.constant dense<0.000000e+00> : vector<288x64xf32>
    %33 = tpu.matmul %29, %32, %cst_26 {dimension_numbers = #tpu.dot_dimension_numbers<[1], [0], [0], [1], [0, 0, 1, 1], [], []>} : vector<288x3xbf16>, vector<3x64xbf16>, vector<288x64xf32> -> vector<288x64xf32>
    %34 = vector.extract_strided_slice %5 {offsets = [1, 0, 0], sizes = [16, 18, 3], strides = [1, 1, 1]} : vector<18x18x3xbf16> to vector<16x18x3xbf16>
    %35 = vector.shape_cast %34 : vector<16x18x3xbf16> to vector<288x3xbf16>
    %c1_27 = arith.constant 1 : index
    %c0_28 = arith.constant 0 : index
    %c0_29 = arith.constant 0 : index
    %36 = vector.load %arg3[%c1_27, %c0_28, %c0_29] : memref<3x9x64xbf16, #tpu.memory_space<vmem>>, vector<1x9x64xbf16>
    %37 = vector.shape_cast %36 : vector<1x9x64xbf16> to vector<9x64xbf16>
    %38 = vector.extract_strided_slice %37 {offsets = [3, 0], sizes = [3, 64], strides = [1, 1]} : vector<9x64xbf16> to vector<3x64xbf16>
    %cst_30 = arith.constant dense<0.000000e+00> : vector<288x64xf32>
    %39 = tpu.matmul %35, %38, %cst_30 {dimension_numbers = #tpu.dot_dimension_numbers<[1], [0], [0], [1], [0, 0, 1, 1], [], []>} : vector<288x3xbf16>, vector<3x64xbf16>, vector<288x64xf32> -> vector<288x64xf32>
    %40 = arith.addf %33, %39 : vector<288x64xf32>
    %41 = vector.extract_strided_slice %5 {offsets = [2, 0, 0], sizes = [16, 18, 3], strides = [1, 1, 1]} : vector<18x18x3xbf16> to vector<16x18x3xbf16>
    %42 = vector.shape_cast %41 : vector<16x18x3xbf16> to vector<288x3xbf16>
    %c1_31 = arith.constant 1 : index
    %c0_32 = arith.constant 0 : index
    %c0_33 = arith.constant 0 : index
    %43 = vector.load %arg3[%c1_31, %c0_32, %c0_33] : memref<3x9x64xbf16, #tpu.memory_space<vmem>>, vector<1x9x64xbf16>
    %44 = vector.shape_cast %43 : vector<1x9x64xbf16> to vector<9x64xbf16>
    %45 = vector.extract_strided_slice %44 {offsets = [6, 0], sizes = [3, 64], strides = [1, 1]} : vector<9x64xbf16> to vector<3x64xbf16>
    %cst_34 = arith.constant dense<0.000000e+00> : vector<288x64xf32>
    %46 = tpu.matmul %42, %45, %cst_34 {dimension_numbers = #tpu.dot_dimension_numbers<[1], [0], [0], [1], [0, 0, 1, 1], [], []>} : vector<288x3xbf16>, vector<3x64xbf16>, vector<288x64xf32> -> vector<288x64xf32>
    %47 = arith.addf %40, %46 : vector<288x64xf32>
    %48 = vector.shape_cast %47 : vector<288x64xf32> to vector<16x18x64xf32>
    %49 = vector.extract_strided_slice %48 {offsets = [0, 1, 0], sizes = [16, 16, 64], strides = [1, 1, 1]} : vector<16x18x64xf32> to vector<16x16x64xf32>
    %50 = arith.addf %27, %49 : vector<16x16x64xf32>
    %51 = vector.extract_strided_slice %5 {offsets = [0, 0, 0], sizes = [16, 18, 3], strides = [1, 1, 1]} : vector<18x18x3xbf16> to vector<16x18x3xbf16>
    %52 = vector.shape_cast %51 : vector<16x18x3xbf16> to vector<288x3xbf16>
    %c2 = arith.constant 2 : index
    %c0_35 = arith.constant 0 : index
    %c0_36 = arith.constant 0 : index
    %53 = vector.load %arg3[%c2, %c0_35, %c0_36] : memref<3x9x64xbf16, #tpu.memory_space<vmem>>, vector<1x9x64xbf16>
    %54 = vector.shape_cast %53 : vector<1x9x64xbf16> to vector<9x64xbf16>
    %55 = vector.extract_strided_slice %54 {offsets = [0, 0], sizes = [3, 64], strides = [1, 1]} : vector<9x64xbf16> to vector<3x64xbf16>
    %cst_37 = arith.constant dense<0.000000e+00> : vector<288x64xf32>
    %56 = tpu.matmul %52, %55, %cst_37 {dimension_numbers = #tpu.dot_dimension_numbers<[1], [0], [0], [1], [0, 0, 1, 1], [], []>} : vector<288x3xbf16>, vector<3x64xbf16>, vector<288x64xf32> -> vector<288x64xf32>
    %57 = vector.extract_strided_slice %5 {offsets = [1, 0, 0], sizes = [16, 18, 3], strides = [1, 1, 1]} : vector<18x18x3xbf16> to vector<16x18x3xbf16>
    %58 = vector.shape_cast %57 : vector<16x18x3xbf16> to vector<288x3xbf16>
    %c2_38 = arith.constant 2 : index
    %c0_39 = arith.constant 0 : index
    %c0_40 = arith.constant 0 : index
    %59 = vector.load %arg3[%c2_38, %c0_39, %c0_40] : memref<3x9x64xbf16, #tpu.memory_space<vmem>>, vector<1x9x64xbf16>
    %60 = vector.shape_cast %59 : vector<1x9x64xbf16> to vector<9x64xbf16>
    %61 = vector.extract_strided_slice %60 {offsets = [3, 0], sizes = [3, 64], strides = [1, 1]} : vector<9x64xbf16> to vector<3x64xbf16>
    %cst_41 = arith.constant dense<0.000000e+00> : vector<288x64xf32>
    %62 = tpu.matmul %58, %61, %cst_41 {dimension_numbers = #tpu.dot_dimension_numbers<[1], [0], [0], [1], [0, 0, 1, 1], [], []>} : vector<288x3xbf16>, vector<3x64xbf16>, vector<288x64xf32> -> vector<288x64xf32>
    %63 = arith.addf %56, %62 : vector<288x64xf32>
    %64 = vector.extract_strided_slice %5 {offsets = [2, 0, 0], sizes = [16, 18, 3], strides = [1, 1, 1]} : vector<18x18x3xbf16> to vector<16x18x3xbf16>
    %65 = vector.shape_cast %64 : vector<16x18x3xbf16> to vector<288x3xbf16>
    %c2_42 = arith.constant 2 : index
    %c0_43 = arith.constant 0 : index
    %c0_44 = arith.constant 0 : index
    %66 = vector.load %arg3[%c2_42, %c0_43, %c0_44] : memref<3x9x64xbf16, #tpu.memory_space<vmem>>, vector<1x9x64xbf16>
    %67 = vector.shape_cast %66 : vector<1x9x64xbf16> to vector<9x64xbf16>
    %68 = vector.extract_strided_slice %67 {offsets = [6, 0], sizes = [3, 64], strides = [1, 1]} : vector<9x64xbf16> to vector<3x64xbf16>
    %cst_45 = arith.constant dense<0.000000e+00> : vector<288x64xf32>
    %69 = tpu.matmul %65, %68, %cst_45 {dimension_numbers = #tpu.dot_dimension_numbers<[1], [0], [0], [1], [0, 0, 1, 1], [], []>} : vector<288x3xbf16>, vector<3x64xbf16>, vector<288x64xf32> -> vector<288x64xf32>
    %70 = arith.addf %63, %69 : vector<288x64xf32>
    %71 = vector.shape_cast %70 : vector<288x64xf32> to vector<16x18x64xf32>
    %72 = vector.extract_strided_slice %71 {offsets = [0, 2, 0], sizes = [16, 16, 64], strides = [1, 1, 1]} : vector<16x18x64xf32> to vector<16x16x64xf32>
    %73 = arith.addf %50, %72 : vector<16x16x64xf32>
    %c0_46 = arith.constant 0 : index
    %c0_47 = arith.constant 0 : index
    %74 = vector.load %arg4[%c0_46, %c0_47] : memref<1x64xf32, #tpu.memory_space<vmem>>, vector<1x64xf32>
    %75 = vector.shape_cast %74 : vector<1x64xf32> to vector<1x1x64xf32>
    %76 = vector.broadcast %75 : vector<1x1x64xf32> to vector<16x16x64xf32>
    %77 = arith.addf %73, %76 : vector<16x16x64xf32>
    %78 = arith.truncf %77 : vector<16x16x64xf32> to vector<16x16x64xbf16>
    %c0_48 = arith.constant 0 : index
    %c0_49 = arith.constant 0 : index
    %c0_50 = arith.constant 0 : index
    %c0_51 = arith.constant 0 : index
    %79 = vector.load %arg5[%c0_48, %c0_49, %c0_50, %c0_51] : memref<1x16x16x64xbf16, #tpu.memory_space<vmem>>, vector<1x16x16x64xbf16>
    %80 = vector.shape_cast %79 : vector<1x16x16x64xbf16> to vector<16x16x64xbf16>
    %81 = vector.shape_cast %78 : vector<16x16x64xbf16> to vector<1x16x16x64xbf16>
    tpu.vector_store %arg5[%c0_48, %c0_49, %c0_50, %c0_51], %81 {strides = array<i32>} : memref<1x16x16x64xbf16, #tpu.memory_space<vmem>>, vector<1x16x16x64xbf16>,
    return
  }
  func.func @transform_0(%arg0: i32, %arg1: i32) -> (i32, i32, i32, i32) {
    %c0_i32 = arith.constant 0 : i32
    %c0_i32_0 = arith.constant 0 : i32
    %c0_i32_1 = arith.constant 0 : i32
    %c0_i32_2 = arith.constant 0 : i32
    return %arg0, %c0_i32, %c0_i32_0, %c0_i32_1 : i32, i32, i32, i32
  }
  func.func @transform_1(%arg0: i32, %arg1: i32) -> (i32, i32, i32) {
    %c0_i32 = arith.constant 0 : i32
    %c0_i32_0 = arith.constant 0 : i32
    %c0_i32_1 = arith.constant 0 : i32
    %c0_i32_2 = arith.constant 0 : i32
    return %c0_i32, %c0_i32_0, %c0_i32_1 : i32, i32, i32
  }
  func.func @transform_2(%arg0: i32, %arg1: i32) -> (i32, i32) {
    %c0_i32 = arith.constant 0 : i32
    %c0_i32_0 = arith.constant 0 : i32
    %c0_i32_1 = arith.constant 0 : i32
    return %c0_i32, %c0_i32_0 : i32, i32
  }
  func.func @transform_3(%arg0: i32, %arg1: i32) -> (i32, i32, i32, i32) {
    %c0_i32 = arith.constant 0 : i32
    %c0_i32_0 = arith.constant 0 : i32
    %c0_i32_1 = arith.constant 0 : i32
    return %arg0, %arg1, %c0_i32, %c0_i32_0 : i32, i32, i32, i32
  }
}

</mosaic_0001>

<llo_original>
// kernel: conv.1
$region0: #{conv.1}
  #allocation0 [shape = 'u32[]', space=smem, size = 0x4, offset = 0x4, fixed_abs, tag = 'smem constant byte address 0x4 - core index']
  #allocation1 [shape = 'u32[144,128]{1,0:T(1,128)}', space=vmem, size = 0x12000, scoped, tag = 'internal scratch']
  #allocation2 [shape = 'bf16[18,18,3]{2,1,0:T(8,128)(2,1)}', space=vmem, size = 0x1b000, scoped, tag = 'scratch operand']
  %s0 = inlined_call_operand.vmem [shape: bf16[2,16,16,3], index: 0, kind: input, shape index: {}]
  %s1 = inlined_call_operand.vmem [shape: bf16[3,9,64], index: 1, kind: input, shape index: {}]
  %s2 = inlined_call_operand.vmem [shape: f32[1,64], index: 2, kind: input, shape index: {}]
  %s3 = inlined_call_operand.hbm [shape: bf16[2,16,16,64], index: 3, kind: output, shape index: {}]
  %s4 = sld [smem:[#allocation0]]
  $region45: #{conv.1} parent=0
    _
  %s6 = ssub.s32 1, %s4
  %s7 = scalar_select 0, %s6, %s4
  $region1: #{conv.1} parent=0
    #allocation3 [shape = 'u8[131072]{0}', space=vmem, size = 0x20000, scoped, tag = 'output window, operand 0']
    #allocation4 [shape = 's32[2]{0}', space=sflag, size = 0x8, scoped, tag = 'scoped memory for conv.1']
    %8 = vsyncpa [#allocation4], 0
    %s9 = scalar_lea.sflag [#allocation4], 1
    %10 = vsyncpa %s9, 0
    loop: start=0, step=1, limit=4
    $region2: #{conv.1} parent=1 // loop_pre_header
      _
    $region3: #{conv.1} parent=1 // loop_header
      %s12 = sphi 0, %s16
      %p13 = scmp.ge.s32.totalorder %s12, 4
      %s19 = sphi 0, %s31
      %s20 = sphi 0, %s27
      %s21 = sphi 0, %s19
      %s22 = sphi 0, %s20
      %s23 = sphi 0, %s21
      %s24 = sphi 0, %s22
      %s34 = sphi 0, %s36
      %s37 = sphi 0, %s34
      %s38 = sphi 0, %s37
      %s54 = sphi 0, %s38
      %s58 = sphi 0, %s58
      %s60 = sphi 0, %s58
      %s61 = sphi 0, %s60
      %s75 = sphi 0, %s61
      %s79 = sphi 0, %s79
      %s81 = sphi 0, %s79
      %s82 = sphi 0, %s81
      %s96 = sphi 0, %s82
      %s104 = sphi 0, %s106
      %s107 = sphi 0, %s104
      %s108 = sphi 0, %s107
      %s124 = sphi 0, %s108
    $region4: #{conv.1} parent=1 // loop_header_branch
      %15 = sbr.rel (%p13) target = $region8
    $region5: #{conv.1} parent=1 // loop_body
      %s17 = ssub.s32 %s12, 1
      %s18 = ssub.s32 %s12, 2
      %s25 = sadd.s32 1, %s20
      %p26 = scmp.ge.s32.totalorder %s25, 1
      %s27 = scalar_select %p26, 0, %s25
      %s28 = sadd.s32 1, %s19
      %s29 = scalar_select %p26, %s28, %s19
      %p30 = scmp.ge.s32.totalorder %s29, 2
      %s31 = scalar_select %p30, 0, %s29
      %s32 = ssub.s32 %s19, %s31
      %p33 = scmp.eq.s32.totalorder %s32, 0
      %s35 = sadd.s32 %s34, 1
      %s36 = scalar_select %p33, %s34, %s35
      %p39 = pneg %p33
      %p40 = scmp.eq.s32.totalorder %s12, 1
      %p41 = por %p39, %p40
      %p42 = scmp.ne.s32.totalorder %s34, %s37
      %p43 = scmp.eq.s32.totalorder %s12, 0
      %p44 = por %p42, %p43
      %p45 = scmp.ne.s32.totalorder %s34, %s37
      %p46 = scmp.eq.s32.totalorder %s17, 1
      %p47 = por %p45, %p46
      %p48 = scmp.ne.s32.totalorder %s37, %s38
      %p49 = scmp.eq.s32.totalorder %s17, 0
      %p50 = por %p48, %p49
      %p51 = scmp.ne.s32.totalorder %s37, %s38
      %p52 = scmp.eq.s32.totalorder %s18, 1
      %p53 = por %p51, %p52
      %p55 = scmp.ne.s32.totalorder %s38, %s54
      %p56 = scmp.eq.s32.totalorder %s18, 0
      %p57 = por %p55, %p56
      %s59 = sadd.s32 %s58, 1
      %p62 = scmp.eq.s32.totalorder %s12, 1
      %p63 = scmp.ne.s32.totalorder %s58, %s60
      %p64 = scmp.eq.s32.totalorder %s12, 0
      %p65 = por %p63, %p64
      %p66 = scmp.ne.s32.totalorder %s58, %s60
      %p67 = scmp.eq.s32.totalorder %s17, 1
      %p68 = por %p66, %p67
      %p69 = scmp.ne.s32.totalorder %s60, %s61
      %p70 = scmp.eq.s32.totalorder %s17, 0
      %p71 = por %p69, %p70
      %p72 = scmp.ne.s32.totalorder %s60, %s61
      %p73 = scmp.eq.s32.totalorder %s18, 1
      %p74 = por %p72, %p73
      %p76 = scmp.ne.s32.totalorder %s61, %s75
      %p77 = scmp.eq.s32.totalorder %s18, 0
      %p78 = por %p76, %p77
      %s80 = sadd.s32 %s79, 1
      %p83 = scmp.eq.s32.totalorder %s12, 1
      %p84 = scmp.ne.s32.totalorder %s79, %s81
      %p85 = scmp.eq.s32.totalorder %s12, 0
      %p86 = por %p84, %p85
      %p87 = scmp.ne.s32.totalorder %s79, %s81
      %p88 = scmp.eq.s32.totalorder %s17, 1
      %p89 = por %p87, %p88
      %p90 = scmp.ne.s32.totalorder %s81, %s82
      %p91 = scmp.eq.s32.totalorder %s17, 0
      %p92 = por %p90, %p91
      %p93 = scmp.ne.s32.totalorder %s81, %s82
      %p94 = scmp.eq.s32.totalorder %s18, 1
      %p95 = por %p93, %p94
      %p97 = scmp.ne.s32.totalorder %s82, %s96
      %p98 = scmp.eq.s32.totalorder %s18, 0
      %p99 = por %p97, %p98
      %s100 = ssub.s32 %s19, %s31
      %s101 = ssub.s32 %s20, %s27
      %s102 = sor.u32 %s100, %s101
      %p103 = scmp.eq.s32.totalorder %s102, 0
      %s105 = sadd.s32 %s104, 1
      %s106 = scalar_select %p103, %s104, %s105
      %p109 = pneg %p103
      %p110 = scmp.eq.s32.totalorder %s12, 1
      %p111 = por %p109, %p110
      %p112 = scmp.ne.s32.totalorder %s104, %s107
      %p113 = scmp.eq.s32.totalorder %s12, 0
      %p114 = por %p112, %p113
      %p115 = scmp.ne.s32.totalorder %s104, %s107
      %p116 = scmp.eq.s32.totalorder %s17, 1
      %p117 = por %p115, %p116
      %p118 = scmp.ne.s32.totalorder %s107, %s108
      %p119 = scmp.eq.s32.totalorder %s17, 0
      %p120 = por %p118, %p119
      %p121 = scmp.ne.s32.totalorder %s107, %s108
      %p122 = scmp.eq.s32.totalorder %s18, 1
      %p123 = por %p121, %p122
      %p125 = scmp.ne.s32.totalorder %s108, %s124
      %p126 = scmp.eq.s32.totalorder %s18, 0
      %p127 = por %p125, %p126
      %p128 = scmp.le.s32.totalorder 1, %s12
      %p129 = scmp.lt.s32.totalorder %s12, 3
      %p130 = pnand %p128, %p129
      %p131 = pneg %p130
      // Predicated region
      $region9: #{conv.1} parent=5 // pred_check
        _
      $region10: #{conv.1} parent=5 // pred_check_branch
        %133 = sbr.rel (%p130) target = $region12
      $region11: #{conv.1} parent=5 // pred_region
        %s134 = ssub.s32 %s12, 1
        // Predicated region
        $region13: #{conv.1} parent=11 // pred_check
          %p135 = pneg %p71
        $region14: #{conv.1} parent=11 // pred_check_branch
          %137 = sbr.rel (%p135) target = $region16
        $region15: #{conv.1} parent=11 // pred_region
          _
        $region16: #{conv.1} parent=11 // pred_fallthru
          _
        // Predicated region
        $region17: #{conv.1} parent=11 // pred_check
          %p138 = pneg %p92
        $region18: #{conv.1} parent=11 // pred_check_branch
          %140 = sbr.rel (%p138) target = $region20
        $region19: #{conv.1} parent=11 // pred_region
          _
        $region20: #{conv.1} parent=11 // pred_fallthru
          _
      $region12: #{conv.1} parent=5 // pred_fallthru
        _
      %p141 = scmp.lt.s32.totalorder %s12, 2
      // Predicated region
      $region21: #{conv.1} parent=5 // pred_check
        %p142 = pneg %p141
      $region22: #{conv.1} parent=5 // pred_check_branch
        %144 = sbr.rel (%p142) target = $region24
      $region23: #{conv.1} parent=5 // pred_region
        // Predicated region
        $region25: #{conv.1} parent=23 // pred_check
          %p145 = pneg %p44
        $region26: #{conv.1} parent=23 // pred_check_branch
          %147 = sbr.rel (%p145) target = $region28
        $region27: #{conv.1} parent=23 // pred_region
          %p148 = scmp.lt.s32.totalorder %s19, 1
          %s149 = scalar_select %p148, %s19, 1
          %s150 = smul.addr %s149, 32
          %s151 = smul.addr %s150, 4
          %s152 = scalar_lea.vmem %s0, %s151
        $region28: #{conv.1} parent=23 // pred_fallthru
          _
      $region24: #{conv.1} parent=5 // pred_fallthru
        _
      %p153 = scmp.le.s32.totalorder 1, %s12
      %p154 = scmp.lt.s32.totalorder %s12, 3
      %p155 = pnand %p153, %p154
      %p156 = pneg %p155
      // Predicated region
      $region29: #{conv.1} parent=5 // pred_check
        _
      $region30: #{conv.1} parent=5 // pred_check_branch
        %158 = sbr.rel (%p155) target = $region32
      $region31: #{conv.1} parent=5 // pred_region
        %s159 = ssub.s32 %s12, 1
        %p160 = scmp.lt.s32.totalorder %s21, 1
        %s161 = scalar_select %p160, %s21, 1
        %s162 = smul.addr %s161, 32
        %s163 = smul.addr %s162, 4
        %s164 = scalar_lea.vmem %s0, %s163
        %p165 = pneg %p50
        %p166 = pneg %p47
        %p167 = pneg %p71
        %p168 = pneg %p68
        %p169 = pneg %p92
        %p170 = pneg %p89
        %p171 = pneg %p120
        %p172 = pneg %p117
        %s173 = sand.u32 %s107, 1
        %s174 = scalar_lea.sflag [#allocation4], %s173
        %s175 = sand.u32 %s107, 1
        %s176 = smul.addr %s175, 128
        %s177 = scalar_lea.vmem [#allocation3], %s176
        %p178 = scmp.lt.s32.totalorder %s21, 1
        %s179 = scalar_select %p178, %s21, 1
        %s180 = smul.addr %s179, 32
        %s181 = smul.addr %s180, 4
        %s182 = scalar_lea.vmem %s0, %s181
        %s183 = smul.u32 16, %s22
        %vm185 = vcmask 19456
        %186 = vst.msk [vmem:[#allocation2] sm:$0xf] %vm185, 0
        %187 = vst.msk [vmem:[#allocation2 + $0x4] sm:$0xf] %vm185, 0
        %vm188 = vcmask 16384
        %189 = vst.msk [vmem:[#allocation2 + $0x8] sm:$0x1] %vm188, 0
        %190 = vst.msk [vmem:[#allocation2 + $0xc] sm:$0xf] %vm185, 0
        %191 = vst.msk [vmem:[#allocation2 + $0x10] sm:$0xf] %vm185, 0
        %192 = vst.msk [vmem:[#allocation2 + $0x14] sm:$0x1] %vm188, 0
        %193 = vst.msk [vmem:[#allocation2 + $0x18] sm:$0xf] %vm185, 0
        %194 = vst.msk [vmem:[#allocation2 + $0x1c] sm:$0xf] %vm185, 0
        %195 = vst.msk [vmem:[#allocation2 + $0x20] sm:$0x1] %vm188, 0
        %196 = vst.msk [vmem:[#allocation2 + $0x24] sm:$0xf] %vm185, 0
        %197 = vst.msk [vmem:[#allocation2 + $0x28] sm:$0xf] %vm185, 0
        %198 = vst.msk [vmem:[#allocation2 + $0x2c] sm:$0x1] %vm188, 0
        %199 = vst.msk [vmem:[#allocation2 + $0x30] sm:$0xf] %vm185, 0
        %200 = vst.msk [vmem:[#allocation2 + $0x34] sm:$0xf] %vm185, 0
        %201 = vst.msk [vmem:[#allocation2 + $0x38] sm:$0x1] %vm188, 0
        %202 = vst.msk [vmem:[#allocation2 + $0x3c] sm:$0xf] %vm185, 0
        %203 = vst.msk [vmem:[#allocation2 + $0x40] sm:$0xf] %vm185, 0
        %204 = vst.msk [vmem:[#allocation2 + $0x44] sm:$0x1] %vm188, 0
        %205 = vst.msk [vmem:[#allocation2 + $0x48] sm:$0xf] %vm185, 0
        %206 = vst.msk [vmem:[#allocation2 + $0x4c] sm:$0xf] %vm185, 0
        %207 = vst.msk [vmem:[#allocation2 + $0x50] sm:$0x1] %vm188, 0
        %208 = vst.msk [vmem:[#allocation2 + $0x54] sm:$0xf] %vm185, 0
        %209 = vst.msk [vmem:[#allocation2 + $0x58] sm:$0xf] %vm185, 0
        %210 = vst.msk [vmem:[#allocation2 + $0x5c] sm:$0x1] %vm188, 0
        %211 = vst.msk [vmem:[#allocation2 + $0x60] sm:$0xf] %vm185, 0
        %212 = vst.msk [vmem:[#allocation2 + $0x64] sm:$0xf] %vm185, 0
        %213 = vst.msk [vmem:[#allocation2 + $0x68] sm:$0x1] %vm188, 0
        %214 = vst.msk [vmem:[#allocation2 + $0x6c] sm:$0xf] %vm185, 0
        %215 = vst.msk [vmem:[#allocation2 + $0x70] sm:$0xf] %vm185, 0
        %216 = vst.msk [vmem:[#allocation2 + $0x74] sm:$0x1] %vm188, 0
        %217 = vst.msk [vmem:[#allocation2 + $0x78] sm:$0xf] %vm185, 0
        %218 = vst.msk [vmem:[#allocation2 + $0x7c] sm:$0xf] %vm185, 0
        %219 = vst.msk [vmem:[#allocation2 + $0x80] sm:$0x1] %vm188, 0
        %220 = vst.msk [vmem:[#allocation2 + $0x84] sm:$0xf] %vm185, 0
        %221 = vst.msk [vmem:[#allocation2 + $0x88] sm:$0xf] %vm185, 0
        %222 = vst.msk [vmem:[#allocation2 + $0x8c] sm:$0x1] %vm188, 0
        %223 = vst.msk [vmem:[#allocation2 + $0x90] sm:$0xf] %vm185, 0
        %224 = vst.msk [vmem:[#allocation2 + $0x94] sm:$0xf] %vm185, 0
        %225 = vst.msk [vmem:[#allocation2 + $0x98] sm:$0x1] %vm188, 0
        %226 = vst.msk [vmem:[#allocation2 + $0x9c] sm:$0xf] %vm185, 0
        %227 = vst.msk [vmem:[#allocation2 + $0xa0] sm:$0xf] %vm185, 0
        %228 = vst.msk [vmem:[#allocation2 + $0xa4] sm:$0x1] %vm188, 0
        %229 = vst.msk [vmem:[#allocation2 + $0xa8] sm:$0xf] %vm185, 0
        %230 = vst.msk [vmem:[#allocation2 + $0xac] sm:$0xf] %vm185, 0
        %231 = vst.msk [vmem:[#allocation2 + $0xb0] sm:$0x1] %vm188, 0
        %232 = vst.msk [vmem:[#allocation2 + $0xb4] sm:$0xf] %vm185, 0
        %233 = vst.msk [vmem:[#allocation2 + $0xb8] sm:$0xf] %vm185, 0
        %234 = vst.msk [vmem:[#allocation2 + $0xbc] sm:$0x1] %vm188, 0
        %235 = vst.msk [vmem:[#allocation2 + $0xc0] sm:$0xf] %vm185, 0
        %236 = vst.msk [vmem:[#allocation2 + $0xc4] sm:$0xf] %vm185, 0
        %237 = vst.msk [vmem:[#allocation2 + $0xc8] sm:$0x1] %vm188, 0
        %238 = vst.msk [vmem:[#allocation2 + $0xcc] sm:$0xf] %vm185, 0
        %239 = vst.msk [vmem:[#allocation2 + $0xd0] sm:$0xf] %vm185, 0
        %240 = vst.msk [vmem:[#allocation2 + $0xd4] sm:$0x1] %vm188, 0
        %v241 = vld [vmem:[%s182] sm:$0xf]
        %v242 = vld [vmem:[%s182 + $0x4] sm:$0xf]
        %v243 = vld [vmem:[%s182 + $0x8] sm:$0xf]
        %v244 = vld [vmem:[%s182 + $0xc] sm:$0xf]
        %v245 = vld [vmem:[%s182 + $0x10] sm:$0xf]
        %v246 = vld [vmem:[%s182 + $0x14] sm:$0xf]
        %v247 = vld [vmem:[%s182 + $0x18] sm:$0xf]
        %v248 = vld [vmem:[%s182 + $0x1c] sm:$0xf]
        %v249 = vld [vmem:[%s182 + $0x20] sm:$0xf]
        %v250 = vld [vmem:[%s182 + $0x24] sm:$0xf]
        %v251 = vld [vmem:[%s182 + $0x28] sm:$0xf]
        %v252 = vld [vmem:[%s182 + $0x2c] sm:$0xf]
        %v253 = vld [vmem:[%s182 + $0x30] sm:$0xf]
        %v254 = vld [vmem:[%s182 + $0x34] sm:$0xf]
        %v255 = vld [vmem:[%s182 + $0x38] sm:$0xf]
        %v256 = vld [vmem:[%s182 + $0x3c] sm:$0xf]
        %v257 = vld [vmem:[%s182 + $0x40] sm:$0xf]
        %v258 = vld [vmem:[%s182 + $0x44] sm:$0xf]
        %v259 = vld [vmem:[%s182 + $0x48] sm:$0xf]
        %v260 = vld [vmem:[%s182 + $0x4c] sm:$0xf]
        %v261 = vld [vmem:[%s182 + $0x50] sm:$0xf]
        %v262 = vld [vmem:[%s182 + $0x54] sm:$0xf]
        %v263 = vld [vmem:[%s182 + $0x58] sm:$0xf]
        %v264 = vld [vmem:[%s182 + $0x5c] sm:$0xf]
        %v265 = vld [vmem:[%s182 + $0x60] sm:$0xf]
        %v266 = vld [vmem:[%s182 + $0x64] sm:$0xf]
        %v267 = vld [vmem:[%s182 + $0x68] sm:$0xf]
        %v268 = vld [vmem:[%s182 + $0x6c] sm:$0xf]
        %v269 = vld [vmem:[%s182 + $0x70] sm:$0xf]
        %v270 = vld [vmem:[%s182 + $0x74] sm:$0xf]
        %v271 = vld [vmem:[%s182 + $0x78] sm:$0xf]
        %v272 = vld [vmem:[%s182 + $0x7c] sm:$0xf]
        %vm273 = vsmask.f32 256
        %vm274 = vsmask.f32 4368
        %vm275 = vmor %vm273, %vm274
        %v277 = vshrl.u32 %v241, 16
        %v279 = vrot.slane %v277, 7
        %v280 = vshll.u32 %v241, 16
        %v282 = vor.u32 %v279, %v280
        %v283 = vrot.slane %v279, 4
        %v285 = vshrl.u32 %v242, 16
        %v287 = vrot.slane %v285, 7
        %v288 = vshll.u32 %v242, 16
        %v290 = vor.u32 %v287, %v288
        %v291 = vsel %vm275, %v283, %v290
        %v292 = vrot.slane %v287, 4
        %v294 = vshrl.u32 %v243, 16
        %v296 = vrot.slane %v294, 7
        %v297 = vshll.u32 %v243, 16
        %v299 = vor.u32 %v296, %v297
        %v300 = vrot.slane %v296, 4
        %v302 = vshrl.u32 %v244, 16
        %v304 = vrot.slane %v302, 7
        %v305 = vshll.u32 %v244, 16
        %v307 = vor.u32 %v304, %v305
        %v308 = vsel %vm275, %v300, %v307
        %v309 = vrot.slane %v304, 4
        %v311 = vshrl.u32 %v245, 16
        %v313 = vrot.slane %v311, 7
        %v314 = vshll.u32 %v245, 16
        %v316 = vor.u32 %v313, %v314
        %v317 = vrot.slane %v313, 4
        %v319 = vshrl.u32 %v246, 16
        %v321 = vrot.slane %v319, 7
        %v322 = vshll.u32 %v246, 16
        %v324 = vor.u32 %v321, %v322
        %v325 = vsel %vm275, %v317, %v324
        %v326 = vrot.slane %v321, 4
        %v328 = vshrl.u32 %v247, 16
        %v330 = vrot.slane %v328, 7
        %v331 = vshll.u32 %v247, 16
        %v333 = vor.u32 %v330, %v331
        %v334 = vrot.slane %v330, 4
        %v336 = vshrl.u32 %v248, 16
        %v338 = vrot.slane %v336, 7
        %v339 = vshll.u32 %v248, 16
        %v341 = vor.u32 %v338, %v339
        %v342 = vsel %vm275, %v334, %v341
        %v343 = vrot.slane %v338, 4
        %v345 = vshrl.u32 %v249, 16
        %v347 = vrot.slane %v345, 7
        %v348 = vshll.u32 %v249, 16
        %v350 = vor.u32 %v347, %v348
        %v351 = vrot.slane %v347, 4
        %v353 = vshrl.u32 %v250, 16
        %v355 = vrot.slane %v353, 7
        %v356 = vshll.u32 %v250, 16
        %v358 = vor.u32 %v355, %v356
        %v359 = vsel %vm275, %v351, %v358
        %v360 = vrot.slane %v355, 4
        %v362 = vshrl.u32 %v251, 16
        %v364 = vrot.slane %v362, 7
        %v365 = vshll.u32 %v251, 16
        %v367 = vor.u32 %v364, %v365
        %v368 = vrot.slane %v364, 4
        %v370 = vshrl.u32 %v252, 16
        %v372 = vrot.slane %v370, 7
        %v373 = vshll.u32 %v252, 16
        %v375 = vor.u32 %v372, %v373
        %v376 = vsel %vm275, %v368, %v375
        %v377 = vrot.slane %v372, 4
        %v379 = vshrl.u32 %v253, 16
        %v381 = vrot.slane %v379, 7
        %v382 = vshll.u32 %v253, 16
        %v384 = vor.u32 %v381, %v382
        %v385 = vrot.slane %v381, 4
        %v387 = vshrl.u32 %v254, 16
        %v389 = vrot.slane %v387, 7
        %v390 = vshll.u32 %v254, 16
        %v392 = vor.u32 %v389, %v390
        %v393 = vsel %vm275, %v385, %v392
        %v394 = vrot.slane %v389, 4
        %v396 = vshrl.u32 %v255, 16
        %v398 = vrot.slane %v396, 7
        %v399 = vshll.u32 %v255, 16
        %v401 = vor.u32 %v398, %v399
        %v402 = vrot.slane %v398, 4
        %v404 = vshrl.u32 %v256, 16
        %v406 = vrot.slane %v404, 7
        %v407 = vshll.u32 %v256, 16
        %v409 = vor.u32 %v406, %v407
        %v410 = vsel %vm275, %v402, %v409
        %v411 = vrot.slane %v406, 4
        %v413 = vshrl.u32 %v257, 16
        %v415 = vrot.slane %v413, 7
        %v416 = vshll.u32 %v257, 16
        %v418 = vor.u32 %v415, %v416
        %v419 = vrot.slane %v415, 4
        %v421 = vshrl.u32 %v258, 16
        %v423 = vrot.slane %v421, 7
        %v424 = vshll.u32 %v258, 16
        %v426 = vor.u32 %v423, %v424
        %v427 = vsel %vm275, %v419, %v426
        %v428 = vrot.slane %v423, 4
        %v430 = vshrl.u32 %v259, 16
        %v432 = vrot.slane %v430, 7
        %v433 = vshll.u32 %v259, 16
        %v435 = vor.u32 %v432, %v433
        %v436 = vrot.slane %v432, 4
        %v438 = vshrl.u32 %v260, 16
        %v440 = vrot.slane %v438, 7
        %v441 = vshll.u32 %v260, 16
        %v443 = vor.u32 %v440, %v441
        %v444 = vsel %vm275, %v436, %v443
        %v445 = vrot.slane %v440, 4
        %v447 = vshrl.u32 %v261, 16
        %v449 = vrot.slane %v447, 7
        %v450 = vshll.u32 %v261, 16
        %v452 = vor.u32 %v449, %v450
        %v453 = vrot.slane %v449, 4
        %v455 = vshrl.u32 %v262, 16
        %v457 = vrot.slane %v455, 7
        %v458 = vshll.u32 %v262, 16
        %v460 = vor.u32 %v457, %v458
        %v461 = vsel %vm275, %v453, %v460
        %v462 = vrot.slane %v457, 4
        %v464 = vshrl.u32 %v263, 16
        %v466 = vrot.slane %v464, 7
        %v467 = vshll.u32 %v263, 16
        %v469 = vor.u32 %v466, %v467
        %v470 = vrot.slane %v466, 4
        %v472 = vshrl.u32 %v264, 16
        %v474 = vrot.slane %v472, 7
        %v475 = vshll.u32 %v264, 16
        %v477 = vor.u32 %v474, %v475
        %v478 = vsel %vm275, %v470, %v477
        %v479 = vrot.slane %v474, 4
        %v481 = vshrl.u32 %v265, 16
        %v483 = vrot.slane %v481, 7
        %v484 = vshll.u32 %v265, 16
        %v486 = vor.u32 %v483, %v484
        %v487 = vrot.slane %v483, 4
        %v489 = vshrl.u32 %v266, 16
        %v491 = vrot.slane %v489, 7
        %v492 = vshll.u32 %v266, 16
        %v494 = vor.u32 %v491, %v492
        %v495 = vsel %vm275, %v487, %v494
        %v496 = vrot.slane %v491, 4
        %v498 = vshrl.u32 %v267, 16
        %v500 = vrot.slane %v498, 7
        %v501 = vshll.u32 %v267, 16
        %v503 = vor.u32 %v500, %v501
        %v504 = vrot.slane %v500, 4
        %v506 = vshrl.u32 %v268, 16
        %v508 = vrot.slane %v506, 7
        %v509 = vshll.u32 %v268, 16
        %v511 = vor.u32 %v508, %v509
        %v512 = vsel %vm275, %v504, %v511
        %v513 = vrot.slane %v508, 4
        %v515 = vshrl.u32 %v269, 16
        %v517 = vrot.slane %v515, 7
        %v518 = vshll.u32 %v269, 16
        %v520 = vor.u32 %v517, %v518
        %v521 = vrot.slane %v517, 4
        %v523 = vshrl.u32 %v270, 16
        %v525 = vrot.slane %v523, 7
        %v526 = vshll.u32 %v270, 16
        %v528 = vor.u32 %v525, %v526
        %v529 = vsel %vm275, %v521, %v528
        %v530 = vrot.slane %v525, 4
        %v532 = vshrl.u32 %v271, 16
        %v534 = vrot.slane %v532, 7
        %v535 = vshll.u32 %v271, 16
        %v537 = vor.u32 %v534, %v535
        %v538 = vrot.slane %v534, 4
        %v540 = vshrl.u32 %v272, 16
        %v542 = vrot.slane %v540, 7
        %v543 = vshll.u32 %v272, 16
        %v545 = vor.u32 %v542, %v543
        %v546 = vsel %vm275, %v538, %v545
        %v547 = vrot.slane %v542, 4
        %s596 = scalar_lea.vmem [#allocation2], 12
        %vm597 = vcmask 19456
        %vm598 = vsmask.f32 7938
        %vm599 = vmand %vm597, %vm598
        %v600 = vld [vmem:[%s596] sm:$0xf]
        %v601 = vsel %vm599, %v282, %v600
        %602 = vst [vmem:[%s596] sm:$0xf] %v601
        %603 = vst.msk [vmem:[%s596 + $0x4] sm:$0xf] %vm185, %v291
        %vm604 = vcmask 16384
        %vm605 = vmand %vm604, %vm273
        %v606 = vld [vmem:[%s596 + $0x8] sm:$0x1]
        %v607 = vsel %vm605, %v292, %v606
        %608 = vst [vmem:[%s596 + $0x8] sm:$0x1] %v607
        %v609 = vld [vmem:[%s596 + $0xc] sm:$0xf]
        %v610 = vsel %vm599, %v299, %v609
        %611 = vst [vmem:[%s596 + $0xc] sm:$0xf] %v610
        %612 = vst.msk [vmem:[%s596 + $0x10] sm:$0xf] %vm185, %v308
        %v613 = vld [vmem:[%s596 + $0x14] sm:$0x1]
        %v614 = vsel %vm605, %v309, %v613
        %615 = vst [vmem:[%s596 + $0x14] sm:$0x1] %v614
        %v616 = vld [vmem:[%s596 + $0x18] sm:$0xf]
        %v617 = vsel %vm599, %v316, %v616
        %618 = vst [vmem:[%s596 + $0x18] sm:$0xf] %v617
        %619 = vst.msk [vmem:[%s596 + $0x1c] sm:$0xf] %vm185, %v325
        %v620 = vld [vmem:[%s596 + $0x20] sm:$0x1]
        %v621 = vsel %vm605, %v326, %v620
        %622 = vst [vmem:[%s596 + $0x20] sm:$0x1] %v621
        %v623 = vld [vmem:[%s596 + $0x24] sm:$0xf]
        %v624 = vsel %vm599, %v333, %v623
        %625 = vst [vmem:[%s596 + $0x24] sm:$0xf] %v624
        %626 = vst.msk [vmem:[%s596 + $0x28] sm:$0xf] %vm185, %v342
        %v627 = vld [vmem:[%s596 + $0x2c] sm:$0x1]
        %v628 = vsel %vm605, %v343, %v627
        %629 = vst [vmem:[%s596 + $0x2c] sm:$0x1] %v628
        %v630 = vld [vmem:[%s596 + $0x30] sm:$0xf]
        %v631 = vsel %vm599, %v350, %v630
        %632 = vst [vmem:[%s596 + $0x30] sm:$0xf] %v631
        %633 = vst.msk [vmem:[%s596 + $0x34] sm:$0xf] %vm185, %v359
        %v634 = vld [vmem:[%s596 + $0x38] sm:$0x1]
        %v635 = vsel %vm605, %v360, %v634
        %636 = vst [vmem:[%s596 + $0x38] sm:$0x1] %v635
        %v637 = vld [vmem:[%s596 + $0x3c] sm:$0xf]
        %v638 = vsel %vm599, %v367, %v637
        %639 = vst [vmem:[%s596 + $0x3c] sm:$0xf] %v638
        %640 = vst.msk [vmem:[%s596 + $0x40] sm:$0xf] %vm185, %v376
        %v641 = vld [vmem:[%s596 + $0x44] sm:$0x1]
        %v642 = vsel %vm605, %v377, %v641
        %643 = vst [vmem:[%s596 + $0x44] sm:$0x1] %v642
        %v644 = vld [vmem:[%s596 + $0x48] sm:$0xf]
        %v645 = vsel %vm599, %v384, %v644
        %646 = vst [vmem:[%s596 + $0x48] sm:$0xf] %v645
        %647 = vst.msk [vmem:[%s596 + $0x4c] sm:$0xf] %vm185, %v393
        %v648 = vld [vmem:[%s596 + $0x50] sm:$0x1]
        %v649 = vsel %vm605, %v394, %v648
        %650 = vst [vmem:[%s596 + $0x50] sm:$0x1] %v649
        %v651 = vld [vmem:[%s596 + $0x54] sm:$0xf]
        %v652 = vsel %vm599, %v401, %v651
        %653 = vst [vmem:[%s596 + $0x54] sm:$0xf] %v652
        %654 = vst.msk [vmem:[%s596 + $0x58] sm:$0xf] %vm185, %v410
        %v655 = vld [vmem:[%s596 + $0x5c] sm:$0x1]
        %v656 = vsel %vm605, %v411, %v655
        %657 = vst [vmem:[%s596 + $0x5c] sm:$0x1] %v656
        %v658 = vld [vmem:[%s596 + $0x60] sm:$0xf]
        %v659 = vsel %vm599, %v418, %v658
        %660 = vst [vmem:[%s596 + $0x60] sm:$0xf] %v659
        %661 = vst.msk [vmem:[%s596 + $0x64] sm:$0xf] %vm185, %v427
        %v662 = vld [vmem:[%s596 + $0x68] sm:$0x1]
        %v663 = vsel %vm605, %v428, %v662
        %664 = vst [vmem:[%s596 + $0x68] sm:$0x1] %v663
        %v665 = vld [vmem:[%s596 + $0x6c] sm:$0xf]
        %v666 = vsel %vm599, %v435, %v665
        %667 = vst [vmem:[%s596 + $0x6c] sm:$0xf] %v666
        %668 = vst.msk [vmem:[%s596 + $0x70] sm:$0xf] %vm185, %v444
        %v669 = vld [vmem:[%s596 + $0x74] sm:$0x1]
        %v670 = vsel %vm605, %v445, %v669
        %671 = vst [vmem:[%s596 + $0x74] sm:$0x1] %v670
        %v672 = vld [vmem:[%s596 + $0x78] sm:$0xf]
        %v673 = vsel %vm599, %v452, %v672
        %674 = vst [vmem:[%s596 + $0x78] sm:$0xf] %v673
        %675 = vst.msk [vmem:[%s596 + $0x7c] sm:$0xf] %vm185, %v461
        %v676 = vld [vmem:[%s596 + $0x80] sm:$0x1]
        %v677 = vsel %vm605, %v462, %v676
        %678 = vst [vmem:[%s596 + $0x80] sm:$0x1] %v677
        %v679 = vld [vmem:[%s596 + $0x84] sm:$0xf]
        %v680 = vsel %vm599, %v469, %v679
        %681 = vst [vmem:[%s596 + $0x84] sm:$0xf] %v680
        %682 = vst.msk [vmem:[%s596 + $0x88] sm:$0xf] %vm185, %v478
        %v683 = vld [vmem:[%s596 + $0x8c] sm:$0x1]
        %v684 = vsel %vm605, %v479, %v683
        %685 = vst [vmem:[%s596 + $0x8c] sm:$0x1] %v684
        %v686 = vld [vmem:[%s596 + $0x90] sm:$0xf]
        %v687 = vsel %vm599, %v486, %v686
        %688 = vst [vmem:[%s596 + $0x90] sm:$0xf] %v687
        %689 = vst.msk [vmem:[%s596 + $0x94] sm:$0xf] %vm185, %v495
        %v690 = vld [vmem:[%s596 + $0x98] sm:$0x1]
        %v691 = vsel %vm605, %v496, %v690
        %692 = vst [vmem:[%s596 + $0x98] sm:$0x1] %v691
        %v693 = vld [vmem:[%s596 + $0x9c] sm:$0xf]
        %v694 = vsel %vm599, %v503, %v693
        %695 = vst [vmem:[%s596 + $0x9c] sm:$0xf] %v694
        %696 = vst.msk [vmem:[%s596 + $0xa0] sm:$0xf] %vm185, %v512
        %v697 = vld [vmem:[%s596 + $0xa4] sm:$0x1]
        %v698 = vsel %vm605, %v513, %v697
        %699 = vst [vmem:[%s596 + $0xa4] sm:$0x1] %v698
        %v700 = vld [vmem:[%s596 + $0xa8] sm:$0xf]
        %v701 = vsel %vm599, %v520, %v700
        %702 = vst [vmem:[%s596 + $0xa8] sm:$0xf] %v701
        %703 = vst.msk [vmem:[%s596 + $0xac] sm:$0xf] %vm185, %v529
        %v704 = vld [vmem:[%s596 + $0xb0] sm:$0x1]
        %v705 = vsel %vm605, %v530, %v704
        %706 = vst [vmem:[%s596 + $0xb0] sm:$0x1] %v705
        %v707 = vld [vmem:[%s596 + $0xb4] sm:$0xf]
        %v708 = vsel %vm599, %v537, %v707
        %709 = vst [vmem:[%s596 + $0xb4] sm:$0xf] %v708
        %710 = vst.msk [vmem:[%s596 + $0xb8] sm:$0xf] %vm185, %v546
        %v711 = vld [vmem:[%s596 + $0xbc] sm:$0x1]
        %v712 = vsel %vm605, %v547, %v711
        %713 = vst [vmem:[%s596 + $0xbc] sm:$0x1] %v712
        %v714 = vld [vmem:[#allocation2] sm:$0xf]
        %v715 = vld [vmem:[#allocation2 + $0x4] sm:$0xf]
        %v716 = vld [vmem:[#allocation2 + $0x8] sm:$0x1]
        %v717 = vld [vmem:[#allocation2 + $0xc] sm:$0xf]
        %v718 = vld [vmem:[#allocation2 + $0x10] sm:$0xf]
        %v719 = vld [vmem:[#allocation2 + $0x14] sm:$0x1]
        %v720 = vld [vmem:[#allocation2 + $0x18] sm:$0xf]
        %v721 = vld [vmem:[#allocation2 + $0x1c] sm:$0xf]
        %v722 = vld [vmem:[#allocation2 + $0x20] sm:$0x1]
        %v723 = vld [vmem:[#allocation2 + $0x24] sm:$0xf]
        %v724 = vld [vmem:[#allocation2 + $0x28] sm:$0xf]
        %v725 = vld [vmem:[#allocation2 + $0x2c] sm:$0x1]
        %v726 = vld [vmem:[#allocation2 + $0x30] sm:$0xf]
        %v727 = vld [vmem:[#allocation2 + $0x34] sm:$0xf]
        %v728 = vld [vmem:[#allocation2 + $0x38] sm:$0x1]
        %v729 = vld [vmem:[#allocation2 + $0x3c] sm:$0xf]
        %v730 = vld [vmem:[#allocation2 + $0x40] sm:$0xf]
        %v731 = vld [vmem:[#allocation2 + $0x44] sm:$0x1]
        %v732 = vld [vmem:[#allocation2 + $0x48] sm:$0xf]
        %v733 = vld [vmem:[#allocation2 + $0x4c] sm:$0xf]
        %v734 = vld [vmem:[#allocation2 + $0x50] sm:$0x1]
        %v735 = vld [vmem:[#allocation2 + $0x54] sm:$0xf]
        %v736 = vld [vmem:[#allocation2 + $0x58] sm:$0xf]
        %v737 = vld [vmem:[#allocation2 + $0x5c] sm:$0x1]
        %v738 = vld [vmem:[#allocation2 + $0x60] sm:$0xf]
        %v739 = vld [vmem:[#allocation2 + $0x64] sm:$0xf]
        %v740 = vld [vmem:[#allocation2 + $0x68] sm:$0x1]
        %v741 = vld [vmem:[#allocation2 + $0x6c] sm:$0xf]
        %v742 = vld [vmem:[#allocation2 + $0x70] sm:$0xf]
        %v743 = vld [vmem:[#allocation2 + $0x74] sm:$0x1]
        %v744 = vld [vmem:[#allocation2 + $0x78] sm:$0xf]
        %v745 = vld [vmem:[#allocation2 + $0x7c] sm:$0xf]
        %v746 = vld [vmem:[#allocation2 + $0x80] sm:$0x1]
        %v747 = vld [vmem:[#allocation2 + $0x84] sm:$0xf]
        %v748 = vld [vmem:[#allocation2 + $0x88] sm:$0xf]
        %v749 = vld [vmem:[#allocation2 + $0x8c] sm:$0x1]
        %v750 = vld [vmem:[#allocation2 + $0x90] sm:$0xf]
        %v751 = vld [vmem:[#allocation2 + $0x94] sm:$0xf]
        %v752 = vld [vmem:[#allocation2 + $0x98] sm:$0x1]
        %v753 = vld [vmem:[#allocation2 + $0x9c] sm:$0xf]
        %v754 = vld [vmem:[#allocation2 + $0xa0] sm:$0xf]
        %v755 = vld [vmem:[#allocation2 + $0xa4] sm:$0x1]
        %v756 = vld [vmem:[#allocation2 + $0xa8] sm:$0xf]
        %v757 = vld [vmem:[#allocation2 + $0xac] sm:$0xf]
        %v758 = vld [vmem:[#allocation2 + $0xb0] sm:$0x1]
        %v759 = vld [vmem:[#allocation2 + $0xb4] sm:$0xf]
        %v760 = vld [vmem:[#allocation2 + $0xb8] sm:$0xf]
        %v761 = vld [vmem:[#allocation2 + $0xbc] sm:$0x1]
        %v762 = vld [vmem:[#allocation2 + $0xc0] sm:$0xf]
        %v763 = vld [vmem:[#allocation2 + $0xc4] sm:$0xf]
        %v764 = vld [vmem:[#allocation2 + $0xc8] sm:$0x1]
        %v765 = vld [vmem:[#allocation2 + $0xcc] sm:$0xf]
        %v766 = vld [vmem:[#allocation2 + $0xd0] sm:$0xf]
        %v767 = vld [vmem:[#allocation2 + $0xd4] sm:$0x1]
        %v817 = vunpack.c.l.s4 1966171168
        %v818 = vunpack.c.0.s8 %v817
        %v819 = vlaneseq
        %v820 = vshrl.u32 %v819, 7
        %v821 = vsub.s32 %v818, %v820
        %v822 = vrot.slane %v714, %v821
        %v823 = vcombine.high %v822, %v822
        %v825 = vunpack.c.l.s4 1966171168
        %v826 = vunpack.c.0.s8 %v825
        %v827 = vlaneseq
        %v828 = vshrl.u32 %v827, 7
        %v829 = vsub.s32 %v826, %v828
        %v830 = vrot.slane %v822, %v829
        %v832 = vunpack.c.l.s4 1966171168
        %v833 = vunpack.c.0.s8 %v832
        %v834 = vlaneseq
        %v835 = vshrl.u32 %v834, 7
        %v836 = vsub.s32 %v833, %v835
        %v837 = vrot.slane %v823, %v836
        %v838 = vcombine.high %v830, %v830
        %v839 = vcombine.high %v837, %v837
        %v841 = vunpack.c.l.s4 1966171168
        %v842 = vunpack.c.0.s8 %v841
        %v843 = vlaneseq
        %v844 = vshrl.u32 %v843, 7
        %v845 = vsub.s32 %v842, %v844
        %v846 = vrot.slane %v715, %v845
        %v847 = vcombine.high %v846, %v846
        %v849 = vunpack.c.l.s4 1966171168
        %v850 = vunpack.c.0.s8 %v849
        %v851 = vlaneseq
        %v852 = vshrl.u32 %v851, 7
        %v853 = vsub.s32 %v850, %v852
        %v854 = vrot.slane %v846, %v853
        %v856 = vunpack.c.l.s4 1966171168
        %v857 = vunpack.c.0.s8 %v856
        %v858 = vlaneseq
        %v859 = vshrl.u32 %v858, 7
        %v860 = vsub.s32 %v857, %v859
        %v861 = vrot.slane %v847, %v860
        %v862 = vcombine.high %v854, %v854
        %v863 = vcombine.high %v861, %v861
        %v865 = vunpack.c.l.s4 1966171168
        %v866 = vunpack.c.0.s8 %v865
        %v867 = vlaneseq
        %v868 = vshrl.u32 %v867, 7
        %v869 = vsub.s32 %v866, %v868
        %v870 = vrot.slane %v716, %v869
        %v872 = vunpack.c.l.s4 1966171168
        %v873 = vunpack.c.0.s8 %v872
        %v874 = vlaneseq
        %v875 = vshrl.u32 %v874, 7
        %v876 = vsub.s32 %v873, %v875
        %v877 = vrot.slane %v870, %v876
        %v879 = vunpack.c.l.s4 1966171168
        %v880 = vunpack.c.0.s8 %v879
        %v881 = vlaneseq
        %v882 = vshrl.u32 %v881, 7
        %v883 = vsub.s32 %v880, %v882
        %v884 = vrot.slane %v717, %v883
        %v885 = vcombine.high %v884, %v884
        %v887 = vunpack.c.l.s4 1966171168
        %v888 = vunpack.c.0.s8 %v887
        %v889 = vlaneseq
        %v890 = vshrl.u32 %v889, 7
        %v891 = vsub.s32 %v888, %v890
        %v892 = vrot.slane %v884, %v891
        %v894 = vunpack.c.l.s4 1966171168
        %v895 = vunpack.c.0.s8 %v894
        %v896 = vlaneseq
        %v897 = vshrl.u32 %v896, 7
        %v898 = vsub.s32 %v895, %v897
        %v899 = vrot.slane %v885, %v898
        %v900 = vcombine.high %v892, %v892
        %v901 = vcombine.high %v899, %v899
        %v903 = vunpack.c.l.s4 1966171168
        %v904 = vunpack.c.0.s8 %v903
        %v905 = vlaneseq
        %v906 = vshrl.u32 %v905, 7
        %v907 = vsub.s32 %v904, %v906
        %v908 = vrot.slane %v718, %v907
        %v909 = vcombine.high %v908, %v908
        %v911 = vunpack.c.l.s4 1966171168
        %v912 = vunpack.c.0.s8 %v911
        %v913 = vlaneseq
        %v914 = vshrl.u32 %v913, 7
        %v915 = vsub.s32 %v912, %v914
        %v916 = vrot.slane %v908, %v915
        %v918 = vunpack.c.l.s4 1966171168
        %v919 = vunpack.c.0.s8 %v918
        %v920 = vlaneseq
        %v921 = vshrl.u32 %v920, 7
        %v922 = vsub.s32 %v919, %v921
        %v923 = vrot.slane %v909, %v922
        %v924 = vcombine.high %v916, %v916
        %v925 = vcombine.high %v923, %v923
        %v927 = vunpack.c.l.s4 1966171168
        %v928 = vunpack.c.0.s8 %v927
        %v929 = vlaneseq
        %v930 = vshrl.u32 %v929, 7
        %v931 = vsub.s32 %v928, %v930
        %v932 = vrot.slane %v719, %v931
        %v934 = vunpack.c.l.s4 1966171168
        %v935 = vunpack.c.0.s8 %v934
        %v936 = vlaneseq
        %v937 = vshrl.u32 %v936, 7
        %v938 = vsub.s32 %v935, %v937
        %v939 = vrot.slane %v932, %v938
        %v941 = vunpack.c.l.s4 1966171168
        %v942 = vunpack.c.0.s8 %v941
        %v943 = vlaneseq
        %v944 = vshrl.u32 %v943, 7
        %v945 = vsub.s32 %v942, %v944
        %v946 = vrot.slane %v720, %v945
        %v947 = vcombine.high %v946, %v946
        %v949 = vunpack.c.l.s4 1966171168
        %v950 = vunpack.c.0.s8 %v949
        %v951 = vlaneseq
        %v952 = vshrl.u32 %v951, 7
        %v953 = vsub.s32 %v950, %v952
        %v954 = vrot.slane %v946, %v953
        %v956 = vunpack.c.l.s4 1966171168
        %v957 = vunpack.c.0.s8 %v956
        %v958 = vlaneseq
        %v959 = vshrl.u32 %v958, 7
        %v960 = vsub.s32 %v957, %v959
        %v961 = vrot.slane %v947, %v960
        %v962 = vcombine.high %v954, %v954
        %v963 = vcombine.high %v961, %v961
        %v965 = vunpack.c.l.s4 1966171168
        %v966 = vunpack.c.0.s8 %v965
        %v967 = vlaneseq
        %v968 = vshrl.u32 %v967, 7
        %v969 = vsub.s32 %v966, %v968
        %v970 = vrot.slane %v721, %v969
        %v971 = vcombine.high %v970, %v970
        %v973 = vunpack.c.l.s4 1966171168
        %v974 = vunpack.c.0.s8 %v973
        %v975 = vlaneseq
        %v976 = vshrl.u32 %v975, 7
        %v977 = vsub.s32 %v974, %v976
        %v978 = vrot.slane %v970, %v977
        %v980 = vunpack.c.l.s4 1966171168
        %v981 = vunpack.c.0.s8 %v980
        %v982 = vlaneseq
        %v983 = vshrl.u32 %v982, 7
        %v984 = vsub.s32 %v981, %v983
        %v985 = vrot.slane %v971, %v984
        %v986 = vcombine.high %v978, %v978
        %v987 = vcombine.high %v985, %v985
        %v989 = vunpack.c.l.s4 1966171168
        %v990 = vunpack.c.0.s8 %v989
        %v991 = vlaneseq
        %v992 = vshrl.u32 %v991, 7
        %v993 = vsub.s32 %v990, %v992
        %v994 = vrot.slane %v722, %v993
        %v996 = vunpack.c.l.s4 1966171168
        %v997 = vunpack.c.0.s8 %v996
        %v998 = vlaneseq
        %v999 = vshrl.u32 %v998, 7
        %v1000 = vsub.s32 %v997, %v999
        %v1001 = vrot.slane %v994, %v1000
        %v1003 = vunpack.c.l.s4 1966171168
        %v1004 = vunpack.c.0.s8 %v1003
        %v1005 = vlaneseq
        %v1006 = vshrl.u32 %v1005, 7
        %v1007 = vsub.s32 %v1004, %v1006
        %v1008 = vrot.slane %v723, %v1007
        %v1009 = vcombine.high %v1008, %v1008
        %v1011 = vunpack.c.l.s4 1966171168
        %v1012 = vunpack.c.0.s8 %v1011
        %v1013 = vlaneseq
        %v1014 = vshrl.u32 %v1013, 7
        %v1015 = vsub.s32 %v1012, %v1014
        %v1016 = vrot.slane %v1008, %v1015
        %v1018 = vunpack.c.l.s4 1966171168
        %v1019 = vunpack.c.0.s8 %v1018
        %v1020 = vlaneseq
        %v1021 = vshrl.u32 %v1020, 7
        %v1022 = vsub.s32 %v1019, %v1021
        %v1023 = vrot.slane %v1009, %v1022
        %v1024 = vcombine.high %v1016, %v1016
        %v1025 = vcombine.high %v1023, %v1023
        %v1027 = vunpack.c.l.s4 1966171168
        %v1028 = vunpack.c.0.s8 %v1027
        %v1029 = vlaneseq
        %v1030 = vshrl.u32 %v1029, 7
        %v1031 = vsub.s32 %v1028, %v1030
        %v1032 = vrot.slane %v724, %v1031
        %v1033 = vcombine.high %v1032, %v1032
        %v1035 = vunpack.c.l.s4 1966171168
        %v1036 = vunpack.c.0.s8 %v1035
        %v1037 = vlaneseq
        %v1038 = vshrl.u32 %v1037, 7
        %v1039 = vsub.s32 %v1036, %v1038
        %v1040 = vrot.slane %v1032, %v1039
        %v1042 = vunpack.c.l.s4 1966171168
        %v1043 = vunpack.c.0.s8 %v1042
        %v1044 = vlaneseq
        %v1045 = vshrl.u32 %v1044, 7
        %v1046 = vsub.s32 %v1043, %v1045
        %v1047 = vrot.slane %v1033, %v1046
        %v1048 = vcombine.high %v1040, %v1040
        %v1049 = vcombine.high %v1047, %v1047
        %v1051 = vunpack.c.l.s4 1966171168
        %v1052 = vunpack.c.0.s8 %v1051
        %v1053 = vlaneseq
        %v1054 = vshrl.u32 %v1053, 7
        %v1055 = vsub.s32 %v1052, %v1054
        %v1056 = vrot.slane %v725, %v1055
        %v1058 = vunpack.c.l.s4 1966171168
        %v1059 = vunpack.c.0.s8 %v1058
        %v1060 = vlaneseq
        %v1061 = vshrl.u32 %v1060, 7
        %v1062 = vsub.s32 %v1059, %v1061
        %v1063 = vrot.slane %v1056, %v1062
        %v1065 = vunpack.c.l.s4 1966171168
        %v1066 = vunpack.c.0.s8 %v1065
        %v1067 = vlaneseq
        %v1068 = vshrl.u32 %v1067, 7
        %v1069 = vsub.s32 %v1066, %v1068
        %v1070 = vrot.slane %v726, %v1069
        %v1071 = vcombine.high %v1070, %v1070
        %v1073 = vunpack.c.l.s4 1966171168
        %v1074 = vunpack.c.0.s8 %v1073
        %v1075 = vlaneseq
        %v1076 = vshrl.u32 %v1075, 7
        %v1077 = vsub.s32 %v1074, %v1076
        %v1078 = vrot.slane %v1070, %v1077
        %v1080 = vunpack.c.l.s4 1966171168
        %v1081 = vunpack.c.0.s8 %v1080
        %v1082 = vlaneseq
        %v1083 = vshrl.u32 %v1082, 7
        %v1084 = vsub.s32 %v1081, %v1083
        %v1085 = vrot.slane %v1071, %v1084
        %v1086 = vcombine.high %v1078, %v1078
        %v1087 = vcombine.high %v1085, %v1085
        %v1089 = vunpack.c.l.s4 1966171168
        %v1090 = vunpack.c.0.s8 %v1089
        %v1091 = vlaneseq
        %v1092 = vshrl.u32 %v1091, 7
        %v1093 = vsub.s32 %v1090, %v1092
        %v1094 = vrot.slane %v727, %v1093
        %v1095 = vcombine.high %v1094, %v1094
        %v1097 = vunpack.c.l.s4 1966171168
        %v1098 = vunpack.c.0.s8 %v1097
        %v1099 = vlaneseq
        %v1100 = vshrl.u32 %v1099, 7
        %v1101 = vsub.s32 %v1098, %v1100
        %v1102 = vrot.slane %v1094, %v1101
        %v1104 = vunpack.c.l.s4 1966171168
        %v1105 = vunpack.c.0.s8 %v1104
        %v1106 = vlaneseq
        %v1107 = vshrl.u32 %v1106, 7
        %v1108 = vsub.s32 %v1105, %v1107
        %v1109 = vrot.slane %v1095, %v1108
        %v1110 = vcombine.high %v1102, %v1102
        %v1111 = vcombine.high %v1109, %v1109
        %v1113 = vunpack.c.l.s4 1966171168
        %v1114 = vunpack.c.0.s8 %v1113
        %v1115 = vlaneseq
        %v1116 = vshrl.u32 %v1115, 7
        %v1117 = vsub.s32 %v1114, %v1116
        %v1118 = vrot.slane %v728, %v1117
        %v1120 = vunpack.c.l.s4 1966171168
        %v1121 = vunpack.c.0.s8 %v1120
        %v1122 = vlaneseq
        %v1123 = vshrl.u32 %v1122, 7
        %v1124 = vsub.s32 %v1121, %v1123
        %v1125 = vrot.slane %v1118, %v1124
        %v1127 = vunpack.c.l.s4 1966171168
        %v1128 = vunpack.c.0.s8 %v1127
        %v1129 = vlaneseq
        %v1130 = vshrl.u32 %v1129, 7
        %v1131 = vsub.s32 %v1128, %v1130
        %v1132 = vrot.slane %v729, %v1131
        %v1133 = vcombine.high %v1132, %v1132
        %v1135 = vunpack.c.l.s4 1966171168
        %v1136 = vunpack.c.0.s8 %v1135
        %v1137 = vlaneseq
        %v1138 = vshrl.u32 %v1137, 7
        %v1139 = vsub.s32 %v1136, %v1138
        %v1140 = vrot.slane %v1132, %v1139
        %v1142 = vunpack.c.l.s4 1966171168
        %v1143 = vunpack.c.0.s8 %v1142
        %v1144 = vlaneseq
        %v1145 = vshrl.u32 %v1144, 7
        %v1146 = vsub.s32 %v1143, %v1145
        %v1147 = vrot.slane %v1133, %v1146
        %v1148 = vcombine.high %v1140, %v1140
        %v1149 = vcombine.high %v1147, %v1147
        %v1151 = vunpack.c.l.s4 1966171168
        %v1152 = vunpack.c.0.s8 %v1151
        %v1153 = vlaneseq
        %v1154 = vshrl.u32 %v1153, 7
        %v1155 = vsub.s32 %v1152, %v1154
        %v1156 = vrot.slane %v730, %v1155
        %v1157 = vcombine.high %v1156, %v1156
        %v1159 = vunpack.c.l.s4 1966171168
        %v1160 = vunpack.c.0.s8 %v1159
        %v1161 = vlaneseq
        %v1162 = vshrl.u32 %v1161, 7
        %v1163 = vsub.s32 %v1160, %v1162
        %v1164 = vrot.slane %v1156, %v1163
        %v1166 = vunpack.c.l.s4 1966171168
        %v1167 = vunpack.c.0.s8 %v1166
        %v1168 = vlaneseq
        %v1169 = vshrl.u32 %v1168, 7
        %v1170 = vsub.s32 %v1167, %v1169
        %v1171 = vrot.slane %v1157, %v1170
        %v1172 = vcombine.high %v1164, %v1164
        %v1173 = vcombine.high %v1171, %v1171
        %v1175 = vunpack.c.l.s4 1966171168
        %v1176 = vunpack.c.0.s8 %v1175
        %v1177 = vlaneseq
        %v1178 = vshrl.u32 %v1177, 7
        %v1179 = vsub.s32 %v1176, %v1178
        %v1180 = vrot.slane %v731, %v1179
        %v1182 = vunpack.c.l.s4 1966171168
        %v1183 = vunpack.c.0.s8 %v1182
        %v1184 = vlaneseq
        %v1185 = vshrl.u32 %v1184, 7
        %v1186 = vsub.s32 %v1183, %v1185
        %v1187 = vrot.slane %v1180, %v1186
        %v1189 = vunpack.c.l.s4 1966171168
        %v1190 = vunpack.c.0.s8 %v1189
        %v1191 = vlaneseq
        %v1192 = vshrl.u32 %v1191, 7
        %v1193 = vsub.s32 %v1190, %v1192
        %v1194 = vrot.slane %v732, %v1193
        %v1195 = vcombine.high %v1194, %v1194
        %v1197 = vunpack.c.l.s4 1966171168
        %v1198 = vunpack.c.0.s8 %v1197
        %v1199 = vlaneseq
        %v1200 = vshrl.u32 %v1199, 7
        %v1201 = vsub.s32 %v1198, %v1200
        %v1202 = vrot.slane %v1194, %v1201
        %v1204 = vunpack.c.l.s4 1966171168
        %v1205 = vunpack.c.0.s8 %v1204
        %v1206 = vlaneseq
        %v1207 = vshrl.u32 %v1206, 7
        %v1208 = vsub.s32 %v1205, %v1207
        %v1209 = vrot.slane %v1195, %v1208
        %v1210 = vcombine.high %v1202, %v1202
        %v1211 = vcombine.high %v1209, %v1209
        %v1213 = vunpack.c.l.s4 1966171168
        %v1214 = vunpack.c.0.s8 %v1213
        %v1215 = vlaneseq
        %v1216 = vshrl.u32 %v1215, 7
        %v1217 = vsub.s32 %v1214, %v1216
        %v1218 = vrot.slane %v733, %v1217
        %v1219 = vcombine.high %v1218, %v1218
        %v1221 = vunpack.c.l.s4 1966171168
        %v1222 = vunpack.c.0.s8 %v1221
        %v1223 = vlaneseq
        %v1224 = vshrl.u32 %v1223, 7
        %v1225 = vsub.s32 %v1222, %v1224
        %v1226 = vrot.slane %v1218, %v1225
        %v1228 = vunpack.c.l.s4 1966171168
        %v1229 = vunpack.c.0.s8 %v1228
        %v1230 = vlaneseq
        %v1231 = vshrl.u32 %v1230, 7
        %v1232 = vsub.s32 %v1229, %v1231
        %v1233 = vrot.slane %v1219, %v1232
        %v1234 = vcombine.high %v1226, %v1226
        %v1235 = vcombine.high %v1233, %v1233
        %v1237 = vunpack.c.l.s4 1966171168
        %v1238 = vunpack.c.0.s8 %v1237
        %v1239 = vlaneseq
        %v1240 = vshrl.u32 %v1239, 7
        %v1241 = vsub.s32 %v1238, %v1240
        %v1242 = vrot.slane %v734, %v1241
        %v1244 = vunpack.c.l.s4 1966171168
        %v1245 = vunpack.c.0.s8 %v1244
        %v1246 = vlaneseq
        %v1247 = vshrl.u32 %v1246, 7
        %v1248 = vsub.s32 %v1245, %v1247
        %v1249 = vrot.slane %v1242, %v1248
        %v1251 = vunpack.c.l.s4 1966171168
        %v1252 = vunpack.c.0.s8 %v1251
        %v1253 = vlaneseq
        %v1254 = vshrl.u32 %v1253, 7
        %v1255 = vsub.s32 %v1252, %v1254
        %v1256 = vrot.slane %v735, %v1255
        %v1257 = vcombine.high %v1256, %v1256
        %v1259 = vunpack.c.l.s4 1966171168
        %v1260 = vunpack.c.0.s8 %v1259
        %v1261 = vlaneseq
        %v1262 = vshrl.u32 %v1261, 7
        %v1263 = vsub.s32 %v1260, %v1262
        %v1264 = vrot.slane %v1256, %v1263
        %v1266 = vunpack.c.l.s4 1966171168
        %v1267 = vunpack.c.0.s8 %v1266
        %v1268 = vlaneseq
        %v1269 = vshrl.u32 %v1268, 7
        %v1270 = vsub.s32 %v1267, %v1269
        %v1271 = vrot.slane %v1257, %v1270
        %v1272 = vcombine.high %v1264, %v1264
        %v1273 = vcombine.high %v1271, %v1271
        %v1275 = vunpack.c.l.s4 1966171168
        %v1276 = vunpack.c.0.s8 %v1275
        %v1277 = vlaneseq
        %v1278 = vshrl.u32 %v1277, 7
        %v1279 = vsub.s32 %v1276, %v1278
        %v1280 = vrot.slane %v736, %v1279
        %v1281 = vcombine.high %v1280, %v1280
        %v1283 = vunpack.c.l.s4 1966171168
        %v1284 = vunpack.c.0.s8 %v1283
        %v1285 = vlaneseq
        %v1286 = vshrl.u32 %v1285, 7
        %v1287 = vsub.s32 %v1284, %v1286
        %v1288 = vrot.slane %v1280, %v1287
        %v1290 = vunpack.c.l.s4 1966171168
        %v1291 = vunpack.c.0.s8 %v1290
        %v1292 = vlaneseq
        %v1293 = vshrl.u32 %v1292, 7
        %v1294 = vsub.s32 %v1291, %v1293
        %v1295 = vrot.slane %v1281, %v1294
        %v1296 = vcombine.high %v1288, %v1288
        %v1297 = vcombine.high %v1295, %v1295
        %v1299 = vunpack.c.l.s4 1966171168
        %v1300 = vunpack.c.0.s8 %v1299
        %v1301 = vlaneseq
        %v1302 = vshrl.u32 %v1301, 7
        %v1303 = vsub.s32 %v1300, %v1302
        %v1304 = vrot.slane %v737, %v1303
        %v1306 = vunpack.c.l.s4 1966171168
        %v1307 = vunpack.c.0.s8 %v1306
        %v1308 = vlaneseq
        %v1309 = vshrl.u32 %v1308, 7
        %v1310 = vsub.s32 %v1307, %v1309
        %v1311 = vrot.slane %v1304, %v1310
        %v1313 = vunpack.c.l.s4 1966171168
        %v1314 = vunpack.c.0.s8 %v1313
        %v1315 = vlaneseq
        %v1316 = vshrl.u32 %v1315, 7
        %v1317 = vsub.s32 %v1314, %v1316
        %v1318 = vrot.slane %v738, %v1317
        %v1319 = vcombine.high %v1318, %v1318
        %v1321 = vunpack.c.l.s4 1966171168
        %v1322 = vunpack.c.0.s8 %v1321
        %v1323 = vlaneseq
        %v1324 = vshrl.u32 %v1323, 7
        %v1325 = vsub.s32 %v1322, %v1324
        %v1326 = vrot.slane %v1318, %v1325
        %v1328 = vunpack.c.l.s4 1966171168
        %v1329 = vunpack.c.0.s8 %v1328
        %v1330 = vlaneseq
        %v1331 = vshrl.u32 %v1330, 7
        %v1332 = vsub.s32 %v1329, %v1331
        %v1333 = vrot.slane %v1319, %v1332
        %v1334 = vcombine.high %v1326, %v1326
        %v1335 = vcombine.high %v1333, %v1333
        %v1337 = vunpack.c.l.s4 1966171168
        %v1338 = vunpack.c.0.s8 %v1337
        %v1339 = vlaneseq
        %v1340 = vshrl.u32 %v1339, 7
        %v1341 = vsub.s32 %v1338, %v1340
        %v1342 = vrot.slane %v739, %v1341
        %v1343 = vcombine.high %v1342, %v1342
        %v1345 = vunpack.c.l.s4 1966171168
        %v1346 = vunpack.c.0.s8 %v1345
        %v1347 = vlaneseq
        %v1348 = vshrl.u32 %v1347, 7
        %v1349 = vsub.s32 %v1346, %v1348
        %v1350 = vrot.slane %v1342, %v1349
        %v1352 = vunpack.c.l.s4 1966171168
        %v1353 = vunpack.c.0.s8 %v1352
        %v1354 = vlaneseq
        %v1355 = vshrl.u32 %v1354, 7
        %v1356 = vsub.s32 %v1353, %v1355
        %v1357 = vrot.slane %v1343, %v1356
        %v1358 = vcombine.high %v1350, %v1350
        %v1359 = vcombine.high %v1357, %v1357
        %v1361 = vunpack.c.l.s4 1966171168
        %v1362 = vunpack.c.0.s8 %v1361
        %v1363 = vlaneseq
        %v1364 = vshrl.u32 %v1363, 7
        %v1365 = vsub.s32 %v1362, %v1364
        %v1366 = vrot.slane %v740, %v1365
        %v1368 = vunpack.c.l.s4 1966171168
        %v1369 = vunpack.c.0.s8 %v1368
        %v1370 = vlaneseq
        %v1371 = vshrl.u32 %v1370, 7
        %v1372 = vsub.s32 %v1369, %v1371
        %v1373 = vrot.slane %v1366, %v1372
        %v1375 = vunpack.c.l.s4 1966171168
        %v1376 = vunpack.c.0.s8 %v1375
        %v1377 = vlaneseq
        %v1378 = vshrl.u32 %v1377, 7
        %v1379 = vsub.s32 %v1376, %v1378
        %v1380 = vrot.slane %v741, %v1379
        %v1381 = vcombine.high %v1380, %v1380
        %v1383 = vunpack.c.l.s4 1966171168
        %v1384 = vunpack.c.0.s8 %v1383
        %v1385 = vlaneseq
        %v1386 = vshrl.u32 %v1385, 7
        %v1387 = vsub.s32 %v1384, %v1386
        %v1388 = vrot.slane %v1380, %v1387
        %v1390 = vunpack.c.l.s4 1966171168
        %v1391 = vunpack.c.0.s8 %v1390
        %v1392 = vlaneseq
        %v1393 = vshrl.u32 %v1392, 7
        %v1394 = vsub.s32 %v1391, %v1393
        %v1395 = vrot.slane %v1381, %v1394
        %v1396 = vcombine.high %v1388, %v1388
        %v1397 = vcombine.high %v1395, %v1395
        %v1399 = vunpack.c.l.s4 1966171168
        %v1400 = vunpack.c.0.s8 %v1399
        %v1401 = vlaneseq
        %v1402 = vshrl.u32 %v1401, 7
        %v1403 = vsub.s32 %v1400, %v1402
        %v1404 = vrot.slane %v742, %v1403
        %v1405 = vcombine.high %v1404, %v1404
        %v1407 = vunpack.c.l.s4 1966171168
        %v1408 = vunpack.c.0.s8 %v1407
        %v1409 = vlaneseq
        %v1410 = vshrl.u32 %v1409, 7
        %v1411 = vsub.s32 %v1408, %v1410
        %v1412 = vrot.slane %v1404, %v1411
        %v1414 = vunpack.c.l.s4 1966171168
        %v1415 = vunpack.c.0.s8 %v1414
        %v1416 = vlaneseq
        %v1417 = vshrl.u32 %v1416, 7
        %v1418 = vsub.s32 %v1415, %v1417
        %v1419 = vrot.slane %v1405, %v1418
        %v1420 = vcombine.high %v1412, %v1412
        %v1421 = vcombine.high %v1419, %v1419
        %v1423 = vunpack.c.l.s4 1966171168
        %v1424 = vunpack.c.0.s8 %v1423
        %v1425 = vlaneseq
        %v1426 = vshrl.u32 %v1425, 7
        %v1427 = vsub.s32 %v1424, %v1426
        %v1428 = vrot.slane %v743, %v1427
        %v1430 = vunpack.c.l.s4 1966171168
        %v1431 = vunpack.c.0.s8 %v1430
        %v1432 = vlaneseq
        %v1433 = vshrl.u32 %v1432, 7
        %v1434 = vsub.s32 %v1431, %v1433
        %v1435 = vrot.slane %v1428, %v1434
        %v1437 = vunpack.c.l.s4 1966171168
        %v1438 = vunpack.c.0.s8 %v1437
        %v1439 = vlaneseq
        %v1440 = vshrl.u32 %v1439, 7
        %v1441 = vsub.s32 %v1438, %v1440
        %v1442 = vrot.slane %v744, %v1441
        %v1443 = vcombine.high %v1442, %v1442
        %v1445 = vunpack.c.l.s4 1966171168
        %v1446 = vunpack.c.0.s8 %v1445
        %v1447 = vlaneseq
        %v1448 = vshrl.u32 %v1447, 7
        %v1449 = vsub.s32 %v1446, %v1448
        %v1450 = vrot.slane %v1442, %v1449
        %v1452 = vunpack.c.l.s4 1966171168
        %v1453 = vunpack.c.0.s8 %v1452
        %v1454 = vlaneseq
        %v1455 = vshrl.u32 %v1454, 7
        %v1456 = vsub.s32 %v1453, %v1455
        %v1457 = vrot.slane %v1443, %v1456
        %v1458 = vcombine.high %v1450, %v1450
        %v1459 = vcombine.high %v1457, %v1457
        %v1461 = vunpack.c.l.s4 1966171168
        %v1462 = vunpack.c.0.s8 %v1461
        %v1463 = vlaneseq
        %v1464 = vshrl.u32 %v1463, 7
        %v1465 = vsub.s32 %v1462, %v1464
        %v1466 = vrot.slane %v745, %v1465
        %v1467 = vcombine.high %v1466, %v1466
        %v1469 = vunpack.c.l.s4 1966171168
        %v1470 = vunpack.c.0.s8 %v1469
        %v1471 = vlaneseq
        %v1472 = vshrl.u32 %v1471, 7
        %v1473 = vsub.s32 %v1470, %v1472
        %v1474 = vrot.slane %v1466, %v1473
        %v1476 = vunpack.c.l.s4 1966171168
        %v1477 = vunpack.c.0.s8 %v1476
        %v1478 = vlaneseq
        %v1479 = vshrl.u32 %v1478, 7
        %v1480 = vsub.s32 %v1477, %v1479
        %v1481 = vrot.slane %v1467, %v1480
        %v1482 = vcombine.high %v1474, %v1474
        %v1483 = vcombine.high %v1481, %v1481
        %v1485 = vunpack.c.l.s4 1966171168
        %v1486 = vunpack.c.0.s8 %v1485
        %v1487 = vlaneseq
        %v1488 = vshrl.u32 %v1487, 7
        %v1489 = vsub.s32 %v1486, %v1488
        %v1490 = vrot.slane %v746, %v1489
        %v1492 = vunpack.c.l.s4 1966171168
        %v1493 = vunpack.c.0.s8 %v1492
        %v1494 = vlaneseq
        %v1495 = vshrl.u32 %v1494, 7
        %v1496 = vsub.s32 %v1493, %v1495
        %v1497 = vrot.slane %v1490, %v1496
        %v1499 = vunpack.c.l.s4 1966171168
        %v1500 = vunpack.c.0.s8 %v1499
        %v1501 = vlaneseq
        %v1502 = vshrl.u32 %v1501, 7
        %v1503 = vsub.s32 %v1500, %v1502
        %v1504 = vrot.slane %v747, %v1503
        %v1505 = vcombine.high %v1504, %v1504
        %v1507 = vunpack.c.l.s4 1966171168
        %v1508 = vunpack.c.0.s8 %v1507
        %v1509 = vlaneseq
        %v1510 = vshrl.u32 %v1509, 7
        %v1511 = vsub.s32 %v1508, %v1510
        %v1512 = vrot.slane %v1504, %v1511
        %v1514 = vunpack.c.l.s4 1966171168
        %v1515 = vunpack.c.0.s8 %v1514
        %v1516 = vlaneseq
        %v1517 = vshrl.u32 %v1516, 7
        %v1518 = vsub.s32 %v1515, %v1517
        %v1519 = vrot.slane %v1505, %v1518
        %v1520 = vcombine.high %v1512, %v1512
        %v1521 = vcombine.high %v1519, %v1519
        %v1523 = vunpack.c.l.s4 1966171168
        %v1524 = vunpack.c.0.s8 %v1523
        %v1525 = vlaneseq
        %v1526 = vshrl.u32 %v1525, 7
        %v1527 = vsub.s32 %v1524, %v1526
        %v1528 = vrot.slane %v748, %v1527
        %v1529 = vcombine.high %v1528, %v1528
        %v1531 = vunpack.c.l.s4 1966171168
        %v1532 = vunpack.c.0.s8 %v1531
        %v1533 = vlaneseq
        %v1534 = vshrl.u32 %v1533, 7
        %v1535 = vsub.s32 %v1532, %v1534
        %v1536 = vrot.slane %v1528, %v1535
        %v1538 = vunpack.c.l.s4 1966171168
        %v1539 = vunpack.c.0.s8 %v1538
        %v1540 = vlaneseq
        %v1541 = vshrl.u32 %v1540, 7
        %v1542 = vsub.s32 %v1539, %v1541
        %v1543 = vrot.slane %v1529, %v1542
        %v1544 = vcombine.high %v1536, %v1536
        %v1545 = vcombine.high %v1543, %v1543
        %v1547 = vunpack.c.l.s4 1966171168
        %v1548 = vunpack.c.0.s8 %v1547
        %v1549 = vlaneseq
        %v1550 = vshrl.u32 %v1549, 7
        %v1551 = vsub.s32 %v1548, %v1550
        %v1552 = vrot.slane %v749, %v1551
        %v1554 = vunpack.c.l.s4 1966171168
        %v1555 = vunpack.c.0.s8 %v1554
        %v1556 = vlaneseq
        %v1557 = vshrl.u32 %v1556, 7
        %v1558 = vsub.s32 %v1555, %v1557
        %v1559 = vrot.slane %v1552, %v1558
        %v1561 = vunpack.c.l.s4 1966171168
        %v1562 = vunpack.c.0.s8 %v1561
        %v1563 = vlaneseq
        %v1564 = vshrl.u32 %v1563, 7
        %v1565 = vsub.s32 %v1562, %v1564
        %v1566 = vrot.slane %v750, %v1565
        %v1567 = vcombine.high %v1566, %v1566
        %v1569 = vunpack.c.l.s4 1966171168
        %v1570 = vunpack.c.0.s8 %v1569
        %v1571 = vlaneseq
        %v1572 = vshrl.u32 %v1571, 7
        %v1573 = vsub.s32 %v1570, %v1572
        %v1574 = vrot.slane %v1566, %v1573
        %v1576 = vunpack.c.l.s4 1966171168
        %v1577 = vunpack.c.0.s8 %v1576
        %v1578 = vlaneseq
        %v1579 = vshrl.u32 %v1578, 7
        %v1580 = vsub.s32 %v1577, %v1579
        %v1581 = vrot.slane %v1567, %v1580
        %v1582 = vcombine.high %v1574, %v1574
        %v1583 = vcombine.high %v1581, %v1581
        %v1585 = vunpack.c.l.s4 1966171168
        %v1586 = vunpack.c.0.s8 %v1585
        %v1587 = vlaneseq
        %v1588 = vshrl.u32 %v1587, 7
        %v1589 = vsub.s32 %v1586, %v1588
        %v1590 = vrot.slane %v751, %v1589
        %v1591 = vcombine.high %v1590, %v1590
        %v1593 = vunpack.c.l.s4 1966171168
        %v1594 = vunpack.c.0.s8 %v1593
        %v1595 = vlaneseq
        %v1596 = vshrl.u32 %v1595, 7
        %v1597 = vsub.s32 %v1594, %v1596
        %v1598 = vrot.slane %v1590, %v1597
        %v1600 = vunpack.c.l.s4 1966171168
        %v1601 = vunpack.c.0.s8 %v1600
        %v1602 = vlaneseq
        %v1603 = vshrl.u32 %v1602, 7
        %v1604 = vsub.s32 %v1601, %v1603
        %v1605 = vrot.slane %v1591, %v1604
        %v1606 = vcombine.high %v1598, %v1598
        %v1607 = vcombine.high %v1605, %v1605
        %v1609 = vunpack.c.l.s4 1966171168
        %v1610 = vunpack.c.0.s8 %v1609
        %v1611 = vlaneseq
        %v1612 = vshrl.u32 %v1611, 7
        %v1613 = vsub.s32 %v1610, %v1612
        %v1614 = vrot.slane %v752, %v1613
        %v1616 = vunpack.c.l.s4 1966171168
        %v1617 = vunpack.c.0.s8 %v1616
        %v1618 = vlaneseq
        %v1619 = vshrl.u32 %v1618, 7
        %v1620 = vsub.s32 %v1617, %v1619
        %v1621 = vrot.slane %v1614, %v1620
        %v1623 = vunpack.c.l.s4 1966171168
        %v1624 = vunpack.c.0.s8 %v1623
        %v1625 = vlaneseq
        %v1626 = vshrl.u32 %v1625, 7
        %v1627 = vsub.s32 %v1624, %v1626
        %v1628 = vrot.slane %v753, %v1627
        %v1629 = vcombine.high %v1628, %v1628
        %v1631 = vunpack.c.l.s4 1966171168
        %v1632 = vunpack.c.0.s8 %v1631
        %v1633 = vlaneseq
        %v1634 = vshrl.u32 %v1633, 7
        %v1635 = vsub.s32 %v1632, %v1634
        %v1636 = vrot.slane %v1628, %v1635
        %v1638 = vunpack.c.l.s4 1966171168
        %v1639 = vunpack.c.0.s8 %v1638
        %v1640 = vlaneseq
        %v1641 = vshrl.u32 %v1640, 7
        %v1642 = vsub.s32 %v1639, %v1641
        %v1643 = vrot.slane %v1629, %v1642
        %v1644 = vcombine.high %v1636, %v1636
        %v1645 = vcombine.high %v1643, %v1643
        %v1647 = vunpack.c.l.s4 1966171168
        %v1648 = vunpack.c.0.s8 %v1647
        %v1649 = vlaneseq
        %v1650 = vshrl.u32 %v1649, 7
        %v1651 = vsub.s32 %v1648, %v1650
        %v1652 = vrot.slane %v754, %v1651
        %v1653 = vcombine.high %v1652, %v1652
        %v1655 = vunpack.c.l.s4 1966171168
        %v1656 = vunpack.c.0.s8 %v1655
        %v1657 = vlaneseq
        %v1658 = vshrl.u32 %v1657, 7
        %v1659 = vsub.s32 %v1656, %v1658
        %v1660 = vrot.slane %v1652, %v1659
        %v1662 = vunpack.c.l.s4 1966171168
        %v1663 = vunpack.c.0.s8 %v1662
        %v1664 = vlaneseq
        %v1665 = vshrl.u32 %v1664, 7
        %v1666 = vsub.s32 %v1663, %v1665
        %v1667 = vrot.slane %v1653, %v1666
        %v1668 = vcombine.high %v1660, %v1660
        %v1669 = vcombine.high %v1667, %v1667
        %v1671 = vunpack.c.l.s4 1966171168
        %v1672 = vunpack.c.0.s8 %v1671
        %v1673 = vlaneseq
        %v1674 = vshrl.u32 %v1673, 7
        %v1675 = vsub.s32 %v1672, %v1674
        %v1676 = vrot.slane %v755, %v1675
        %v1678 = vunpack.c.l.s4 1966171168
        %v1679 = vunpack.c.0.s8 %v1678
        %v1680 = vlaneseq
        %v1681 = vshrl.u32 %v1680, 7
        %v1682 = vsub.s32 %v1679, %v1681
        %v1683 = vrot.slane %v1676, %v1682
        %v1685 = vunpack.c.l.s4 1966171168
        %v1686 = vunpack.c.0.s8 %v1685
        %v1687 = vlaneseq
        %v1688 = vshrl.u32 %v1687, 7
        %v1689 = vsub.s32 %v1686, %v1688
        %v1690 = vrot.slane %v756, %v1689
        %v1691 = vcombine.high %v1690, %v1690
        %v1693 = vunpack.c.l.s4 1966171168
        %v1694 = vunpack.c.0.s8 %v1693
        %v1695 = vlaneseq
        %v1696 = vshrl.u32 %v1695, 7
        %v1697 = vsub.s32 %v1694, %v1696
        %v1698 = vrot.slane %v1690, %v1697
        %v1700 = vunpack.c.l.s4 1966171168
        %v1701 = vunpack.c.0.s8 %v1700
        %v1702 = vlaneseq
        %v1703 = vshrl.u32 %v1702, 7
        %v1704 = vsub.s32 %v1701, %v1703
        %v1705 = vrot.slane %v1691, %v1704
        %v1706 = vcombine.high %v1698, %v1698
        %v1707 = vcombine.high %v1705, %v1705
        %v1709 = vunpack.c.l.s4 1966171168
        %v1710 = vunpack.c.0.s8 %v1709
        %v1711 = vlaneseq
        %v1712 = vshrl.u32 %v1711, 7
        %v1713 = vsub.s32 %v1710, %v1712
        %v1714 = vrot.slane %v757, %v1713
        %v1715 = vcombine.high %v1714, %v1714
        %v1717 = vunpack.c.l.s4 1966171168
        %v1718 = vunpack.c.0.s8 %v1717
        %v1719 = vlaneseq
        %v1720 = vshrl.u32 %v1719, 7
        %v1721 = vsub.s32 %v1718, %v1720
        %v1722 = vrot.slane %v1714, %v1721
        %v1724 = vunpack.c.l.s4 1966171168
        %v1725 = vunpack.c.0.s8 %v1724
        %v1726 = vlaneseq
        %v1727 = vshrl.u32 %v1726, 7
        %v1728 = vsub.s32 %v1725, %v1727
        %v1729 = vrot.slane %v1715, %v1728
        %v1730 = vcombine.high %v1722, %v1722
        %v1731 = vcombine.high %v1729, %v1729
        %v1733 = vunpack.c.l.s4 1966171168
        %v1734 = vunpack.c.0.s8 %v1733
        %v1735 = vlaneseq
        %v1736 = vshrl.u32 %v1735, 7
        %v1737 = vsub.s32 %v1734, %v1736
        %v1738 = vrot.slane %v758, %v1737
        %v1740 = vunpack.c.l.s4 1966171168
        %v1741 = vunpack.c.0.s8 %v1740
        %v1742 = vlaneseq
        %v1743 = vshrl.u32 %v1742, 7
        %v1744 = vsub.s32 %v1741, %v1743
        %v1745 = vrot.slane %v1738, %v1744
        %v1747 = vunpack.c.l.s4 1966171168
        %v1748 = vunpack.c.0.s8 %v1747
        %v1749 = vlaneseq
        %v1750 = vshrl.u32 %v1749, 7
        %v1751 = vsub.s32 %v1748, %v1750
        %v1752 = vrot.slane %v759, %v1751
        %v1753 = vcombine.high %v1752, %v1752
        %v1755 = vunpack.c.l.s4 1966171168
        %v1756 = vunpack.c.0.s8 %v1755
        %v1757 = vlaneseq
        %v1758 = vshrl.u32 %v1757, 7
        %v1759 = vsub.s32 %v1756, %v1758
        %v1760 = vrot.slane %v1752, %v1759
        %v1762 = vunpack.c.l.s4 1966171168
        %v1763 = vunpack.c.0.s8 %v1762
        %v1764 = vlaneseq
        %v1765 = vshrl.u32 %v1764, 7
        %v1766 = vsub.s32 %v1763, %v1765
        %v1767 = vrot.slane %v1753, %v1766
        %v1768 = vcombine.high %v1760, %v1760
        %v1769 = vcombine.high %v1767, %v1767
        %v1771 = vunpack.c.l.s4 1966171168
        %v1772 = vunpack.c.0.s8 %v1771
        %v1773 = vlaneseq
        %v1774 = vshrl.u32 %v1773, 7
        %v1775 = vsub.s32 %v1772, %v1774
        %v1776 = vrot.slane %v760, %v1775
        %v1777 = vcombine.high %v1776, %v1776
        %v1779 = vunpack.c.l.s4 1966171168
        %v1780 = vunpack.c.0.s8 %v1779
        %v1781 = vlaneseq
        %v1782 = vshrl.u32 %v1781, 7
        %v1783 = vsub.s32 %v1780, %v1782
        %v1784 = vrot.slane %v1776, %v1783
        %v1786 = vunpack.c.l.s4 1966171168
        %v1787 = vunpack.c.0.s8 %v1786
        %v1788 = vlaneseq
        %v1789 = vshrl.u32 %v1788, 7
        %v1790 = vsub.s32 %v1787, %v1789
        %v1791 = vrot.slane %v1777, %v1790
        %v1792 = vcombine.high %v1784, %v1784
        %v1793 = vcombine.high %v1791, %v1791
        %v1795 = vunpack.c.l.s4 1966171168
        %v1796 = vunpack.c.0.s8 %v1795
        %v1797 = vlaneseq
        %v1798 = vshrl.u32 %v1797, 7
        %v1799 = vsub.s32 %v1796, %v1798
        %v1800 = vrot.slane %v761, %v1799
        %v1802 = vunpack.c.l.s4 1966171168
        %v1803 = vunpack.c.0.s8 %v1802
        %v1804 = vlaneseq
        %v1805 = vshrl.u32 %v1804, 7
        %v1806 = vsub.s32 %v1803, %v1805
        %v1807 = vrot.slane %v1800, %v1806
        %v1808 = vld [vmem:[%s1] sm:$0xf]
        %v1809 = vld [vmem:[%s1 + $0x4] sm:$0x1]
        %v1814 = vunpack.c.l.s4 1966171168
        %v1815 = vunpack.c.0.s8 %v1814
        %v1816 = vlaneseq
        %v1817 = vshrl.u32 %v1816, 7
        %v1818 = vsub.s32 %v1815, %v1817
        %v1819 = vrot.slane %v762, %v1818
        %v1820 = vcombine.high %v1819, %v1819
        %v1822 = vunpack.c.l.s4 1966171168
        %v1823 = vunpack.c.0.s8 %v1822
        %v1824 = vlaneseq
        %v1825 = vshrl.u32 %v1824, 7
        %v1826 = vsub.s32 %v1823, %v1825
        %v1827 = vrot.slane %v1819, %v1826
        %v1829 = vunpack.c.l.s4 1966171168
        %v1830 = vunpack.c.0.s8 %v1829
        %v1831 = vlaneseq
        %v1832 = vshrl.u32 %v1831, 7
        %v1833 = vsub.s32 %v1830, %v1832
        %v1834 = vrot.slane %v1820, %v1833
        %v1835 = vcombine.high %v1827, %v1827
        %v1836 = vcombine.high %v1834, %v1834
        %v1838 = vunpack.c.l.s4 1966171168
        %v1839 = vunpack.c.0.s8 %v1838
        %v1840 = vlaneseq
        %v1841 = vshrl.u32 %v1840, 7
        %v1842 = vsub.s32 %v1839, %v1841
        %v1843 = vrot.slane %v763, %v1842
        %v1844 = vcombine.high %v1843, %v1843
        %v1846 = vunpack.c.l.s4 1966171168
        %v1847 = vunpack.c.0.s8 %v1846
        %v1848 = vlaneseq
        %v1849 = vshrl.u32 %v1848, 7
        %v1850 = vsub.s32 %v1847, %v1849
        %v1851 = vrot.slane %v1843, %v1850
        %v1853 = vunpack.c.l.s4 1966171168
        %v1854 = vunpack.c.0.s8 %v1853
        %v1855 = vlaneseq
        %v1856 = vshrl.u32 %v1855, 7
        %v1857 = vsub.s32 %v1854, %v1856
        %v1858 = vrot.slane %v1844, %v1857
        %v1859 = vcombine.high %v1851, %v1851
        %v1860 = vcombine.high %v1858, %v1858
        %v1862 = vunpack.c.l.s4 1966171168
        %v1863 = vunpack.c.0.s8 %v1862
        %v1864 = vlaneseq
        %v1865 = vshrl.u32 %v1864, 7
        %v1866 = vsub.s32 %v1863, %v1865
        %v1867 = vrot.slane %v764, %v1866
        %v1869 = vunpack.c.l.s4 1966171168
        %v1870 = vunpack.c.0.s8 %v1869
        %v1871 = vlaneseq
        %v1872 = vshrl.u32 %v1871, 7
        %v1873 = vsub.s32 %v1870, %v1872
        %v1874 = vrot.slane %v1867, %v1873
        %v1875 = vcombine.low %v892, %v899
        %v1876 = vcombine.low %v900, %v901
        %v1877 = vcombine.low %v916, %v923
        %v1878 = vcombine.low %v924, %v925
        %v1880 = vunpack.c.l.s4 1966171168
        %v1881 = vunpack.c.0.s8 %v1880
        %v1882 = vlaneseq
        %v1883 = vshrl.u32 %v1882, 7
        %v1884 = vsub.s32 %v1881, %v1883
        %v1885 = vrot.slane %v1875, %v1884
        %v1887 = vunpack.c.l.s4 1966171168
        %v1888 = vunpack.c.0.s8 %v1887
        %v1889 = vlaneseq
        %v1890 = vshrl.u32 %v1889, 7
        %v1891 = vsub.s32 %v1888, %v1890
        %v1892 = vrot.slane %v1876, %v1891
        %v1894 = vunpack.c.l.s4 1966171168
        %v1895 = vunpack.c.0.s8 %v1894
        %v1896 = vlaneseq
        %v1897 = vshrl.u32 %v1896, 7
        %v1898 = vsub.s32 %v1895, %v1897
        %v1899 = vrot.slane %v1877, %v1898
        %v1901 = vunpack.c.l.s4 1966171168
        %v1902 = vunpack.c.0.s8 %v1901
        %v1903 = vlaneseq
        %v1904 = vshrl.u32 %v1903, 7
        %v1905 = vsub.s32 %v1902, %v1904
        %v1906 = vrot.slane %v1878, %v1905
        %v1907 = vcombine.low %v1885, %v1892
        %v1908 = vcombine.low %v1899, %v1906
        %v1910 = vunpack.c.l.s4 1966171168
        %v1911 = vunpack.c.0.s8 %v1910
        %v1912 = vlaneseq
        %v1913 = vshrl.u32 %v1912, 7
        %v1914 = vsub.s32 %v1911, %v1913
        %v1915 = vrot.slane %v1907, %v1914
        %v1917 = vunpack.c.l.s4 1966171168
        %v1918 = vunpack.c.0.s8 %v1917
        %v1919 = vlaneseq
        %v1920 = vshrl.u32 %v1919, 7
        %v1921 = vsub.s32 %v1918, %v1920
        %v1922 = vrot.slane %v1908, %v1921
        %v1923 = vcombine.low %v1915, %v1922
        %v1924 = vcombine.low %v939, %v954
        %v1925 = vcombine.low %v961, %v962
        %v1926 = vcombine.low %v963, %v978
        %v1927 = vcombine.low %v985, %v986
        %v1929 = vunpack.c.l.s4 1966171168
        %v1930 = vunpack.c.0.s8 %v1929
        %v1931 = vlaneseq
        %v1932 = vshrl.u32 %v1931, 7
        %v1933 = vsub.s32 %v1930, %v1932
        %v1934 = vrot.slane %v1924, %v1933
        %v1936 = vunpack.c.l.s4 1966171168
        %v1937 = vunpack.c.0.s8 %v1936
        %v1938 = vlaneseq
        %v1939 = vshrl.u32 %v1938, 7
        %v1940 = vsub.s32 %v1937, %v1939
        %v1941 = vrot.slane %v1925, %v1940
        %v1943 = vunpack.c.l.s4 1966171168
        %v1944 = vunpack.c.0.s8 %v1943
        %v1945 = vlaneseq
        %v1946 = vshrl.u32 %v1945, 7
        %v1947 = vsub.s32 %v1944, %v1946
        %v1948 = vrot.slane %v1926, %v1947
        %v1950 = vunpack.c.l.s4 1966171168
        %v1951 = vunpack.c.0.s8 %v1950
        %v1952 = vlaneseq
        %v1953 = vshrl.u32 %v1952, 7
        %v1954 = vsub.s32 %v1951, %v1953
        %v1955 = vrot.slane %v1927, %v1954
        %v1956 = vcombine.low %v1934, %v1941
        %v1957 = vcombine.low %v1948, %v1955
        %v1959 = vunpack.c.l.s4 1966171168
        %v1960 = vunpack.c.0.s8 %v1959
        %v1961 = vlaneseq
        %v1962 = vshrl.u32 %v1961, 7
        %v1963 = vsub.s32 %v1960, %v1962
        %v1964 = vrot.slane %v1956, %v1963
        %v1966 = vunpack.c.l.s4 1966171168
        %v1967 = vunpack.c.0.s8 %v1966
        %v1968 = vlaneseq
        %v1969 = vshrl.u32 %v1968, 7
        %v1970 = vsub.s32 %v1967, %v1969
        %v1971 = vrot.slane %v1957, %v1970
        %v1972 = vcombine.low %v1964, %v1971
        %v1973 = vcombine.low %v987, %v1001
        %v1974 = vcombine.low %v1016, %v1023
        %v1975 = vcombine.low %v1024, %v1025
        %v1976 = vcombine.low %v1040, %v1047
        %v1978 = vunpack.c.l.s4 1966171168
        %v1979 = vunpack.c.0.s8 %v1978
        %v1980 = vlaneseq
        %v1981 = vshrl.u32 %v1980, 7
        %v1982 = vsub.s32 %v1979, %v1981
        %v1983 = vrot.slane %v1973, %v1982
        %v1985 = vunpack.c.l.s4 1966171168
        %v1986 = vunpack.c.0.s8 %v1985
        %v1987 = vlaneseq
        %v1988 = vshrl.u32 %v1987, 7
        %v1989 = vsub.s32 %v1986, %v1988
        %v1990 = vrot.slane %v1974, %v1989
        %v1992 = vunpack.c.l.s4 1966171168
        %v1993 = vunpack.c.0.s8 %v1992
        %v1994 = vlaneseq
        %v1995 = vshrl.u32 %v1994, 7
        %v1996 = vsub.s32 %v1993, %v1995
        %v1997 = vrot.slane %v1975, %v1996
        %v1999 = vunpack.c.l.s4 1966171168
        %v2000 = vunpack.c.0.s8 %v1999
        %v2001 = vlaneseq
        %v2002 = vshrl.u32 %v2001, 7
        %v2003 = vsub.s32 %v2000, %v2002
        %v2004 = vrot.slane %v1976, %v2003
        %v2005 = vcombine.low %v1983, %v1990
        %v2006 = vcombine.low %v1997, %v2004
        %v2008 = vunpack.c.l.s4 1966171168
        %v2009 = vunpack.c.0.s8 %v2008
        %v2010 = vlaneseq
        %v2011 = vshrl.u32 %v2010, 7
        %v2012 = vsub.s32 %v2009, %v2011
        %v2013 = vrot.slane %v2005, %v2012
        %v2015 = vunpack.c.l.s4 1966171168
        %v2016 = vunpack.c.0.s8 %v2015
        %v2017 = vlaneseq
        %v2018 = vshrl.u32 %v2017, 7
        %v2019 = vsub.s32 %v2016, %v2018
        %v2020 = vrot.slane %v2006, %v2019
        %v2021 = vcombine.low %v2013, %v2020
        %v2022 = vcombine.low %v1048, %v1049
        %v2023 = vcombine.low %v1063, %v1078
        %v2024 = vcombine.low %v1085, %v1086
        %v2025 = vcombine.low %v1087, %v1102
        %v2027 = vunpack.c.l.s4 1966171168
        %v2028 = vunpack.c.0.s8 %v2027
        %v2029 = vlaneseq
        %v2030 = vshrl.u32 %v2029, 7
        %v2031 = vsub.s32 %v2028, %v2030
        %v2032 = vrot.slane %v2022, %v2031
        %v2034 = vunpack.c.l.s4 1966171168
        %v2035 = vunpack.c.0.s8 %v2034
        %v2036 = vlaneseq
        %v2037 = vshrl.u32 %v2036, 7
        %v2038 = vsub.s32 %v2035, %v2037
        %v2039 = vrot.slane %v2023, %v2038
        %v2041 = vunpack.c.l.s4 1966171168
        %v2042 = vunpack.c.0.s8 %v2041
        %v2043 = vlaneseq
        %v2044 = vshrl.u32 %v2043, 7
        %v2045 = vsub.s32 %v2042, %v2044
        %v2046 = vrot.slane %v2024, %v2045
        %v2048 = vunpack.c.l.s4 1966171168
        %v2049 = vunpack.c.0.s8 %v2048
        %v2050 = vlaneseq
        %v2051 = vshrl.u32 %v2050, 7
        %v2052 = vsub.s32 %v2049, %v2051
        %v2053 = vrot.slane %v2025, %v2052
        %v2054 = vcombine.low %v2032, %v2039
        %v2055 = vcombine.low %v2046, %v2053
        %v2057 = vunpack.c.l.s4 1966171168
        %v2058 = vunpack.c.0.s8 %v2057
        %v2059 = vlaneseq
        %v2060 = vshrl.u32 %v2059, 7
        %v2061 = vsub.s32 %v2058, %v2060
        %v2062 = vrot.slane %v2054, %v2061
        %v2064 = vunpack.c.l.s4 1966171168
        %v2065 = vunpack.c.0.s8 %v2064
        %v2066 = vlaneseq
        %v2067 = vshrl.u32 %v2066, 7
        %v2068 = vsub.s32 %v2065, %v2067
        %v2069 = vrot.slane %v2055, %v2068
        %v2070 = vcombine.low %v2062, %v2069
        %v2071 = vcombine.low %v1109, %v1110
        %v2072 = vcombine.low %v1111, %v1125
        %v2073 = vcombine.low %v1140, %v1147
        %v2074 = vcombine.low %v1148, %v1149
        %v2076 = vunpack.c.l.s4 1966171168
        %v2077 = vunpack.c.0.s8 %v2076
        %v2078 = vlaneseq
        %v2079 = vshrl.u32 %v2078, 7
        %v2080 = vsub.s32 %v2077, %v2079
        %v2081 = vrot.slane %v2071, %v2080
        %v2083 = vunpack.c.l.s4 1966171168
        %v2084 = vunpack.c.0.s8 %v2083
        %v2085 = vlaneseq
        %v2086 = vshrl.u32 %v2085, 7
        %v2087 = vsub.s32 %v2084, %v2086
        %v2088 = vrot.slane %v2072, %v2087
        %v2090 = vunpack.c.l.s4 1966171168
        %v2091 = vunpack.c.0.s8 %v2090
        %v2092 = vlaneseq
        %v2093 = vshrl.u32 %v2092, 7
        %v2094 = vsub.s32 %v2091, %v2093
        %v2095 = vrot.slane %v2073, %v2094
        %v2097 = vunpack.c.l.s4 1966171168
        %v2098 = vunpack.c.0.s8 %v2097
        %v2099 = vlaneseq
        %v2100 = vshrl.u32 %v2099, 7
        %v2101 = vsub.s32 %v2098, %v2100
        %v2102 = vrot.slane %v2074, %v2101
        %v2103 = vcombine.low %v2081, %v2088
        %v2104 = vcombine.low %v2095, %v2102
        %v2106 = vunpack.c.l.s4 1966171168
        %v2107 = vunpack.c.0.s8 %v2106
        %v2108 = vlaneseq
        %v2109 = vshrl.u32 %v2108, 7
        %v2110 = vsub.s32 %v2107, %v2109
        %v2111 = vrot.slane %v2103, %v2110
        %v2113 = vunpack.c.l.s4 1966171168
        %v2114 = vunpack.c.0.s8 %v2113
        %v2115 = vlaneseq
        %v2116 = vshrl.u32 %v2115, 7
        %v2117 = vsub.s32 %v2114, %v2116
        %v2118 = vrot.slane %v2104, %v2117
        %v2119 = vcombine.low %v2111, %v2118
        %v2120 = vcombine.low %v1164, %v1171
        %v2121 = vcombine.low %v1172, %v1173
        %v2122 = vcombine.low %v1187, %v1202
        %v2123 = vcombine.low %v1209, %v1210
        %v2125 = vunpack.c.l.s4 1966171168
        %v2126 = vunpack.c.0.s8 %v2125
        %v2127 = vlaneseq
        %v2128 = vshrl.u32 %v2127, 7
        %v2129 = vsub.s32 %v2126, %v2128
        %v2130 = vrot.slane %v2120, %v2129
        %v2132 = vunpack.c.l.s4 1966171168
        %v2133 = vunpack.c.0.s8 %v2132
        %v2134 = vlaneseq
        %v2135 = vshrl.u32 %v2134, 7
        %v2136 = vsub.s32 %v2133, %v2135
        %v2137 = vrot.slane %v2121, %v2136
        %v2139 = vunpack.c.l.s4 1966171168
        %v2140 = vunpack.c.0.s8 %v2139
        %v2141 = vlaneseq
        %v2142 = vshrl.u32 %v2141, 7
        %v2143 = vsub.s32 %v2140, %v2142
        %v2144 = vrot.slane %v2122, %v2143
        %v2146 = vunpack.c.l.s4 1966171168
        %v2147 = vunpack.c.0.s8 %v2146
        %v2148 = vlaneseq
        %v2149 = vshrl.u32 %v2148, 7
        %v2150 = vsub.s32 %v2147, %v2149
        %v2151 = vrot.slane %v2123, %v2150
        %v2152 = vcombine.low %v2130, %v2137
        %v2153 = vcombine.low %v2144, %v2151
        %v2155 = vunpack.c.l.s4 1966171168
        %v2156 = vunpack.c.0.s8 %v2155
        %v2157 = vlaneseq
        %v2158 = vshrl.u32 %v2157, 7
        %v2159 = vsub.s32 %v2156, %v2158
        %v2160 = vrot.slane %v2152, %v2159
        %v2162 = vunpack.c.l.s4 1966171168
        %v2163 = vunpack.c.0.s8 %v2162
        %v2164 = vlaneseq
        %v2165 = vshrl.u32 %v2164, 7
        %v2166 = vsub.s32 %v2163, %v2165
        %v2167 = vrot.slane %v2153, %v2166
        %v2168 = vcombine.low %v2160, %v2167
        %v2169 = vcombine.low %v1211, %v1226
        %v2170 = vcombine.low %v1233, %v1234
        %v2171 = vcombine.low %v1235, %v1249
        %v2172 = vcombine.low %v1264, %v1271
        %v2174 = vunpack.c.l.s4 1966171168
        %v2175 = vunpack.c.0.s8 %v2174
        %v2176 = vlaneseq
        %v2177 = vshrl.u32 %v2176, 7
        %v2178 = vsub.s32 %v2175, %v2177
        %v2179 = vrot.slane %v2169, %v2178
        %v2181 = vunpack.c.l.s4 1966171168
        %v2182 = vunpack.c.0.s8 %v2181
        %v2183 = vlaneseq
        %v2184 = vshrl.u32 %v2183, 7
        %v2185 = vsub.s32 %v2182, %v2184
        %v2186 = vrot.slane %v2170, %v2185
        %v2188 = vunpack.c.l.s4 1966171168
        %v2189 = vunpack.c.0.s8 %v2188
        %v2190 = vlaneseq
        %v2191 = vshrl.u32 %v2190, 7
        %v2192 = vsub.s32 %v2189, %v2191
        %v2193 = vrot.slane %v2171, %v2192
        %v2195 = vunpack.c.l.s4 1966171168
        %v2196 = vunpack.c.0.s8 %v2195
        %v2197 = vlaneseq
        %v2198 = vshrl.u32 %v2197, 7
        %v2199 = vsub.s32 %v2196, %v2198
        %v2200 = vrot.slane %v2172, %v2199
        %v2201 = vcombine.low %v2179, %v2186
        %v2202 = vcombine.low %v2193, %v2200
        %v2204 = vunpack.c.l.s4 1966171168
        %v2205 = vunpack.c.0.s8 %v2204
        %v2206 = vlaneseq
        %v2207 = vshrl.u32 %v2206, 7
        %v2208 = vsub.s32 %v2205, %v2207
        %v2209 = vrot.slane %v2201, %v2208
        %v2211 = vunpack.c.l.s4 1966171168
        %v2212 = vunpack.c.0.s8 %v2211
        %v2213 = vlaneseq
        %v2214 = vshrl.u32 %v2213, 7
        %v2215 = vsub.s32 %v2212, %v2214
        %v2216 = vrot.slane %v2202, %v2215
        %v2217 = vcombine.low %v2209, %v2216
        %v2218 = vcombine.low %v1272, %v1273
        %v2219 = vcombine.low %v1288, %v1295
        %v2220 = vcombine.low %v1296, %v1297
        %v2221 = vcombine.low %v1311, %v1326
        %v2223 = vunpack.c.l.s4 1966171168
        %v2224 = vunpack.c.0.s8 %v2223
        %v2225 = vlaneseq
        %v2226 = vshrl.u32 %v2225, 7
        %v2227 = vsub.s32 %v2224, %v2226
        %v2228 = vrot.slane %v2218, %v2227
        %v2230 = vunpack.c.l.s4 1966171168
        %v2231 = vunpack.c.0.s8 %v2230
        %v2232 = vlaneseq
        %v2233 = vshrl.u32 %v2232, 7
        %v2234 = vsub.s32 %v2231, %v2233
        %v2235 = vrot.slane %v2219, %v2234
        %v2237 = vunpack.c.l.s4 1966171168
        %v2238 = vunpack.c.0.s8 %v2237
        %v2239 = vlaneseq
        %v2240 = vshrl.u32 %v2239, 7
        %v2241 = vsub.s32 %v2238, %v2240
        %v2242 = vrot.slane %v2220, %v2241
        %v2244 = vunpack.c.l.s4 1966171168
        %v2245 = vunpack.c.0.s8 %v2244
        %v2246 = vlaneseq
        %v2247 = vshrl.u32 %v2246, 7
        %v2248 = vsub.s32 %v2245, %v2247
        %v2249 = vrot.slane %v2221, %v2248
        %v2250 = vcombine.low %v2228, %v2235
        %v2251 = vcombine.low %v2242, %v2249
        %v2253 = vunpack.c.l.s4 1966171168
        %v2254 = vunpack.c.0.s8 %v2253
        %v2255 = vlaneseq
        %v2256 = vshrl.u32 %v2255, 7
        %v2257 = vsub.s32 %v2254, %v2256
        %v2258 = vrot.slane %v2250, %v2257
        %v2260 = vunpack.c.l.s4 1966171168
        %v2261 = vunpack.c.0.s8 %v2260
        %v2262 = vlaneseq
        %v2263 = vshrl.u32 %v2262, 7
        %v2264 = vsub.s32 %v2261, %v2263
        %v2265 = vrot.slane %v2251, %v2264
        %v2266 = vcombine.low %v2258, %v2265
        %v2267 = vcombine.low %v1333, %v1334
        %v2268 = vcombine.low %v1335, %v1350
        %v2269 = vcombine.low %v1357, %v1358
        %v2270 = vcombine.low %v1359, %v1373
        %v2272 = vunpack.c.l.s4 1966171168
        %v2273 = vunpack.c.0.s8 %v2272
        %v2274 = vlaneseq
        %v2275 = vshrl.u32 %v2274, 7
        %v2276 = vsub.s32 %v2273, %v2275
        %v2277 = vrot.slane %v2267, %v2276
        %v2279 = vunpack.c.l.s4 1966171168
        %v2280 = vunpack.c.0.s8 %v2279
        %v2281 = vlaneseq
        %v2282 = vshrl.u32 %v2281, 7
        %v2283 = vsub.s32 %v2280, %v2282
        %v2284 = vrot.slane %v2268, %v2283
        %v2286 = vunpack.c.l.s4 1966171168
        %v2287 = vunpack.c.0.s8 %v2286
        %v2288 = vlaneseq
        %v2289 = vshrl.u32 %v2288, 7
        %v2290 = vsub.s32 %v2287, %v2289
        %v2291 = vrot.slane %v2269, %v2290
        %v2293 = vunpack.c.l.s4 1966171168
        %v2294 = vunpack.c.0.s8 %v2293
        %v2295 = vlaneseq
        %v2296 = vshrl.u32 %v2295, 7
        %v2297 = vsub.s32 %v2294, %v2296
        %v2298 = vrot.slane %v2270, %v2297
        %v2299 = vcombine.low %v2277, %v2284
        %v2300 = vcombine.low %v2291, %v2298
        %v2302 = vunpack.c.l.s4 1966171168
        %v2303 = vunpack.c.0.s8 %v2302
        %v2304 = vlaneseq
        %v2305 = vshrl.u32 %v2304, 7
        %v2306 = vsub.s32 %v2303, %v2305
        %v2307 = vrot.slane %v2299, %v2306
        %v2309 = vunpack.c.l.s4 1966171168
        %v2310 = vunpack.c.0.s8 %v2309
        %v2311 = vlaneseq
        %v2312 = vshrl.u32 %v2311, 7
        %v2313 = vsub.s32 %v2310, %v2312
        %v2314 = vrot.slane %v2300, %v2313
        %v2315 = vcombine.low %v2307, %v2314
        %v2316 = vcombine.low %v1388, %v1395
        %v2317 = vcombine.low %v1396, %v1397
        %v2318 = vcombine.low %v1412, %v1419
        %v2319 = vcombine.low %v1420, %v1421
        %v2321 = vunpack.c.l.s4 1966171168
        %v2322 = vunpack.c.0.s8 %v2321
        %v2323 = vlaneseq
        %v2324 = vshrl.u32 %v2323, 7
        %v2325 = vsub.s32 %v2322, %v2324
        %v2326 = vrot.slane %v2316, %v2325
        %v2328 = vunpack.c.l.s4 1966171168
        %v2329 = vunpack.c.0.s8 %v2328
        %v2330 = vlaneseq
        %v2331 = vshrl.u32 %v2330, 7
        %v2332 = vsub.s32 %v2329, %v2331
        %v2333 = vrot.slane %v2317, %v2332
        %v2335 = vunpack.c.l.s4 1966171168
        %v2336 = vunpack.c.0.s8 %v2335
        %v2337 = vlaneseq
        %v2338 = vshrl.u32 %v2337, 7
        %v2339 = vsub.s32 %v2336, %v2338
        %v2340 = vrot.slane %v2318, %v2339
        %v2342 = vunpack.c.l.s4 1966171168
        %v2343 = vunpack.c.0.s8 %v2342
        %v2344 = vlaneseq
        %v2345 = vshrl.u32 %v2344, 7
        %v2346 = vsub.s32 %v2343, %v2345
        %v2347 = vrot.slane %v2319, %v2346
        %v2348 = vcombine.low %v2326, %v2333
        %v2349 = vcombine.low %v2340, %v2347
        %v2351 = vunpack.c.l.s4 1966171168
        %v2352 = vunpack.c.0.s8 %v2351
        %v2353 = vlaneseq
        %v2354 = vshrl.u32 %v2353, 7
        %v2355 = vsub.s32 %v2352, %v2354
        %v2356 = vrot.slane %v2348, %v2355
        %v2358 = vunpack.c.l.s4 1966171168
        %v2359 = vunpack.c.0.s8 %v2358
        %v2360 = vlaneseq
        %v2361 = vshrl.u32 %v2360, 7
        %v2362 = vsub.s32 %v2359, %v2361
        %v2363 = vrot.slane %v2349, %v2362
        %v2364 = vcombine.low %v2356, %v2363
        %v2365 = vcombine.low %v1435, %v1450
        %v2366 = vcombine.low %v1457, %v1458
        %v2367 = vcombine.low %v1459, %v1474
        %v2368 = vcombine.low %v1481, %v1482
        %v2370 = vunpack.c.l.s4 1966171168
        %v2371 = vunpack.c.0.s8 %v2370
        %v2372 = vlaneseq
        %v2373 = vshrl.u32 %v2372, 7
        %v2374 = vsub.s32 %v2371, %v2373
        %v2375 = vrot.slane %v2365, %v2374
        %v2377 = vunpack.c.l.s4 1966171168
        %v2378 = vunpack.c.0.s8 %v2377
        %v2379 = vlaneseq
        %v2380 = vshrl.u32 %v2379, 7
        %v2381 = vsub.s32 %v2378, %v2380
        %v2382 = vrot.slane %v2366, %v2381
        %v2384 = vunpack.c.l.s4 1966171168
        %v2385 = vunpack.c.0.s8 %v2384
        %v2386 = vlaneseq
        %v2387 = vshrl.u32 %v2386, 7
        %v2388 = vsub.s32 %v2385, %v2387
        %v2389 = vrot.slane %v2367, %v2388
        %v2391 = vunpack.c.l.s4 1966171168
        %v2392 = vunpack.c.0.s8 %v2391
        %v2393 = vlaneseq
        %v2394 = vshrl.u32 %v2393, 7
        %v2395 = vsub.s32 %v2392, %v2394
        %v2396 = vrot.slane %v2368, %v2395
        %v2397 = vcombine.low %v2375, %v2382
        %v2398 = vcombine.low %v2389, %v2396
        %v2400 = vunpack.c.l.s4 1966171168
        %v2401 = vunpack.c.0.s8 %v2400
        %v2402 = vlaneseq
        %v2403 = vshrl.u32 %v2402, 7
        %v2404 = vsub.s32 %v2401, %v2403
        %v2405 = vrot.slane %v2397, %v2404
        %v2407 = vunpack.c.l.s4 1966171168
        %v2408 = vunpack.c.0.s8 %v2407
        %v2409 = vlaneseq
        %v2410 = vshrl.u32 %v2409, 7
        %v2411 = vsub.s32 %v2408, %v2410
        %v2412 = vrot.slane %v2398, %v2411
        %v2413 = vcombine.low %v2405, %v2412
        %v2414 = vcombine.low %v1483, %v1497
        %v2415 = vcombine.low %v1512, %v1519
        %v2416 = vcombine.low %v1520, %v1521
        %v2417 = vcombine.low %v1536, %v1543
        %v2419 = vunpack.c.l.s4 1966171168
        %v2420 = vunpack.c.0.s8 %v2419
        %v2421 = vlaneseq
        %v2422 = vshrl.u32 %v2421, 7
        %v2423 = vsub.s32 %v2420, %v2422
        %v2424 = vrot.slane %v2414, %v2423
        %v2426 = vunpack.c.l.s4 1966171168
        %v2427 = vunpack.c.0.s8 %v2426
        %v2428 = vlaneseq
        %v2429 = vshrl.u32 %v2428, 7
        %v2430 = vsub.s32 %v2427, %v2429
        %v2431 = vrot.slane %v2415, %v2430
        %v2433 = vunpack.c.l.s4 1966171168
        %v2434 = vunpack.c.0.s8 %v2433
        %v2435 = vlaneseq
        %v2436 = vshrl.u32 %v2435, 7
        %v2437 = vsub.s32 %v2434, %v2436
        %v2438 = vrot.slane %v2416, %v2437
        %v2440 = vunpack.c.l.s4 1966171168
        %v2441 = vunpack.c.0.s8 %v2440
        %v2442 = vlaneseq
        %v2443 = vshrl.u32 %v2442, 7
        %v2444 = vsub.s32 %v2441, %v2443
        %v2445 = vrot.slane %v2417, %v2444
        %v2446 = vcombine.low %v2424, %v2431
        %v2447 = vcombine.low %v2438, %v2445
        %v2449 = vunpack.c.l.s4 1966171168
        %v2450 = vunpack.c.0.s8 %v2449
        %v2451 = vlaneseq
        %v2452 = vshrl.u32 %v2451, 7
        %v2453 = vsub.s32 %v2450, %v2452
        %v2454 = vrot.slane %v2446, %v2453
        %v2456 = vunpack.c.l.s4 1966171168
        %v2457 = vunpack.c.0.s8 %v2456
        %v2458 = vlaneseq
        %v2459 = vshrl.u32 %v2458, 7
        %v2460 = vsub.s32 %v2457, %v2459
        %v2461 = vrot.slane %v2447, %v2460
        %v2462 = vcombine.low %v2454, %v2461
        %v2463 = vcombine.low %v1544, %v1545
        %v2464 = vcombine.low %v1559, %v1574
        %v2465 = vcombine.low %v1581, %v1582
        %v2466 = vcombine.low %v1583, %v1598
        %v2468 = vunpack.c.l.s4 1966171168
        %v2469 = vunpack.c.0.s8 %v2468
        %v2470 = vlaneseq
        %v2471 = vshrl.u32 %v2470, 7
        %v2472 = vsub.s32 %v2469, %v2471
        %v2473 = vrot.slane %v2463, %v2472
        %v2475 = vunpack.c.l.s4 1966171168
        %v2476 = vunpack.c.0.s8 %v2475
        %v2477 = vlaneseq
        %v2478 = vshrl.u32 %v2477, 7
        %v2479 = vsub.s32 %v2476, %v2478
        %v2480 = vrot.slane %v2464, %v2479
        %v2482 = vunpack.c.l.s4 1966171168
        %v2483 = vunpack.c.0.s8 %v2482
        %v2484 = vlaneseq
        %v2485 = vshrl.u32 %v2484, 7
        %v2486 = vsub.s32 %v2483, %v2485
        %v2487 = vrot.slane %v2465, %v2486
        %v2489 = vunpack.c.l.s4 1966171168
        %v2490 = vunpack.c.0.s8 %v2489
        %v2491 = vlaneseq
        %v2492 = vshrl.u32 %v2491, 7
        %v2493 = vsub.s32 %v2490, %v2492
        %v2494 = vrot.slane %v2466, %v2493
        %v2495 = vcombine.low %v2473, %v2480
        %v2496 = vcombine.low %v2487, %v2494
        %v2498 = vunpack.c.l.s4 1966171168
        %v2499 = vunpack.c.0.s8 %v2498
        %v2500 = vlaneseq
        %v2501 = vshrl.u32 %v2500, 7
        %v2502 = vsub.s32 %v2499, %v2501
        %v2503 = vrot.slane %v2495, %v2502
        %v2505 = vunpack.c.l.s4 1966171168
        %v2506 = vunpack.c.0.s8 %v2505
        %v2507 = vlaneseq
        %v2508 = vshrl.u32 %v2507, 7
        %v2509 = vsub.s32 %v2506, %v2508
        %v2510 = vrot.slane %v2496, %v2509
        %v2511 = vcombine.low %v2503, %v2510
        %v2512 = vcombine.low %v1605, %v1606
        %v2513 = vcombine.low %v1607, %v1621
        %v2514 = vcombine.low %v1636, %v1643
        %v2515 = vcombine.low %v1644, %v1645
        %v2517 = vunpack.c.l.s4 1966171168
        %v2518 = vunpack.c.0.s8 %v2517
        %v2519 = vlaneseq
        %v2520 = vshrl.u32 %v2519, 7
        %v2521 = vsub.s32 %v2518, %v2520
        %v2522 = vrot.slane %v2512, %v2521
        %v2524 = vunpack.c.l.s4 1966171168
        %v2525 = vunpack.c.0.s8 %v2524
        %v2526 = vlaneseq
        %v2527 = vshrl.u32 %v2526, 7
        %v2528 = vsub.s32 %v2525, %v2527
        %v2529 = vrot.slane %v2513, %v2528
        %v2531 = vunpack.c.l.s4 1966171168
        %v2532 = vunpack.c.0.s8 %v2531
        %v2533 = vlaneseq
        %v2534 = vshrl.u32 %v2533, 7
        %v2535 = vsub.s32 %v2532, %v2534
        %v2536 = vrot.slane %v2514, %v2535
        %v2538 = vunpack.c.l.s4 1966171168
        %v2539 = vunpack.c.0.s8 %v2538
        %v2540 = vlaneseq
        %v2541 = vshrl.u32 %v2540, 7
        %v2542 = vsub.s32 %v2539, %v2541
        %v2543 = vrot.slane %v2515, %v2542
        %v2544 = vcombine.low %v2522, %v2529
        %v2545 = vcombine.low %v2536, %v2543
        %v2547 = vunpack.c.l.s4 1966171168
        %v2548 = vunpack.c.0.s8 %v2547
        %v2549 = vlaneseq
        %v2550 = vshrl.u32 %v2549, 7
        %v2551 = vsub.s32 %v2548, %v2550
        %v2552 = vrot.slane %v2544, %v2551
        %v2554 = vunpack.c.l.s4 1966171168
        %v2555 = vunpack.c.0.s8 %v2554
        %v2556 = vlaneseq
        %v2557 = vshrl.u32 %v2556, 7
        %v2558 = vsub.s32 %v2555, %v2557
        %v2559 = vrot.slane %v2545, %v2558
        %v2560 = vcombine.low %v2552, %v2559
        %v2561 = vcombine.low %v1660, %v1667
        %v2562 = vcombine.low %v1668, %v1669
        %v2563 = vcombine.low %v1683, %v1698
        %v2564 = vcombine.low %v1705, %v1706
        %v2566 = vunpack.c.l.s4 1966171168
        %v2567 = vunpack.c.0.s8 %v2566
        %v2568 = vlaneseq
        %v2569 = vshrl.u32 %v2568, 7
        %v2570 = vsub.s32 %v2567, %v2569
        %v2571 = vrot.slane %v2561, %v2570
        %v2573 = vunpack.c.l.s4 1966171168
        %v2574 = vunpack.c.0.s8 %v2573
        %v2575 = vlaneseq
        %v2576 = vshrl.u32 %v2575, 7
        %v2577 = vsub.s32 %v2574, %v2576
        %v2578 = vrot.slane %v2562, %v2577
        %v2580 = vunpack.c.l.s4 1966171168
        %v2581 = vunpack.c.0.s8 %v2580
        %v2582 = vlaneseq
        %v2583 = vshrl.u32 %v2582, 7
        %v2584 = vsub.s32 %v2581, %v2583
        %v2585 = vrot.slane %v2563, %v2584
        %v2587 = vunpack.c.l.s4 1966171168
        %v2588 = vunpack.c.0.s8 %v2587
        %v2589 = vlaneseq
        %v2590 = vshrl.u32 %v2589, 7
        %v2591 = vsub.s32 %v2588, %v2590
        %v2592 = vrot.slane %v2564, %v2591
        %v2593 = vcombine.low %v2571, %v2578
        %v2594 = vcombine.low %v2585, %v2592
        %v2596 = vunpack.c.l.s4 1966171168
        %v2597 = vunpack.c.0.s8 %v2596
        %v2598 = vlaneseq
        %v2599 = vshrl.u32 %v2598, 7
        %v2600 = vsub.s32 %v2597, %v2599
        %v2601 = vrot.slane %v2593, %v2600
        %v2603 = vunpack.c.l.s4 1966171168
        %v2604 = vunpack.c.0.s8 %v2603
        %v2605 = vlaneseq
        %v2606 = vshrl.u32 %v2605, 7
        %v2607 = vsub.s32 %v2604, %v2606
        %v2608 = vrot.slane %v2594, %v2607
        %v2609 = vcombine.low %v2601, %v2608
        %v2610 = vcombine.low %v1707, %v1722
        %v2611 = vcombine.low %v1729, %v1730
        %v2612 = vcombine.low %v1731, %v1745
        %v2613 = vcombine.low %v1760, %v1767
        %v2615 = vunpack.c.l.s4 1966171168
        %v2616 = vunpack.c.0.s8 %v2615
        %v2617 = vlaneseq
        %v2618 = vshrl.u32 %v2617, 7
        %v2619 = vsub.s32 %v2616, %v2618
        %v2620 = vrot.slane %v2610, %v2619
        %v2622 = vunpack.c.l.s4 1966171168
        %v2623 = vunpack.c.0.s8 %v2622
        %v2624 = vlaneseq
        %v2625 = vshrl.u32 %v2624, 7
        %v2626 = vsub.s32 %v2623, %v2625
        %v2627 = vrot.slane %v2611, %v2626
        %v2629 = vunpack.c.l.s4 1966171168
        %v2630 = vunpack.c.0.s8 %v2629
        %v2631 = vlaneseq
        %v2632 = vshrl.u32 %v2631, 7
        %v2633 = vsub.s32 %v2630, %v2632
        %v2634 = vrot.slane %v2612, %v2633
        %v2636 = vunpack.c.l.s4 1966171168
        %v2637 = vunpack.c.0.s8 %v2636
        %v2638 = vlaneseq
        %v2639 = vshrl.u32 %v2638, 7
        %v2640 = vsub.s32 %v2637, %v2639
        %v2641 = vrot.slane %v2613, %v2640
        %v2642 = vcombine.low %v2620, %v2627
        %v2643 = vcombine.low %v2634, %v2641
        %v2645 = vunpack.c.l.s4 1966171168
        %v2646 = vunpack.c.0.s8 %v2645
        %v2647 = vlaneseq
        %v2648 = vshrl.u32 %v2647, 7
        %v2649 = vsub.s32 %v2646, %v2648
        %v2650 = vrot.slane %v2642, %v2649
        %v2652 = vunpack.c.l.s4 1966171168
        %v2653 = vunpack.c.0.s8 %v2652
        %v2654 = vlaneseq
        %v2655 = vshrl.u32 %v2654, 7
        %v2656 = vsub.s32 %v2653, %v2655
        %v2657 = vrot.slane %v2643, %v2656
        %v2658 = vcombine.low %v2650, %v2657
        %v2659 = vcombine.low %v1768, %v1769
        %v2660 = vcombine.low %v1784, %v1791
        %v2661 = vcombine.low %v1792, %v1793
        %v2662 = vcombine.low %v1807, %v1827
        %v2664 = vunpack.c.l.s4 1966171168
        %v2665 = vunpack.c.0.s8 %v2664
        %v2666 = vlaneseq
        %v2667 = vshrl.u32 %v2666, 7
        %v2668 = vsub.s32 %v2665, %v2667
        %v2669 = vrot.slane %v2659, %v2668
        %v2671 = vunpack.c.l.s4 1966171168
        %v2672 = vunpack.c.0.s8 %v2671
        %v2673 = vlaneseq
        %v2674 = vshrl.u32 %v2673, 7
        %v2675 = vsub.s32 %v2672, %v2674
        %v2676 = vrot.slane %v2660, %v2675
        %v2678 = vunpack.c.l.s4 1966171168
        %v2679 = vunpack.c.0.s8 %v2678
        %v2680 = vlaneseq
        %v2681 = vshrl.u32 %v2680, 7
        %v2682 = vsub.s32 %v2679, %v2681
        %v2683 = vrot.slane %v2661, %v2682
        %v2685 = vunpack.c.l.s4 1966171168
        %v2686 = vunpack.c.0.s8 %v2685
        %v2687 = vlaneseq
        %v2688 = vshrl.u32 %v2687, 7
        %v2689 = vsub.s32 %v2686, %v2688
        %v2690 = vrot.slane %v2662, %v2689
        %v2691 = vcombine.low %v2669, %v2676
        %v2692 = vcombine.low %v2683, %v2690
        %v2694 = vunpack.c.l.s4 1966171168
        %v2695 = vunpack.c.0.s8 %v2694
        %v2696 = vlaneseq
        %v2697 = vshrl.u32 %v2696, 7
        %v2698 = vsub.s32 %v2695, %v2697
        %v2699 = vrot.slane %v2691, %v2698
        %v2701 = vunpack.c.l.s4 1966171168
        %v2702 = vunpack.c.0.s8 %v2701
        %v2703 = vlaneseq
        %v2704 = vshrl.u32 %v2703, 7
        %v2705 = vsub.s32 %v2702, %v2704
        %v2706 = vrot.slane %v2692, %v2705
        %v2707 = vcombine.low %v2699, %v2706
        %v2708 = vcombine.low %v1834, %v1835
        %v2709 = vcombine.low %v1836, %v1851
        %v2710 = vcombine.low %v1858, %v1859
        %v2711 = vcombine.low %v1860, %v1874
        %v2713 = vunpack.c.l.s4 1966171168
        %v2714 = vunpack.c.0.s8 %v2713
        %v2715 = vlaneseq
        %v2716 = vshrl.u32 %v2715, 7
        %v2717 = vsub.s32 %v2714, %v2716
        %v2718 = vrot.slane %v2708, %v2717
        %v2720 = vunpack.c.l.s4 1966171168
        %v2721 = vunpack.c.0.s8 %v2720
        %v2722 = vlaneseq
        %v2723 = vshrl.u32 %v2722, 7
        %v2724 = vsub.s32 %v2721, %v2723
        %v2725 = vrot.slane %v2709, %v2724
        %v2727 = vunpack.c.l.s4 1966171168
        %v2728 = vunpack.c.0.s8 %v2727
        %v2729 = vlaneseq
        %v2730 = vshrl.u32 %v2729, 7
        %v2731 = vsub.s32 %v2728, %v2730
        %v2732 = vrot.slane %v2710, %v2731
        %v2734 = vunpack.c.l.s4 1966171168
        %v2735 = vunpack.c.0.s8 %v2734
        %v2736 = vlaneseq
        %v2737 = vshrl.u32 %v2736, 7
        %v2738 = vsub.s32 %v2735, %v2737
        %v2739 = vrot.slane %v2711, %v2738
        %v2740 = vcombine.low %v2718, %v2725
        %v2741 = vcombine.low %v2732, %v2739
        %v2743 = vunpack.c.l.s4 1966171168
        %v2744 = vunpack.c.0.s8 %v2743
        %v2745 = vlaneseq
        %v2746 = vshrl.u32 %v2745, 7
        %v2747 = vsub.s32 %v2744, %v2746
        %v2748 = vrot.slane %v2740, %v2747
        %v2750 = vunpack.c.l.s4 1966171168
        %v2751 = vunpack.c.0.s8 %v2750
        %v2752 = vlaneseq
        %v2753 = vshrl.u32 %v2752, 7
        %v2754 = vsub.s32 %v2751, %v2753
        %v2755 = vrot.slane %v2741, %v2754
        %v2756 = vcombine.low %v2748, %v2755
        %v2758 = vunpack.c.l.b16 %v1808
        %v2759 = vpack.c.b16 %v2758, %v2758
        %v2761 = vshrl.u32 %v2759, 16
        %v2763 = vrot.slane %v2761, 1
        %v2764 = vshll.u32 %v2759, 16
        %v2766 = vrot.slane %v2764, 2
        %v2767 = vor.u32 %v2763, %v2766
        %vm2768 = vcmask 23552
        %v2770 = vsel %vm2768, %v1923, 0
        %v2773 = vsel %vm2768, %v1972, 0
        %v2776 = vsel %vm2768, %v2021, 0
        %v2779 = vsel %vm2768, %v2070, 0
        %v2782 = vsel %vm2768, %v2119, 0
        %v2785 = vsel %vm2768, %v2168, 0
        %v2788 = vsel %vm2768, %v2217, 0
        %v2791 = vsel %vm2768, %v2266, 0
        %v2794 = vsel %vm2768, %v2315, 0
        %v2797 = vsel %vm2768, %v2364, 0
        %v2800 = vsel %vm2768, %v2413, 0
        %v2803 = vsel %vm2768, %v2462, 0
        %v2806 = vsel %vm2768, %v2511, 0
        %v2809 = vsel %vm2768, %v2560, 0
        %v2812 = vsel %vm2768, %v2609, 0
        %v2815 = vsel %vm2768, %v2658, 0
        %v2818 = vsel %vm2768, %v2707, 0
        %v2821 = vsel %vm2768, %v2756, 0
        %vm2823 = vcmask 1040384
        %vm2824 = vcmask 1041408
        %v2825 = vsel %vm2823, 4294967295, 65535
        %v2826 = vsel %vm2824, %v2825, 0
        %v2828 = vand.u32 %v2767, %v2826
        %2830 = vmatprep.subr.bf16.mxu0 0
        %2831 = vmatpush1.bf16.msra.mxu0 %v2828
        %2832 = vmatprep.subr.bf16.mxu0 0
        %2833 = vmatpush1.bf16.msra.mxu0 0
        %2834 = vmatprep.subr.bf16.mxu0 0
        %2835 = vmatpush1.bf16.msra.mxu0 0
        %2836 = vmatprep.subr.bf16.mxu0 0
        %2837 = vmatpush1.bf16.msra.mxu0 0
        %2838 = vmatprep.subr.bf16.mxu0 0
        %2839 = vmatpush1.bf16.msra.mxu0 0
        %2840 = vmatprep.subr.bf16.mxu0 0
        %2841 = vmatpush1.bf16.msra.mxu0 0
        %2842 = vmatprep.subr.bf16.mxu0 0
        %2843 = vmatpush1.bf16.msra.mxu0 0
        %2844 = vmatprep.subr.bf16.mxu0 0
        %2845 = vmatpush1.bf16.msra.mxu0 0
        %2846 = vmatprep.subr.bf16.mxu0 0
        %2847 = vmatpush1.bf16.msra.mxu0 0
        %2848 = vmatprep.subr.bf16.mxu0 0
        %2849 = vmatpush1.bf16.msra.mxu0 0
        %2850 = vmatprep.subr.bf16.mxu0 0
        %2851 = vmatpush1.bf16.msra.mxu0 0
        %2852 = vmatprep.subr.bf16.mxu0 0
        %2853 = vmatpush1.bf16.msra.mxu0 0
        %2854 = vmatprep.subr.bf16.mxu0 0
        %2855 = vmatpush1.bf16.msra.mxu0 0
        %2856 = vmatprep.subr.bf16.mxu0 0
        %2857 = vmatpush1.bf16.msra.mxu0 0
        %2858 = vmatprep.subr.bf16.mxu0 0
        %2859 = vmatpush1.bf16.msra.mxu0 0
        %2860 = vmatprep.subr.bf16.mxu0 0
        %2861 = vmatpush1.bf16.msra.mxu0 0
        %2862 = vmatprep.mubr.bf16.mxu0 0
        %2863 = vmatmul.mubr.bf16.gmra.mrb[0].mxu0 %v2770
        %v2864 = vpop.f32.mrb[0].mxu0
        %v2865 = vadd.f32 0.0, %v2864
        %v2866 = vpop.f32.mrb[0].mxu0
        %v2867 = vpop.f32.mrb[0].mxu0
        %v2868 = vadd.f32 0.0, %v2867
        %v2869 = vpop.f32.mrb[0].mxu0
        %2870 = vmatprep.mubr.bf16.mxu0 0
        %2871 = vmatmul.mubr.bf16.gmra.mrb[0].mxu0 %v2773
        %v2872 = vpop.f32.mrb[0].mxu0
        %v2873 = vadd.f32 0.0, %v2872
        %v2874 = vpop.f32.mrb[0].mxu0
        %v2875 = vpop.f32.mrb[0].mxu0
        %v2876 = vadd.f32 0.0, %v2875
        %v2877 = vpop.f32.mrb[0].mxu0
        %2878 = vmatprep.mubr.bf16.mxu0 0
        %2879 = vmatmul.mubr.bf16.gmra.mrb[0].mxu0 %v2776
        %v2880 = vpop.f32.mrb[0].mxu0
        %v2881 = vadd.f32 0.0, %v2880
        %v2882 = vpop.f32.mrb[0].mxu0
        %v2883 = vpop.f32.mrb[0].mxu0
        %v2884 = vadd.f32 0.0, %v2883
        %v2885 = vpop.f32.mrb[0].mxu0
        %2886 = vmatprep.mubr.bf16.mxu0 0
        %2887 = vmatmul.mubr.bf16.gmra.mrb[0].mxu0 %v2779
        %v2888 = vpop.f32.mrb[0].mxu0
        %v2889 = vadd.f32 0.0, %v2888
        %v2890 = vpop.f32.mrb[0].mxu0
        %v2891 = vpop.f32.mrb[0].mxu0
        %v2892 = vadd.f32 0.0, %v2891
        %v2893 = vpop.f32.mrb[0].mxu0
        %2894 = vmatprep.mubr.bf16.mxu0 0
        %2895 = vmatmul.mubr.bf16.gmra.mrb[0].mxu0 %v2782
        %v2896 = vpop.f32.mrb[0].mxu0
        %v2897 = vadd.f32 0.0, %v2896
        %v2898 = vpop.f32.mrb[0].mxu0
        %v2899 = vpop.f32.mrb[0].mxu0
        %v2900 = vadd.f32 0.0, %v2899
        %v2901 = vpop.f32.mrb[0].mxu0
        %2902 = vmatprep.mubr.bf16.mxu0 0
        %2903 = vmatmul.mubr.bf16.gmra.mrb[0].mxu0 %v2785
        %v2904 = vpop.f32.mrb[0].mxu0
        %v2905 = vadd.f32 0.0, %v2904
        %v2906 = vpop.f32.mrb[0].mxu0
        %v2907 = vpop.f32.mrb[0].mxu0
        %v2908 = vadd.f32 0.0, %v2907
        %v2909 = vpop.f32.mrb[0].mxu0
        %2910 = vmatprep.mubr.bf16.mxu0 0
        %2911 = vmatmul.mubr.bf16.gmra.mrb[0].mxu0 %v2788
        %v2912 = vpop.f32.mrb[0].mxu0
        %v2913 = vadd.f32 0.0, %v2912
        %v2914 = vpop.f32.mrb[0].mxu0
        %v2915 = vpop.f32.mrb[0].mxu0
        %v2916 = vadd.f32 0.0, %v2915
        %v2917 = vpop.f32.mrb[0].mxu0
        %2918 = vmatprep.mubr.bf16.mxu0 0
        %2919 = vmatmul.mubr.bf16.gmra.mrb[0].mxu0 %v2791
        %v2920 = vpop.f32.mrb[0].mxu0
        %v2921 = vadd.f32 0.0, %v2920
        %v2922 = vpop.f32.mrb[0].mxu0
        %v2923 = vpop.f32.mrb[0].mxu0
        %v2924 = vadd.f32 0.0, %v2923
        %v2925 = vpop.f32.mrb[0].mxu0
        %2926 = vmatprep.mubr.bf16.mxu0 0
        %2927 = vmatmul.mubr.bf16.gmra.mrb[0].mxu0 %v2794
        %v2928 = vpop.f32.mrb[0].mxu0
        %v2929 = vadd.f32 0.0, %v2928
        %v2930 = vpop.f32.mrb[0].mxu0
        %v2931 = vpop.f32.mrb[0].mxu0
        %v2932 = vadd.f32 0.0, %v2931
        %v2933 = vpop.f32.mrb[0].mxu0
        %2934 = vmatprep.mubr.bf16.mxu0 0
        %2935 = vmatmul.mubr.bf16.gmra.mrb[0].mxu0 %v2797
        %v2936 = vpop.f32.mrb[0].mxu0
        %v2937 = vadd.f32 0.0, %v2936
        %v2938 = vpop.f32.mrb[0].mxu0
        %v2939 = vpop.f32.mrb[0].mxu0
        %v2940 = vadd.f32 0.0, %v2939
        %v2941 = vpop.f32.mrb[0].mxu0
        %2942 = vmatprep.mubr.bf16.mxu0 0
        %2943 = vmatmul.mubr.bf16.gmra.mrb[0].mxu0 %v2800
        %v2944 = vpop.f32.mrb[0].mxu0
        %v2945 = vadd.f32 0.0, %v2944
        %v2946 = vpop.f32.mrb[0].mxu0
        %v2947 = vpop.f32.mrb[0].mxu0
        %v2948 = vadd.f32 0.0, %v2947
        %v2949 = vpop.f32.mrb[0].mxu0
        %2950 = vmatprep.mubr.bf16.mxu0 0
        %2951 = vmatmul.mubr.bf16.gmra.mrb[0].mxu0 %v2803
        %v2952 = vpop.f32.mrb[0].mxu0
        %v2953 = vadd.f32 0.0, %v2952
        %v2954 = vpop.f32.mrb[0].mxu0
        %v2955 = vpop.f32.mrb[0].mxu0
        %v2956 = vadd.f32 0.0, %v2955
        %v2957 = vpop.f32.mrb[0].mxu0
        %2958 = vmatprep.mubr.bf16.mxu0 0
        %2959 = vmatmul.mubr.bf16.gmra.mrb[0].mxu0 %v2806
        %v2960 = vpop.f32.mrb[0].mxu0
        %v2961 = vadd.f32 0.0, %v2960
        %v2962 = vpop.f32.mrb[0].mxu0
        %v2963 = vpop.f32.mrb[0].mxu0
        %v2964 = vadd.f32 0.0, %v2963
        %v2965 = vpop.f32.mrb[0].mxu0
        %2966 = vmatprep.mubr.bf16.mxu0 0
        %2967 = vmatmul.mubr.bf16.gmra.mrb[0].mxu0 %v2809
        %v2968 = vpop.f32.mrb[0].mxu0
        %v2969 = vadd.f32 0.0, %v2968
        %v2970 = vpop.f32.mrb[0].mxu0
        %v2971 = vpop.f32.mrb[0].mxu0
        %v2972 = vadd.f32 0.0, %v2971
        %v2973 = vpop.f32.mrb[0].mxu0
        %2974 = vmatprep.mubr.bf16.mxu0 0
        %2975 = vmatmul.mubr.bf16.gmra.mrb[0].mxu0 %v2812
        %v2976 = vpop.f32.mrb[0].mxu0
        %v2977 = vadd.f32 0.0, %v2976
        %v2978 = vpop.f32.mrb[0].mxu0
        %v2979 = vpop.f32.mrb[0].mxu0
        %v2980 = vadd.f32 0.0, %v2979
        %v2981 = vpop.f32.mrb[0].mxu0
        %2982 = vmatprep.mubr.bf16.mxu0 0
        %2983 = vmatmul.mubr.bf16.gmra.mrb[0].mxu0 %v2815
        %v2984 = vpop.f32.mrb[0].mxu0
        %v2985 = vadd.f32 0.0, %v2984
        %v2986 = vpop.f32.mrb[0].mxu0
        %v2987 = vpop.f32.mrb[0].mxu0
        %v2988 = vadd.f32 0.0, %v2987
        %v2989 = vpop.f32.mrb[0].mxu0
        %2990 = vmatprep.mubr.bf16.mxu0 0
        %2991 = vmatmul.mubr.bf16.gmra.mrb[0].mxu0 %v2818
        %v2992 = vpop.f32.mrb[0].mxu0
        %v2993 = vadd.f32 0.0, %v2992
        %v2994 = vpop.f32.mrb[0].mxu0
        %v2995 = vpop.f32.mrb[0].mxu0
        %v2996 = vadd.f32 0.0, %v2995
        %v2997 = vpop.f32.mrb[0].mxu0
        %2998 = vmatprep.mubr.bf16.mxu0 0
        %2999 = vmatmul.mubr.bf16.gmra.mrb[0].mxu0 %v2821
        %v3000 = vpop.f32.mrb[0].mxu0
        %v3001 = vadd.f32 0.0, %v3000
        %v3002 = vpop.f32.mrb[0].mxu0
        %v3003 = vpop.f32.mrb[0].mxu0
        %v3004 = vadd.f32 0.0, %v3003
        %v3005 = vpop.f32.mrb[0].mxu0
        %3006 = vdwg.mxu0
        %v3007 = vcombine.low %v830, %v837
        %v3008 = vcombine.low %v838, %v839
        %v3009 = vcombine.low %v854, %v861
        %v3010 = vcombine.low %v862, %v863
        %v3012 = vunpack.c.l.s4 1966171168
        %v3013 = vunpack.c.0.s8 %v3012
        %v3014 = vlaneseq
        %v3015 = vshrl.u32 %v3014, 7
        %v3016 = vsub.s32 %v3013, %v3015
        %v3017 = vrot.slane %v3007, %v3016
        %v3019 = vunpack.c.l.s4 1966171168
        %v3020 = vunpack.c.0.s8 %v3019
        %v3021 = vlaneseq
        %v3022 = vshrl.u32 %v3021, 7
        %v3023 = vsub.s32 %v3020, %v3022
        %v3024 = vrot.slane %v3008, %v3023
        %v3026 = vunpack.c.l.s4 1966171168
        %v3027 = vunpack.c.0.s8 %v3026
        %v3028 = vlaneseq
        %v3029 = vshrl.u32 %v3028, 7
        %v3030 = vsub.s32 %v3027, %v3029
        %v3031 = vrot.slane %v3009, %v3030
        %v3033 = vunpack.c.l.s4 1966171168
        %v3034 = vunpack.c.0.s8 %v3033
        %v3035 = vlaneseq
        %v3036 = vshrl.u32 %v3035, 7
        %v3037 = vsub.s32 %v3034, %v3036
        %v3038 = vrot.slane %v3010, %v3037
        %v3039 = vcombine.low %v3017, %v3024
        %v3040 = vcombine.low %v3031, %v3038
        %v3042 = vunpack.c.l.s4 1966171168
        %v3043 = vunpack.c.0.s8 %v3042
        %v3044 = vlaneseq
        %v3045 = vshrl.u32 %v3044, 7
        %v3046 = vsub.s32 %v3043, %v3045
        %v3047 = vrot.slane %v3039, %v3046
        %v3049 = vunpack.c.l.s4 1966171168
        %v3050 = vunpack.c.0.s8 %v3049
        %v3051 = vlaneseq
        %v3052 = vshrl.u32 %v3051, 7
        %v3053 = vsub.s32 %v3050, %v3052
        %v3054 = vrot.slane %v3040, %v3053
        %v3055 = vcombine.low %v3047, %v3054
        %v3056 = vcombine.low %v877, %v892
        %v3057 = vcombine.low %v899, %v900
        %v3058 = vcombine.low %v901, %v916
        %v3059 = vcombine.low %v923, %v924
        %v3061 = vunpack.c.l.s4 1966171168
        %v3062 = vunpack.c.0.s8 %v3061
        %v3063 = vlaneseq
        %v3064 = vshrl.u32 %v3063, 7
        %v3065 = vsub.s32 %v3062, %v3064
        %v3066 = vrot.slane %v3056, %v3065
        %v3068 = vunpack.c.l.s4 1966171168
        %v3069 = vunpack.c.0.s8 %v3068
        %v3070 = vlaneseq
        %v3071 = vshrl.u32 %v3070, 7
        %v3072 = vsub.s32 %v3069, %v3071
        %v3073 = vrot.slane %v3057, %v3072
        %v3075 = vunpack.c.l.s4 1966171168
        %v3076 = vunpack.c.0.s8 %v3075
        %v3077 = vlaneseq
        %v3078 = vshrl.u32 %v3077, 7
        %v3079 = vsub.s32 %v3076, %v3078
        %v3080 = vrot.slane %v3058, %v3079
        %v3082 = vunpack.c.l.s4 1966171168
        %v3083 = vunpack.c.0.s8 %v3082
        %v3084 = vlaneseq
        %v3085 = vshrl.u32 %v3084, 7
        %v3086 = vsub.s32 %v3083, %v3085
        %v3087 = vrot.slane %v3059, %v3086
        %v3088 = vcombine.low %v3066, %v3073
        %v3089 = vcombine.low %v3080, %v3087
        %v3091 = vunpack.c.l.s4 1966171168
        %v3092 = vunpack.c.0.s8 %v3091
        %v3093 = vlaneseq
        %v3094 = vshrl.u32 %v3093, 7
        %v3095 = vsub.s32 %v3092, %v3094
        %v3096 = vrot.slane %v3088, %v3095
        %v3098 = vunpack.c.l.s4 1966171168
        %v3099 = vunpack.c.0.s8 %v3098
        %v3100 = vlaneseq
        %v3101 = vshrl.u32 %v3100, 7
        %v3102 = vsub.s32 %v3099, %v3101
        %v3103 = vrot.slane %v3089, %v3102
        %v3104 = vcombine.low %v3096, %v3103
        %v3105 = vcombine.low %v925, %v939
        %v3106 = vcombine.low %v954, %v961
        %v3107 = vcombine.low %v962, %v963
        %v3108 = vcombine.low %v978, %v985
        %v3110 = vunpack.c.l.s4 1966171168
        %v3111 = vunpack.c.0.s8 %v3110
        %v3112 = vlaneseq
        %v3113 = vshrl.u32 %v3112, 7
        %v3114 = vsub.s32 %v3111, %v3113
        %v3115 = vrot.slane %v3105, %v3114
        %v3117 = vunpack.c.l.s4 1966171168
        %v3118 = vunpack.c.0.s8 %v3117
        %v3119 = vlaneseq
        %v3120 = vshrl.u32 %v3119, 7
        %v3121 = vsub.s32 %v3118, %v3120
        %v3122 = vrot.slane %v3106, %v3121
        %v3124 = vunpack.c.l.s4 1966171168
        %v3125 = vunpack.c.0.s8 %v3124
        %v3126 = vlaneseq
        %v3127 = vshrl.u32 %v3126, 7
        %v3128 = vsub.s32 %v3125, %v3127
        %v3129 = vrot.slane %v3107, %v3128
        %v3131 = vunpack.c.l.s4 1966171168
        %v3132 = vunpack.c.0.s8 %v3131
        %v3133 = vlaneseq
        %v3134 = vshrl.u32 %v3133, 7
        %v3135 = vsub.s32 %v3132, %v3134
        %v3136 = vrot.slane %v3108, %v3135
        %v3137 = vcombine.low %v3115, %v3122
        %v3138 = vcombine.low %v3129, %v3136
        %v3140 = vunpack.c.l.s4 1966171168
        %v3141 = vunpack.c.0.s8 %v3140
        %v3142 = vlaneseq
        %v3143 = vshrl.u32 %v3142, 7
        %v3144 = vsub.s32 %v3141, %v3143
        %v3145 = vrot.slane %v3137, %v3144
        %v3147 = vunpack.c.l.s4 1966171168
        %v3148 = vunpack.c.0.s8 %v3147
        %v3149 = vlaneseq
        %v3150 = vshrl.u32 %v3149, 7
        %v3151 = vsub.s32 %v3148, %v3150
        %v3152 = vrot.slane %v3138, %v3151
        %v3153 = vcombine.low %v3145, %v3152
        %v3154 = vcombine.low %v986, %v987
        %v3155 = vcombine.low %v1001, %v1016
        %v3156 = vcombine.low %v1023, %v1024
        %v3157 = vcombine.low %v1025, %v1040
        %v3159 = vunpack.c.l.s4 1966171168
        %v3160 = vunpack.c.0.s8 %v3159
        %v3161 = vlaneseq
        %v3162 = vshrl.u32 %v3161, 7
        %v3163 = vsub.s32 %v3160, %v3162
        %v3164 = vrot.slane %v3154, %v3163
        %v3166 = vunpack.c.l.s4 1966171168
        %v3167 = vunpack.c.0.s8 %v3166
        %v3168 = vlaneseq
        %v3169 = vshrl.u32 %v3168, 7
        %v3170 = vsub.s32 %v3167, %v3169
        %v3171 = vrot.slane %v3155, %v3170
        %v3173 = vunpack.c.l.s4 1966171168
        %v3174 = vunpack.c.0.s8 %v3173
        %v3175 = vlaneseq
        %v3176 = vshrl.u32 %v3175, 7
        %v3177 = vsub.s32 %v3174, %v3176
        %v3178 = vrot.slane %v3156, %v3177
        %v3180 = vunpack.c.l.s4 1966171168
        %v3181 = vunpack.c.0.s8 %v3180
        %v3182 = vlaneseq
        %v3183 = vshrl.u32 %v3182, 7
        %v3184 = vsub.s32 %v3181, %v3183
        %v3185 = vrot.slane %v3157, %v3184
        %v3186 = vcombine.low %v3164, %v3171
        %v3187 = vcombine.low %v3178, %v3185
        %v3189 = vunpack.c.l.s4 1966171168
        %v3190 = vunpack.c.0.s8 %v3189
        %v3191 = vlaneseq
        %v3192 = vshrl.u32 %v3191, 7
        %v3193 = vsub.s32 %v3190, %v3192
        %v3194 = vrot.slane %v3186, %v3193
        %v3196 = vunpack.c.l.s4 1966171168
        %v3197 = vunpack.c.0.s8 %v3196
        %v3198 = vlaneseq
        %v3199 = vshrl.u32 %v3198, 7
        %v3200 = vsub.s32 %v3197, %v3199
        %v3201 = vrot.slane %v3187, %v3200
        %v3202 = vcombine.low %v3194, %v3201
        %v3203 = vcombine.low %v1047, %v1048
        %v3204 = vcombine.low %v1049, %v1063
        %v3205 = vcombine.low %v1078, %v1085
        %v3206 = vcombine.low %v1086, %v1087
        %v3208 = vunpack.c.l.s4 1966171168
        %v3209 = vunpack.c.0.s8 %v3208
        %v3210 = vlaneseq
        %v3211 = vshrl.u32 %v3210, 7
        %v3212 = vsub.s32 %v3209, %v3211
        %v3213 = vrot.slane %v3203, %v3212
        %v3215 = vunpack.c.l.s4 1966171168
        %v3216 = vunpack.c.0.s8 %v3215
        %v3217 = vlaneseq
        %v3218 = vshrl.u32 %v3217, 7
        %v3219 = vsub.s32 %v3216, %v3218
        %v3220 = vrot.slane %v3204, %v3219
        %v3222 = vunpack.c.l.s4 1966171168
        %v3223 = vunpack.c.0.s8 %v3222
        %v3224 = vlaneseq
        %v3225 = vshrl.u32 %v3224, 7
        %v3226 = vsub.s32 %v3223, %v3225
        %v3227 = vrot.slane %v3205, %v3226
        %v3229 = vunpack.c.l.s4 1966171168
        %v3230 = vunpack.c.0.s8 %v3229
        %v3231 = vlaneseq
        %v3232 = vshrl.u32 %v3231, 7
        %v3233 = vsub.s32 %v3230, %v3232
        %v3234 = vrot.slane %v3206, %v3233
        %v3235 = vcombine.low %v3213, %v3220
        %v3236 = vcombine.low %v3227, %v3234
        %v3238 = vunpack.c.l.s4 1966171168
        %v3239 = vunpack.c.0.s8 %v3238
        %v3240 = vlaneseq
        %v3241 = vshrl.u32 %v3240, 7
        %v3242 = vsub.s32 %v3239, %v3241
        %v3243 = vrot.slane %v3235, %v3242
        %v3245 = vunpack.c.l.s4 1966171168
        %v3246 = vunpack.c.0.s8 %v3245
        %v3247 = vlaneseq
        %v3248 = vshrl.u32 %v3247, 7
        %v3249 = vsub.s32 %v3246, %v3248
        %v3250 = vrot.slane %v3236, %v3249
        %v3251 = vcombine.low %v3243, %v3250
        %v3252 = vcombine.low %v1102, %v1109
        %v3253 = vcombine.low %v1110, %v1111
        %v3254 = vcombine.low %v1125, %v1140
        %v3255 = vcombine.low %v1147, %v1148
        %v3257 = vunpack.c.l.s4 1966171168
        %v3258 = vunpack.c.0.s8 %v3257
        %v3259 = vlaneseq
        %v3260 = vshrl.u32 %v3259, 7
        %v3261 = vsub.s32 %v3258, %v3260
        %v3262 = vrot.slane %v3252, %v3261
        %v3264 = vunpack.c.l.s4 1966171168
        %v3265 = vunpack.c.0.s8 %v3264
        %v3266 = vlaneseq
        %v3267 = vshrl.u32 %v3266, 7
        %v3268 = vsub.s32 %v3265, %v3267
        %v3269 = vrot.slane %v3253, %v3268
        %v3271 = vunpack.c.l.s4 1966171168
        %v3272 = vunpack.c.0.s8 %v3271
        %v3273 = vlaneseq
        %v3274 = vshrl.u32 %v3273, 7
        %v3275 = vsub.s32 %v3272, %v3274
        %v3276 = vrot.slane %v3254, %v3275
        %v3278 = vunpack.c.l.s4 1966171168
        %v3279 = vunpack.c.0.s8 %v3278
        %v3280 = vlaneseq
        %v3281 = vshrl.u32 %v3280, 7
        %v3282 = vsub.s32 %v3279, %v3281
        %v3283 = vrot.slane %v3255, %v3282
        %v3284 = vcombine.low %v3262, %v3269
        %v3285 = vcombine.low %v3276, %v3283
        %v3287 = vunpack.c.l.s4 1966171168
        %v3288 = vunpack.c.0.s8 %v3287
        %v3289 = vlaneseq
        %v3290 = vshrl.u32 %v3289, 7
        %v3291 = vsub.s32 %v3288, %v3290
        %v3292 = vrot.slane %v3284, %v3291
        %v3294 = vunpack.c.l.s4 1966171168
        %v3295 = vunpack.c.0.s8 %v3294
        %v3296 = vlaneseq
        %v3297 = vshrl.u32 %v3296, 7
        %v3298 = vsub.s32 %v3295, %v3297
        %v3299 = vrot.slane %v3285, %v3298
        %v3300 = vcombine.low %v3292, %v3299
        %v3301 = vcombine.low %v1149, %v1164
        %v3302 = vcombine.low %v1171, %v1172
        %v3303 = vcombine.low %v1173, %v1187
        %v3304 = vcombine.low %v1202, %v1209
        %v3306 = vunpack.c.l.s4 1966171168
        %v3307 = vunpack.c.0.s8 %v3306
        %v3308 = vlaneseq
        %v3309 = vshrl.u32 %v3308, 7
        %v3310 = vsub.s32 %v3307, %v3309
        %v3311 = vrot.slane %v3301, %v3310
        %v3313 = vunpack.c.l.s4 1966171168
        %v3314 = vunpack.c.0.s8 %v3313
        %v3315 = vlaneseq
        %v3316 = vshrl.u32 %v3315, 7
        %v3317 = vsub.s32 %v3314, %v3316
        %v3318 = vrot.slane %v3302, %v3317
        %v3320 = vunpack.c.l.s4 1966171168
        %v3321 = vunpack.c.0.s8 %v3320
        %v3322 = vlaneseq
        %v3323 = vshrl.u32 %v3322, 7
        %v3324 = vsub.s32 %v3321, %v3323
        %v3325 = vrot.slane %v3303, %v3324
        %v3327 = vunpack.c.l.s4 1966171168
        %v3328 = vunpack.c.0.s8 %v3327
        %v3329 = vlaneseq
        %v3330 = vshrl.u32 %v3329, 7
        %v3331 = vsub.s32 %v3328, %v3330
        %v3332 = vrot.slane %v3304, %v3331
        %v3333 = vcombine.low %v3311, %v3318
        %v3334 = vcombine.low %v3325, %v3332
        %v3336 = vunpack.c.l.s4 1966171168
        %v3337 = vunpack.c.0.s8 %v3336
        %v3338 = vlaneseq
        %v3339 = vshrl.u32 %v3338, 7
        %v3340 = vsub.s32 %v3337, %v3339
        %v3341 = vrot.slane %v3333, %v3340
        %v3343 = vunpack.c.l.s4 1966171168
        %v3344 = vunpack.c.0.s8 %v3343
        %v3345 = vlaneseq
        %v3346 = vshrl.u32 %v3345, 7
        %v3347 = vsub.s32 %v3344, %v3346
        %v3348 = vrot.slane %v3334, %v3347
        %v3349 = vcombine.low %v3341, %v3348
        %v3350 = vcombine.low %v1210, %v1211
        %v3351 = vcombine.low %v1226, %v1233
        %v3352 = vcombine.low %v1234, %v1235
        %v3353 = vcombine.low %v1249, %v1264
        %v3355 = vunpack.c.l.s4 1966171168
        %v3356 = vunpack.c.0.s8 %v3355
        %v3357 = vlaneseq
        %v3358 = vshrl.u32 %v3357, 7
        %v3359 = vsub.s32 %v3356, %v3358
        %v3360 = vrot.slane %v3350, %v3359
        %v3362 = vunpack.c.l.s4 1966171168
        %v3363 = vunpack.c.0.s8 %v3362
        %v3364 = vlaneseq
        %v3365 = vshrl.u32 %v3364, 7
        %v3366 = vsub.s32 %v3363, %v3365
        %v3367 = vrot.slane %v3351, %v3366
        %v3369 = vunpack.c.l.s4 1966171168
        %v3370 = vunpack.c.0.s8 %v3369
        %v3371 = vlaneseq
        %v3372 = vshrl.u32 %v3371, 7
        %v3373 = vsub.s32 %v3370, %v3372
        %v3374 = vrot.slane %v3352, %v3373
        %v3376 = vunpack.c.l.s4 1966171168
        %v3377 = vunpack.c.0.s8 %v3376
        %v3378 = vlaneseq
        %v3379 = vshrl.u32 %v3378, 7
        %v3380 = vsub.s32 %v3377, %v3379
        %v3381 = vrot.slane %v3353, %v3380
        %v3382 = vcombine.low %v3360, %v3367
        %v3383 = vcombine.low %v3374, %v3381
        %v3385 = vunpack.c.l.s4 1966171168
        %v3386 = vunpack.c.0.s8 %v3385
        %v3387 = vlaneseq
        %v3388 = vshrl.u32 %v3387, 7
        %v3389 = vsub.s32 %v3386, %v3388
        %v3390 = vrot.slane %v3382, %v3389
        %v3392 = vunpack.c.l.s4 1966171168
        %v3393 = vunpack.c.0.s8 %v3392
        %v3394 = vlaneseq
        %v3395 = vshrl.u32 %v3394, 7
        %v3396 = vsub.s32 %v3393, %v3395
        %v3397 = vrot.slane %v3383, %v3396
        %v3398 = vcombine.low %v3390, %v3397
        %v3399 = vcombine.low %v1271, %v1272
        %v3400 = vcombine.low %v1273, %v1288
        %v3401 = vcombine.low %v1295, %v1296
        %v3402 = vcombine.low %v1297, %v1311
        %v3404 = vunpack.c.l.s4 1966171168
        %v3405 = vunpack.c.0.s8 %v3404
        %v3406 = vlaneseq
        %v3407 = vshrl.u32 %v3406, 7
        %v3408 = vsub.s32 %v3405, %v3407
        %v3409 = vrot.slane %v3399, %v3408
        %v3411 = vunpack.c.l.s4 1966171168
        %v3412 = vunpack.c.0.s8 %v3411
        %v3413 = vlaneseq
        %v3414 = vshrl.u32 %v3413, 7
        %v3415 = vsub.s32 %v3412, %v3414
        %v3416 = vrot.slane %v3400, %v3415
        %v3418 = vunpack.c.l.s4 1966171168
        %v3419 = vunpack.c.0.s8 %v3418
        %v3420 = vlaneseq
        %v3421 = vshrl.u32 %v3420, 7
        %v3422 = vsub.s32 %v3419, %v3421
        %v3423 = vrot.slane %v3401, %v3422
        %v3425 = vunpack.c.l.s4 1966171168
        %v3426 = vunpack.c.0.s8 %v3425
        %v3427 = vlaneseq
        %v3428 = vshrl.u32 %v3427, 7
        %v3429 = vsub.s32 %v3426, %v3428
        %v3430 = vrot.slane %v3402, %v3429
        %v3431 = vcombine.low %v3409, %v3416
        %v3432 = vcombine.low %v3423, %v3430
        %v3434 = vunpack.c.l.s4 1966171168
        %v3435 = vunpack.c.0.s8 %v3434
        %v3436 = vlaneseq
        %v3437 = vshrl.u32 %v3436, 7
        %v3438 = vsub.s32 %v3435, %v3437
        %v3439 = vrot.slane %v3431, %v3438
        %v3441 = vunpack.c.l.s4 1966171168
        %v3442 = vunpack.c.0.s8 %v3441
        %v3443 = vlaneseq
        %v3444 = vshrl.u32 %v3443, 7
        %v3445 = vsub.s32 %v3442, %v3444
        %v3446 = vrot.slane %v3432, %v3445
        %v3447 = vcombine.low %v3439, %v3446
        %v3448 = vcombine.low %v1326, %v1333
        %v3449 = vcombine.low %v1334, %v1335
        %v3450 = vcombine.low %v1350, %v1357
        %v3451 = vcombine.low %v1358, %v1359
        %v3453 = vunpack.c.l.s4 1966171168
        %v3454 = vunpack.c.0.s8 %v3453
        %v3455 = vlaneseq
        %v3456 = vshrl.u32 %v3455, 7
        %v3457 = vsub.s32 %v3454, %v3456
        %v3458 = vrot.slane %v3448, %v3457
        %v3460 = vunpack.c.l.s4 1966171168
        %v3461 = vunpack.c.0.s8 %v3460
        %v3462 = vlaneseq
        %v3463 = vshrl.u32 %v3462, 7
        %v3464 = vsub.s32 %v3461, %v3463
        %v3465 = vrot.slane %v3449, %v3464
        %v3467 = vunpack.c.l.s4 1966171168
        %v3468 = vunpack.c.0.s8 %v3467
        %v3469 = vlaneseq
        %v3470 = vshrl.u32 %v3469, 7
        %v3471 = vsub.s32 %v3468, %v3470
        %v3472 = vrot.slane %v3450, %v3471
        %v3474 = vunpack.c.l.s4 1966171168
        %v3475 = vunpack.c.0.s8 %v3474
        %v3476 = vlaneseq
        %v3477 = vshrl.u32 %v3476, 7
        %v3478 = vsub.s32 %v3475, %v3477
        %v3479 = vrot.slane %v3451, %v3478
        %v3480 = vcombine.low %v3458, %v3465
        %v3481 = vcombine.low %v3472, %v3479
        %v3483 = vunpack.c.l.s4 1966171168
        %v3484 = vunpack.c.0.s8 %v3483
        %v3485 = vlaneseq
        %v3486 = vshrl.u32 %v3485, 7
        %v3487 = vsub.s32 %v3484, %v3486
        %v3488 = vrot.slane %v3480, %v3487
        %v3490 = vunpack.c.l.s4 1966171168
        %v3491 = vunpack.c.0.s8 %v3490
        %v3492 = vlaneseq
        %v3493 = vshrl.u32 %v3492, 7
        %v3494 = vsub.s32 %v3491, %v3493
        %v3495 = vrot.slane %v3481, %v3494
        %v3496 = vcombine.low %v3488, %v3495
        %v3497 = vcombine.low %v1373, %v1388
        %v3498 = vcombine.low %v1395, %v1396
        %v3499 = vcombine.low %v1397, %v1412
        %v3500 = vcombine.low %v1419, %v1420
        %v3502 = vunpack.c.l.s4 1966171168
        %v3503 = vunpack.c.0.s8 %v3502
        %v3504 = vlaneseq
        %v3505 = vshrl.u32 %v3504, 7
        %v3506 = vsub.s32 %v3503, %v3505
        %v3507 = vrot.slane %v3497, %v3506
        %v3509 = vunpack.c.l.s4 1966171168
        %v3510 = vunpack.c.0.s8 %v3509
        %v3511 = vlaneseq
        %v3512 = vshrl.u32 %v3511, 7
        %v3513 = vsub.s32 %v3510, %v3512
        %v3514 = vrot.slane %v3498, %v3513
        %v3516 = vunpack.c.l.s4 1966171168
        %v3517 = vunpack.c.0.s8 %v3516
        %v3518 = vlaneseq
        %v3519 = vshrl.u32 %v3518, 7
        %v3520 = vsub.s32 %v3517, %v3519
        %v3521 = vrot.slane %v3499, %v3520
        %v3523 = vunpack.c.l.s4 1966171168
        %v3524 = vunpack.c.0.s8 %v3523
        %v3525 = vlaneseq
        %v3526 = vshrl.u32 %v3525, 7
        %v3527 = vsub.s32 %v3524, %v3526
        %v3528 = vrot.slane %v3500, %v3527
        %v3529 = vcombine.low %v3507, %v3514
        %v3530 = vcombine.low %v3521, %v3528
        %v3532 = vunpack.c.l.s4 1966171168
        %v3533 = vunpack.c.0.s8 %v3532
        %v3534 = vlaneseq
        %v3535 = vshrl.u32 %v3534, 7
        %v3536 = vsub.s32 %v3533, %v3535
        %v3537 = vrot.slane %v3529, %v3536
        %v3539 = vunpack.c.l.s4 1966171168
        %v3540 = vunpack.c.0.s8 %v3539
        %v3541 = vlaneseq
        %v3542 = vshrl.u32 %v3541, 7
        %v3543 = vsub.s32 %v3540, %v3542
        %v3544 = vrot.slane %v3530, %v3543
        %v3545 = vcombine.low %v3537, %v3544
        %v3546 = vcombine.low %v1421, %v1435
        %v3547 = vcombine.low %v1450, %v1457
        %v3548 = vcombine.low %v1458, %v1459
        %v3549 = vcombine.low %v1474, %v1481
        %v3551 = vunpack.c.l.s4 1966171168
        %v3552 = vunpack.c.0.s8 %v3551
        %v3553 = vlaneseq
        %v3554 = vshrl.u32 %v3553, 7
        %v3555 = vsub.s32 %v3552, %v3554
        %v3556 = vrot.slane %v3546, %v3555
        %v3558 = vunpack.c.l.s4 1966171168
        %v3559 = vunpack.c.0.s8 %v3558
        %v3560 = vlaneseq
        %v3561 = vshrl.u32 %v3560, 7
        %v3562 = vsub.s32 %v3559, %v3561
        %v3563 = vrot.slane %v3547, %v3562
        %v3565 = vunpack.c.l.s4 1966171168
        %v3566 = vunpack.c.0.s8 %v3565
        %v3567 = vlaneseq
        %v3568 = vshrl.u32 %v3567, 7
        %v3569 = vsub.s32 %v3566, %v3568
        %v3570 = vrot.slane %v3548, %v3569
        %v3572 = vunpack.c.l.s4 1966171168
        %v3573 = vunpack.c.0.s8 %v3572
        %v3574 = vlaneseq
        %v3575 = vshrl.u32 %v3574, 7
        %v3576 = vsub.s32 %v3573, %v3575
        %v3577 = vrot.slane %v3549, %v3576
        %v3578 = vcombine.low %v3556, %v3563
        %v3579 = vcombine.low %v3570, %v3577
        %v3581 = vunpack.c.l.s4 1966171168
        %v3582 = vunpack.c.0.s8 %v3581
        %v3583 = vlaneseq
        %v3584 = vshrl.u32 %v3583, 7
        %v3585 = vsub.s32 %v3582, %v3584
        %v3586 = vrot.slane %v3578, %v3585
        %v3588 = vunpack.c.l.s4 1966171168
        %v3589 = vunpack.c.0.s8 %v3588
        %v3590 = vlaneseq
        %v3591 = vshrl.u32 %v3590, 7
        %v3592 = vsub.s32 %v3589, %v3591
        %v3593 = vrot.slane %v3579, %v3592
        %v3594 = vcombine.low %v3586, %v3593
        %v3595 = vcombine.low %v1482, %v1483
        %v3596 = vcombine.low %v1497, %v1512
        %v3597 = vcombine.low %v1519, %v1520
        %v3598 = vcombine.low %v1521, %v1536
        %v3600 = vunpack.c.l.s4 1966171168
        %v3601 = vunpack.c.0.s8 %v3600
        %v3602 = vlaneseq
        %v3603 = vshrl.u32 %v3602, 7
        %v3604 = vsub.s32 %v3601, %v3603
        %v3605 = vrot.slane %v3595, %v3604
        %v3607 = vunpack.c.l.s4 1966171168
        %v3608 = vunpack.c.0.s8 %v3607
        %v3609 = vlaneseq
        %v3610 = vshrl.u32 %v3609, 7
        %v3611 = vsub.s32 %v3608, %v3610
        %v3612 = vrot.slane %v3596, %v3611
        %v3614 = vunpack.c.l.s4 1966171168
        %v3615 = vunpack.c.0.s8 %v3614
        %v3616 = vlaneseq
        %v3617 = vshrl.u32 %v3616, 7
        %v3618 = vsub.s32 %v3615, %v3617
        %v3619 = vrot.slane %v3597, %v3618
        %v3621 = vunpack.c.l.s4 1966171168
        %v3622 = vunpack.c.0.s8 %v3621
        %v3623 = vlaneseq
        %v3624 = vshrl.u32 %v3623, 7
        %v3625 = vsub.s32 %v3622, %v3624
        %v3626 = vrot.slane %v3598, %v3625
        %v3627 = vcombine.low %v3605, %v3612
        %v3628 = vcombine.low %v3619, %v3626
        %v3630 = vunpack.c.l.s4 1966171168
        %v3631 = vunpack.c.0.s8 %v3630
        %v3632 = vlaneseq
        %v3633 = vshrl.u32 %v3632, 7
        %v3634 = vsub.s32 %v3631, %v3633
        %v3635 = vrot.slane %v3627, %v3634
        %v3637 = vunpack.c.l.s4 1966171168
        %v3638 = vunpack.c.0.s8 %v3637
        %v3639 = vlaneseq
        %v3640 = vshrl.u32 %v3639, 7
        %v3641 = vsub.s32 %v3638, %v3640
        %v3642 = vrot.slane %v3628, %v3641
        %v3643 = vcombine.low %v3635, %v3642
        %v3644 = vcombine.low %v1543, %v1544
        %v3645 = vcombine.low %v1545, %v1559
        %v3646 = vcombine.low %v1574, %v1581
        %v3647 = vcombine.low %v1582, %v1583
        %v3649 = vunpack.c.l.s4 1966171168
        %v3650 = vunpack.c.0.s8 %v3649
        %v3651 = vlaneseq
        %v3652 = vshrl.u32 %v3651, 7
        %v3653 = vsub.s32 %v3650, %v3652
        %v3654 = vrot.slane %v3644, %v3653
        %v3656 = vunpack.c.l.s4 1966171168
        %v3657 = vunpack.c.0.s8 %v3656
        %v3658 = vlaneseq
        %v3659 = vshrl.u32 %v3658, 7
        %v3660 = vsub.s32 %v3657, %v3659
        %v3661 = vrot.slane %v3645, %v3660
        %v3663 = vunpack.c.l.s4 1966171168
        %v3664 = vunpack.c.0.s8 %v3663
        %v3665 = vlaneseq
        %v3666 = vshrl.u32 %v3665, 7
        %v3667 = vsub.s32 %v3664, %v3666
        %v3668 = vrot.slane %v3646, %v3667
        %v3670 = vunpack.c.l.s4 1966171168
        %v3671 = vunpack.c.0.s8 %v3670
        %v3672 = vlaneseq
        %v3673 = vshrl.u32 %v3672, 7
        %v3674 = vsub.s32 %v3671, %v3673
        %v3675 = vrot.slane %v3647, %v3674
        %v3676 = vcombine.low %v3654, %v3661
        %v3677 = vcombine.low %v3668, %v3675
        %v3679 = vunpack.c.l.s4 1966171168
        %v3680 = vunpack.c.0.s8 %v3679
        %v3681 = vlaneseq
        %v3682 = vshrl.u32 %v3681, 7
        %v3683 = vsub.s32 %v3680, %v3682
        %v3684 = vrot.slane %v3676, %v3683
        %v3686 = vunpack.c.l.s4 1966171168
        %v3687 = vunpack.c.0.s8 %v3686
        %v3688 = vlaneseq
        %v3689 = vshrl.u32 %v3688, 7
        %v3690 = vsub.s32 %v3687, %v3689
        %v3691 = vrot.slane %v3677, %v3690
        %v3692 = vcombine.low %v3684, %v3691
        %v3693 = vcombine.low %v1598, %v1605
        %v3694 = vcombine.low %v1606, %v1607
        %v3695 = vcombine.low %v1621, %v1636
        %v3696 = vcombine.low %v1643, %v1644
        %v3698 = vunpack.c.l.s4 1966171168
        %v3699 = vunpack.c.0.s8 %v3698
        %v3700 = vlaneseq
        %v3701 = vshrl.u32 %v3700, 7
        %v3702 = vsub.s32 %v3699, %v3701
        %v3703 = vrot.slane %v3693, %v3702
        %v3705 = vunpack.c.l.s4 1966171168
        %v3706 = vunpack.c.0.s8 %v3705
        %v3707 = vlaneseq
        %v3708 = vshrl.u32 %v3707, 7
        %v3709 = vsub.s32 %v3706, %v3708
        %v3710 = vrot.slane %v3694, %v3709
        %v3712 = vunpack.c.l.s4 1966171168
        %v3713 = vunpack.c.0.s8 %v3712
        %v3714 = vlaneseq
        %v3715 = vshrl.u32 %v3714, 7
        %v3716 = vsub.s32 %v3713, %v3715
        %v3717 = vrot.slane %v3695, %v3716
        %v3719 = vunpack.c.l.s4 1966171168
        %v3720 = vunpack.c.0.s8 %v3719
        %v3721 = vlaneseq
        %v3722 = vshrl.u32 %v3721, 7
        %v3723 = vsub.s32 %v3720, %v3722
        %v3724 = vrot.slane %v3696, %v3723
        %v3725 = vcombine.low %v3703, %v3710
        %v3726 = vcombine.low %v3717, %v3724
        %v3728 = vunpack.c.l.s4 1966171168
        %v3729 = vunpack.c.0.s8 %v3728
        %v3730 = vlaneseq
        %v3731 = vshrl.u32 %v3730, 7
        %v3732 = vsub.s32 %v3729, %v3731
        %v3733 = vrot.slane %v3725, %v3732
        %v3735 = vunpack.c.l.s4 1966171168
        %v3736 = vunpack.c.0.s8 %v3735
        %v3737 = vlaneseq
        %v3738 = vshrl.u32 %v3737, 7
        %v3739 = vsub.s32 %v3736, %v3738
        %v3740 = vrot.slane %v3726, %v3739
        %v3741 = vcombine.low %v3733, %v3740
        %v3742 = vcombine.low %v1645, %v1660
        %v3743 = vcombine.low %v1667, %v1668
        %v3744 = vcombine.low %v1669, %v1683
        %v3745 = vcombine.low %v1698, %v1705
        %v3747 = vunpack.c.l.s4 1966171168
        %v3748 = vunpack.c.0.s8 %v3747
        %v3749 = vlaneseq
        %v3750 = vshrl.u32 %v3749, 7
        %v3751 = vsub.s32 %v3748, %v3750
        %v3752 = vrot.slane %v3742, %v3751
        %v3754 = vunpack.c.l.s4 1966171168
        %v3755 = vunpack.c.0.s8 %v3754
        %v3756 = vlaneseq
        %v3757 = vshrl.u32 %v3756, 7
        %v3758 = vsub.s32 %v3755, %v3757
        %v3759 = vrot.slane %v3743, %v3758
        %v3761 = vunpack.c.l.s4 1966171168
        %v3762 = vunpack.c.0.s8 %v3761
        %v3763 = vlaneseq
        %v3764 = vshrl.u32 %v3763, 7
        %v3765 = vsub.s32 %v3762, %v3764
        %v3766 = vrot.slane %v3744, %v3765
        %v3768 = vunpack.c.l.s4 1966171168
        %v3769 = vunpack.c.0.s8 %v3768
        %v3770 = vlaneseq
        %v3771 = vshrl.u32 %v3770, 7
        %v3772 = vsub.s32 %v3769, %v3771
        %v3773 = vrot.slane %v3745, %v3772
        %v3774 = vcombine.low %v3752, %v3759
        %v3775 = vcombine.low %v3766, %v3773
        %v3777 = vunpack.c.l.s4 1966171168
        %v3778 = vunpack.c.0.s8 %v3777
        %v3779 = vlaneseq
        %v3780 = vshrl.u32 %v3779, 7
        %v3781 = vsub.s32 %v3778, %v3780
        %v3782 = vrot.slane %v3774, %v3781
        %v3784 = vunpack.c.l.s4 1966171168
        %v3785 = vunpack.c.0.s8 %v3784
        %v3786 = vlaneseq
        %v3787 = vshrl.u32 %v3786, 7
        %v3788 = vsub.s32 %v3785, %v3787
        %v3789 = vrot.slane %v3775, %v3788
        %v3790 = vcombine.low %v3782, %v3789
        %v3791 = vcombine.low %v1706, %v1707
        %v3792 = vcombine.low %v1722, %v1729
        %v3793 = vcombine.low %v1730, %v1731
        %v3794 = vcombine.low %v1745, %v1760
        %v3796 = vunpack.c.l.s4 1966171168
        %v3797 = vunpack.c.0.s8 %v3796
        %v3798 = vlaneseq
        %v3799 = vshrl.u32 %v3798, 7
        %v3800 = vsub.s32 %v3797, %v3799
        %v3801 = vrot.slane %v3791, %v3800
        %v3803 = vunpack.c.l.s4 1966171168
        %v3804 = vunpack.c.0.s8 %v3803
        %v3805 = vlaneseq
        %v3806 = vshrl.u32 %v3805, 7
        %v3807 = vsub.s32 %v3804, %v3806
        %v3808 = vrot.slane %v3792, %v3807
        %v3810 = vunpack.c.l.s4 1966171168
        %v3811 = vunpack.c.0.s8 %v3810
        %v3812 = vlaneseq
        %v3813 = vshrl.u32 %v3812, 7
        %v3814 = vsub.s32 %v3811, %v3813
        %v3815 = vrot.slane %v3793, %v3814
        %v3817 = vunpack.c.l.s4 1966171168
        %v3818 = vunpack.c.0.s8 %v3817
        %v3819 = vlaneseq
        %v3820 = vshrl.u32 %v3819, 7
        %v3821 = vsub.s32 %v3818, %v3820
        %v3822 = vrot.slane %v3794, %v3821
        %v3823 = vcombine.low %v3801, %v3808
        %v3824 = vcombine.low %v3815, %v3822
        %v3826 = vunpack.c.l.s4 1966171168
        %v3827 = vunpack.c.0.s8 %v3826
        %v3828 = vlaneseq
        %v3829 = vshrl.u32 %v3828, 7
        %v3830 = vsub.s32 %v3827, %v3829
        %v3831 = vrot.slane %v3823, %v3830
        %v3833 = vunpack.c.l.s4 1966171168
        %v3834 = vunpack.c.0.s8 %v3833
        %v3835 = vlaneseq
        %v3836 = vshrl.u32 %v3835, 7
        %v3837 = vsub.s32 %v3834, %v3836
        %v3838 = vrot.slane %v3824, %v3837
        %v3839 = vcombine.low %v3831, %v3838
        %v3840 = vcombine.low %v1767, %v1768
        %v3841 = vcombine.low %v1769, %v1784
        %v3842 = vcombine.low %v1791, %v1792
        %v3843 = vcombine.low %v1793, %v1807
        %v3845 = vunpack.c.l.s4 1966171168
        %v3846 = vunpack.c.0.s8 %v3845
        %v3847 = vlaneseq
        %v3848 = vshrl.u32 %v3847, 7
        %v3849 = vsub.s32 %v3846, %v3848
        %v3850 = vrot.slane %v3840, %v3849
        %v3852 = vunpack.c.l.s4 1966171168
        %v3853 = vunpack.c.0.s8 %v3852
        %v3854 = vlaneseq
        %v3855 = vshrl.u32 %v3854, 7
        %v3856 = vsub.s32 %v3853, %v3855
        %v3857 = vrot.slane %v3841, %v3856
        %v3859 = vunpack.c.l.s4 1966171168
        %v3860 = vunpack.c.0.s8 %v3859
        %v3861 = vlaneseq
        %v3862 = vshrl.u32 %v3861, 7
        %v3863 = vsub.s32 %v3860, %v3862
        %v3864 = vrot.slane %v3842, %v3863
        %v3866 = vunpack.c.l.s4 1966171168
        %v3867 = vunpack.c.0.s8 %v3866
        %v3868 = vlaneseq
        %v3869 = vshrl.u32 %v3868, 7
        %v3870 = vsub.s32 %v3867, %v3869
        %v3871 = vrot.slane %v3843, %v3870
        %v3872 = vcombine.low %v3850, %v3857
        %v3873 = vcombine.low %v3864, %v3871
        %v3875 = vunpack.c.l.s4 1966171168
        %v3876 = vunpack.c.0.s8 %v3875
        %v3877 = vlaneseq
        %v3878 = vshrl.u32 %v3877, 7
        %v3879 = vsub.s32 %v3876, %v3878
        %v3880 = vrot.slane %v3872, %v3879
        %v3882 = vunpack.c.l.s4 1966171168
        %v3883 = vunpack.c.0.s8 %v3882
        %v3884 = vlaneseq
        %v3885 = vshrl.u32 %v3884, 7
        %v3886 = vsub.s32 %v3883, %v3885
        %v3887 = vrot.slane %v3873, %v3886
        %v3888 = vcombine.low %v3880, %v3887
        %v3890 = vsel %vm2768, %v3055, 0
        %v3893 = vsel %vm2768, %v3104, 0
        %v3896 = vsel %vm2768, %v3153, 0
        %v3899 = vsel %vm2768, %v3202, 0
        %v3902 = vsel %vm2768, %v3251, 0
        %v3905 = vsel %vm2768, %v3300, 0
        %v3908 = vsel %vm2768, %v3349, 0
        %v3911 = vsel %vm2768, %v3398, 0
        %v3914 = vsel %vm2768, %v3447, 0
        %v3917 = vsel %vm2768, %v3496, 0
        %v3920 = vsel %vm2768, %v3545, 0
        %v3923 = vsel %vm2768, %v3594, 0
        %v3926 = vsel %vm2768, %v3643, 0
        %v3929 = vsel %vm2768, %v3692, 0
        %v3932 = vsel %vm2768, %v3741, 0
        %v3935 = vsel %vm2768, %v3790, 0
        %v3938 = vsel %vm2768, %v3839, 0
        %v3941 = vsel %vm2768, %v3888, 0
        %v3944 = vand.u32 %v1808, %v2826
        %3946 = vmatprep.subr.bf16.mxu0 0
        %3947 = vmatpush1.bf16.msra.mxu0 %v3944
        %3948 = vmatprep.subr.bf16.mxu0 0
        %3949 = vmatpush1.bf16.msra.mxu0 0
        %3950 = vmatprep.subr.bf16.mxu0 0
        %3951 = vmatpush1.bf16.msra.mxu0 0
        %3952 = vmatprep.subr.bf16.mxu0 0
        %3953 = vmatpush1.bf16.msra.mxu0 0
        %3954 = vmatprep.subr.bf16.mxu0 0
        %3955 = vmatpush1.bf16.msra.mxu0 0
        %3956 = vmatprep.subr.bf16.mxu0 0
        %3957 = vmatpush1.bf16.msra.mxu0 0
        %3958 = vmatprep.subr.bf16.mxu0 0
        %3959 = vmatpush1.bf16.msra.mxu0 0
        %3960 = vmatprep.subr.bf16.mxu0 0
        %3961 = vmatpush1.bf16.msra.mxu0 0
        %3962 = vmatprep.subr.bf16.mxu0 0
        %3963 = vmatpush1.bf16.msra.mxu0 0
        %3964 = vmatprep.subr.bf16.mxu0 0
        %3965 = vmatpush1.bf16.msra.mxu0 0
        %3966 = vmatprep.subr.bf16.mxu0 0
        %3967 = vmatpush1.bf16.msra.mxu0 0
        %3968 = vmatprep.subr.bf16.mxu0 0
        %3969 = vmatpush1.bf16.msra.mxu0 0
        %3970 = vmatprep.subr.bf16.mxu0 0
        %3971 = vmatpush1.bf16.msra.mxu0 0
        %3972 = vmatprep.subr.bf16.mxu0 0
        %3973 = vmatpush1.bf16.msra.mxu0 0
        %3974 = vmatprep.subr.bf16.mxu0 0
        %3975 = vmatpush1.bf16.msra.mxu0 0
        %3976 = vmatprep.subr.bf16.mxu0 0
        %3977 = vmatpush1.bf16.msra.mxu0 0
        %3978 = vmatprep.mubr.bf16.mxu0 0
        %3979 = vmatmul.mubr.bf16.gmra.mrb[0].mxu0 %v3890
        %v3980 = vpop.f32.mrb[0].mxu0
        %v3981 = vadd.f32 %v2865, %v3980
        %v3982 = vpop.f32.mrb[0].mxu0
        %v3983 = vpop.f32.mrb[0].mxu0
        %v3984 = vadd.f32 %v2868, %v3983
        %v3985 = vpop.f32.mrb[0].mxu0
        %3986 = vmatprep.mubr.bf16.mxu0 0
        %3987 = vmatmul.mubr.bf16.gmra.mrb[0].mxu0 %v3893
        %v3988 = vpop.f32.mrb[0].mxu0
        %v3989 = vadd.f32 %v2873, %v3988
        %v3990 = vpop.f32.mrb[0].mxu0
        %v3991 = vpop.f32.mrb[0].mxu0
        %v3992 = vadd.f32 %v2876, %v3991
        %v3993 = vpop.f32.mrb[0].mxu0
        %3994 = vmatprep.mubr.bf16.mxu0 0
        %3995 = vmatmul.mubr.bf16.gmra.mrb[0].mxu0 %v3896
        %v3996 = vpop.f32.mrb[0].mxu0
        %v3997 = vadd.f32 %v2881, %v3996
        %v3998 = vpop.f32.mrb[0].mxu0
        %v3999 = vpop.f32.mrb[0].mxu0
        %v4000 = vadd.f32 %v2884, %v3999
        %v4001 = vpop.f32.mrb[0].mxu0
        %4002 = vmatprep.mubr.bf16.mxu0 0
        %4003 = vmatmul.mubr.bf16.gmra.mrb[0].mxu0 %v3899
        %v4004 = vpop.f32.mrb[0].mxu0
        %v4005 = vadd.f32 %v2889, %v4004
        %v4006 = vpop.f32.mrb[0].mxu0
        %v4007 = vpop.f32.mrb[0].mxu0
        %v4008 = vadd.f32 %v2892, %v4007
        %v4009 = vpop.f32.mrb[0].mxu0
        %4010 = vmatprep.mubr.bf16.mxu0 0
        %4011 = vmatmul.mubr.bf16.gmra.mrb[0].mxu0 %v3902
        %v4012 = vpop.f32.mrb[0].mxu0
        %v4013 = vadd.f32 %v2897, %v4012
        %v4014 = vpop.f32.mrb[0].mxu0
        %v4015 = vpop.f32.mrb[0].mxu0
        %v4016 = vadd.f32 %v2900, %v4015
        %v4017 = vpop.f32.mrb[0].mxu0
        %4018 = vmatprep.mubr.bf16.mxu0 0
        %4019 = vmatmul.mubr.bf16.gmra.mrb[0].mxu0 %v3905
        %v4020 = vpop.f32.mrb[0].mxu0
        %v4021 = vadd.f32 %v2905, %v4020
        %v4022 = vpop.f32.mrb[0].mxu0
        %v4023 = vpop.f32.mrb[0].mxu0
        %v4024 = vadd.f32 %v2908, %v4023
        %v4025 = vpop.f32.mrb[0].mxu0
        %4026 = vmatprep.mubr.bf16.mxu0 0
        %4027 = vmatmul.mubr.bf16.gmra.mrb[0].mxu0 %v3908
        %v4028 = vpop.f32.mrb[0].mxu0
        %v4029 = vadd.f32 %v2913, %v4028
        %v4030 = vpop.f32.mrb[0].mxu0
        %v4031 = vpop.f32.mrb[0].mxu0
        %v4032 = vadd.f32 %v2916, %v4031
        %v4033 = vpop.f32.mrb[0].mxu0
        %4034 = vmatprep.mubr.bf16.mxu0 0
        %4035 = vmatmul.mubr.bf16.gmra.mrb[0].mxu0 %v3911
        %v4036 = vpop.f32.mrb[0].mxu0
        %v4037 = vadd.f32 %v2921, %v4036
        %v4038 = vpop.f32.mrb[0].mxu0
        %v4039 = vpop.f32.mrb[0].mxu0
        %v4040 = vadd.f32 %v2924, %v4039
        %v4041 = vpop.f32.mrb[0].mxu0
        %4042 = vmatprep.mubr.bf16.mxu0 0
        %4043 = vmatmul.mubr.bf16.gmra.mrb[0].mxu0 %v3914
        %v4044 = vpop.f32.mrb[0].mxu0
        %v4045 = vadd.f32 %v2929, %v4044
        %v4046 = vpop.f32.mrb[0].mxu0
        %v4047 = vpop.f32.mrb[0].mxu0
        %v4048 = vadd.f32 %v2932, %v4047
        %v4049 = vpop.f32.mrb[0].mxu0
        %4050 = vmatprep.mubr.bf16.mxu0 0
        %4051 = vmatmul.mubr.bf16.gmra.mrb[0].mxu0 %v3917
        %v4052 = vpop.f32.mrb[0].mxu0
        %v4053 = vadd.f32 %v2937, %v4052
        %v4054 = vpop.f32.mrb[0].mxu0
        %v4055 = vpop.f32.mrb[0].mxu0
        %v4056 = vadd.f32 %v2940, %v4055
        %v4057 = vpop.f32.mrb[0].mxu0
        %4058 = vmatprep.mubr.bf16.mxu0 0
        %4059 = vmatmul.mubr.bf16.gmra.mrb[0].mxu0 %v3920
        %v4060 = vpop.f32.mrb[0].mxu0
        %v4061 = vadd.f32 %v2945, %v4060
        %v4062 = vpop.f32.mrb[0].mxu0
        %v4063 = vpop.f32.mrb[0].mxu0
        %v4064 = vadd.f32 %v2948, %v4063
        %v4065 = vpop.f32.mrb[0].mxu0
        %4066 = vmatprep.mubr.bf16.mxu0 0
        %4067 = vmatmul.mubr.bf16.gmra.mrb[0].mxu0 %v3923
        %v4068 = vpop.f32.mrb[0].mxu0
        %v4069 = vadd.f32 %v2953, %v4068
        %v4070 = vpop.f32.mrb[0].mxu0
        %v4071 = vpop.f32.mrb[0].mxu0
        %v4072 = vadd.f32 %v2956, %v4071
        %v4073 = vpop.f32.mrb[0].mxu0
        %4074 = vmatprep.mubr.bf16.mxu0 0
        %4075 = vmatmul.mubr.bf16.gmra.mrb[0].mxu0 %v3926
        %v4076 = vpop.f32.mrb[0].mxu0
        %v4077 = vadd.f32 %v2961, %v4076
        %v4078 = vpop.f32.mrb[0].mxu0
        %v4079 = vpop.f32.mrb[0].mxu0
        %v4080 = vadd.f32 %v2964, %v4079
        %v4081 = vpop.f32.mrb[0].mxu0
        %4082 = vmatprep.mubr.bf16.mxu0 0
        %4083 = vmatmul.mubr.bf16.gmra.mrb[0].mxu0 %v3929
        %v4084 = vpop.f32.mrb[0].mxu0
        %v4085 = vadd.f32 %v2969, %v4084
        %v4086 = vpop.f32.mrb[0].mxu0
        %v4087 = vpop.f32.mrb[0].mxu0
        %v4088 = vadd.f32 %v2972, %v4087
        %v4089 = vpop.f32.mrb[0].mxu0
        %4090 = vmatprep.mubr.bf16.mxu0 0
        %4091 = vmatmul.mubr.bf16.gmra.mrb[0].mxu0 %v3932
        %v4092 = vpop.f32.mrb[0].mxu0
        %v4093 = vadd.f32 %v2977, %v4092
        %v4094 = vpop.f32.mrb[0].mxu0
        %v4095 = vpop.f32.mrb[0].mxu0
        %v4096 = vadd.f32 %v2980, %v4095
        %v4097 = vpop.f32.mrb[0].mxu0
        %4098 = vmatprep.mubr.bf16.mxu0 0
        %4099 = vmatmul.mubr.bf16.gmra.mrb[0].mxu0 %v3935
        %v4100 = vpop.f32.mrb[0].mxu0
        %v4101 = vadd.f32 %v2985, %v4100
        %v4102 = vpop.f32.mrb[0].mxu0
        %v4103 = vpop.f32.mrb[0].mxu0
        %v4104 = vadd.f32 %v2988, %v4103
        %v4105 = vpop.f32.mrb[0].mxu0
        %4106 = vmatprep.mubr.bf16.mxu0 0
        %4107 = vmatmul.mubr.bf16.gmra.mrb[0].mxu0 %v3938
        %v4108 = vpop.f32.mrb[0].mxu0
        %v4109 = vadd.f32 %v2993, %v4108
        %v4110 = vpop.f32.mrb[0].mxu0
        %v4111 = vpop.f32.mrb[0].mxu0
        %v4112 = vadd.f32 %v2996, %v4111
        %v4113 = vpop.f32.mrb[0].mxu0
        %4114 = vmatprep.mubr.bf16.mxu0 0
        %4115 = vmatmul.mubr.bf16.gmra.mrb[0].mxu0 %v3941
        %v4116 = vpop.f32.mrb[0].mxu0
        %v4117 = vadd.f32 %v3001, %v4116
        %v4118 = vpop.f32.mrb[0].mxu0
        %v4119 = vpop.f32.mrb[0].mxu0
        %v4120 = vadd.f32 %v3004, %v4119
        %v4121 = vpop.f32.mrb[0].mxu0
        %4122 = vdwg.mxu0
        %v4127 = vunpack.c.l.s4 1966171168
        %v4128 = vunpack.c.0.s8 %v4127
        %v4129 = vlaneseq
        %v4130 = vshrl.u32 %v4129, 7
        %v4131 = vsub.s32 %v4128, %v4130
        %v4132 = vrot.slane %v765, %v4131
        %v4133 = vcombine.high %v4132, %v4132
        %v4135 = vunpack.c.l.s4 1966171168
        %v4136 = vunpack.c.0.s8 %v4135
        %v4137 = vlaneseq
        %v4138 = vshrl.u32 %v4137, 7
        %v4139 = vsub.s32 %v4136, %v4138
        %v4140 = vrot.slane %v4132, %v4139
        %v4142 = vunpack.c.l.s4 1966171168
        %v4143 = vunpack.c.0.s8 %v4142
        %v4144 = vlaneseq
        %v4145 = vshrl.u32 %v4144, 7
        %v4146 = vsub.s32 %v4143, %v4145
        %v4147 = vrot.slane %v4133, %v4146
        %v4148 = vcombine.high %v4140, %v4140
        %v4149 = vcombine.high %v4147, %v4147
        %v4151 = vunpack.c.l.s4 1966171168
        %v4152 = vunpack.c.0.s8 %v4151
        %v4153 = vlaneseq
        %v4154 = vshrl.u32 %v4153, 7
        %v4155 = vsub.s32 %v4152, %v4154
        %v4156 = vrot.slane %v766, %v4155
        %v4157 = vcombine.high %v4156, %v4156
        %v4159 = vunpack.c.l.s4 1966171168
        %v4160 = vunpack.c.0.s8 %v4159
        %v4161 = vlaneseq
        %v4162 = vshrl.u32 %v4161, 7
        %v4163 = vsub.s32 %v4160, %v4162
        %v4164 = vrot.slane %v4156, %v4163
        %v4166 = vunpack.c.l.s4 1966171168
        %v4167 = vunpack.c.0.s8 %v4166
        %v4168 = vlaneseq
        %v4169 = vshrl.u32 %v4168, 7
        %v4170 = vsub.s32 %v4167, %v4169
        %v4171 = vrot.slane %v4157, %v4170
        %v4172 = vcombine.high %v4164, %v4164
        %v4173 = vcombine.high %v4171, %v4171
        %v4175 = vunpack.c.l.s4 1966171168
        %v4176 = vunpack.c.0.s8 %v4175
        %v4177 = vlaneseq
        %v4178 = vshrl.u32 %v4177, 7
        %v4179 = vsub.s32 %v4176, %v4178
        %v4180 = vrot.slane %v767, %v4179
        %v4182 = vunpack.c.l.s4 1966171168
        %v4183 = vunpack.c.0.s8 %v4182
        %v4184 = vlaneseq
        %v4185 = vshrl.u32 %v4184, 7
        %v4186 = vsub.s32 %v4183, %v4185
        %v4187 = vrot.slane %v4180, %v4186
        %v4188 = vcombine.low %v3122, %v3129
        %v4189 = vcombine.low %v3136, %v3164
        %v4191 = vunpack.c.l.s4 1966171168
        %v4192 = vunpack.c.0.s8 %v4191
        %v4193 = vlaneseq
        %v4194 = vshrl.u32 %v4193, 7
        %v4195 = vsub.s32 %v4192, %v4194
        %v4196 = vrot.slane %v4188, %v4195
        %v4198 = vunpack.c.l.s4 1966171168
        %v4199 = vunpack.c.0.s8 %v4198
        %v4200 = vlaneseq
        %v4201 = vshrl.u32 %v4200, 7
        %v4202 = vsub.s32 %v4199, %v4201
        %v4203 = vrot.slane %v4189, %v4202
        %v4204 = vcombine.low %v4196, %v4203
        %v4205 = vcombine.low %v3171, %v3178
        %v4206 = vcombine.low %v3185, %v3213
        %v4208 = vunpack.c.l.s4 1966171168
        %v4209 = vunpack.c.0.s8 %v4208
        %v4210 = vlaneseq
        %v4211 = vshrl.u32 %v4210, 7
        %v4212 = vsub.s32 %v4209, %v4211
        %v4213 = vrot.slane %v4205, %v4212
        %v4215 = vunpack.c.l.s4 1966171168
        %v4216 = vunpack.c.0.s8 %v4215
        %v4217 = vlaneseq
        %v4218 = vshrl.u32 %v4217, 7
        %v4219 = vsub.s32 %v4216, %v4218
        %v4220 = vrot.slane %v4206, %v4219
        %v4221 = vcombine.low %v4213, %v4220
        %v4222 = vcombine.low %v3220, %v3227
        %v4223 = vcombine.low %v3234, %v3262
        %v4225 = vunpack.c.l.s4 1966171168
        %v4226 = vunpack.c.0.s8 %v4225
        %v4227 = vlaneseq
        %v4228 = vshrl.u32 %v4227, 7
        %v4229 = vsub.s32 %v4226, %v4228
        %v4230 = vrot.slane %v4222, %v4229
        %v4232 = vunpack.c.l.s4 1966171168
        %v4233 = vunpack.c.0.s8 %v4232
        %v4234 = vlaneseq
        %v4235 = vshrl.u32 %v4234, 7
        %v4236 = vsub.s32 %v4233, %v4235
        %v4237 = vrot.slane %v4223, %v4236
        %v4238 = vcombine.low %v4230, %v4237
        %v4239 = vcombine.low %v3269, %v3276
        %v4240 = vcombine.low %v3283, %v3311
        %v4242 = vunpack.c.l.s4 1966171168
        %v4243 = vunpack.c.0.s8 %v4242
        %v4244 = vlaneseq
        %v4245 = vshrl.u32 %v4244, 7
        %v4246 = vsub.s32 %v4243, %v4245
        %v4247 = vrot.slane %v4239, %v4246
        %v4249 = vunpack.c.l.s4 1966171168
        %v4250 = vunpack.c.0.s8 %v4249
        %v4251 = vlaneseq
        %v4252 = vshrl.u32 %v4251, 7
        %v4253 = vsub.s32 %v4250, %v4252
        %v4254 = vrot.slane %v4240, %v4253
        %v4255 = vcombine.low %v4247, %v4254
        %v4256 = vcombine.low %v3318, %v3325
        %v4257 = vcombine.low %v3332, %v3360
        %v4259 = vunpack.c.l.s4 1966171168
        %v4260 = vunpack.c.0.s8 %v4259
        %v4261 = vlaneseq
        %v4262 = vshrl.u32 %v4261, 7
        %v4263 = vsub.s32 %v4260, %v4262
        %v4264 = vrot.slane %v4256, %v4263
        %v4266 = vunpack.c.l.s4 1966171168
        %v4267 = vunpack.c.0.s8 %v4266
        %v4268 = vlaneseq
        %v4269 = vshrl.u32 %v4268, 7
        %v4270 = vsub.s32 %v4267, %v4269
        %v4271 = vrot.slane %v4257, %v4270
        %v4272 = vcombine.low %v4264, %v4271
        %v4273 = vcombine.low %v3367, %v3374
        %v4274 = vcombine.low %v3381, %v3409
        %v4276 = vunpack.c.l.s4 1966171168
        %v4277 = vunpack.c.0.s8 %v4276
        %v4278 = vlaneseq
        %v4279 = vshrl.u32 %v4278, 7
        %v4280 = vsub.s32 %v4277, %v4279
        %v4281 = vrot.slane %v4273, %v4280
        %v4283 = vunpack.c.l.s4 1966171168
        %v4284 = vunpack.c.0.s8 %v4283
        %v4285 = vlaneseq
        %v4286 = vshrl.u32 %v4285, 7
        %v4287 = vsub.s32 %v4284, %v4286
        %v4288 = vrot.slane %v4274, %v4287
        %v4289 = vcombine.low %v4281, %v4288
        %v4290 = vcombine.low %v3416, %v3423
        %v4291 = vcombine.low %v3430, %v3458
        %v4293 = vunpack.c.l.s4 1966171168
        %v4294 = vunpack.c.0.s8 %v4293
        %v4295 = vlaneseq
        %v4296 = vshrl.u32 %v4295, 7
        %v4297 = vsub.s32 %v4294, %v4296
        %v4298 = vrot.slane %v4290, %v4297
        %v4300 = vunpack.c.l.s4 1966171168
        %v4301 = vunpack.c.0.s8 %v4300
        %v4302 = vlaneseq
        %v4303 = vshrl.u32 %v4302, 7
        %v4304 = vsub.s32 %v4301, %v4303
        %v4305 = vrot.slane %v4291, %v4304
        %v4306 = vcombine.low %v4298, %v4305
        %v4307 = vcombine.low %v3465, %v3472
        %v4308 = vcombine.low %v3479, %v3507
        %v4310 = vunpack.c.l.s4 1966171168
        %v4311 = vunpack.c.0.s8 %v4310
        %v4312 = vlaneseq
        %v4313 = vshrl.u32 %v4312, 7
        %v4314 = vsub.s32 %v4311, %v4313
        %v4315 = vrot.slane %v4307, %v4314
        %v4317 = vunpack.c.l.s4 1966171168
        %v4318 = vunpack.c.0.s8 %v4317
        %v4319 = vlaneseq
        %v4320 = vshrl.u32 %v4319, 7
        %v4321 = vsub.s32 %v4318, %v4320
        %v4322 = vrot.slane %v4308, %v4321
        %v4323 = vcombine.low %v4315, %v4322
        %v4324 = vcombine.low %v3514, %v3521
        %v4325 = vcombine.low %v3528, %v3556
        %v4327 = vunpack.c.l.s4 1966171168
        %v4328 = vunpack.c.0.s8 %v4327
        %v4329 = vlaneseq
        %v4330 = vshrl.u32 %v4329, 7
        %v4331 = vsub.s32 %v4328, %v4330
        %v4332 = vrot.slane %v4324, %v4331
        %v4334 = vunpack.c.l.s4 1966171168
        %v4335 = vunpack.c.0.s8 %v4334
        %v4336 = vlaneseq
        %v4337 = vshrl.u32 %v4336, 7
        %v4338 = vsub.s32 %v4335, %v4337
        %v4339 = vrot.slane %v4325, %v4338
        %v4340 = vcombine.low %v4332, %v4339
        %v4341 = vcombine.low %v3563, %v3570
        %v4342 = vcombine.low %v3577, %v3605
        %v4344 = vunpack.c.l.s4 1966171168
        %v4345 = vunpack.c.0.s8 %v4344
        %v4346 = vlaneseq
        %v4347 = vshrl.u32 %v4346, 7
        %v4348 = vsub.s32 %v4345, %v4347
        %v4349 = vrot.slane %v4341, %v4348
        %v4351 = vunpack.c.l.s4 1966171168
        %v4352 = vunpack.c.0.s8 %v4351
        %v4353 = vlaneseq
        %v4354 = vshrl.u32 %v4353, 7
        %v4355 = vsub.s32 %v4352, %v4354
        %v4356 = vrot.slane %v4342, %v4355
        %v4357 = vcombine.low %v4349, %v4356
        %v4358 = vcombine.low %v3612, %v3619
        %v4359 = vcombine.low %v3626, %v3654
        %v4361 = vunpack.c.l.s4 1966171168
        %v4362 = vunpack.c.0.s8 %v4361
        %v4363 = vlaneseq
        %v4364 = vshrl.u32 %v4363, 7
        %v4365 = vsub.s32 %v4362, %v4364
        %v4366 = vrot.slane %v4358, %v4365
        %v4368 = vunpack.c.l.s4 1966171168
        %v4369 = vunpack.c.0.s8 %v4368
        %v4370 = vlaneseq
        %v4371 = vshrl.u32 %v4370, 7
        %v4372 = vsub.s32 %v4369, %v4371
        %v4373 = vrot.slane %v4359, %v4372
        %v4374 = vcombine.low %v4366, %v4373
        %v4375 = vcombine.low %v3661, %v3668
        %v4376 = vcombine.low %v3675, %v3703
        %v4378 = vunpack.c.l.s4 1966171168
        %v4379 = vunpack.c.0.s8 %v4378
        %v4380 = vlaneseq
        %v4381 = vshrl.u32 %v4380, 7
        %v4382 = vsub.s32 %v4379, %v4381
        %v4383 = vrot.slane %v4375, %v4382
        %v4385 = vunpack.c.l.s4 1966171168
        %v4386 = vunpack.c.0.s8 %v4385
        %v4387 = vlaneseq
        %v4388 = vshrl.u32 %v4387, 7
        %v4389 = vsub.s32 %v4386, %v4388
        %v4390 = vrot.slane %v4376, %v4389
        %v4391 = vcombine.low %v4383, %v4390
        %v4392 = vcombine.low %v3710, %v3717
        %v4393 = vcombine.low %v3724, %v3752
        %v4395 = vunpack.c.l.s4 1966171168
        %v4396 = vunpack.c.0.s8 %v4395
        %v4397 = vlaneseq
        %v4398 = vshrl.u32 %v4397, 7
        %v4399 = vsub.s32 %v4396, %v4398
        %v4400 = vrot.slane %v4392, %v4399
        %v4402 = vunpack.c.l.s4 1966171168
        %v4403 = vunpack.c.0.s8 %v4402
        %v4404 = vlaneseq
        %v4405 = vshrl.u32 %v4404, 7
        %v4406 = vsub.s32 %v4403, %v4405
        %v4407 = vrot.slane %v4393, %v4406
        %v4408 = vcombine.low %v4400, %v4407
        %v4409 = vcombine.low %v3759, %v3766
        %v4410 = vcombine.low %v3773, %v3801
        %v4412 = vunpack.c.l.s4 1966171168
        %v4413 = vunpack.c.0.s8 %v4412
        %v4414 = vlaneseq
        %v4415 = vshrl.u32 %v4414, 7
        %v4416 = vsub.s32 %v4413, %v4415
        %v4417 = vrot.slane %v4409, %v4416
        %v4419 = vunpack.c.l.s4 1966171168
        %v4420 = vunpack.c.0.s8 %v4419
        %v4421 = vlaneseq
        %v4422 = vshrl.u32 %v4421, 7
        %v4423 = vsub.s32 %v4420, %v4422
        %v4424 = vrot.slane %v4410, %v4423
        %v4425 = vcombine.low %v4417, %v4424
        %v4426 = vcombine.low %v3808, %v3815
        %v4427 = vcombine.low %v3822, %v3850
        %v4429 = vunpack.c.l.s4 1966171168
        %v4430 = vunpack.c.0.s8 %v4429
        %v4431 = vlaneseq
        %v4432 = vshrl.u32 %v4431, 7
        %v4433 = vsub.s32 %v4430, %v4432
        %v4434 = vrot.slane %v4426, %v4433
        %v4436 = vunpack.c.l.s4 1966171168
        %v4437 = vunpack.c.0.s8 %v4436
        %v4438 = vlaneseq
        %v4439 = vshrl.u32 %v4438, 7
        %v4440 = vsub.s32 %v4437, %v4439
        %v4441 = vrot.slane %v4427, %v4440
        %v4442 = vcombine.low %v4434, %v4441
        %v4443 = vcombine.low %v1827, %v1834
        %v4445 = vunpack.c.l.s4 1966171168
        %v4446 = vunpack.c.0.s8 %v4445
        %v4447 = vlaneseq
        %v4448 = vshrl.u32 %v4447, 7
        %v4449 = vsub.s32 %v4446, %v4448
        %v4450 = vrot.slane %v4443, %v4449
        %v4451 = vcombine.low %v3857, %v3864
        %v4452 = vcombine.low %v3871, %v4450
        %v4454 = vunpack.c.l.s4 1966171168
        %v4455 = vunpack.c.0.s8 %v4454
        %v4456 = vlaneseq
        %v4457 = vshrl.u32 %v4456, 7
        %v4458 = vsub.s32 %v4455, %v4457
        %v4459 = vrot.slane %v4451, %v4458
        %v4461 = vunpack.c.l.s4 1966171168
        %v4462 = vunpack.c.0.s8 %v4461
        %v4463 = vlaneseq
        %v4464 = vshrl.u32 %v4463, 7
        %v4465 = vsub.s32 %v4462, %v4464
        %v4466 = vrot.slane %v4452, %v4465
        %v4467 = vcombine.low %v4459, %v4466
        %v4468 = vcombine.low %v1835, %v1836
        %v4469 = vcombine.low %v1851, %v1858
        %v4470 = vcombine.low %v1859, %v1860
        %v4471 = vcombine.low %v1874, %v4140
        %v4473 = vunpack.c.l.s4 1966171168
        %v4474 = vunpack.c.0.s8 %v4473
        %v4475 = vlaneseq
        %v4476 = vshrl.u32 %v4475, 7
        %v4477 = vsub.s32 %v4474, %v4476
        %v4478 = vrot.slane %v4468, %v4477
        %v4480 = vunpack.c.l.s4 1966171168
        %v4481 = vunpack.c.0.s8 %v4480
        %v4482 = vlaneseq
        %v4483 = vshrl.u32 %v4482, 7
        %v4484 = vsub.s32 %v4481, %v4483
        %v4485 = vrot.slane %v4469, %v4484
        %v4487 = vunpack.c.l.s4 1966171168
        %v4488 = vunpack.c.0.s8 %v4487
        %v4489 = vlaneseq
        %v4490 = vshrl.u32 %v4489, 7
        %v4491 = vsub.s32 %v4488, %v4490
        %v4492 = vrot.slane %v4470, %v4491
        %v4494 = vunpack.c.l.s4 1966171168
        %v4495 = vunpack.c.0.s8 %v4494
        %v4496 = vlaneseq
        %v4497 = vshrl.u32 %v4496, 7
        %v4498 = vsub.s32 %v4495, %v4497
        %v4499 = vrot.slane %v4471, %v4498
        %v4500 = vcombine.low %v4478, %v4485
        %v4501 = vcombine.low %v4492, %v4499
        %v4503 = vunpack.c.l.s4 1966171168
        %v4504 = vunpack.c.0.s8 %v4503
        %v4505 = vlaneseq
        %v4506 = vshrl.u32 %v4505, 7
        %v4507 = vsub.s32 %v4504, %v4506
        %v4508 = vrot.slane %v4500, %v4507
        %v4510 = vunpack.c.l.s4 1966171168
        %v4511 = vunpack.c.0.s8 %v4510
        %v4512 = vlaneseq
        %v4513 = vshrl.u32 %v4512, 7
        %v4514 = vsub.s32 %v4511, %v4513
        %v4515 = vrot.slane %v4501, %v4514
        %v4516 = vcombine.low %v4508, %v4515
        %v4517 = vcombine.low %v4147, %v4148
        %v4518 = vcombine.low %v4149, %v4164
        %v4519 = vcombine.low %v4171, %v4172
        %v4520 = vcombine.low %v4173, %v4187
        %v4522 = vunpack.c.l.s4 1966171168
        %v4523 = vunpack.c.0.s8 %v4522
        %v4524 = vlaneseq
        %v4525 = vshrl.u32 %v4524, 7
        %v4526 = vsub.s32 %v4523, %v4525
        %v4527 = vrot.slane %v4517, %v4526
        %v4529 = vunpack.c.l.s4 1966171168
        %v4530 = vunpack.c.0.s8 %v4529
        %v4531 = vlaneseq
        %v4532 = vshrl.u32 %v4531, 7
        %v4533 = vsub.s32 %v4530, %v4532
        %v4534 = vrot.slane %v4518, %v4533
        %v4536 = vunpack.c.l.s4 1966171168
        %v4537 = vunpack.c.0.s8 %v4536
        %v4538 = vlaneseq
        %v4539 = vshrl.u32 %v4538, 7
        %v4540 = vsub.s32 %v4537, %v4539
        %v4541 = vrot.slane %v4519, %v4540
        %v4543 = vunpack.c.l.s4 1966171168
        %v4544 = vunpack.c.0.s8 %v4543
        %v4545 = vlaneseq
        %v4546 = vshrl.u32 %v4545, 7
        %v4547 = vsub.s32 %v4544, %v4546
        %v4548 = vrot.slane %v4520, %v4547
        %v4549 = vcombine.low %v4527, %v4534
        %v4550 = vcombine.low %v4541, %v4548
        %v4552 = vunpack.c.l.s4 1966171168
        %v4553 = vunpack.c.0.s8 %v4552
        %v4554 = vlaneseq
        %v4555 = vshrl.u32 %v4554, 7
        %v4556 = vsub.s32 %v4553, %v4555
        %v4557 = vrot.slane %v4549, %v4556
        %v4559 = vunpack.c.l.s4 1966171168
        %v4560 = vunpack.c.0.s8 %v4559
        %v4561 = vlaneseq
        %v4562 = vshrl.u32 %v4561, 7
        %v4563 = vsub.s32 %v4560, %v4562
        %v4564 = vrot.slane %v4550, %v4563
        %v4565 = vcombine.low %v4557, %v4564
        %v4567 = vunpack.c.l.b16 %v1809
        %v4568 = vpack.c.b16 %v4567, %v2758
        %v4569 = vrot.slane %v4568, 3
        %v4571 = vsel %vm2768, %v4204, 0
        %v4574 = vsel %vm2768, %v4221, 0
        %v4577 = vsel %vm2768, %v4238, 0
        %v4580 = vsel %vm2768, %v4255, 0
        %v4583 = vsel %vm2768, %v4272, 0
        %v4586 = vsel %vm2768, %v4289, 0
        %v4589 = vsel %vm2768, %v4306, 0
        %v4592 = vsel %vm2768, %v4323, 0
        %v4595 = vsel %vm2768, %v4340, 0
        %v4598 = vsel %vm2768, %v4357, 0
        %v4601 = vsel %vm2768, %v4374, 0
        %v4604 = vsel %vm2768, %v4391, 0
        %v4607 = vsel %vm2768, %v4408, 0
        %v4610 = vsel %vm2768, %v4425, 0
        %v4613 = vsel %vm2768, %v4442, 0
        %v4616 = vsel %vm2768, %v4467, 0
        %v4619 = vsel %vm2768, %v4516, 0
        %v4622 = vsel %vm2768, %v4565, 0
        %v4625 = vand.u32 %v4569, %v2826
        %4627 = vmatprep.subr.bf16.mxu0 0
        %4628 = vmatpush1.bf16.msra.mxu0 %v4625
        %4629 = vmatprep.subr.bf16.mxu0 0
        %4630 = vmatpush1.bf16.msra.mxu0 0
        %4631 = vmatprep.subr.bf16.mxu0 0
        %4632 = vmatpush1.bf16.msra.mxu0 0
        %4633 = vmatprep.subr.bf16.mxu0 0
        %4634 = vmatpush1.bf16.msra.mxu0 0
        %4635 = vmatprep.subr.bf16.mxu0 0
        %4636 = vmatpush1.bf16.msra.mxu0 0
        %4637 = vmatprep.subr.bf16.mxu0 0
        %4638 = vmatpush1.bf16.msra.mxu0 0
        %4639 = vmatprep.subr.bf16.mxu0 0
        %4640 = vmatpush1.bf16.msra.mxu0 0
        %4641 = vmatprep.subr.bf16.mxu0 0
        %4642 = vmatpush1.bf16.msra.mxu0 0
        %4643 = vmatprep.subr.bf16.mxu0 0
        %4644 = vmatpush1.bf16.msra.mxu0 0
        %4645 = vmatprep.subr.bf16.mxu0 0
        %4646 = vmatpush1.bf16.msra.mxu0 0
        %4647 = vmatprep.subr.bf16.mxu0 0
        %4648 = vmatpush1.bf16.msra.mxu0 0
        %4649 = vmatprep.subr.bf16.mxu0 0
        %4650 = vmatpush1.bf16.msra.mxu0 0
        %4651 = vmatprep.subr.bf16.mxu0 0
        %4652 = vmatpush1.bf16.msra.mxu0 0
        %4653 = vmatprep.subr.bf16.mxu0 0
        %4654 = vmatpush1.bf16.msra.mxu0 0
        %4655 = vmatprep.subr.bf16.mxu0 0
        %4656 = vmatpush1.bf16.msra.mxu0 0
        %4657 = vmatprep.subr.bf16.mxu0 0
        %4658 = vmatpush1.bf16.msra.mxu0 0
        %4659 = vmatprep.mubr.bf16.mxu0 0
        %4660 = vmatmul.mubr.bf16.gmra.mrb[0].mxu0 %v4571
        %v4661 = vpop.f32.mrb[0].mxu0
        %v4662 = vadd.f32 0.0, %v4661
        %v4663 = vpop.f32.mrb[0].mxu0
        %v4664 = vpop.f32.mrb[0].mxu0
        %v4665 = vadd.f32 0.0, %v4664
        %v4666 = vpop.f32.mrb[0].mxu0
        %4667 = vmatprep.mubr.bf16.mxu0 0
        %4668 = vmatmul.mubr.bf16.gmra.mrb[0].mxu0 %v4574
        %v4669 = vpop.f32.mrb[0].mxu0
        %v4670 = vadd.f32 0.0, %v4669
        %v4671 = vpop.f32.mrb[0].mxu0
        %v4672 = vpop.f32.mrb[0].mxu0
        %v4673 = vadd.f32 0.0, %v4672
        %v4674 = vpop.f32.mrb[0].mxu0
        %4675 = vmatprep.mubr.bf16.mxu0 0
        %4676 = vmatmul.mubr.bf16.gmra.mrb[0].mxu0 %v4577
        %v4677 = vpop.f32.mrb[0].mxu0
        %v4678 = vadd.f32 0.0, %v4677
        %v4679 = vpop.f32.mrb[0].mxu0
        %v4680 = vpop.f32.mrb[0].mxu0
        %v4681 = vadd.f32 0.0, %v4680
        %v4682 = vpop.f32.mrb[0].mxu0
        %4683 = vmatprep.mubr.bf16.mxu0 0
        %4684 = vmatmul.mubr.bf16.gmra.mrb[0].mxu0 %v4580
        %v4685 = vpop.f32.mrb[0].mxu0
        %v4686 = vadd.f32 0.0, %v4685
        %v4687 = vpop.f32.mrb[0].mxu0
        %v4688 = vpop.f32.mrb[0].mxu0
        %v4689 = vadd.f32 0.0, %v4688
        %v4690 = vpop.f32.mrb[0].mxu0
        %4691 = vmatprep.mubr.bf16.mxu0 0
        %4692 = vmatmul.mubr.bf16.gmra.mrb[0].mxu0 %v4583
        %v4693 = vpop.f32.mrb[0].mxu0
        %v4694 = vadd.f32 0.0, %v4693
        %v4695 = vpop.f32.mrb[0].mxu0
        %v4696 = vpop.f32.mrb[0].mxu0
        %v4697 = vadd.f32 0.0, %v4696
        %v4698 = vpop.f32.mrb[0].mxu0
        %4699 = vmatprep.mubr.bf16.mxu0 0
        %4700 = vmatmul.mubr.bf16.gmra.mrb[0].mxu0 %v4586
        %v4701 = vpop.f32.mrb[0].mxu0
        %v4702 = vadd.f32 0.0, %v4701
        %v4703 = vpop.f32.mrb[0].mxu0
        %v4704 = vpop.f32.mrb[0].mxu0
        %v4705 = vadd.f32 0.0, %v4704
        %v4706 = vpop.f32.mrb[0].mxu0
        %4707 = vmatprep.mubr.bf16.mxu0 0
        %4708 = vmatmul.mubr.bf16.gmra.mrb[0].mxu0 %v4589
        %v4709 = vpop.f32.mrb[0].mxu0
        %v4710 = vadd.f32 0.0, %v4709
        %v4711 = vpop.f32.mrb[0].mxu0
        %v4712 = vpop.f32.mrb[0].mxu0
        %v4713 = vadd.f32 0.0, %v4712
        %v4714 = vpop.f32.mrb[0].mxu0
        %4715 = vmatprep.mubr.bf16.mxu0 0
        %4716 = vmatmul.mubr.bf16.gmra.mrb[0].mxu0 %v4592
        %v4717 = vpop.f32.mrb[0].mxu0
        %v4718 = vadd.f32 0.0, %v4717
        %v4719 = vpop.f32.mrb[0].mxu0
        %v4720 = vpop.f32.mrb[0].mxu0
        %v4721 = vadd.f32 0.0, %v4720
        %v4722 = vpop.f32.mrb[0].mxu0
        %4723 = vmatprep.mubr.bf16.mxu0 0
        %4724 = vmatmul.mubr.bf16.gmra.mrb[0].mxu0 %v4595
        %v4725 = vpop.f32.mrb[0].mxu0
        %v4726 = vadd.f32 0.0, %v4725
        %v4727 = vpop.f32.mrb[0].mxu0
        %v4728 = vpop.f32.mrb[0].mxu0
        %v4729 = vadd.f32 0.0, %v4728
        %v4730 = vpop.f32.mrb[0].mxu0
        %4731 = vmatprep.mubr.bf16.mxu0 0
        %4732 = vmatmul.mubr.bf16.gmra.mrb[0].mxu0 %v4598
        %v4733 = vpop.f32.mrb[0].mxu0
        %v4734 = vadd.f32 0.0, %v4733
        %v4735 = vpop.f32.mrb[0].mxu0
        %v4736 = vpop.f32.mrb[0].mxu0
        %v4737 = vadd.f32 0.0, %v4736
        %v4738 = vpop.f32.mrb[0].mxu0
        %4739 = vmatprep.mubr.bf16.mxu0 0
        %4740 = vmatmul.mubr.bf16.gmra.mrb[0].mxu0 %v4601
        %v4741 = vpop.f32.mrb[0].mxu0
        %v4742 = vadd.f32 0.0, %v4741
        %v4743 = vpop.f32.mrb[0].mxu0
        %v4744 = vpop.f32.mrb[0].mxu0
        %v4745 = vadd.f32 0.0, %v4744
        %v4746 = vpop.f32.mrb[0].mxu0
        %4747 = vmatprep.mubr.bf16.mxu0 0
        %4748 = vmatmul.mubr.bf16.gmra.mrb[0].mxu0 %v4604
        %v4749 = vpop.f32.mrb[0].mxu0
        %v4750 = vadd.f32 0.0, %v4749
        %v4751 = vpop.f32.mrb[0].mxu0
        %v4752 = vpop.f32.mrb[0].mxu0
        %v4753 = vadd.f32 0.0, %v4752
        %v4754 = vpop.f32.mrb[0].mxu0
        %4755 = vmatprep.mubr.bf16.mxu0 0
        %4756 = vmatmul.mubr.bf16.gmra.mrb[0].mxu0 %v4607
        %v4757 = vpop.f32.mrb[0].mxu0
        %v4758 = vadd.f32 0.0, %v4757
        %v4759 = vpop.f32.mrb[0].mxu0
        %v4760 = vpop.f32.mrb[0].mxu0
        %v4761 = vadd.f32 0.0, %v4760
        %v4762 = vpop.f32.mrb[0].mxu0
        %4763 = vmatprep.mubr.bf16.mxu0 0
        %4764 = vmatmul.mubr.bf16.gmra.mrb[0].mxu0 %v4610
        %v4765 = vpop.f32.mrb[0].mxu0
        %v4766 = vadd.f32 0.0, %v4765
        %v4767 = vpop.f32.mrb[0].mxu0
        %v4768 = vpop.f32.mrb[0].mxu0
        %v4769 = vadd.f32 0.0, %v4768
        %v4770 = vpop.f32.mrb[0].mxu0
        %4771 = vmatprep.mubr.bf16.mxu0 0
        %4772 = vmatmul.mubr.bf16.gmra.mrb[0].mxu0 %v4613
        %v4773 = vpop.f32.mrb[0].mxu0
        %v4774 = vadd.f32 0.0, %v4773
        %v4775 = vpop.f32.mrb[0].mxu0
        %v4776 = vpop.f32.mrb[0].mxu0
        %v4777 = vadd.f32 0.0, %v4776
        %v4778 = vpop.f32.mrb[0].mxu0
        %4779 = vmatprep.mubr.bf16.mxu0 0
        %4780 = vmatmul.mubr.bf16.gmra.mrb[0].mxu0 %v4616
        %v4781 = vpop.f32.mrb[0].mxu0
        %v4782 = vadd.f32 0.0, %v4781
        %v4783 = vpop.f32.mrb[0].mxu0
        %v4784 = vpop.f32.mrb[0].mxu0
        %v4785 = vadd.f32 0.0, %v4784
        %v4786 = vpop.f32.mrb[0].mxu0
        %4787 = vmatprep.mubr.bf16.mxu0 0
        %4788 = vmatmul.mubr.bf16.gmra.mrb[0].mxu0 %v4619
        %v4789 = vpop.f32.mrb[0].mxu0
        %v4790 = vadd.f32 0.0, %v4789
        %v4791 = vpop.f32.mrb[0].mxu0
        %v4792 = vpop.f32.mrb[0].mxu0
        %v4793 = vadd.f32 0.0, %v4792
        %v4794 = vpop.f32.mrb[0].mxu0
        %4795 = vmatprep.mubr.bf16.mxu0 0
        %4796 = vmatmul.mubr.bf16.gmra.mrb[0].mxu0 %v4622
        %v4797 = vpop.f32.mrb[0].mxu0
        %v4798 = vadd.f32 0.0, %v4797
        %v4799 = vpop.f32.mrb[0].mxu0
        %v4800 = vpop.f32.mrb[0].mxu0
        %v4801 = vadd.f32 0.0, %v4800
        %v4802 = vpop.f32.mrb[0].mxu0
        %4803 = vdwg.mxu0
        %v4804 = vadd.f32 %v3981, %v4662
        %v4805 = vadd.f32 %v3984, %v4665
        %v4806 = vadd.f32 %v3989, %v4670
        %v4807 = vadd.f32 %v3992, %v4673
        %v4808 = vadd.f32 %v3997, %v4678
        %v4809 = vadd.f32 %v4000, %v4681
        %v4810 = vadd.f32 %v4005, %v4686
        %v4811 = vadd.f32 %v4008, %v4689
        %v4812 = vadd.f32 %v4013, %v4694
        %v4813 = vadd.f32 %v4016, %v4697
        %v4814 = vadd.f32 %v4021, %v4702
        %v4815 = vadd.f32 %v4024, %v4705
        %v4816 = vadd.f32 %v4029, %v4710
        %v4817 = vadd.f32 %v4032, %v4713
        %v4818 = vadd.f32 %v4037, %v4718
        %v4819 = vadd.f32 %v4040, %v4721
        %v4820 = vadd.f32 %v4045, %v4726
        %v4821 = vadd.f32 %v4048, %v4729
        %v4822 = vadd.f32 %v4053, %v4734
        %v4823 = vadd.f32 %v4056, %v4737
        %v4824 = vadd.f32 %v4061, %v4742
        %v4825 = vadd.f32 %v4064, %v4745
        %v4826 = vadd.f32 %v4069, %v4750
        %v4827 = vadd.f32 %v4072, %v4753
        %v4828 = vadd.f32 %v4077, %v4758
        %v4829 = vadd.f32 %v4080, %v4761
        %v4830 = vadd.f32 %v4085, %v4766
        %v4831 = vadd.f32 %v4088, %v4769
        %v4832 = vadd.f32 %v4093, %v4774
        %v4833 = vadd.f32 %v4096, %v4777
        %v4834 = vadd.f32 %v4101, %v4782
        %v4835 = vadd.f32 %v4104, %v4785
        %v4836 = vadd.f32 %v4109, %v4790
        %v4837 = vadd.f32 %v4112, %v4793
        %v4838 = vadd.f32 %v4117, %v4798
        %v4839 = vadd.f32 %v4120, %v4801
        %v4876 = vcombine.high %v4804, %v4804
        %v4878 = vunpack.c.l.s4 1983009808
        %v4879 = vunpack.c.0.s8 %v4878
        %v4880 = vlaneseq
        %v4881 = vshrl.u32 %v4880, 7
        %v4882 = vsub.s32 %v4879, %v4881
        %v4883 = vrot.slane %v4804, %v4882
        %v4885 = vunpack.c.l.s4 1983009808
        %v4886 = vunpack.c.0.s8 %v4885
        %v4887 = vlaneseq
        %v4888 = vshrl.u32 %v4887, 7
        %v4889 = vsub.s32 %v4886, %v4888
        %v4890 = vrot.slane %v4876, %v4889
        %v4891 = vcombine.high %v4883, %v4883
        %v4892 = vcombine.high %v4890, %v4890
        %v4893 = vcombine.high %v4805, %v4805
        %v4895 = vunpack.c.l.s4 1983009808
        %v4896 = vunpack.c.0.s8 %v4895
        %v4897 = vlaneseq
        %v4898 = vshrl.u32 %v4897, 7
        %v4899 = vsub.s32 %v4896, %v4898
        %v4900 = vrot.slane %v4805, %v4899
        %v4902 = vunpack.c.l.s4 1983009808
        %v4903 = vunpack.c.0.s8 %v4902
        %v4904 = vlaneseq
        %v4905 = vshrl.u32 %v4904, 7
        %v4906 = vsub.s32 %v4903, %v4905
        %v4907 = vrot.slane %v4893, %v4906
        %v4908 = vcombine.high %v4900, %v4900
        %v4909 = vcombine.high %v4907, %v4907
        %v4910 = vcombine.high %v4806, %v4806
        %v4912 = vunpack.c.l.s4 1983009808
        %v4913 = vunpack.c.0.s8 %v4912
        %v4914 = vlaneseq
        %v4915 = vshrl.u32 %v4914, 7
        %v4916 = vsub.s32 %v4913, %v4915
        %v4917 = vrot.slane %v4806, %v4916
        %v4919 = vunpack.c.l.s4 1983009808
        %v4920 = vunpack.c.0.s8 %v4919
        %v4921 = vlaneseq
        %v4922 = vshrl.u32 %v4921, 7
        %v4923 = vsub.s32 %v4920, %v4922
        %v4924 = vrot.slane %v4910, %v4923
        %v4925 = vcombine.high %v4917, %v4917
        %v4926 = vcombine.high %v4924, %v4924
        %v4927 = vcombine.high %v4807, %v4807
        %v4929 = vunpack.c.l.s4 1983009808
        %v4930 = vunpack.c.0.s8 %v4929
        %v4931 = vlaneseq
        %v4932 = vshrl.u32 %v4931, 7
        %v4933 = vsub.s32 %v4930, %v4932
        %v4934 = vrot.slane %v4807, %v4933
        %v4936 = vunpack.c.l.s4 1983009808
        %v4937 = vunpack.c.0.s8 %v4936
        %v4938 = vlaneseq
        %v4939 = vshrl.u32 %v4938, 7
        %v4940 = vsub.s32 %v4937, %v4939
        %v4941 = vrot.slane %v4927, %v4940
        %v4942 = vcombine.high %v4934, %v4934
        %v4943 = vcombine.high %v4941, %v4941
        %v4944 = vcombine.high %v4808, %v4808
        %v4946 = vunpack.c.l.s4 1983009808
        %v4947 = vunpack.c.0.s8 %v4946
        %v4948 = vlaneseq
        %v4949 = vshrl.u32 %v4948, 7
        %v4950 = vsub.s32 %v4947, %v4949
        %v4951 = vrot.slane %v4808, %v4950
        %v4953 = vunpack.c.l.s4 1983009808
        %v4954 = vunpack.c.0.s8 %v4953
        %v4955 = vlaneseq
        %v4956 = vshrl.u32 %v4955, 7
        %v4957 = vsub.s32 %v4954, %v4956
        %v4958 = vrot.slane %v4944, %v4957
        %v4959 = vcombine.high %v4958, %v4958
        %v4960 = vcombine.high %v4809, %v4809
        %v4962 = vunpack.c.l.s4 1983009808
        %v4963 = vunpack.c.0.s8 %v4962
        %v4964 = vlaneseq
        %v4965 = vshrl.u32 %v4964, 7
        %v4966 = vsub.s32 %v4963, %v4965
        %v4967 = vrot.slane %v4809, %v4966
        %v4969 = vunpack.c.l.s4 1983009808
        %v4970 = vunpack.c.0.s8 %v4969
        %v4971 = vlaneseq
        %v4972 = vshrl.u32 %v4971, 7
        %v4973 = vsub.s32 %v4970, %v4972
        %v4974 = vrot.slane %v4960, %v4973
        %v4975 = vcombine.high %v4967, %v4967
        %v4976 = vcombine.high %v4974, %v4974
        %v4977 = vcombine.high %v4810, %v4810
        %v4979 = vunpack.c.l.s4 1983009808
        %v4980 = vunpack.c.0.s8 %v4979
        %v4981 = vlaneseq
        %v4982 = vshrl.u32 %v4981, 7
        %v4983 = vsub.s32 %v4980, %v4982
        %v4984 = vrot.slane %v4810, %v4983
        %v4986 = vunpack.c.l.s4 1983009808
        %v4987 = vunpack.c.0.s8 %v4986
        %v4988 = vlaneseq
        %v4989 = vshrl.u32 %v4988, 7
        %v4990 = vsub.s32 %v4987, %v4989
        %v4991 = vrot.slane %v4977, %v4990
        %v4992 = vcombine.high %v4984, %v4984
        %v4993 = vcombine.high %v4991, %v4991
        %v4994 = vcombine.high %v4811, %v4811
        %v4996 = vunpack.c.l.s4 1983009808
        %v4997 = vunpack.c.0.s8 %v4996
        %v4998 = vlaneseq
        %v4999 = vshrl.u32 %v4998, 7
        %v5000 = vsub.s32 %v4997, %v4999
        %v5001 = vrot.slane %v4811, %v5000
        %v5003 = vunpack.c.l.s4 1983009808
        %v5004 = vunpack.c.0.s8 %v5003
        %v5005 = vlaneseq
        %v5006 = vshrl.u32 %v5005, 7
        %v5007 = vsub.s32 %v5004, %v5006
        %v5008 = vrot.slane %v4994, %v5007
        %v5009 = vcombine.high %v5001, %v5001
        %v5010 = vcombine.high %v5008, %v5008
        %v5011 = vcombine.high %v4812, %v4812
        %v5013 = vunpack.c.l.s4 1983009808
        %v5014 = vunpack.c.0.s8 %v5013
        %v5015 = vlaneseq
        %v5016 = vshrl.u32 %v5015, 7
        %v5017 = vsub.s32 %v5014, %v5016
        %v5018 = vrot.slane %v4812, %v5017
        %v5020 = vunpack.c.l.s4 1983009808
        %v5021 = vunpack.c.0.s8 %v5020
        %v5022 = vlaneseq
        %v5023 = vshrl.u32 %v5022, 7
        %v5024 = vsub.s32 %v5021, %v5023
        %v5025 = vrot.slane %v5011, %v5024
        %v5026 = vcombine.high %v5018, %v5018
        %v5027 = vcombine.high %v4813, %v4813
        %v5029 = vunpack.c.l.s4 1983009808
        %v5030 = vunpack.c.0.s8 %v5029
        %v5031 = vlaneseq
        %v5032 = vshrl.u32 %v5031, 7
        %v5033 = vsub.s32 %v5030, %v5032
        %v5034 = vrot.slane %v4813, %v5033
        %v5036 = vunpack.c.l.s4 1983009808
        %v5037 = vunpack.c.0.s8 %v5036
        %v5038 = vlaneseq
        %v5039 = vshrl.u32 %v5038, 7
        %v5040 = vsub.s32 %v5037, %v5039
        %v5041 = vrot.slane %v5027, %v5040
        %v5042 = vcombine.high %v5034, %v5034
        %v5043 = vcombine.high %v5041, %v5041
        %v5044 = vcombine.high %v4814, %v4814
        %v5046 = vunpack.c.l.s4 1983009808
        %v5047 = vunpack.c.0.s8 %v5046
        %v5048 = vlaneseq
        %v5049 = vshrl.u32 %v5048, 7
        %v5050 = vsub.s32 %v5047, %v5049
        %v5051 = vrot.slane %v4814, %v5050
        %v5053 = vunpack.c.l.s4 1983009808
        %v5054 = vunpack.c.0.s8 %v5053
        %v5055 = vlaneseq
        %v5056 = vshrl.u32 %v5055, 7
        %v5057 = vsub.s32 %v5054, %v5056
        %v5058 = vrot.slane %v5044, %v5057
        %v5059 = vcombine.high %v5051, %v5051
        %v5060 = vcombine.high %v5058, %v5058
        %v5061 = vcombine.high %v4815, %v4815
        %v5063 = vunpack.c.l.s4 1983009808
        %v5064 = vunpack.c.0.s8 %v5063
        %v5065 = vlaneseq
        %v5066 = vshrl.u32 %v5065, 7
        %v5067 = vsub.s32 %v5064, %v5066
        %v5068 = vrot.slane %v4815, %v5067
        %v5070 = vunpack.c.l.s4 1983009808
        %v5071 = vunpack.c.0.s8 %v5070
        %v5072 = vlaneseq
        %v5073 = vshrl.u32 %v5072, 7
        %v5074 = vsub.s32 %v5071, %v5073
        %v5075 = vrot.slane %v5061, %v5074
        %v5076 = vcombine.high %v5068, %v5068
        %v5077 = vcombine.high %v5075, %v5075
        %v5078 = vcombine.high %v4816, %v4816
        %v5080 = vunpack.c.l.s4 1983009808
        %v5081 = vunpack.c.0.s8 %v5080
        %v5082 = vlaneseq
        %v5083 = vshrl.u32 %v5082, 7
        %v5084 = vsub.s32 %v5081, %v5083
        %v5085 = vrot.slane %v4816, %v5084
        %v5087 = vunpack.c.l.s4 1983009808
        %v5088 = vunpack.c.0.s8 %v5087
        %v5089 = vlaneseq
        %v5090 = vshrl.u32 %v5089, 7
        %v5091 = vsub.s32 %v5088, %v5090
        %v5092 = vrot.slane %v5078, %v5091
        %v5093 = vcombine.high %v5085, %v5085
        %v5094 = vcombine.high %v5092, %v5092
        %v5095 = vcombine.high %v4817, %v4817
        %v5097 = vunpack.c.l.s4 1983009808
        %v5098 = vunpack.c.0.s8 %v5097
        %v5099 = vlaneseq
        %v5100 = vshrl.u32 %v5099, 7
        %v5101 = vsub.s32 %v5098, %v5100
        %v5102 = vrot.slane %v4817, %v5101
        %v5104 = vunpack.c.l.s4 1983009808
        %v5105 = vunpack.c.0.s8 %v5104
        %v5106 = vlaneseq
        %v5107 = vshrl.u32 %v5106, 7
        %v5108 = vsub.s32 %v5105, %v5107
        %v5109 = vrot.slane %v5095, %v5108
        %v5110 = vcombine.high %v5109, %v5109
        %v5111 = vcombine.high %v4818, %v4818
        %v5113 = vunpack.c.l.s4 1983009808
        %v5114 = vunpack.c.0.s8 %v5113
        %v5115 = vlaneseq
        %v5116 = vshrl.u32 %v5115, 7
        %v5117 = vsub.s32 %v5114, %v5116
        %v5118 = vrot.slane %v4818, %v5117
        %v5120 = vunpack.c.l.s4 1983009808
        %v5121 = vunpack.c.0.s8 %v5120
        %v5122 = vlaneseq
        %v5123 = vshrl.u32 %v5122, 7
        %v5124 = vsub.s32 %v5121, %v5123
        %v5125 = vrot.slane %v5111, %v5124
        %v5126 = vcombine.high %v5118, %v5118
        %v5127 = vcombine.high %v5125, %v5125
        %v5128 = vcombine.high %v4819, %v4819
        %v5130 = vunpack.c.l.s4 1983009808
        %v5131 = vunpack.c.0.s8 %v5130
        %v5132 = vlaneseq
        %v5133 = vshrl.u32 %v5132, 7
        %v5134 = vsub.s32 %v5131, %v5133
        %v5135 = vrot.slane %v4819, %v5134
        %v5137 = vunpack.c.l.s4 1983009808
        %v5138 = vunpack.c.0.s8 %v5137
        %v5139 = vlaneseq
        %v5140 = vshrl.u32 %v5139, 7
        %v5141 = vsub.s32 %v5138, %v5140
        %v5142 = vrot.slane %v5128, %v5141
        %v5143 = vcombine.high %v5135, %v5135
        %v5144 = vcombine.high %v5142, %v5142
        %v5145 = vcombine.high %v4820, %v4820
        %v5147 = vunpack.c.l.s4 1983009808
        %v5148 = vunpack.c.0.s8 %v5147
        %v5149 = vlaneseq
        %v5150 = vshrl.u32 %v5149, 7
        %v5151 = vsub.s32 %v5148, %v5150
        %v5152 = vrot.slane %v4820, %v5151
        %v5154 = vunpack.c.l.s4 1983009808
        %v5155 = vunpack.c.0.s8 %v5154
        %v5156 = vlaneseq
        %v5157 = vshrl.u32 %v5156, 7
        %v5158 = vsub.s32 %v5155, %v5157
        %v5159 = vrot.slane %v5145, %v5158
        %v5160 = vcombine.high %v5152, %v5152
        %v5161 = vcombine.high %v5159, %v5159
        %v5162 = vcombine.high %v4821, %v4821
        %v5164 = vunpack.c.l.s4 1983009808
        %v5165 = vunpack.c.0.s8 %v5164
        %v5166 = vlaneseq
        %v5167 = vshrl.u32 %v5166, 7
        %v5168 = vsub.s32 %v5165, %v5167
        %v5169 = vrot.slane %v4821, %v5168
        %v5171 = vunpack.c.l.s4 1983009808
        %v5172 = vunpack.c.0.s8 %v5171
        %v5173 = vlaneseq
        %v5174 = vshrl.u32 %v5173, 7
        %v5175 = vsub.s32 %v5172, %v5174
        %v5176 = vrot.slane %v5162, %v5175
        %v5177 = vcombine.high %v5169, %v5169
        %v5178 = vcombine.high %v4822, %v4822
        %v5180 = vunpack.c.l.s4 1983009808
        %v5181 = vunpack.c.0.s8 %v5180
        %v5182 = vlaneseq
        %v5183 = vshrl.u32 %v5182, 7
        %v5184 = vsub.s32 %v5181, %v5183
        %v5185 = vrot.slane %v4822, %v5184
        %v5187 = vunpack.c.l.s4 1983009808
        %v5188 = vunpack.c.0.s8 %v5187
        %v5189 = vlaneseq
        %v5190 = vshrl.u32 %v5189, 7
        %v5191 = vsub.s32 %v5188, %v5190
        %v5192 = vrot.slane %v5178, %v5191
        %v5193 = vcombine.high %v5185, %v5185
        %v5194 = vcombine.high %v5192, %v5192
        %v5195 = vcombine.high %v4823, %v4823
        %v5197 = vunpack.c.l.s4 1983009808
        %v5198 = vunpack.c.0.s8 %v5197
        %v5199 = vlaneseq
        %v5200 = vshrl.u32 %v5199, 7
        %v5201 = vsub.s32 %v5198, %v5200
        %v5202 = vrot.slane %v4823, %v5201
        %v5204 = vunpack.c.l.s4 1983009808
        %v5205 = vunpack.c.0.s8 %v5204
        %v5206 = vlaneseq
        %v5207 = vshrl.u32 %v5206, 7
        %v5208 = vsub.s32 %v5205, %v5207
        %v5209 = vrot.slane %v5195, %v5208
        %v5210 = vcombine.high %v5202, %v5202
        %v5211 = vcombine.high %v5209, %v5209
        %v5212 = vcombine.high %v4824, %v4824
        %v5214 = vunpack.c.l.s4 1983009808
        %v5215 = vunpack.c.0.s8 %v5214
        %v5216 = vlaneseq
        %v5217 = vshrl.u32 %v5216, 7
        %v5218 = vsub.s32 %v5215, %v5217
        %v5219 = vrot.slane %v4824, %v5218
        %v5221 = vunpack.c.l.s4 1983009808
        %v5222 = vunpack.c.0.s8 %v5221
        %v5223 = vlaneseq
        %v5224 = vshrl.u32 %v5223, 7
        %v5225 = vsub.s32 %v5222, %v5224
        %v5226 = vrot.slane %v5212, %v5225
        %v5227 = vcombine.high %v5219, %v5219
        %v5228 = vcombine.high %v5226, %v5226
        %v5229 = vcombine.high %v4825, %v4825
        %v5231 = vunpack.c.l.s4 1983009808
        %v5232 = vunpack.c.0.s8 %v5231
        %v5233 = vlaneseq
        %v5234 = vshrl.u32 %v5233, 7
        %v5235 = vsub.s32 %v5232, %v5234
        %v5236 = vrot.slane %v4825, %v5235
        %v5238 = vunpack.c.l.s4 1983009808
        %v5239 = vunpack.c.0.s8 %v5238
        %v5240 = vlaneseq
        %v5241 = vshrl.u32 %v5240, 7
        %v5242 = vsub.s32 %v5239, %v5241
        %v5243 = vrot.slane %v5229, %v5242
        %v5244 = vcombine.high %v5236, %v5236
        %v5245 = vcombine.high %v5243, %v5243
        %v5246 = vcombine.high %v4826, %v4826
        %v5248 = vunpack.c.l.s4 1983009808
        %v5249 = vunpack.c.0.s8 %v5248
        %v5250 = vlaneseq
        %v5251 = vshrl.u32 %v5250, 7
        %v5252 = vsub.s32 %v5249, %v5251
        %v5253 = vrot.slane %v4826, %v5252
        %v5255 = vunpack.c.l.s4 1983009808
        %v5256 = vunpack.c.0.s8 %v5255
        %v5257 = vlaneseq
        %v5258 = vshrl.u32 %v5257, 7
        %v5259 = vsub.s32 %v5256, %v5258
        %v5260 = vrot.slane %v5246, %v5259
        %v5261 = vcombine.high %v5260, %v5260
        %v5262 = vcombine.high %v4827, %v4827
        %v5264 = vunpack.c.l.s4 1983009808
        %v5265 = vunpack.c.0.s8 %v5264
        %v5266 = vlaneseq
        %v5267 = vshrl.u32 %v5266, 7
        %v5268 = vsub.s32 %v5265, %v5267
        %v5269 = vrot.slane %v4827, %v5268
        %v5271 = vunpack.c.l.s4 1983009808
        %v5272 = vunpack.c.0.s8 %v5271
        %v5273 = vlaneseq
        %v5274 = vshrl.u32 %v5273, 7
        %v5275 = vsub.s32 %v5272, %v5274
        %v5276 = vrot.slane %v5262, %v5275
        %v5277 = vcombine.high %v5269, %v5269
        %v5278 = vcombine.high %v5276, %v5276
        %v5279 = vcombine.high %v4828, %v4828
        %v5281 = vunpack.c.l.s4 1983009808
        %v5282 = vunpack.c.0.s8 %v5281
        %v5283 = vlaneseq
        %v5284 = vshrl.u32 %v5283, 7
        %v5285 = vsub.s32 %v5282, %v5284
        %v5286 = vrot.slane %v4828, %v5285
        %v5288 = vunpack.c.l.s4 1983009808
        %v5289 = vunpack.c.0.s8 %v5288
        %v5290 = vlaneseq
        %v5291 = vshrl.u32 %v5290, 7
        %v5292 = vsub.s32 %v5289, %v5291
        %v5293 = vrot.slane %v5279, %v5292
        %v5294 = vcombine.high %v5286, %v5286
        %v5295 = vcombine.high %v5293, %v5293
        %v5296 = vcombine.high %v4829, %v4829
        %v5298 = vunpack.c.l.s4 1983009808
        %v5299 = vunpack.c.0.s8 %v5298
        %v5300 = vlaneseq
        %v5301 = vshrl.u32 %v5300, 7
        %v5302 = vsub.s32 %v5299, %v5301
        %v5303 = vrot.slane %v4829, %v5302
        %v5305 = vunpack.c.l.s4 1983009808
        %v5306 = vunpack.c.0.s8 %v5305
        %v5307 = vlaneseq
        %v5308 = vshrl.u32 %v5307, 7
        %v5309 = vsub.s32 %v5306, %v5308
        %v5310 = vrot.slane %v5296, %v5309
        %v5311 = vcombine.high %v5303, %v5303
        %v5312 = vcombine.high %v5310, %v5310
        %v5313 = vcombine.high %v4830, %v4830
        %v5315 = vunpack.c.l.s4 1983009808
        %v5316 = vunpack.c.0.s8 %v5315
        %v5317 = vlaneseq
        %v5318 = vshrl.u32 %v5317, 7
        %v5319 = vsub.s32 %v5316, %v5318
        %v5320 = vrot.slane %v4830, %v5319
        %v5322 = vunpack.c.l.s4 1983009808
        %v5323 = vunpack.c.0.s8 %v5322
        %v5324 = vlaneseq
        %v5325 = vshrl.u32 %v5324, 7
        %v5326 = vsub.s32 %v5323, %v5325
        %v5327 = vrot.slane %v5313, %v5326
        %v5328 = vcombine.high %v5320, %v5320
        %v5329 = vcombine.high %v4831, %v4831
        %v5331 = vunpack.c.l.s4 1983009808
        %v5332 = vunpack.c.0.s8 %v5331
        %v5333 = vlaneseq
        %v5334 = vshrl.u32 %v5333, 7
        %v5335 = vsub.s32 %v5332, %v5334
        %v5336 = vrot.slane %v4831, %v5335
        %v5338 = vunpack.c.l.s4 1983009808
        %v5339 = vunpack.c.0.s8 %v5338
        %v5340 = vlaneseq
        %v5341 = vshrl.u32 %v5340, 7
        %v5342 = vsub.s32 %v5339, %v5341
        %v5343 = vrot.slane %v5329, %v5342
        %v5344 = vcombine.high %v5336, %v5336
        %v5345 = vcombine.high %v5343, %v5343
        %v5346 = vcombine.high %v4832, %v4832
        %v5348 = vunpack.c.l.s4 1983009808
        %v5349 = vunpack.c.0.s8 %v5348
        %v5350 = vlaneseq
        %v5351 = vshrl.u32 %v5350, 7
        %v5352 = vsub.s32 %v5349, %v5351
        %v5353 = vrot.slane %v4832, %v5352
        %v5355 = vunpack.c.l.s4 1983009808
        %v5356 = vunpack.c.0.s8 %v5355
        %v5357 = vlaneseq
        %v5358 = vshrl.u32 %v5357, 7
        %v5359 = vsub.s32 %v5356, %v5358
        %v5360 = vrot.slane %v5346, %v5359
        %v5361 = vcombine.high %v5353, %v5353
        %v5362 = vcombine.high %v5360, %v5360
        %v5363 = vcombine.high %v4833, %v4833
        %v5365 = vunpack.c.l.s4 1983009808
        %v5366 = vunpack.c.0.s8 %v5365
        %v5367 = vlaneseq
        %v5368 = vshrl.u32 %v5367, 7
        %v5369 = vsub.s32 %v5366, %v5368
        %v5370 = vrot.slane %v4833, %v5369
        %v5372 = vunpack.c.l.s4 1983009808
        %v5373 = vunpack.c.0.s8 %v5372
        %v5374 = vlaneseq
        %v5375 = vshrl.u32 %v5374, 7
        %v5376 = vsub.s32 %v5373, %v5375
        %v5377 = vrot.slane %v5363, %v5376
        %v5378 = vcombine.high %v5370, %v5370
        %v5379 = vcombine.high %v5377, %v5377
        %v5380 = vcombine.high %v4834, %v4834
        %v5382 = vunpack.c.l.s4 1983009808
        %v5383 = vunpack.c.0.s8 %v5382
        %v5384 = vlaneseq
        %v5385 = vshrl.u32 %v5384, 7
        %v5386 = vsub.s32 %v5383, %v5385
        %v5387 = vrot.slane %v4834, %v5386
        %v5389 = vunpack.c.l.s4 1983009808
        %v5390 = vunpack.c.0.s8 %v5389
        %v5391 = vlaneseq
        %v5392 = vshrl.u32 %v5391, 7
        %v5393 = vsub.s32 %v5390, %v5392
        %v5394 = vrot.slane %v5380, %v5393
        %v5395 = vcombine.high %v5387, %v5387
        %v5396 = vcombine.high %v5394, %v5394
        %v5397 = vcombine.high %v4835, %v4835
        %v5399 = vunpack.c.l.s4 1983009808
        %v5400 = vunpack.c.0.s8 %v5399
        %v5401 = vlaneseq
        %v5402 = vshrl.u32 %v5401, 7
        %v5403 = vsub.s32 %v5400, %v5402
        %v5404 = vrot.slane %v4835, %v5403
        %v5406 = vunpack.c.l.s4 1983009808
        %v5407 = vunpack.c.0.s8 %v5406
        %v5408 = vlaneseq
        %v5409 = vshrl.u32 %v5408, 7
        %v5410 = vsub.s32 %v5407, %v5409
        %v5411 = vrot.slane %v5397, %v5410
        %v5412 = vcombine.high %v5411, %v5411
        %v5413 = vcombine.high %v4836, %v4836
        %v5415 = vunpack.c.l.s4 1983009808
        %v5416 = vunpack.c.0.s8 %v5415
        %v5417 = vlaneseq
        %v5418 = vshrl.u32 %v5417, 7
        %v5419 = vsub.s32 %v5416, %v5418
        %v5420 = vrot.slane %v4836, %v5419
        %v5422 = vunpack.c.l.s4 1983009808
        %v5423 = vunpack.c.0.s8 %v5422
        %v5424 = vlaneseq
        %v5425 = vshrl.u32 %v5424, 7
        %v5426 = vsub.s32 %v5423, %v5425
        %v5427 = vrot.slane %v5413, %v5426
        %v5428 = vcombine.high %v5420, %v5420
        %v5429 = vcombine.high %v5427, %v5427
        %v5430 = vcombine.high %v4837, %v4837
        %v5432 = vunpack.c.l.s4 1983009808
        %v5433 = vunpack.c.0.s8 %v5432
        %v5434 = vlaneseq
        %v5435 = vshrl.u32 %v5434, 7
        %v5436 = vsub.s32 %v5433, %v5435
        %v5437 = vrot.slane %v4837, %v5436
        %v5439 = vunpack.c.l.s4 1983009808
        %v5440 = vunpack.c.0.s8 %v5439
        %v5441 = vlaneseq
        %v5442 = vshrl.u32 %v5441, 7
        %v5443 = vsub.s32 %v5440, %v5442
        %v5444 = vrot.slane %v5430, %v5443
        %v5445 = vcombine.high %v5437, %v5437
        %v5446 = vcombine.high %v5444, %v5444
        %v5447 = vcombine.high %v4838, %v4838
        %v5449 = vunpack.c.l.s4 1983009808
        %v5450 = vunpack.c.0.s8 %v5449
        %v5451 = vlaneseq
        %v5452 = vshrl.u32 %v5451, 7
        %v5453 = vsub.s32 %v5450, %v5452
        %v5454 = vrot.slane %v4838, %v5453
        %v5456 = vunpack.c.l.s4 1983009808
        %v5457 = vunpack.c.0.s8 %v5456
        %v5458 = vlaneseq
        %v5459 = vshrl.u32 %v5458, 7
        %v5460 = vsub.s32 %v5457, %v5459
        %v5461 = vrot.slane %v5447, %v5460
        %v5462 = vcombine.high %v5454, %v5454
        %v5463 = vcombine.high %v5461, %v5461
        %v5464 = vcombine.high %v4839, %v4839
        %v5466 = vunpack.c.l.s4 1983009808
        %v5467 = vunpack.c.0.s8 %v5466
        %v5468 = vlaneseq
        %v5469 = vshrl.u32 %v5468, 7
        %v5470 = vsub.s32 %v5467, %v5469
        %v5471 = vrot.slane %v4839, %v5470
        %v5473 = vunpack.c.l.s4 1983009808
        %v5474 = vunpack.c.0.s8 %v5473
        %v5475 = vlaneseq
        %v5476 = vshrl.u32 %v5475, 7
        %v5477 = vsub.s32 %v5474, %v5476
        %v5478 = vrot.slane %v5464, %v5477
        %v5479 = vcombine.high %v5471, %v5471
        %s5608 = scalar_lea.vmem %s1, 8
        %v5609 = vld [vmem:[%s5608] sm:$0xf]
        %v5610 = vld [vmem:[%s5608 + $0x4] sm:$0x1]
        %v5612 = vunpack.c.l.b16 %v5609
        %v5613 = vpack.c.b16 %v5612, %v5612
        %v5615 = vshrl.u32 %v5613, 16
        %v5617 = vrot.slane %v5615, 1
        %v5618 = vshll.u32 %v5613, 16
        %v5620 = vrot.slane %v5618, 2
        %v5621 = vor.u32 %v5617, %v5620
        %v5623 = vand.u32 %v5621, %v2826
        %5625 = vmatprep.subr.bf16.mxu0 0
        %5626 = vmatpush1.bf16.msra.mxu0 %v5623
        %5627 = vmatprep.subr.bf16.mxu0 0
        %5628 = vmatpush1.bf16.msra.mxu0 0
        %5629 = vmatprep.subr.bf16.mxu0 0
        %5630 = vmatpush1.bf16.msra.mxu0 0
        %5631 = vmatprep.subr.bf16.mxu0 0
        %5632 = vmatpush1.bf16.msra.mxu0 0
        %5633 = vmatprep.subr.bf16.mxu0 0
        %5634 = vmatpush1.bf16.msra.mxu0 0
        %5635 = vmatprep.subr.bf16.mxu0 0
        %5636 = vmatpush1.bf16.msra.mxu0 0
        %5637 = vmatprep.subr.bf16.mxu0 0
        %5638 = vmatpush1.bf16.msra.mxu0 0
        %5639 = vmatprep.subr.bf16.mxu0 0
        %5640 = vmatpush1.bf16.msra.mxu0 0
        %5641 = vmatprep.subr.bf16.mxu0 0
        %5642 = vmatpush1.bf16.msra.mxu0 0
        %5643 = vmatprep.subr.bf16.mxu0 0
        %5644 = vmatpush1.bf16.msra.mxu0 0
        %5645 = vmatprep.subr.bf16.mxu0 0
        %5646 = vmatpush1.bf16.msra.mxu0 0
        %5647 = vmatprep.subr.bf16.mxu0 0
        %5648 = vmatpush1.bf16.msra.mxu0 0
        %5649 = vmatprep.subr.bf16.mxu0 0
        %5650 = vmatpush1.bf16.msra.mxu0 0
        %5651 = vmatprep.subr.bf16.mxu0 0
        %5652 = vmatpush1.bf16.msra.mxu0 0
        %5653 = vmatprep.subr.bf16.mxu0 0
        %5654 = vmatpush1.bf16.msra.mxu0 0
        %5655 = vmatprep.subr.bf16.mxu0 0
        %5656 = vmatpush1.bf16.msra.mxu0 0
        %5657 = vmatprep.mubr.bf16.mxu0 0
        %5658 = vmatmul.mubr.bf16.gmra.mrb[0].mxu0 %v2770
        %v5659 = vpop.f32.mrb[0].mxu0
        %v5660 = vadd.f32 0.0, %v5659
        %v5661 = vpop.f32.mrb[0].mxu0
        %v5662 = vpop.f32.mrb[0].mxu0
        %v5663 = vadd.f32 0.0, %v5662
        %v5664 = vpop.f32.mrb[0].mxu0
        %5665 = vmatprep.mubr.bf16.mxu0 0
        %5666 = vmatmul.mubr.bf16.gmra.mrb[0].mxu0 %v2773
        %v5667 = vpop.f32.mrb[0].mxu0
        %v5668 = vadd.f32 0.0, %v5667
        %v5669 = vpop.f32.mrb[0].mxu0
        %v5670 = vpop.f32.mrb[0].mxu0
        %v5671 = vadd.f32 0.0, %v5670
        %v5672 = vpop.f32.mrb[0].mxu0
        %5673 = vmatprep.mubr.bf16.mxu0 0
        %5674 = vmatmul.mubr.bf16.gmra.mrb[0].mxu0 %v2776
        %v5675 = vpop.f32.mrb[0].mxu0
        %v5676 = vadd.f32 0.0, %v5675
        %v5677 = vpop.f32.mrb[0].mxu0
        %v5678 = vpop.f32.mrb[0].mxu0
        %v5679 = vadd.f32 0.0, %v5678
        %v5680 = vpop.f32.mrb[0].mxu0
        %5681 = vmatprep.mubr.bf16.mxu0 0
        %5682 = vmatmul.mubr.bf16.gmra.mrb[0].mxu0 %v2779
        %v5683 = vpop.f32.mrb[0].mxu0
        %v5684 = vadd.f32 0.0, %v5683
        %v5685 = vpop.f32.mrb[0].mxu0
        %v5686 = vpop.f32.mrb[0].mxu0
        %v5687 = vadd.f32 0.0, %v5686
        %v5688 = vpop.f32.mrb[0].mxu0
        %5689 = vmatprep.mubr.bf16.mxu0 0
        %5690 = vmatmul.mubr.bf16.gmra.mrb[0].mxu0 %v2782
        %v5691 = vpop.f32.mrb[0].mxu0
        %v5692 = vadd.f32 0.0, %v5691
        %v5693 = vpop.f32.mrb[0].mxu0
        %v5694 = vpop.f32.mrb[0].mxu0
        %v5695 = vadd.f32 0.0, %v5694
        %v5696 = vpop.f32.mrb[0].mxu0
        %5697 = vmatprep.mubr.bf16.mxu0 0
        %5698 = vmatmul.mubr.bf16.gmra.mrb[0].mxu0 %v2785
        %v5699 = vpop.f32.mrb[0].mxu0
        %v5700 = vadd.f32 0.0, %v5699
        %v5701 = vpop.f32.mrb[0].mxu0
        %v5702 = vpop.f32.mrb[0].mxu0
        %v5703 = vadd.f32 0.0, %v5702
        %v5704 = vpop.f32.mrb[0].mxu0
        %5705 = vmatprep.mubr.bf16.mxu0 0
        %5706 = vmatmul.mubr.bf16.gmra.mrb[0].mxu0 %v2788
        %v5707 = vpop.f32.mrb[0].mxu0
        %v5708 = vadd.f32 0.0, %v5707
        %v5709 = vpop.f32.mrb[0].mxu0
        %v5710 = vpop.f32.mrb[0].mxu0
        %v5711 = vadd.f32 0.0, %v5710
        %v5712 = vpop.f32.mrb[0].mxu0
        %5713 = vmatprep.mubr.bf16.mxu0 0
        %5714 = vmatmul.mubr.bf16.gmra.mrb[0].mxu0 %v2791
        %v5715 = vpop.f32.mrb[0].mxu0
        %v5716 = vadd.f32 0.0, %v5715
        %v5717 = vpop.f32.mrb[0].mxu0
        %v5718 = vpop.f32.mrb[0].mxu0
        %v5719 = vadd.f32 0.0, %v5718
        %v5720 = vpop.f32.mrb[0].mxu0
        %5721 = vmatprep.mubr.bf16.mxu0 0
        %5722 = vmatmul.mubr.bf16.gmra.mrb[0].mxu0 %v2794
        %v5723 = vpop.f32.mrb[0].mxu0
        %v5724 = vadd.f32 0.0, %v5723
        %v5725 = vpop.f32.mrb[0].mxu0
        %v5726 = vpop.f32.mrb[0].mxu0
        %v5727 = vadd.f32 0.0, %v5726
        %v5728 = vpop.f32.mrb[0].mxu0
        %5729 = vmatprep.mubr.bf16.mxu0 0
        %5730 = vmatmul.mubr.bf16.gmra.mrb[0].mxu0 %v2797
        %v5731 = vpop.f32.mrb[0].mxu0
        %v5732 = vadd.f32 0.0, %v5731
        %v5733 = vpop.f32.mrb[0].mxu0
        %v5734 = vpop.f32.mrb[0].mxu0
        %v5735 = vadd.f32 0.0, %v5734
        %v5736 = vpop.f32.mrb[0].mxu0
        %5737 = vmatprep.mubr.bf16.mxu0 0
        %5738 = vmatmul.mubr.bf16.gmra.mrb[0].mxu0 %v2800
        %v5739 = vpop.f32.mrb[0].mxu0
        %v5740 = vadd.f32 0.0, %v5739
        %v5741 = vpop.f32.mrb[0].mxu0
        %v5742 = vpop.f32.mrb[0].mxu0
        %v5743 = vadd.f32 0.0, %v5742
        %v5744 = vpop.f32.mrb[0].mxu0
        %5745 = vmatprep.mubr.bf16.mxu0 0
        %5746 = vmatmul.mubr.bf16.gmra.mrb[0].mxu0 %v2803
        %v5747 = vpop.f32.mrb[0].mxu0
        %v5748 = vadd.f32 0.0, %v5747
        %v5749 = vpop.f32.mrb[0].mxu0
        %v5750 = vpop.f32.mrb[0].mxu0
        %v5751 = vadd.f32 0.0, %v5750
        %v5752 = vpop.f32.mrb[0].mxu0
        %5753 = vmatprep.mubr.bf16.mxu0 0
        %5754 = vmatmul.mubr.bf16.gmra.mrb[0].mxu0 %v2806
        %v5755 = vpop.f32.mrb[0].mxu0
        %v5756 = vadd.f32 0.0, %v5755
        %v5757 = vpop.f32.mrb[0].mxu0
        %v5758 = vpop.f32.mrb[0].mxu0
        %v5759 = vadd.f32 0.0, %v5758
        %v5760 = vpop.f32.mrb[0].mxu0
        %5761 = vmatprep.mubr.bf16.mxu0 0
        %5762 = vmatmul.mubr.bf16.gmra.mrb[0].mxu0 %v2809
        %v5763 = vpop.f32.mrb[0].mxu0
        %v5764 = vadd.f32 0.0, %v5763
        %v5765 = vpop.f32.mrb[0].mxu0
        %v5766 = vpop.f32.mrb[0].mxu0
        %v5767 = vadd.f32 0.0, %v5766
        %v5768 = vpop.f32.mrb[0].mxu0
        %5769 = vmatprep.mubr.bf16.mxu0 0
        %5770 = vmatmul.mubr.bf16.gmra.mrb[0].mxu0 %v2812
        %v5771 = vpop.f32.mrb[0].mxu0
        %v5772 = vadd.f32 0.0, %v5771
        %v5773 = vpop.f32.mrb[0].mxu0
        %v5774 = vpop.f32.mrb[0].mxu0
        %v5775 = vadd.f32 0.0, %v5774
        %v5776 = vpop.f32.mrb[0].mxu0
        %5777 = vmatprep.mubr.bf16.mxu0 0
        %5778 = vmatmul.mubr.bf16.gmra.mrb[0].mxu0 %v2815
        %v5779 = vpop.f32.mrb[0].mxu0
        %v5780 = vadd.f32 0.0, %v5779
        %v5781 = vpop.f32.mrb[0].mxu0
        %v5782 = vpop.f32.mrb[0].mxu0
        %v5783 = vadd.f32 0.0, %v5782
        %v5784 = vpop.f32.mrb[0].mxu0
        %5785 = vmatprep.mubr.bf16.mxu0 0
        %5786 = vmatmul.mubr.bf16.gmra.mrb[0].mxu0 %v2818
        %v5787 = vpop.f32.mrb[0].mxu0
        %v5788 = vadd.f32 0.0, %v5787
        %v5789 = vpop.f32.mrb[0].mxu0
        %v5790 = vpop.f32.mrb[0].mxu0
        %v5791 = vadd.f32 0.0, %v5790
        %v5792 = vpop.f32.mrb[0].mxu0
        %5793 = vmatprep.mubr.bf16.mxu0 0
        %5794 = vmatmul.mubr.bf16.gmra.mrb[0].mxu0 %v2821
        %v5795 = vpop.f32.mrb[0].mxu0
        %v5796 = vadd.f32 0.0, %v5795
        %v5797 = vpop.f32.mrb[0].mxu0
        %v5798 = vpop.f32.mrb[0].mxu0
        %v5799 = vadd.f32 0.0, %v5798
        %v5800 = vpop.f32.mrb[0].mxu0
        %5801 = vdwg.mxu0
        %v5803 = vand.u32 %v5609, %v2826
        %5805 = vmatprep.subr.bf16.mxu0 0
        %5806 = vmatpush1.bf16.msra.mxu0 %v5803
        %5807 = vmatprep.subr.bf16.mxu0 0
        %5808 = vmatpush1.bf16.msra.mxu0 0
        %5809 = vmatprep.subr.bf16.mxu0 0
        %5810 = vmatpush1.bf16.msra.mxu0 0
        %5811 = vmatprep.subr.bf16.mxu0 0
        %5812 = vmatpush1.bf16.msra.mxu0 0
        %5813 = vmatprep.subr.bf16.mxu0 0
        %5814 = vmatpush1.bf16.msra.mxu0 0
        %5815 = vmatprep.subr.bf16.mxu0 0
        %5816 = vmatpush1.bf16.msra.mxu0 0
        %5817 = vmatprep.subr.bf16.mxu0 0
        %5818 = vmatpush1.bf16.msra.mxu0 0
        %5819 = vmatprep.subr.bf16.mxu0 0
        %5820 = vmatpush1.bf16.msra.mxu0 0
        %5821 = vmatprep.subr.bf16.mxu0 0
        %5822 = vmatpush1.bf16.msra.mxu0 0
        %5823 = vmatprep.subr.bf16.mxu0 0
        %5824 = vmatpush1.bf16.msra.mxu0 0
        %5825 = vmatprep.subr.bf16.mxu0 0
        %5826 = vmatpush1.bf16.msra.mxu0 0
        %5827 = vmatprep.subr.bf16.mxu0 0
        %5828 = vmatpush1.bf16.msra.mxu0 0
        %5829 = vmatprep.subr.bf16.mxu0 0
        %5830 = vmatpush1.bf16.msra.mxu0 0
        %5831 = vmatprep.subr.bf16.mxu0 0
        %5832 = vmatpush1.bf16.msra.mxu0 0
        %5833 = vmatprep.subr.bf16.mxu0 0
        %5834 = vmatpush1.bf16.msra.mxu0 0
        %5835 = vmatprep.subr.bf16.mxu0 0
        %5836 = vmatpush1.bf16.msra.mxu0 0
        %5837 = vmatprep.mubr.bf16.mxu0 0
        %5838 = vmatmul.mubr.bf16.gmra.mrb[0].mxu0 %v3890
        %v5839 = vpop.f32.mrb[0].mxu0
        %v5840 = vadd.f32 %v5660, %v5839
        %v5841 = vpop.f32.mrb[0].mxu0
        %v5842 = vpop.f32.mrb[0].mxu0
        %v5843 = vadd.f32 %v5663, %v5842
        %v5844 = vpop.f32.mrb[0].mxu0
        %5845 = vmatprep.mubr.bf16.mxu0 0
        %5846 = vmatmul.mubr.bf16.gmra.mrb[0].mxu0 %v3893
        %v5847 = vpop.f32.mrb[0].mxu0
        %v5848 = vadd.f32 %v5668, %v5847
        %v5849 = vpop.f32.mrb[0].mxu0
        %v5850 = vpop.f32.mrb[0].mxu0
        %v5851 = vadd.f32 %v5671, %v5850
        %v5852 = vpop.f32.mrb[0].mxu0
        %5853 = vmatprep.mubr.bf16.mxu0 0
        %5854 = vmatmul.mubr.bf16.gmra.mrb[0].mxu0 %v3896
        %v5855 = vpop.f32.mrb[0].mxu0
        %v5856 = vadd.f32 %v5676, %v5855
        %v5857 = vpop.f32.mrb[0].mxu0
        %v5858 = vpop.f32.mrb[0].mxu0
        %v5859 = vadd.f32 %v5679, %v5858
        %v5860 = vpop.f32.mrb[0].mxu0
        %5861 = vmatprep.mubr.bf16.mxu0 0
        %5862 = vmatmul.mubr.bf16.gmra.mrb[0].mxu0 %v3899
        %v5863 = vpop.f32.mrb[0].mxu0
        %v5864 = vadd.f32 %v5684, %v5863
        %v5865 = vpop.f32.mrb[0].mxu0
        %v5866 = vpop.f32.mrb[0].mxu0
        %v5867 = vadd.f32 %v5687, %v5866
        %v5868 = vpop.f32.mrb[0].mxu0
        %5869 = vmatprep.mubr.bf16.mxu0 0
        %5870 = vmatmul.mubr.bf16.gmra.mrb[0].mxu0 %v3902
        %v5871 = vpop.f32.mrb[0].mxu0
        %v5872 = vadd.f32 %v5692, %v5871
        %v5873 = vpop.f32.mrb[0].mxu0
        %v5874 = vpop.f32.mrb[0].mxu0
        %v5875 = vadd.f32 %v5695, %v5874
        %v5876 = vpop.f32.mrb[0].mxu0
        %5877 = vmatprep.mubr.bf16.mxu0 0
        %5878 = vmatmul.mubr.bf16.gmra.mrb[0].mxu0 %v3905
        %v5879 = vpop.f32.mrb[0].mxu0
        %v5880 = vadd.f32 %v5700, %v5879
        %v5881 = vpop.f32.mrb[0].mxu0
        %v5882 = vpop.f32.mrb[0].mxu0
        %v5883 = vadd.f32 %v5703, %v5882
        %v5884 = vpop.f32.mrb[0].mxu0
        %5885 = vmatprep.mubr.bf16.mxu0 0
        %5886 = vmatmul.mubr.bf16.gmra.mrb[0].mxu0 %v3908
        %v5887 = vpop.f32.mrb[0].mxu0
        %v5888 = vadd.f32 %v5708, %v5887
        %v5889 = vpop.f32.mrb[0].mxu0
        %v5890 = vpop.f32.mrb[0].mxu0
        %v5891 = vadd.f32 %v5711, %v5890
        %v5892 = vpop.f32.mrb[0].mxu0
        %5893 = vmatprep.mubr.bf16.mxu0 0
        %5894 = vmatmul.mubr.bf16.gmra.mrb[0].mxu0 %v3911
        %v5895 = vpop.f32.mrb[0].mxu0
        %v5896 = vadd.f32 %v5716, %v5895
        %v5897 = vpop.f32.mrb[0].mxu0
        %v5898 = vpop.f32.mrb[0].mxu0
        %v5899 = vadd.f32 %v5719, %v5898
        %v5900 = vpop.f32.mrb[0].mxu0
        %5901 = vmatprep.mubr.bf16.mxu0 0
        %5902 = vmatmul.mubr.bf16.gmra.mrb[0].mxu0 %v3914
        %v5903 = vpop.f32.mrb[0].mxu0
        %v5904 = vadd.f32 %v5724, %v5903
        %v5905 = vpop.f32.mrb[0].mxu0
        %v5906 = vpop.f32.mrb[0].mxu0
        %v5907 = vadd.f32 %v5727, %v5906
        %v5908 = vpop.f32.mrb[0].mxu0
        %5909 = vmatprep.mubr.bf16.mxu0 0
        %5910 = vmatmul.mubr.bf16.gmra.mrb[0].mxu0 %v3917
        %v5911 = vpop.f32.mrb[0].mxu0
        %v5912 = vadd.f32 %v5732, %v5911
        %v5913 = vpop.f32.mrb[0].mxu0
        %v5914 = vpop.f32.mrb[0].mxu0
        %v5915 = vadd.f32 %v5735, %v5914
        %v5916 = vpop.f32.mrb[0].mxu0
        %5917 = vmatprep.mubr.bf16.mxu0 0
        %5918 = vmatmul.mubr.bf16.gmra.mrb[0].mxu0 %v3920
        %v5919 = vpop.f32.mrb[0].mxu0
        %v5920 = vadd.f32 %v5740, %v5919
        %v5921 = vpop.f32.mrb[0].mxu0
        %v5922 = vpop.f32.mrb[0].mxu0
        %v5923 = vadd.f32 %v5743, %v5922
        %v5924 = vpop.f32.mrb[0].mxu0
        %5925 = vmatprep.mubr.bf16.mxu0 0
        %5926 = vmatmul.mubr.bf16.gmra.mrb[0].mxu0 %v3923
        %v5927 = vpop.f32.mrb[0].mxu0
        %v5928 = vadd.f32 %v5748, %v5927
        %v5929 = vpop.f32.mrb[0].mxu0
        %v5930 = vpop.f32.mrb[0].mxu0
        %v5931 = vadd.f32 %v5751, %v5930
        %v5932 = vpop.f32.mrb[0].mxu0
        %5933 = vmatprep.mubr.bf16.mxu0 0
        %5934 = vmatmul.mubr.bf16.gmra.mrb[0].mxu0 %v3926
        %v5935 = vpop.f32.mrb[0].mxu0
        %v5936 = vadd.f32 %v5756, %v5935
        %v5937 = vpop.f32.mrb[0].mxu0
        %v5938 = vpop.f32.mrb[0].mxu0
        %v5939 = vadd.f32 %v5759, %v5938
        %v5940 = vpop.f32.mrb[0].mxu0
        %5941 = vmatprep.mubr.bf16.mxu0 0
        %5942 = vmatmul.mubr.bf16.gmra.mrb[0].mxu0 %v3929
        %v5943 = vpop.f32.mrb[0].mxu0
        %v5944 = vadd.f32 %v5764, %v5943
        %v5945 = vpop.f32.mrb[0].mxu0
        %v5946 = vpop.f32.mrb[0].mxu0
        %v5947 = vadd.f32 %v5767, %v5946
        %v5948 = vpop.f32.mrb[0].mxu0
        %5949 = vmatprep.mubr.bf16.mxu0 0
        %5950 = vmatmul.mubr.bf16.gmra.mrb[0].mxu0 %v3932
        %v5951 = vpop.f32.mrb[0].mxu0
        %v5952 = vadd.f32 %v5772, %v5951
        %v5953 = vpop.f32.mrb[0].mxu0
        %v5954 = vpop.f32.mrb[0].mxu0
        %v5955 = vadd.f32 %v5775, %v5954
        %v5956 = vpop.f32.mrb[0].mxu0
        %5957 = vmatprep.mubr.bf16.mxu0 0
        %5958 = vmatmul.mubr.bf16.gmra.mrb[0].mxu0 %v3935
        %v5959 = vpop.f32.mrb[0].mxu0
        %v5960 = vadd.f32 %v5780, %v5959
        %v5961 = vpop.f32.mrb[0].mxu0
        %v5962 = vpop.f32.mrb[0].mxu0
        %v5963 = vadd.f32 %v5783, %v5962
        %v5964 = vpop.f32.mrb[0].mxu0
        %5965 = vmatprep.mubr.bf16.mxu0 0
        %5966 = vmatmul.mubr.bf16.gmra.mrb[0].mxu0 %v3938
        %v5967 = vpop.f32.mrb[0].mxu0
        %v5968 = vadd.f32 %v5788, %v5967
        %v5969 = vpop.f32.mrb[0].mxu0
        %v5970 = vpop.f32.mrb[0].mxu0
        %v5971 = vadd.f32 %v5791, %v5970
        %v5972 = vpop.f32.mrb[0].mxu0
        %5973 = vmatprep.mubr.bf16.mxu0 0
        %5974 = vmatmul.mubr.bf16.gmra.mrb[0].mxu0 %v3941
        %v5975 = vpop.f32.mrb[0].mxu0
        %v5976 = vadd.f32 %v5796, %v5975
        %v5977 = vpop.f32.mrb[0].mxu0
        %v5978 = vpop.f32.mrb[0].mxu0
        %v5979 = vadd.f32 %v5799, %v5978
        %v5980 = vpop.f32.mrb[0].mxu0
        %5981 = vdwg.mxu0
        %v5983 = vunpack.c.l.b16 %v5610
        %v5984 = vpack.c.b16 %v5983, %v5612
        %v5985 = vrot.slane %v5984, 3
        %v5987 = vand.u32 %v5985, %v2826
        %5989 = vmatprep.subr.bf16.mxu0 0
        %5990 = vmatpush1.bf16.msra.mxu0 %v5987
        %5991 = vmatprep.subr.bf16.mxu0 0
        %5992 = vmatpush1.bf16.msra.mxu0 0
        %5993 = vmatprep.subr.bf16.mxu0 0
        %5994 = vmatpush1.bf16.msra.mxu0 0
        %5995 = vmatprep.subr.bf16.mxu0 0
        %5996 = vmatpush1.bf16.msra.mxu0 0
        %5997 = vmatprep.subr.bf16.mxu0 0
        %5998 = vmatpush1.bf16.msra.mxu0 0
        %5999 = vmatprep.subr.bf16.mxu0 0
        %6000 = vmatpush1.bf16.msra.mxu0 0
        %6001 = vmatprep.subr.bf16.mxu0 0
        %6002 = vmatpush1.bf16.msra.mxu0 0
        %6003 = vmatprep.subr.bf16.mxu0 0
        %6004 = vmatpush1.bf16.msra.mxu0 0
        %6005 = vmatprep.subr.bf16.mxu0 0
        %6006 = vmatpush1.bf16.msra.mxu0 0
        %6007 = vmatprep.subr.bf16.mxu0 0
        %6008 = vmatpush1.bf16.msra.mxu0 0
        %6009 = vmatprep.subr.bf16.mxu0 0
        %6010 = vmatpush1.bf16.msra.mxu0 0
        %6011 = vmatprep.subr.bf16.mxu0 0
        %6012 = vmatpush1.bf16.msra.mxu0 0
        %6013 = vmatprep.subr.bf16.mxu0 0
        %6014 = vmatpush1.bf16.msra.mxu0 0
        %6015 = vmatprep.subr.bf16.mxu0 0
        %6016 = vmatpush1.bf16.msra.mxu0 0
        %6017 = vmatprep.subr.bf16.mxu0 0
        %6018 = vmatpush1.bf16.msra.mxu0 0
        %6019 = vmatprep.subr.bf16.mxu0 0
        %6020 = vmatpush1.bf16.msra.mxu0 0
        %6021 = vmatprep.mubr.bf16.mxu0 0
        %6022 = vmatmul.mubr.bf16.gmra.mrb[0].mxu0 %v4571
        %v6023 = vpop.f32.mrb[0].mxu0
        %v6024 = vadd.f32 0.0, %v6023
        %v6025 = vpop.f32.mrb[0].mxu0
        %v6026 = vpop.f32.mrb[0].mxu0
        %v6027 = vadd.f32 0.0, %v6026
        %v6028 = vpop.f32.mrb[0].mxu0
        %6029 = vmatprep.mubr.bf16.mxu0 0
        %6030 = vmatmul.mubr.bf16.gmra.mrb[0].mxu0 %v4574
        %v6031 = vpop.f32.mrb[0].mxu0
        %v6032 = vadd.f32 0.0, %v6031
        %v6033 = vpop.f32.mrb[0].mxu0
        %v6034 = vpop.f32.mrb[0].mxu0
        %v6035 = vadd.f32 0.0, %v6034
        %v6036 = vpop.f32.mrb[0].mxu0
        %6037 = vmatprep.mubr.bf16.mxu0 0
        %6038 = vmatmul.mubr.bf16.gmra.mrb[0].mxu0 %v4577
        %v6039 = vpop.f32.mrb[0].mxu0
        %v6040 = vadd.f32 0.0, %v6039
        %v6041 = vpop.f32.mrb[0].mxu0
        %v6042 = vpop.f32.mrb[0].mxu0
        %v6043 = vadd.f32 0.0, %v6042
        %v6044 = vpop.f32.mrb[0].mxu0
        %6045 = vmatprep.mubr.bf16.mxu0 0
        %6046 = vmatmul.mubr.bf16.gmra.mrb[0].mxu0 %v4580
        %v6047 = vpop.f32.mrb[0].mxu0
        %v6048 = vadd.f32 0.0, %v6047
        %v6049 = vpop.f32.mrb[0].mxu0
        %v6050 = vpop.f32.mrb[0].mxu0
        %v6051 = vadd.f32 0.0, %v6050
        %v6052 = vpop.f32.mrb[0].mxu0
        %6053 = vmatprep.mubr.bf16.mxu0 0
        %6054 = vmatmul.mubr.bf16.gmra.mrb[0].mxu0 %v4583
        %v6055 = vpop.f32.mrb[0].mxu0
        %v6056 = vadd.f32 0.0, %v6055
        %v6057 = vpop.f32.mrb[0].mxu0
        %v6058 = vpop.f32.mrb[0].mxu0
        %v6059 = vadd.f32 0.0, %v6058
        %v6060 = vpop.f32.mrb[0].mxu0
        %6061 = vmatprep.mubr.bf16.mxu0 0
        %6062 = vmatmul.mubr.bf16.gmra.mrb[0].mxu0 %v4586
        %v6063 = vpop.f32.mrb[0].mxu0
        %v6064 = vadd.f32 0.0, %v6063
        %v6065 = vpop.f32.mrb[0].mxu0
        %v6066 = vpop.f32.mrb[0].mxu0
        %v6067 = vadd.f32 0.0, %v6066
        %v6068 = vpop.f32.mrb[0].mxu0
        %6069 = vmatprep.mubr.bf16.mxu0 0
        %6070 = vmatmul.mubr.bf16.gmra.mrb[0].mxu0 %v4589
        %v6071 = vpop.f32.mrb[0].mxu0
        %v6072 = vadd.f32 0.0, %v6071
        %v6073 = vpop.f32.mrb[0].mxu0
        %v6074 = vpop.f32.mrb[0].mxu0
        %v6075 = vadd.f32 0.0, %v6074
        %v6076 = vpop.f32.mrb[0].mxu0
        %6077 = vmatprep.mubr.bf16.mxu0 0
        %6078 = vmatmul.mubr.bf16.gmra.mrb[0].mxu0 %v4592
        %v6079 = vpop.f32.mrb[0].mxu0
        %v6080 = vadd.f32 0.0, %v6079
        %v6081 = vpop.f32.mrb[0].mxu0
        %v6082 = vpop.f32.mrb[0].mxu0
        %v6083 = vadd.f32 0.0, %v6082
        %v6084 = vpop.f32.mrb[0].mxu0
        %6085 = vmatprep.mubr.bf16.mxu0 0
        %6086 = vmatmul.mubr.bf16.gmra.mrb[0].mxu0 %v4595
        %v6087 = vpop.f32.mrb[0].mxu0
        %v6088 = vadd.f32 0.0, %v6087
        %v6089 = vpop.f32.mrb[0].mxu0
        %v6090 = vpop.f32.mrb[0].mxu0
        %v6091 = vadd.f32 0.0, %v6090
        %v6092 = vpop.f32.mrb[0].mxu0
        %6093 = vmatprep.mubr.bf16.mxu0 0
        %6094 = vmatmul.mubr.bf16.gmra.mrb[0].mxu0 %v4598
        %v6095 = vpop.f32.mrb[0].mxu0
        %v6096 = vadd.f32 0.0, %v6095
        %v6097 = vpop.f32.mrb[0].mxu0
        %v6098 = vpop.f32.mrb[0].mxu0
        %v6099 = vadd.f32 0.0, %v6098
        %v6100 = vpop.f32.mrb[0].mxu0
        %6101 = vmatprep.mubr.bf16.mxu0 0
        %6102 = vmatmul.mubr.bf16.gmra.mrb[0].mxu0 %v4601
        %v6103 = vpop.f32.mrb[0].mxu0
        %v6104 = vadd.f32 0.0, %v6103
        %v6105 = vpop.f32.mrb[0].mxu0
        %v6106 = vpop.f32.mrb[0].mxu0
        %v6107 = vadd.f32 0.0, %v6106
        %v6108 = vpop.f32.mrb[0].mxu0
        %6109 = vmatprep.mubr.bf16.mxu0 0
        %6110 = vmatmul.mubr.bf16.gmra.mrb[0].mxu0 %v4604
        %v6111 = vpop.f32.mrb[0].mxu0
        %v6112 = vadd.f32 0.0, %v6111
        %v6113 = vpop.f32.mrb[0].mxu0
        %v6114 = vpop.f32.mrb[0].mxu0
        %v6115 = vadd.f32 0.0, %v6114
        %v6116 = vpop.f32.mrb[0].mxu0
        %6117 = vmatprep.mubr.bf16.mxu0 0
        %6118 = vmatmul.mubr.bf16.gmra.mrb[0].mxu0 %v4607
        %v6119 = vpop.f32.mrb[0].mxu0
        %v6120 = vadd.f32 0.0, %v6119
        %v6121 = vpop.f32.mrb[0].mxu0
        %v6122 = vpop.f32.mrb[0].mxu0
        %v6123 = vadd.f32 0.0, %v6122
        %v6124 = vpop.f32.mrb[0].mxu0
        %6125 = vmatprep.mubr.bf16.mxu0 0
        %6126 = vmatmul.mubr.bf16.gmra.mrb[0].mxu0 %v4610
        %v6127 = vpop.f32.mrb[0].mxu0
        %v6128 = vadd.f32 0.0, %v6127
        %v6129 = vpop.f32.mrb[0].mxu0
        %v6130 = vpop.f32.mrb[0].mxu0
        %v6131 = vadd.f32 0.0, %v6130
        %v6132 = vpop.f32.mrb[0].mxu0
        %6133 = vmatprep.mubr.bf16.mxu0 0
        %6134 = vmatmul.mubr.bf16.gmra.mrb[0].mxu0 %v4613
        %v6135 = vpop.f32.mrb[0].mxu0
        %v6136 = vadd.f32 0.0, %v6135
        %v6137 = vpop.f32.mrb[0].mxu0
        %v6138 = vpop.f32.mrb[0].mxu0
        %v6139 = vadd.f32 0.0, %v6138
        %v6140 = vpop.f32.mrb[0].mxu0
        %6141 = vmatprep.mubr.bf16.mxu0 0
        %6142 = vmatmul.mubr.bf16.gmra.mrb[0].mxu0 %v4616
        %v6143 = vpop.f32.mrb[0].mxu0
        %v6144 = vadd.f32 0.0, %v6143
        %v6145 = vpop.f32.mrb[0].mxu0
        %v6146 = vpop.f32.mrb[0].mxu0
        %v6147 = vadd.f32 0.0, %v6146
        %v6148 = vpop.f32.mrb[0].mxu0
        %6149 = vmatprep.mubr.bf16.mxu0 0
        %6150 = vmatmul.mubr.bf16.gmra.mrb[0].mxu0 %v4619
        %v6151 = vpop.f32.mrb[0].mxu0
        %v6152 = vadd.f32 0.0, %v6151
        %v6153 = vpop.f32.mrb[0].mxu0
        %v6154 = vpop.f32.mrb[0].mxu0
        %v6155 = vadd.f32 0.0, %v6154
        %v6156 = vpop.f32.mrb[0].mxu0
        %6157 = vmatprep.mubr.bf16.mxu0 0
        %6158 = vmatmul.mubr.bf16.gmra.mrb[0].mxu0 %v4622
        %v6159 = vpop.f32.mrb[0].mxu0
        %v6160 = vadd.f32 0.0, %v6159
        %v6161 = vpop.f32.mrb[0].mxu0
        %v6162 = vpop.f32.mrb[0].mxu0
        %v6163 = vadd.f32 0.0, %v6162
        %v6164 = vpop.f32.mrb[0].mxu0
        %6165 = vdwg.mxu0
        %v6166 = vadd.f32 %v5840, %v6024
        %v6167 = vadd.f32 %v5843, %v6027
        %v6168 = vadd.f32 %v5848, %v6032
        %v6169 = vadd.f32 %v5851, %v6035
        %v6170 = vadd.f32 %v5856, %v6040
        %v6171 = vadd.f32 %v5859, %v6043
        %v6172 = vadd.f32 %v5864, %v6048
        %v6173 = vadd.f32 %v5867, %v6051
        %v6174 = vadd.f32 %v5872, %v6056
        %v6175 = vadd.f32 %v5875, %v6059
        %v6176 = vadd.f32 %v5880, %v6064
        %v6177 = vadd.f32 %v5883, %v6067
        %v6178 = vadd.f32 %v5888, %v6072
        %v6179 = vadd.f32 %v5891, %v6075
        %v6180 = vadd.f32 %v5896, %v6080
        %v6181 = vadd.f32 %v5899, %v6083
        %v6182 = vadd.f32 %v5904, %v6088
        %v6183 = vadd.f32 %v5907, %v6091
        %v6184 = vadd.f32 %v5912, %v6096
        %v6185 = vadd.f32 %v5915, %v6099
        %v6186 = vadd.f32 %v5920, %v6104
        %v6187 = vadd.f32 %v5923, %v6107
        %v6188 = vadd.f32 %v5928, %v6112
        %v6189 = vadd.f32 %v5931, %v6115
        %v6190 = vadd.f32 %v5936, %v6120
        %v6191 = vadd.f32 %v5939, %v6123
        %v6192 = vadd.f32 %v5944, %v6128
        %v6193 = vadd.f32 %v5947, %v6131
        %v6194 = vadd.f32 %v5952, %v6136
        %v6195 = vadd.f32 %v5955, %v6139
        %v6196 = vadd.f32 %v5960, %v6144
        %v6197 = vadd.f32 %v5963, %v6147
        %v6198 = vadd.f32 %v5968, %v6152
        %v6199 = vadd.f32 %v5971, %v6155
        %v6200 = vadd.f32 %v5976, %v6160
        %v6201 = vadd.f32 %v5979, %v6163
        %v6238 = vcombine.high %v6166, %v6166
        %v6240 = vunpack.c.l.s4 1983009808
        %v6241 = vunpack.c.0.s8 %v6240
        %v6242 = vlaneseq
        %v6243 = vshrl.u32 %v6242, 7
        %v6244 = vsub.s32 %v6241, %v6243
        %v6245 = vrot.slane %v6166, %v6244
        %v6247 = vunpack.c.l.s4 1983009808
        %v6248 = vunpack.c.0.s8 %v6247
        %v6249 = vlaneseq
        %v6250 = vshrl.u32 %v6249, 7
        %v6251 = vsub.s32 %v6248, %v6250
        %v6252 = vrot.slane %v6238, %v6251
        %v6253 = vcombine.high %v6245, %v6245
        %v6254 = vcombine.high %v6252, %v6252
        %v6255 = vcombine.high %v6167, %v6167
        %v6257 = vunpack.c.l.s4 1983009808
        %v6258 = vunpack.c.0.s8 %v6257
        %v6259 = vlaneseq
        %v6260 = vshrl.u32 %v6259, 7
        %v6261 = vsub.s32 %v6258, %v6260
        %v6262 = vrot.slane %v6167, %v6261
        %v6264 = vunpack.c.l.s4 1983009808
        %v6265 = vunpack.c.0.s8 %v6264
        %v6266 = vlaneseq
        %v6267 = vshrl.u32 %v6266, 7
        %v6268 = vsub.s32 %v6265, %v6267
        %v6269 = vrot.slane %v6255, %v6268
        %v6270 = vcombine.high %v6262, %v6262
        %v6271 = vcombine.high %v6269, %v6269
        %v6272 = vcombine.high %v6168, %v6168
        %v6274 = vunpack.c.l.s4 1983009808
        %v6275 = vunpack.c.0.s8 %v6274
        %v6276 = vlaneseq
        %v6277 = vshrl.u32 %v6276, 7
        %v6278 = vsub.s32 %v6275, %v6277
        %v6279 = vrot.slane %v6168, %v6278
        %v6281 = vunpack.c.l.s4 1983009808
        %v6282 = vunpack.c.0.s8 %v6281
        %v6283 = vlaneseq
        %v6284 = vshrl.u32 %v6283, 7
        %v6285 = vsub.s32 %v6282, %v6284
        %v6286 = vrot.slane %v6272, %v6285
        %v6287 = vcombine.high %v6279, %v6279
        %v6288 = vcombine.high %v6286, %v6286
        %v6289 = vcombine.high %v6169, %v6169
        %v6291 = vunpack.c.l.s4 1983009808
        %v6292 = vunpack.c.0.s8 %v6291
        %v6293 = vlaneseq
        %v6294 = vshrl.u32 %v6293, 7
        %v6295 = vsub.s32 %v6292, %v6294
        %v6296 = vrot.slane %v6169, %v6295
        %v6298 = vunpack.c.l.s4 1983009808
        %v6299 = vunpack.c.0.s8 %v6298
        %v6300 = vlaneseq
        %v6301 = vshrl.u32 %v6300, 7
        %v6302 = vsub.s32 %v6299, %v6301
        %v6303 = vrot.slane %v6289, %v6302
        %v6304 = vcombine.high %v6296, %v6296
        %v6305 = vcombine.high %v6303, %v6303
        %v6306 = vcombine.high %v6170, %v6170
        %v6308 = vunpack.c.l.s4 1983009808
        %v6309 = vunpack.c.0.s8 %v6308
        %v6310 = vlaneseq
        %v6311 = vshrl.u32 %v6310, 7
        %v6312 = vsub.s32 %v6309, %v6311
        %v6313 = vrot.slane %v6170, %v6312
        %v6315 = vunpack.c.l.s4 1983009808
        %v6316 = vunpack.c.0.s8 %v6315
        %v6317 = vlaneseq
        %v6318 = vshrl.u32 %v6317, 7
        %v6319 = vsub.s32 %v6316, %v6318
        %v6320 = vrot.slane %v6306, %v6319
        %v6321 = vcombine.high %v6313, %v6313
        %v6322 = vcombine.high %v6320, %v6320
        %v6323 = vcombine.high %v6171, %v6171
        %v6325 = vunpack.c.l.s4 1983009808
        %v6326 = vunpack.c.0.s8 %v6325
        %v6327 = vlaneseq
        %v6328 = vshrl.u32 %v6327, 7
        %v6329 = vsub.s32 %v6326, %v6328
        %v6330 = vrot.slane %v6171, %v6329
        %v6332 = vunpack.c.l.s4 1983009808
        %v6333 = vunpack.c.0.s8 %v6332
        %v6334 = vlaneseq
        %v6335 = vshrl.u32 %v6334, 7
        %v6336 = vsub.s32 %v6333, %v6335
        %v6337 = vrot.slane %v6323, %v6336
        %v6338 = vcombine.high %v6330, %v6330
        %v6339 = vcombine.high %v6337, %v6337
        %v6340 = vcombine.high %v6172, %v6172
        %v6342 = vunpack.c.l.s4 1983009808
        %v6343 = vunpack.c.0.s8 %v6342
        %v6344 = vlaneseq
        %v6345 = vshrl.u32 %v6344, 7
        %v6346 = vsub.s32 %v6343, %v6345
        %v6347 = vrot.slane %v6172, %v6346
        %v6349 = vunpack.c.l.s4 1983009808
        %v6350 = vunpack.c.0.s8 %v6349
        %v6351 = vlaneseq
        %v6352 = vshrl.u32 %v6351, 7
        %v6353 = vsub.s32 %v6350, %v6352
        %v6354 = vrot.slane %v6340, %v6353
        %v6355 = vcombine.high %v6347, %v6347
        %v6356 = vcombine.high %v6354, %v6354
        %v6357 = vcombine.high %v6173, %v6173
        %v6359 = vunpack.c.l.s4 1983009808
        %v6360 = vunpack.c.0.s8 %v6359
        %v6361 = vlaneseq
        %v6362 = vshrl.u32 %v6361, 7
        %v6363 = vsub.s32 %v6360, %v6362
        %v6364 = vrot.slane %v6173, %v6363
        %v6366 = vunpack.c.l.s4 1983009808
        %v6367 = vunpack.c.0.s8 %v6366
        %v6368 = vlaneseq
        %v6369 = vshrl.u32 %v6368, 7
        %v6370 = vsub.s32 %v6367, %v6369
        %v6371 = vrot.slane %v6357, %v6370
        %v6372 = vcombine.high %v6364, %v6364
        %v6373 = vcombine.high %v6371, %v6371
        %v6374 = vcombine.high %v6174, %v6174
        %v6376 = vunpack.c.l.s4 1983009808
        %v6377 = vunpack.c.0.s8 %v6376
        %v6378 = vlaneseq
        %v6379 = vshrl.u32 %v6378, 7
        %v6380 = vsub.s32 %v6377, %v6379
        %v6381 = vrot.slane %v6174, %v6380
        %v6383 = vunpack.c.l.s4 1983009808
        %v6384 = vunpack.c.0.s8 %v6383
        %v6385 = vlaneseq
        %v6386 = vshrl.u32 %v6385, 7
        %v6387 = vsub.s32 %v6384, %v6386
        %v6388 = vrot.slane %v6374, %v6387
        %v6389 = vcombine.high %v6381, %v6381
        %v6390 = vcombine.high %v6388, %v6388
        %v6391 = vcombine.high %v6175, %v6175
        %v6393 = vunpack.c.l.s4 1983009808
        %v6394 = vunpack.c.0.s8 %v6393
        %v6395 = vlaneseq
        %v6396 = vshrl.u32 %v6395, 7
        %v6397 = vsub.s32 %v6394, %v6396
        %v6398 = vrot.slane %v6175, %v6397
        %v6400 = vunpack.c.l.s4 1983009808
        %v6401 = vunpack.c.0.s8 %v6400
        %v6402 = vlaneseq
        %v6403 = vshrl.u32 %v6402, 7
        %v6404 = vsub.s32 %v6401, %v6403
        %v6405 = vrot.slane %v6391, %v6404
        %v6406 = vcombine.high %v6398, %v6398
        %v6407 = vcombine.high %v6405, %v6405
        %v6408 = vcombine.high %v6176, %v6176
        %v6410 = vunpack.c.l.s4 1983009808
        %v6411 = vunpack.c.0.s8 %v6410
        %v6412 = vlaneseq
        %v6413 = vshrl.u32 %v6412, 7
        %v6414 = vsub.s32 %v6411, %v6413
        %v6415 = vrot.slane %v6176, %v6414
        %v6417 = vunpack.c.l.s4 1983009808
        %v6418 = vunpack.c.0.s8 %v6417
        %v6419 = vlaneseq
        %v6420 = vshrl.u32 %v6419, 7
        %v6421 = vsub.s32 %v6418, %v6420
        %v6422 = vrot.slane %v6408, %v6421
        %v6423 = vcombine.high %v6415, %v6415
        %v6424 = vcombine.high %v6422, %v6422
        %v6425 = vcombine.high %v6177, %v6177
        %v6427 = vunpack.c.l.s4 1983009808
        %v6428 = vunpack.c.0.s8 %v6427
        %v6429 = vlaneseq
        %v6430 = vshrl.u32 %v6429, 7
        %v6431 = vsub.s32 %v6428, %v6430
        %v6432 = vrot.slane %v6177, %v6431
        %v6434 = vunpack.c.l.s4 1983009808
        %v6435 = vunpack.c.0.s8 %v6434
        %v6436 = vlaneseq
        %v6437 = vshrl.u32 %v6436, 7
        %v6438 = vsub.s32 %v6435, %v6437
        %v6439 = vrot.slane %v6425, %v6438
        %v6440 = vcombine.high %v6432, %v6432
        %v6441 = vcombine.high %v6439, %v6439
        %v6442 = vcombine.high %v6178, %v6178
        %v6444 = vunpack.c.l.s4 1983009808
        %v6445 = vunpack.c.0.s8 %v6444
        %v6446 = vlaneseq
        %v6447 = vshrl.u32 %v6446, 7
        %v6448 = vsub.s32 %v6445, %v6447
        %v6449 = vrot.slane %v6178, %v6448
        %v6451 = vunpack.c.l.s4 1983009808
        %v6452 = vunpack.c.0.s8 %v6451
        %v6453 = vlaneseq
        %v6454 = vshrl.u32 %v6453, 7
        %v6455 = vsub.s32 %v6452, %v6454
        %v6456 = vrot.slane %v6442, %v6455
        %v6457 = vcombine.high %v6449, %v6449
        %v6458 = vcombine.high %v6456, %v6456
        %v6459 = vcombine.high %v6179, %v6179
        %v6461 = vunpack.c.l.s4 1983009808
        %v6462 = vunpack.c.0.s8 %v6461
        %v6463 = vlaneseq
        %v6464 = vshrl.u32 %v6463, 7
        %v6465 = vsub.s32 %v6462, %v6464
        %v6466 = vrot.slane %v6179, %v6465
        %v6468 = vunpack.c.l.s4 1983009808
        %v6469 = vunpack.c.0.s8 %v6468
        %v6470 = vlaneseq
        %v6471 = vshrl.u32 %v6470, 7
        %v6472 = vsub.s32 %v6469, %v6471
        %v6473 = vrot.slane %v6459, %v6472
        %v6474 = vcombine.high %v6466, %v6466
        %v6475 = vcombine.high %v6473, %v6473
        %v6476 = vcombine.high %v6180, %v6180
        %v6478 = vunpack.c.l.s4 1983009808
        %v6479 = vunpack.c.0.s8 %v6478
        %v6480 = vlaneseq
        %v6481 = vshrl.u32 %v6480, 7
        %v6482 = vsub.s32 %v6479, %v6481
        %v6483 = vrot.slane %v6180, %v6482
        %v6485 = vunpack.c.l.s4 1983009808
        %v6486 = vunpack.c.0.s8 %v6485
        %v6487 = vlaneseq
        %v6488 = vshrl.u32 %v6487, 7
        %v6489 = vsub.s32 %v6486, %v6488
        %v6490 = vrot.slane %v6476, %v6489
        %v6491 = vcombine.high %v6483, %v6483
        %v6492 = vcombine.high %v6490, %v6490
        %v6493 = vcombine.high %v6181, %v6181
        %v6495 = vunpack.c.l.s4 1983009808
        %v6496 = vunpack.c.0.s8 %v6495
        %v6497 = vlaneseq
        %v6498 = vshrl.u32 %v6497, 7
        %v6499 = vsub.s32 %v6496, %v6498
        %v6500 = vrot.slane %v6181, %v6499
        %v6502 = vunpack.c.l.s4 1983009808
        %v6503 = vunpack.c.0.s8 %v6502
        %v6504 = vlaneseq
        %v6505 = vshrl.u32 %v6504, 7
        %v6506 = vsub.s32 %v6503, %v6505
        %v6507 = vrot.slane %v6493, %v6506
        %v6508 = vcombine.high %v6500, %v6500
        %v6509 = vcombine.high %v6507, %v6507
        %v6510 = vcombine.high %v6182, %v6182
        %v6512 = vunpack.c.l.s4 1983009808
        %v6513 = vunpack.c.0.s8 %v6512
        %v6514 = vlaneseq
        %v6515 = vshrl.u32 %v6514, 7
        %v6516 = vsub.s32 %v6513, %v6515
        %v6517 = vrot.slane %v6182, %v6516
        %v6519 = vunpack.c.l.s4 1983009808
        %v6520 = vunpack.c.0.s8 %v6519
        %v6521 = vlaneseq
        %v6522 = vshrl.u32 %v6521, 7
        %v6523 = vsub.s32 %v6520, %v6522
        %v6524 = vrot.slane %v6510, %v6523
        %v6525 = vcombine.high %v6517, %v6517
        %v6526 = vcombine.high %v6524, %v6524
        %v6527 = vcombine.high %v6183, %v6183
        %v6529 = vunpack.c.l.s4 1983009808
        %v6530 = vunpack.c.0.s8 %v6529
        %v6531 = vlaneseq
        %v6532 = vshrl.u32 %v6531, 7
        %v6533 = vsub.s32 %v6530, %v6532
        %v6534 = vrot.slane %v6183, %v6533
        %v6536 = vunpack.c.l.s4 1983009808
        %v6537 = vunpack.c.0.s8 %v6536
        %v6538 = vlaneseq
        %v6539 = vshrl.u32 %v6538, 7
        %v6540 = vsub.s32 %v6537, %v6539
        %v6541 = vrot.slane %v6527, %v6540
        %v6542 = vcombine.high %v6534, %v6534
        %v6543 = vcombine.high %v6541, %v6541
        %v6544 = vcombine.high %v6184, %v6184
        %v6546 = vunpack.c.l.s4 1983009808
        %v6547 = vunpack.c.0.s8 %v6546
        %v6548 = vlaneseq
        %v6549 = vshrl.u32 %v6548, 7
        %v6550 = vsub.s32 %v6547, %v6549
        %v6551 = vrot.slane %v6184, %v6550
        %v6553 = vunpack.c.l.s4 1983009808
        %v6554 = vunpack.c.0.s8 %v6553
        %v6555 = vlaneseq
        %v6556 = vshrl.u32 %v6555, 7
        %v6557 = vsub.s32 %v6554, %v6556
        %v6558 = vrot.slane %v6544, %v6557
        %v6559 = vcombine.high %v6551, %v6551
        %v6560 = vcombine.high %v6558, %v6558
        %v6561 = vcombine.high %v6185, %v6185
        %v6563 = vunpack.c.l.s4 1983009808
        %v6564 = vunpack.c.0.s8 %v6563
        %v6565 = vlaneseq
        %v6566 = vshrl.u32 %v6565, 7
        %v6567 = vsub.s32 %v6564, %v6566
        %v6568 = vrot.slane %v6185, %v6567
        %v6570 = vunpack.c.l.s4 1983009808
        %v6571 = vunpack.c.0.s8 %v6570
        %v6572 = vlaneseq
        %v6573 = vshrl.u32 %v6572, 7
        %v6574 = vsub.s32 %v6571, %v6573
        %v6575 = vrot.slane %v6561, %v6574
        %v6576 = vcombine.high %v6568, %v6568
        %v6577 = vcombine.high %v6575, %v6575
        %v6578 = vcombine.high %v6186, %v6186
        %v6580 = vunpack.c.l.s4 1983009808
        %v6581 = vunpack.c.0.s8 %v6580
        %v6582 = vlaneseq
        %v6583 = vshrl.u32 %v6582, 7
        %v6584 = vsub.s32 %v6581, %v6583
        %v6585 = vrot.slane %v6186, %v6584
        %v6587 = vunpack.c.l.s4 1983009808
        %v6588 = vunpack.c.0.s8 %v6587
        %v6589 = vlaneseq
        %v6590 = vshrl.u32 %v6589, 7
        %v6591 = vsub.s32 %v6588, %v6590
        %v6592 = vrot.slane %v6578, %v6591
        %v6593 = vcombine.high %v6585, %v6585
        %v6594 = vcombine.high %v6592, %v6592
        %v6595 = vcombine.high %v6187, %v6187
        %v6597 = vunpack.c.l.s4 1983009808
        %v6598 = vunpack.c.0.s8 %v6597
        %v6599 = vlaneseq
        %v6600 = vshrl.u32 %v6599, 7
        %v6601 = vsub.s32 %v6598, %v6600
        %v6602 = vrot.slane %v6187, %v6601
        %v6604 = vunpack.c.l.s4 1983009808
        %v6605 = vunpack.c.0.s8 %v6604
        %v6606 = vlaneseq
        %v6607 = vshrl.u32 %v6606, 7
        %v6608 = vsub.s32 %v6605, %v6607
        %v6609 = vrot.slane %v6595, %v6608
        %v6610 = vcombine.high %v6602, %v6602
        %v6611 = vcombine.high %v6609, %v6609
        %v6612 = vcombine.high %v6188, %v6188
        %v6614 = vunpack.c.l.s4 1983009808
        %v6615 = vunpack.c.0.s8 %v6614
        %v6616 = vlaneseq
        %v6617 = vshrl.u32 %v6616, 7
        %v6618 = vsub.s32 %v6615, %v6617
        %v6619 = vrot.slane %v6188, %v6618
        %v6621 = vunpack.c.l.s4 1983009808
        %v6622 = vunpack.c.0.s8 %v6621
        %v6623 = vlaneseq
        %v6624 = vshrl.u32 %v6623, 7
        %v6625 = vsub.s32 %v6622, %v6624
        %v6626 = vrot.slane %v6612, %v6625
        %v6627 = vcombine.high %v6619, %v6619
        %v6628 = vcombine.high %v6626, %v6626
        %v6629 = vcombine.high %v6189, %v6189
        %v6631 = vunpack.c.l.s4 1983009808
        %v6632 = vunpack.c.0.s8 %v6631
        %v6633 = vlaneseq
        %v6634 = vshrl.u32 %v6633, 7
        %v6635 = vsub.s32 %v6632, %v6634
        %v6636 = vrot.slane %v6189, %v6635
        %v6638 = vunpack.c.l.s4 1983009808
        %v6639 = vunpack.c.0.s8 %v6638
        %v6640 = vlaneseq
        %v6641 = vshrl.u32 %v6640, 7
        %v6642 = vsub.s32 %v6639, %v6641
        %v6643 = vrot.slane %v6629, %v6642
        %v6644 = vcombine.high %v6636, %v6636
        %v6645 = vcombine.high %v6643, %v6643
        %v6646 = vcombine.high %v6190, %v6190
        %v6648 = vunpack.c.l.s4 1983009808
        %v6649 = vunpack.c.0.s8 %v6648
        %v6650 = vlaneseq
        %v6651 = vshrl.u32 %v6650, 7
        %v6652 = vsub.s32 %v6649, %v6651
        %v6653 = vrot.slane %v6190, %v6652
        %v6655 = vunpack.c.l.s4 1983009808
        %v6656 = vunpack.c.0.s8 %v6655
        %v6657 = vlaneseq
        %v6658 = vshrl.u32 %v6657, 7
        %v6659 = vsub.s32 %v6656, %v6658
        %v6660 = vrot.slane %v6646, %v6659
        %v6661 = vcombine.high %v6653, %v6653
        %v6662 = vcombine.high %v6660, %v6660
        %v6663 = vcombine.high %v6191, %v6191
        %v6665 = vunpack.c.l.s4 1983009808
        %v6666 = vunpack.c.0.s8 %v6665
        %v6667 = vlaneseq
        %v6668 = vshrl.u32 %v6667, 7
        %v6669 = vsub.s32 %v6666, %v6668
        %v6670 = vrot.slane %v6191, %v6669
        %v6672 = vunpack.c.l.s4 1983009808
        %v6673 = vunpack.c.0.s8 %v6672
        %v6674 = vlaneseq
        %v6675 = vshrl.u32 %v6674, 7
        %v6676 = vsub.s32 %v6673, %v6675
        %v6677 = vrot.slane %v6663, %v6676
        %v6678 = vcombine.high %v6670, %v6670
        %v6679 = vcombine.high %v6677, %v6677
        %v6680 = vcombine.high %v6192, %v6192
        %v6682 = vunpack.c.l.s4 1983009808
        %v6683 = vunpack.c.0.s8 %v6682
        %v6684 = vlaneseq
        %v6685 = vshrl.u32 %v6684, 7
        %v6686 = vsub.s32 %v6683, %v6685
        %v6687 = vrot.slane %v6192, %v6686
        %v6689 = vunpack.c.l.s4 1983009808
        %v6690 = vunpack.c.0.s8 %v6689
        %v6691 = vlaneseq
        %v6692 = vshrl.u32 %v6691, 7
        %v6693 = vsub.s32 %v6690, %v6692
        %v6694 = vrot.slane %v6680, %v6693
        %v6695 = vcombine.high %v6687, %v6687
        %v6696 = vcombine.high %v6694, %v6694
        %v6697 = vcombine.high %v6193, %v6193
        %v6699 = vunpack.c.l.s4 1983009808
        %v6700 = vunpack.c.0.s8 %v6699
        %v6701 = vlaneseq
        %v6702 = vshrl.u32 %v6701, 7
        %v6703 = vsub.s32 %v6700, %v6702
        %v6704 = vrot.slane %v6193, %v6703
        %v6706 = vunpack.c.l.s4 1983009808
        %v6707 = vunpack.c.0.s8 %v6706
        %v6708 = vlaneseq
        %v6709 = vshrl.u32 %v6708, 7
        %v6710 = vsub.s32 %v6707, %v6709
        %v6711 = vrot.slane %v6697, %v6710
        %v6712 = vcombine.high %v6704, %v6704
        %v6713 = vcombine.high %v6711, %v6711
        %v6714 = vcombine.high %v6194, %v6194
        %v6716 = vunpack.c.l.s4 1983009808
        %v6717 = vunpack.c.0.s8 %v6716
        %v6718 = vlaneseq
        %v6719 = vshrl.u32 %v6718, 7
        %v6720 = vsub.s32 %v6717, %v6719
        %v6721 = vrot.slane %v6194, %v6720
        %v6723 = vunpack.c.l.s4 1983009808
        %v6724 = vunpack.c.0.s8 %v6723
        %v6725 = vlaneseq
        %v6726 = vshrl.u32 %v6725, 7
        %v6727 = vsub.s32 %v6724, %v6726
        %v6728 = vrot.slane %v6714, %v6727
        %v6729 = vcombine.high %v6721, %v6721
        %v6730 = vcombine.high %v6728, %v6728
        %v6731 = vcombine.high %v6195, %v6195
        %v6733 = vunpack.c.l.s4 1983009808
        %v6734 = vunpack.c.0.s8 %v6733
        %v6735 = vlaneseq
        %v6736 = vshrl.u32 %v6735, 7
        %v6737 = vsub.s32 %v6734, %v6736
        %v6738 = vrot.slane %v6195, %v6737
        %v6740 = vunpack.c.l.s4 1983009808
        %v6741 = vunpack.c.0.s8 %v6740
        %v6742 = vlaneseq
        %v6743 = vshrl.u32 %v6742, 7
        %v6744 = vsub.s32 %v6741, %v6743
        %v6745 = vrot.slane %v6731, %v6744
        %v6746 = vcombine.high %v6738, %v6738
        %v6747 = vcombine.high %v6745, %v6745
        %v6748 = vcombine.high %v6196, %v6196
        %v6750 = vunpack.c.l.s4 1983009808
        %v6751 = vunpack.c.0.s8 %v6750
        %v6752 = vlaneseq
        %v6753 = vshrl.u32 %v6752, 7
        %v6754 = vsub.s32 %v6751, %v6753
        %v6755 = vrot.slane %v6196, %v6754
        %v6757 = vunpack.c.l.s4 1983009808
        %v6758 = vunpack.c.0.s8 %v6757
        %v6759 = vlaneseq
        %v6760 = vshrl.u32 %v6759, 7
        %v6761 = vsub.s32 %v6758, %v6760
        %v6762 = vrot.slane %v6748, %v6761
        %v6763 = vcombine.high %v6755, %v6755
        %v6764 = vcombine.high %v6762, %v6762
        %v6765 = vcombine.high %v6197, %v6197
        %v6767 = vunpack.c.l.s4 1983009808
        %v6768 = vunpack.c.0.s8 %v6767
        %v6769 = vlaneseq
        %v6770 = vshrl.u32 %v6769, 7
        %v6771 = vsub.s32 %v6768, %v6770
        %v6772 = vrot.slane %v6197, %v6771
        %v6774 = vunpack.c.l.s4 1983009808
        %v6775 = vunpack.c.0.s8 %v6774
        %v6776 = vlaneseq
        %v6777 = vshrl.u32 %v6776, 7
        %v6778 = vsub.s32 %v6775, %v6777
        %v6779 = vrot.slane %v6765, %v6778
        %v6780 = vcombine.high %v6772, %v6772
        %v6781 = vcombine.high %v6779, %v6779
        %v6782 = vcombine.high %v6198, %v6198
        %v6784 = vunpack.c.l.s4 1983009808
        %v6785 = vunpack.c.0.s8 %v6784
        %v6786 = vlaneseq
        %v6787 = vshrl.u32 %v6786, 7
        %v6788 = vsub.s32 %v6785, %v6787
        %v6789 = vrot.slane %v6198, %v6788
        %v6791 = vunpack.c.l.s4 1983009808
        %v6792 = vunpack.c.0.s8 %v6791
        %v6793 = vlaneseq
        %v6794 = vshrl.u32 %v6793, 7
        %v6795 = vsub.s32 %v6792, %v6794
        %v6796 = vrot.slane %v6782, %v6795
        %v6797 = vcombine.high %v6789, %v6789
        %v6798 = vcombine.high %v6796, %v6796
        %v6799 = vcombine.high %v6199, %v6199
        %v6801 = vunpack.c.l.s4 1983009808
        %v6802 = vunpack.c.0.s8 %v6801
        %v6803 = vlaneseq
        %v6804 = vshrl.u32 %v6803, 7
        %v6805 = vsub.s32 %v6802, %v6804
        %v6806 = vrot.slane %v6199, %v6805
        %v6808 = vunpack.c.l.s4 1983009808
        %v6809 = vunpack.c.0.s8 %v6808
        %v6810 = vlaneseq
        %v6811 = vshrl.u32 %v6810, 7
        %v6812 = vsub.s32 %v6809, %v6811
        %v6813 = vrot.slane %v6799, %v6812
        %v6814 = vcombine.high %v6806, %v6806
        %v6815 = vcombine.high %v6813, %v6813
        %v6816 = vcombine.high %v6200, %v6200
        %v6818 = vunpack.c.l.s4 1983009808
        %v6819 = vunpack.c.0.s8 %v6818
        %v6820 = vlaneseq
        %v6821 = vshrl.u32 %v6820, 7
        %v6822 = vsub.s32 %v6819, %v6821
        %v6823 = vrot.slane %v6200, %v6822
        %v6825 = vunpack.c.l.s4 1983009808
        %v6826 = vunpack.c.0.s8 %v6825
        %v6827 = vlaneseq
        %v6828 = vshrl.u32 %v6827, 7
        %v6829 = vsub.s32 %v6826, %v6828
        %v6830 = vrot.slane %v6816, %v6829
        %v6831 = vcombine.high %v6823, %v6823
        %v6832 = vcombine.high %v6830, %v6830
        %v6833 = vcombine.high %v6201, %v6201
        %v6835 = vunpack.c.l.s4 1983009808
        %v6836 = vunpack.c.0.s8 %v6835
        %v6837 = vlaneseq
        %v6838 = vshrl.u32 %v6837, 7
        %v6839 = vsub.s32 %v6836, %v6838
        %v6840 = vrot.slane %v6201, %v6839
        %v6842 = vunpack.c.l.s4 1983009808
        %v6843 = vunpack.c.0.s8 %v6842
        %v6844 = vlaneseq
        %v6845 = vshrl.u32 %v6844, 7
        %v6846 = vsub.s32 %v6843, %v6845
        %v6847 = vrot.slane %v6833, %v6846
        %v6848 = vcombine.high %v6840, %v6840
        %v6849 = vcombine.high %v6847, %v6847
        %vm6850 = vcmask 1042434
        %vm6851 = vmor %vm2823, %vm6850
        %vm6852 = vcmask 1044484
        %vm6853 = vmor %vm6851, %vm6852
        %vm6854 = vcmask 1046534
        %vm6855 = vmor %vm6853, %vm6854
        %v6856 = vrot.slane %v6245, 7
        %v6857 = vrot.slane %v6856, 2
        %v6858 = vrot.slane %v6253, 7
        %v6859 = vsel %vm6855, %v6857, %v6858
        %v6860 = vrot.slane %v6858, 2
        %v6861 = vrot.slane %v6252, 7
        %v6862 = vsel %vm6855, %v6860, %v6861
        %v6863 = vrot.slane %v6861, 2
        %v6864 = vrot.slane %v6254, 7
        %v6865 = vsel %vm6855, %v6863, %v6864
        %v6866 = vrot.slane %v6864, 2
        %v6867 = vrot.slane %v6262, 7
        %v6868 = vsel %vm6855, %v6866, %v6867
        %v6869 = vrot.slane %v6867, 2
        %v6870 = vrot.slane %v6270, 7
        %v6871 = vsel %vm6855, %v6869, %v6870
        %v6872 = vrot.slane %v6870, 2
        %v6873 = vrot.slane %v6269, 7
        %v6874 = vsel %vm6855, %v6872, %v6873
        %v6875 = vrot.slane %v6873, 2
        %v6876 = vrot.slane %v6271, 7
        %v6877 = vsel %vm6855, %v6875, %v6876
        %v6878 = vrot.slane %v6876, 2
        %v6879 = vrot.slane %v6279, 7
        %v6880 = vsel %vm6855, %v6878, %v6879
        %v6881 = vrot.slane %v6287, 7
        %v6882 = vrot.slane %v6881, 2
        %v6883 = vrot.slane %v6286, 7
        %v6884 = vsel %vm6855, %v6882, %v6883
        %v6885 = vrot.slane %v6883, 2
        %v6886 = vrot.slane %v6288, 7
        %v6887 = vsel %vm6855, %v6885, %v6886
        %v6888 = vrot.slane %v6886, 2
        %v6889 = vrot.slane %v6296, 7
        %v6890 = vsel %vm6855, %v6888, %v6889
        %v6891 = vrot.slane %v6889, 2
        %v6892 = vrot.slane %v6304, 7
        %v6893 = vsel %vm6855, %v6891, %v6892
        %v6894 = vrot.slane %v6892, 2
        %v6895 = vrot.slane %v6303, 7
        %v6896 = vsel %vm6855, %v6894, %v6895
        %v6897 = vrot.slane %v6895, 2
        %v6898 = vrot.slane %v6305, 7
        %v6899 = vsel %vm6855, %v6897, %v6898
        %v6900 = vrot.slane %v6898, 2
        %v6901 = vrot.slane %v6313, 7
        %v6902 = vsel %vm6855, %v6900, %v6901
        %v6903 = vrot.slane %v6901, 2
        %v6904 = vrot.slane %v6321, 7
        %v6905 = vsel %vm6855, %v6903, %v6904
        %v6906 = vrot.slane %v6320, 7
        %v6907 = vrot.slane %v6906, 2
        %v6908 = vrot.slane %v6322, 7
        %v6909 = vsel %vm6855, %v6907, %v6908
        %v6910 = vrot.slane %v6908, 2
        %v6911 = vrot.slane %v6330, 7
        %v6912 = vsel %vm6855, %v6910, %v6911
        %v6913 = vrot.slane %v6911, 2
        %v6914 = vrot.slane %v6338, 7
        %v6915 = vsel %vm6855, %v6913, %v6914
        %v6916 = vrot.slane %v6914, 2
        %v6917 = vrot.slane %v6337, 7
        %v6918 = vsel %vm6855, %v6916, %v6917
        %v6919 = vrot.slane %v6917, 2
        %v6920 = vrot.slane %v6339, 7
        %v6921 = vsel %vm6855, %v6919, %v6920
        %v6922 = vrot.slane %v6920, 2
        %v6923 = vrot.slane %v6347, 7
        %v6924 = vsel %vm6855, %v6922, %v6923
        %v6925 = vrot.slane %v6923, 2
        %v6926 = vrot.slane %v6355, 7
        %v6927 = vsel %vm6855, %v6925, %v6926
        %v6928 = vrot.slane %v6926, 2
        %v6929 = vrot.slane %v6354, 7
        %v6930 = vsel %vm6855, %v6928, %v6929
        %v6931 = vrot.slane %v6356, 7
        %v6932 = vrot.slane %v6931, 2
        %v6933 = vrot.slane %v6364, 7
        %v6934 = vsel %vm6855, %v6932, %v6933
        %v6935 = vrot.slane %v6933, 2
        %v6936 = vrot.slane %v6372, 7
        %v6937 = vsel %vm6855, %v6935, %v6936
        %v6938 = vrot.slane %v6936, 2
        %v6939 = vrot.slane %v6371, 7
        %v6940 = vsel %vm6855, %v6938, %v6939
        %v6941 = vrot.slane %v6939, 2
        %v6942 = vrot.slane %v6373, 7
        %v6943 = vsel %vm6855, %v6941, %v6942
        %v6944 = vrot.slane %v6942, 2
        %v6945 = vrot.slane %v6381, 7
        %v6946 = vsel %vm6855, %v6944, %v6945
        %v6947 = vrot.slane %v6945, 2
        %v6948 = vrot.slane %v6389, 7
        %v6949 = vsel %vm6855, %v6947, %v6948
        %v6950 = vrot.slane %v6948, 2
        %v6951 = vrot.slane %v6388, 7
        %v6952 = vsel %vm6855, %v6950, %v6951
        %v6953 = vrot.slane %v6951, 2
        %v6954 = vrot.slane %v6390, 7
        %v6955 = vsel %vm6855, %v6953, %v6954
        %v6956 = vrot.slane %v6398, 7
        %v6957 = vrot.slane %v6956, 2
        %v6958 = vrot.slane %v6406, 7
        %v6959 = vsel %vm6855, %v6957, %v6958
        %v6960 = vrot.slane %v6958, 2
        %v6961 = vrot.slane %v6405, 7
        %v6962 = vsel %vm6855, %v6960, %v6961
        %v6963 = vrot.slane %v6961, 2
        %v6964 = vrot.slane %v6407, 7
        %v6965 = vsel %vm6855, %v6963, %v6964
        %v6966 = vrot.slane %v6964, 2
        %v6967 = vrot.slane %v6415, 7
        %v6968 = vsel %vm6855, %v6966, %v6967
        %v6969 = vrot.slane %v6967, 2
        %v6970 = vrot.slane %v6423, 7
        %v6971 = vsel %vm6855, %v6969, %v6970
        %v6972 = vrot.slane %v6970, 2
        %v6973 = vrot.slane %v6422, 7
        %v6974 = vsel %vm6855, %v6972, %v6973
        %v6975 = vrot.slane %v6973, 2
        %v6976 = vrot.slane %v6424, 7
        %v6977 = vsel %vm6855, %v6975, %v6976
        %v6978 = vrot.slane %v6976, 2
        %v6979 = vrot.slane %v6432, 7
        %v6980 = vsel %vm6855, %v6978, %v6979
        %v6981 = vrot.slane %v6440, 7
        %v6982 = vrot.slane %v6981, 2
        %v6983 = vrot.slane %v6439, 7
        %v6984 = vsel %vm6855, %v6982, %v6983
        %v6985 = vrot.slane %v6983, 2
        %v6986 = vrot.slane %v6441, 7
        %v6987 = vsel %vm6855, %v6985, %v6986
        %v6988 = vrot.slane %v6986, 2
        %v6989 = vrot.slane %v6449, 7
        %v6990 = vsel %vm6855, %v6988, %v6989
        %v6991 = vrot.slane %v6989, 2
        %v6992 = vrot.slane %v6457, 7
        %v6993 = vsel %vm6855, %v6991, %v6992
        %v6994 = vrot.slane %v6992, 2
        %v6995 = vrot.slane %v6456, 7
        %v6996 = vsel %vm6855, %v6994, %v6995
        %v6997 = vrot.slane %v6995, 2
        %v6998 = vrot.slane %v6458, 7
        %v6999 = vsel %vm6855, %v6997, %v6998
        %v7000 = vrot.slane %v6998, 2
        %v7001 = vrot.slane %v6466, 7
        %v7002 = vsel %vm6855, %v7000, %v7001
        %v7003 = vrot.slane %v7001, 2
        %v7004 = vrot.slane %v6474, 7
        %v7005 = vsel %vm6855, %v7003, %v7004
        %v7006 = vrot.slane %v6473, 7
        %v7007 = vrot.slane %v7006, 2
        %v7008 = vrot.slane %v6475, 7
        %v7009 = vsel %vm6855, %v7007, %v7008
        %v7010 = vrot.slane %v7008, 2
        %v7011 = vrot.slane %v6483, 7
        %v7012 = vsel %vm6855, %v7010, %v7011
        %v7013 = vrot.slane %v7011, 2
        %v7014 = vrot.slane %v6491, 7
        %v7015 = vsel %vm6855, %v7013, %v7014
        %v7016 = vrot.slane %v7014, 2
        %v7017 = vrot.slane %v6490, 7
        %v7018 = vsel %vm6855, %v7016, %v7017
        %v7019 = vrot.slane %v7017, 2
        %v7020 = vrot.slane %v6492, 7
        %v7021 = vsel %vm6855, %v7019, %v7020
        %v7022 = vrot.slane %v7020, 2
        %v7023 = vrot.slane %v6500, 7
        %v7024 = vsel %vm6855, %v7022, %v7023
        %v7025 = vrot.slane %v7023, 2
        %v7026 = vrot.slane %v6508, 7
        %v7027 = vsel %vm6855, %v7025, %v7026
        %v7028 = vrot.slane %v7026, 2
        %v7029 = vrot.slane %v6507, 7
        %v7030 = vsel %vm6855, %v7028, %v7029
        %v7031 = vrot.slane %v6509, 7
        %v7032 = vrot.slane %v7031, 2
        %v7033 = vrot.slane %v6517, 7
        %v7034 = vsel %vm6855, %v7032, %v7033
        %v7035 = vrot.slane %v7033, 2
        %v7036 = vrot.slane %v6525, 7
        %v7037 = vsel %vm6855, %v7035, %v7036
        %v7038 = vrot.slane %v7036, 2
        %v7039 = vrot.slane %v6524, 7
        %v7040 = vsel %vm6855, %v7038, %v7039
        %v7041 = vrot.slane %v7039, 2
        %v7042 = vrot.slane %v6526, 7
        %v7043 = vsel %vm6855, %v7041, %v7042
        %v7044 = vrot.slane %v7042, 2
        %v7045 = vrot.slane %v6534, 7
        %v7046 = vsel %vm6855, %v7044, %v7045
        %v7047 = vrot.slane %v7045, 2
        %v7048 = vrot.slane %v6542, 7
        %v7049 = vsel %vm6855, %v7047, %v7048
        %v7050 = vrot.slane %v7048, 2
        %v7051 = vrot.slane %v6541, 7
        %v7052 = vsel %vm6855, %v7050, %v7051
        %v7053 = vrot.slane %v7051, 2
        %v7054 = vrot.slane %v6543, 7
        %v7055 = vsel %vm6855, %v7053, %v7054
        %v7056 = vrot.slane %v6551, 7
        %v7057 = vrot.slane %v7056, 2
        %v7058 = vrot.slane %v6559, 7
        %v7059 = vsel %vm6855, %v7057, %v7058
        %v7060 = vrot.slane %v7058, 2
        %v7061 = vrot.slane %v6558, 7
        %v7062 = vsel %vm6855, %v7060, %v7061
        %v7063 = vrot.slane %v7061, 2
        %v7064 = vrot.slane %v6560, 7
        %v7065 = vsel %vm6855, %v7063, %v7064
        %v7066 = vrot.slane %v7064, 2
        %v7067 = vrot.slane %v6568, 7
        %v7068 = vsel %vm6855, %v7066, %v7067
        %v7069 = vrot.slane %v7067, 2
        %v7070 = vrot.slane %v6576, 7
        %v7071 = vsel %vm6855, %v7069, %v7070
        %v7072 = vrot.slane %v7070, 2
        %v7073 = vrot.slane %v6575, 7
        %v7074 = vsel %vm6855, %v7072, %v7073
        %v7075 = vrot.slane %v7073, 2
        %v7076 = vrot.slane %v6577, 7
        %v7077 = vsel %vm6855, %v7075, %v7076
        %v7078 = vrot.slane %v7076, 2
        %v7079 = vrot.slane %v6585, 7
        %v7080 = vsel %vm6855, %v7078, %v7079
        %v7081 = vrot.slane %v6593, 7
        %v7082 = vrot.slane %v7081, 2
        %v7083 = vrot.slane %v6592, 7
        %v7084 = vsel %vm6855, %v7082, %v7083
        %v7085 = vrot.slane %v7083, 2
        %v7086 = vrot.slane %v6594, 7
        %v7087 = vsel %vm6855, %v7085, %v7086
        %v7088 = vrot.slane %v7086, 2
        %v7089 = vrot.slane %v6602, 7
        %v7090 = vsel %vm6855, %v7088, %v7089
        %v7091 = vrot.slane %v7089, 2
        %v7092 = vrot.slane %v6610, 7
        %v7093 = vsel %vm6855, %v7091, %v7092
        %v7094 = vrot.slane %v7092, 2
        %v7095 = vrot.slane %v6609, 7
        %v7096 = vsel %vm6855, %v7094, %v7095
        %v7097 = vrot.slane %v7095, 2
        %v7098 = vrot.slane %v6611, 7
        %v7099 = vsel %vm6855, %v7097, %v7098
        %v7100 = vrot.slane %v7098, 2
        %v7101 = vrot.slane %v6619, 7
        %v7102 = vsel %vm6855, %v7100, %v7101
        %v7103 = vrot.slane %v7101, 2
        %v7104 = vrot.slane %v6627, 7
        %v7105 = vsel %vm6855, %v7103, %v7104
        %v7106 = vrot.slane %v6626, 7
        %v7107 = vrot.slane %v7106, 2
        %v7108 = vrot.slane %v6628, 7
        %v7109 = vsel %vm6855, %v7107, %v7108
        %v7110 = vrot.slane %v7108, 2
        %v7111 = vrot.slane %v6636, 7
        %v7112 = vsel %vm6855, %v7110, %v7111
        %v7113 = vrot.slane %v7111, 2
        %v7114 = vrot.slane %v6644, 7
        %v7115 = vsel %vm6855, %v7113, %v7114
        %v7116 = vrot.slane %v7114, 2
        %v7117 = vrot.slane %v6643, 7
        %v7118 = vsel %vm6855, %v7116, %v7117
        %v7119 = vrot.slane %v7117, 2
        %v7120 = vrot.slane %v6645, 7
        %v7121 = vsel %vm6855, %v7119, %v7120
        %v7122 = vrot.slane %v7120, 2
        %v7123 = vrot.slane %v6653, 7
        %v7124 = vsel %vm6855, %v7122, %v7123
        %v7125 = vrot.slane %v7123, 2
        %v7126 = vrot.slane %v6661, 7
        %v7127 = vsel %vm6855, %v7125, %v7126
        %v7128 = vrot.slane %v7126, 2
        %v7129 = vrot.slane %v6660, 7
        %v7130 = vsel %vm6855, %v7128, %v7129
        %v7131 = vrot.slane %v6662, 7
        %v7132 = vrot.slane %v7131, 2
        %v7133 = vrot.slane %v6670, 7
        %v7134 = vsel %vm6855, %v7132, %v7133
        %v7135 = vrot.slane %v7133, 2
        %v7136 = vrot.slane %v6678, 7
        %v7137 = vsel %vm6855, %v7135, %v7136
        %v7138 = vrot.slane %v7136, 2
        %v7139 = vrot.slane %v6677, 7
        %v7140 = vsel %vm6855, %v7138, %v7139
        %v7141 = vrot.slane %v7139, 2
        %v7142 = vrot.slane %v6679, 7
        %v7143 = vsel %vm6855, %v7141, %v7142
        %v7144 = vrot.slane %v7142, 2
        %v7145 = vrot.slane %v6687, 7
        %v7146 = vsel %vm6855, %v7144, %v7145
        %v7147 = vrot.slane %v7145, 2
        %v7148 = vrot.slane %v6695, 7
        %v7149 = vsel %vm6855, %v7147, %v7148
        %v7150 = vrot.slane %v7148, 2
        %v7151 = vrot.slane %v6694, 7
        %v7152 = vsel %vm6855, %v7150, %v7151
        %v7153 = vrot.slane %v7151, 2
        %v7154 = vrot.slane %v6696, 7
        %v7155 = vsel %vm6855, %v7153, %v7154
        %v7156 = vrot.slane %v6704, 7
        %v7157 = vrot.slane %v7156, 2
        %v7158 = vrot.slane %v6712, 7
        %v7159 = vsel %vm6855, %v7157, %v7158
        %v7160 = vrot.slane %v7158, 2
        %v7161 = vrot.slane %v6711, 7
        %v7162 = vsel %vm6855, %v7160, %v7161
        %v7163 = vrot.slane %v7161, 2
        %v7164 = vrot.slane %v6713, 7
        %v7165 = vsel %vm6855, %v7163, %v7164
        %v7166 = vrot.slane %v7164, 2
        %v7167 = vrot.slane %v6721, 7
        %v7168 = vsel %vm6855, %v7166, %v7167
        %v7169 = vrot.slane %v7167, 2
        %v7170 = vrot.slane %v6729, 7
        %v7171 = vsel %vm6855, %v7169, %v7170
        %v7172 = vrot.slane %v7170, 2
        %v7173 = vrot.slane %v6728, 7
        %v7174 = vsel %vm6855, %v7172, %v7173
        %v7175 = vrot.slane %v7173, 2
        %v7176 = vrot.slane %v6730, 7
        %v7177 = vsel %vm6855, %v7175, %v7176
        %v7178 = vrot.slane %v7176, 2
        %v7179 = vrot.slane %v6738, 7
        %v7180 = vsel %vm6855, %v7178, %v7179
        %v7181 = vrot.slane %v6746, 7
        %v7182 = vrot.slane %v7181, 2
        %v7183 = vrot.slane %v6745, 7
        %v7184 = vsel %vm6855, %v7182, %v7183
        %v7185 = vrot.slane %v7183, 2
        %v7186 = vrot.slane %v6747, 7
        %v7187 = vsel %vm6855, %v7185, %v7186
        %v7188 = vrot.slane %v7186, 2
        %v7189 = vrot.slane %v6755, 7
        %v7190 = vsel %vm6855, %v7188, %v7189
        %v7191 = vrot.slane %v7189, 2
        %v7192 = vrot.slane %v6763, 7
        %v7193 = vsel %vm6855, %v7191, %v7192
        %v7194 = vrot.slane %v7192, 2
        %v7195 = vrot.slane %v6762, 7
        %v7196 = vsel %vm6855, %v7194, %v7195
        %v7197 = vrot.slane %v7195, 2
        %v7198 = vrot.slane %v6764, 7
        %v7199 = vsel %vm6855, %v7197, %v7198
        %v7200 = vrot.slane %v7198, 2
        %v7201 = vrot.slane %v6772, 7
        %v7202 = vsel %vm6855, %v7200, %v7201
        %v7203 = vrot.slane %v7201, 2
        %v7204 = vrot.slane %v6780, 7
        %v7205 = vsel %vm6855, %v7203, %v7204
        %v7206 = vrot.slane %v6779, 7
        %v7207 = vrot.slane %v7206, 2
        %v7208 = vrot.slane %v6781, 7
        %v7209 = vsel %vm6855, %v7207, %v7208
        %v7210 = vrot.slane %v7208, 2
        %v7211 = vrot.slane %v6789, 7
        %v7212 = vsel %vm6855, %v7210, %v7211
        %v7213 = vrot.slane %v7211, 2
        %v7214 = vrot.slane %v6797, 7
        %v7215 = vsel %vm6855, %v7213, %v7214
        %v7216 = vrot.slane %v7214, 2
        %v7217 = vrot.slane %v6796, 7
        %v7218 = vsel %vm6855, %v7216, %v7217
        %v7219 = vrot.slane %v7217, 2
        %v7220 = vrot.slane %v6798, 7
        %v7221 = vsel %vm6855, %v7219, %v7220
        %v7222 = vrot.slane %v7220, 2
        %v7223 = vrot.slane %v6806, 7
        %v7224 = vsel %vm6855, %v7222, %v7223
        %v7225 = vrot.slane %v7223, 2
        %v7226 = vrot.slane %v6814, 7
        %v7227 = vsel %vm6855, %v7225, %v7226
        %v7228 = vrot.slane %v7226, 2
        %v7229 = vrot.slane %v6813, 7
        %v7230 = vsel %vm6855, %v7228, %v7229
        %v7231 = vrot.slane %v6815, 7
        %v7232 = vrot.slane %v7231, 2
        %v7233 = vrot.slane %v6823, 7
        %v7234 = vsel %vm6855, %v7232, %v7233
        %v7235 = vrot.slane %v7233, 2
        %v7236 = vrot.slane %v6831, 7
        %v7237 = vsel %vm6855, %v7235, %v7236
        %v7238 = vrot.slane %v7236, 2
        %v7239 = vrot.slane %v6830, 7
        %v7240 = vsel %vm6855, %v7238, %v7239
        %v7241 = vrot.slane %v7239, 2
        %v7242 = vrot.slane %v6832, 7
        %v7243 = vsel %vm6855, %v7241, %v7242
        %v7244 = vrot.slane %v7242, 2
        %v7245 = vrot.slane %v6840, 7
        %v7246 = vsel %vm6855, %v7244, %v7245
        %v7247 = vrot.slane %v7245, 2
        %v7248 = vrot.slane %v6848, 7
        %v7249 = vsel %vm6855, %v7247, %v7248
        %v7250 = vrot.slane %v7248, 2
        %v7251 = vrot.slane %v6847, 7
        %v7252 = vsel %vm6855, %v7250, %v7251
        %v7253 = vrot.slane %v7251, 2
        %v7254 = vrot.slane %v6849, 7
        %v7255 = vsel %vm6855, %v7253, %v7254
        %v7384 = vadd.f32 %v4883, %v6859
        %v7385 = vadd.f32 %v4891, %v6862
        %v7386 = vadd.f32 %v4890, %v6865
        %v7387 = vadd.f32 %v4892, %v6868
        %v7388 = vadd.f32 %v4900, %v6871
        %v7389 = vadd.f32 %v4908, %v6874
        %v7390 = vadd.f32 %v4907, %v6877
        %v7391 = vadd.f32 %v4909, %v6880
        %v7392 = vadd.f32 %v4925, %v6884
        %v7393 = vadd.f32 %v4924, %v6887
        %v7394 = vadd.f32 %v4926, %v6890
        %v7395 = vadd.f32 %v4934, %v6893
        %v7396 = vadd.f32 %v4942, %v6896
        %v7397 = vadd.f32 %v4941, %v6899
        %v7398 = vadd.f32 %v4943, %v6902
        %v7399 = vadd.f32 %v4951, %v6905
        %v7400 = vadd.f32 %v4958, %v6909
        %v7401 = vadd.f32 %v4959, %v6912
        %v7402 = vadd.f32 %v4967, %v6915
        %v7403 = vadd.f32 %v4975, %v6918
        %v7404 = vadd.f32 %v4974, %v6921
        %v7405 = vadd.f32 %v4976, %v6924
        %v7406 = vadd.f32 %v4984, %v6927
        %v7407 = vadd.f32 %v4992, %v6930
        %v7408 = vadd.f32 %v4993, %v6934
        %v7409 = vadd.f32 %v5001, %v6937
        %v7410 = vadd.f32 %v5009, %v6940
        %v7411 = vadd.f32 %v5008, %v6943
        %v7412 = vadd.f32 %v5010, %v6946
        %v7413 = vadd.f32 %v5018, %v6949
        %v7414 = vadd.f32 %v5026, %v6952
        %v7415 = vadd.f32 %v5025, %v6955
        %v7416 = vadd.f32 %v5034, %v6959
        %v7417 = vadd.f32 %v5042, %v6962
        %v7418 = vadd.f32 %v5041, %v6965
        %v7419 = vadd.f32 %v5043, %v6968
        %v7420 = vadd.f32 %v5051, %v6971
        %v7421 = vadd.f32 %v5059, %v6974
        %v7422 = vadd.f32 %v5058, %v6977
        %v7423 = vadd.f32 %v5060, %v6980
        %v7424 = vadd.f32 %v5076, %v6984
        %v7425 = vadd.f32 %v5075, %v6987
        %v7426 = vadd.f32 %v5077, %v6990
        %v7427 = vadd.f32 %v5085, %v6993
        %v7428 = vadd.f32 %v5093, %v6996
        %v7429 = vadd.f32 %v5092, %v6999
        %v7430 = vadd.f32 %v5094, %v7002
        %v7431 = vadd.f32 %v5102, %v7005
        %v7432 = vadd.f32 %v5109, %v7009
        %v7433 = vadd.f32 %v5110, %v7012
        %v7434 = vadd.f32 %v5118, %v7015
        %v7435 = vadd.f32 %v5126, %v7018
        %v7436 = vadd.f32 %v5125, %v7021
        %v7437 = vadd.f32 %v5127, %v7024
        %v7438 = vadd.f32 %v5135, %v7027
        %v7439 = vadd.f32 %v5143, %v7030
        %v7440 = vadd.f32 %v5144, %v7034
        %v7441 = vadd.f32 %v5152, %v7037
        %v7442 = vadd.f32 %v5160, %v7040
        %v7443 = vadd.f32 %v5159, %v7043
        %v7444 = vadd.f32 %v5161, %v7046
        %v7445 = vadd.f32 %v5169, %v7049
        %v7446 = vadd.f32 %v5177, %v7052
        %v7447 = vadd.f32 %v5176, %v7055
        %v7448 = vadd.f32 %v5185, %v7059
        %v7449 = vadd.f32 %v5193, %v7062
        %v7450 = vadd.f32 %v5192, %v7065
        %v7451 = vadd.f32 %v5194, %v7068
        %v7452 = vadd.f32 %v5202, %v7071
        %v7453 = vadd.f32 %v5210, %v7074
        %v7454 = vadd.f32 %v5209, %v7077
        %v7455 = vadd.f32 %v5211, %v7080
        %v7456 = vadd.f32 %v5227, %v7084
        %v7457 = vadd.f32 %v5226, %v7087
        %v7458 = vadd.f32 %v5228, %v7090
        %v7459 = vadd.f32 %v5236, %v7093
        %v7460 = vadd.f32 %v5244, %v7096
        %v7461 = vadd.f32 %v5243, %v7099
        %v7462 = vadd.f32 %v5245, %v7102
        %v7463 = vadd.f32 %v5253, %v7105
        %v7464 = vadd.f32 %v5260, %v7109
        %v7465 = vadd.f32 %v5261, %v7112
        %v7466 = vadd.f32 %v5269, %v7115
        %v7467 = vadd.f32 %v5277, %v7118
        %v7468 = vadd.f32 %v5276, %v7121
        %v7469 = vadd.f32 %v5278, %v7124
        %v7470 = vadd.f32 %v5286, %v7127
        %v7471 = vadd.f32 %v5294, %v7130
        %v7472 = vadd.f32 %v5295, %v7134
        %v7473 = vadd.f32 %v5303, %v7137
        %v7474 = vadd.f32 %v5311, %v7140
        %v7475 = vadd.f32 %v5310, %v7143
        %v7476 = vadd.f32 %v5312, %v7146
        %v7477 = vadd.f32 %v5320, %v7149
        %v7478 = vadd.f32 %v5328, %v7152
        %v7479 = vadd.f32 %v5327, %v7155
        %v7480 = vadd.f32 %v5336, %v7159
        %v7481 = vadd.f32 %v5344, %v7162
        %v7482 = vadd.f32 %v5343, %v7165
        %v7483 = vadd.f32 %v5345, %v7168
        %v7484 = vadd.f32 %v5353, %v7171
        %v7485 = vadd.f32 %v5361, %v7174
        %v7486 = vadd.f32 %v5360, %v7177
        %v7487 = vadd.f32 %v5362, %v7180
        %v7488 = vadd.f32 %v5378, %v7184
        %v7489 = vadd.f32 %v5377, %v7187
        %v7490 = vadd.f32 %v5379, %v7190
        %v7491 = vadd.f32 %v5387, %v7193
        %v7492 = vadd.f32 %v5395, %v7196
        %v7493 = vadd.f32 %v5394, %v7199
        %v7494 = vadd.f32 %v5396, %v7202
        %v7495 = vadd.f32 %v5404, %v7205
        %v7496 = vadd.f32 %v5411, %v7209
        %v7497 = vadd.f32 %v5412, %v7212
        %v7498 = vadd.f32 %v5420, %v7215
        %v7499 = vadd.f32 %v5428, %v7218
        %v7500 = vadd.f32 %v5427, %v7221
        %v7501 = vadd.f32 %v5429, %v7224
        %v7502 = vadd.f32 %v5437, %v7227
        %v7503 = vadd.f32 %v5445, %v7230
        %v7504 = vadd.f32 %v5446, %v7234
        %v7505 = vadd.f32 %v5454, %v7237
        %v7506 = vadd.f32 %v5462, %v7240
        %v7507 = vadd.f32 %v5461, %v7243
        %v7508 = vadd.f32 %v5463, %v7246
        %v7509 = vadd.f32 %v5471, %v7249
        %v7510 = vadd.f32 %v5479, %v7252
        %v7511 = vadd.f32 %v5478, %v7255
        %s7512 = scalar_lea.vmem %s1, 16
        %v7513 = vld [vmem:[%s7512] sm:$0xf]
        %v7514 = vld [vmem:[%s7512 + $0x4] sm:$0x1]
        %v7516 = vunpack.c.l.b16 %v7513
        %v7517 = vpack.c.b16 %v7516, %v7516
        %v7519 = vshrl.u32 %v7517, 16
        %v7521 = vrot.slane %v7519, 1
        %v7522 = vshll.u32 %v7517, 16
        %v7524 = vrot.slane %v7522, 2
        %v7525 = vor.u32 %v7521, %v7524
        %v7527 = vand.u32 %v7525, %v2826
        %7529 = vmatprep.subr.bf16.mxu0 0
        %7530 = vmatpush1.bf16.msra.mxu0 %v7527
        %7531 = vmatprep.subr.bf16.mxu0 0
        %7532 = vmatpush1.bf16.msra.mxu0 0
        %7533 = vmatprep.subr.bf16.mxu0 0
        %7534 = vmatpush1.bf16.msra.mxu0 0
        %7535 = vmatprep.subr.bf16.mxu0 0
        %7536 = vmatpush1.bf16.msra.mxu0 0
        %7537 = vmatprep.subr.bf16.mxu0 0
        %7538 = vmatpush1.bf16.msra.mxu0 0
        %7539 = vmatprep.subr.bf16.mxu0 0
        %7540 = vmatpush1.bf16.msra.mxu0 0
        %7541 = vmatprep.subr.bf16.mxu0 0
        %7542 = vmatpush1.bf16.msra.mxu0 0
        %7543 = vmatprep.subr.bf16.mxu0 0
        %7544 = vmatpush1.bf16.msra.mxu0 0
        %7545 = vmatprep.subr.bf16.mxu0 0
        %7546 = vmatpush1.bf16.msra.mxu0 0
        %7547 = vmatprep.subr.bf16.mxu0 0
        %7548 = vmatpush1.bf16.msra.mxu0 0
        %7549 = vmatprep.subr.bf16.mxu0 0
        %7550 = vmatpush1.bf16.msra.mxu0 0
        %7551 = vmatprep.subr.bf16.mxu0 0
        %7552 = vmatpush1.bf16.msra.mxu0 0
        %7553 = vmatprep.subr.bf16.mxu0 0
        %7554 = vmatpush1.bf16.msra.mxu0 0
        %7555 = vmatprep.subr.bf16.mxu0 0
        %7556 = vmatpush1.bf16.msra.mxu0 0
        %7557 = vmatprep.subr.bf16.mxu0 0
        %7558 = vmatpush1.bf16.msra.mxu0 0
        %7559 = vmatprep.subr.bf16.mxu0 0
        %7560 = vmatpush1.bf16.msra.mxu0 0
        %7561 = vmatprep.mubr.bf16.mxu0 0
        %7562 = vmatmul.mubr.bf16.gmra.mrb[0].mxu0 %v2770
        %v7563 = vpop.f32.mrb[0].mxu0
        %v7564 = vadd.f32 0.0, %v7563
        %v7565 = vpop.f32.mrb[0].mxu0
        %v7566 = vpop.f32.mrb[0].mxu0
        %v7567 = vadd.f32 0.0, %v7566
        %v7568 = vpop.f32.mrb[0].mxu0
        %7569 = vmatprep.mubr.bf16.mxu0 0
        %7570 = vmatmul.mubr.bf16.gmra.mrb[0].mxu0 %v2773
        %v7571 = vpop.f32.mrb[0].mxu0
        %v7572 = vadd.f32 0.0, %v7571
        %v7573 = vpop.f32.mrb[0].mxu0
        %v7574 = vpop.f32.mrb[0].mxu0
        %v7575 = vadd.f32 0.0, %v7574
        %v7576 = vpop.f32.mrb[0].mxu0
        %7577 = vmatprep.mubr.bf16.mxu0 0
        %7578 = vmatmul.mubr.bf16.gmra.mrb[0].mxu0 %v2776
        %v7579 = vpop.f32.mrb[0].mxu0
        %v7580 = vadd.f32 0.0, %v7579
        %v7581 = vpop.f32.mrb[0].mxu0
        %v7582 = vpop.f32.mrb[0].mxu0
        %v7583 = vadd.f32 0.0, %v7582
        %v7584 = vpop.f32.mrb[0].mxu0
        %7585 = vmatprep.mubr.bf16.mxu0 0
        %7586 = vmatmul.mubr.bf16.gmra.mrb[0].mxu0 %v2779
        %v7587 = vpop.f32.mrb[0].mxu0
        %v7588 = vadd.f32 0.0, %v7587
        %v7589 = vpop.f32.mrb[0].mxu0
        %v7590 = vpop.f32.mrb[0].mxu0
        %v7591 = vadd.f32 0.0, %v7590
        %v7592 = vpop.f32.mrb[0].mxu0
        %7593 = vmatprep.mubr.bf16.mxu0 0
        %7594 = vmatmul.mubr.bf16.gmra.mrb[0].mxu0 %v2782
        %v7595 = vpop.f32.mrb[0].mxu0
        %v7596 = vadd.f32 0.0, %v7595
        %v7597 = vpop.f32.mrb[0].mxu0
        %v7598 = vpop.f32.mrb[0].mxu0
        %v7599 = vadd.f32 0.0, %v7598
        %v7600 = vpop.f32.mrb[0].mxu0
        %7601 = vmatprep.mubr.bf16.mxu0 0
        %7602 = vmatmul.mubr.bf16.gmra.mrb[0].mxu0 %v2785
        %v7603 = vpop.f32.mrb[0].mxu0
        %v7604 = vadd.f32 0.0, %v7603
        %v7605 = vpop.f32.mrb[0].mxu0
        %v7606 = vpop.f32.mrb[0].mxu0
        %v7607 = vadd.f32 0.0, %v7606
        %v7608 = vpop.f32.mrb[0].mxu0
        %7609 = vmatprep.mubr.bf16.mxu0 0
        %7610 = vmatmul.mubr.bf16.gmra.mrb[0].mxu0 %v2788
        %v7611 = vpop.f32.mrb[0].mxu0
        %v7612 = vadd.f32 0.0, %v7611
        %v7613 = vpop.f32.mrb[0].mxu0
        %v7614 = vpop.f32.mrb[0].mxu0
        %v7615 = vadd.f32 0.0, %v7614
        %v7616 = vpop.f32.mrb[0].mxu0
        %7617 = vmatprep.mubr.bf16.mxu0 0
        %7618 = vmatmul.mubr.bf16.gmra.mrb[0].mxu0 %v2791
        %v7619 = vpop.f32.mrb[0].mxu0
        %v7620 = vadd.f32 0.0, %v7619
        %v7621 = vpop.f32.mrb[0].mxu0
        %v7622 = vpop.f32.mrb[0].mxu0
        %v7623 = vadd.f32 0.0, %v7622
        %v7624 = vpop.f32.mrb[0].mxu0
        %7625 = vmatprep.mubr.bf16.mxu0 0
        %7626 = vmatmul.mubr.bf16.gmra.mrb[0].mxu0 %v2794
        %v7627 = vpop.f32.mrb[0].mxu0
        %v7628 = vadd.f32 0.0, %v7627
        %v7629 = vpop.f32.mrb[0].mxu0
        %v7630 = vpop.f32.mrb[0].mxu0
        %v7631 = vadd.f32 0.0, %v7630
        %v7632 = vpop.f32.mrb[0].mxu0
        %7633 = vmatprep.mubr.bf16.mxu0 0
        %7634 = vmatmul.mubr.bf16.gmra.mrb[0].mxu0 %v2797
        %v7635 = vpop.f32.mrb[0].mxu0
        %v7636 = vadd.f32 0.0, %v7635
        %v7637 = vpop.f32.mrb[0].mxu0
        %v7638 = vpop.f32.mrb[0].mxu0
        %v7639 = vadd.f32 0.0, %v7638
        %v7640 = vpop.f32.mrb[0].mxu0
        %7641 = vmatprep.mubr.bf16.mxu0 0
        %7642 = vmatmul.mubr.bf16.gmra.mrb[0].mxu0 %v2800
        %v7643 = vpop.f32.mrb[0].mxu0
        %v7644 = vadd.f32 0.0, %v7643
        %v7645 = vpop.f32.mrb[0].mxu0
        %v7646 = vpop.f32.mrb[0].mxu0
        %v7647 = vadd.f32 0.0, %v7646
        %v7648 = vpop.f32.mrb[0].mxu0
        %7649 = vmatprep.mubr.bf16.mxu0 0
        %7650 = vmatmul.mubr.bf16.gmra.mrb[0].mxu0 %v2803
        %v7651 = vpop.f32.mrb[0].mxu0
        %v7652 = vadd.f32 0.0, %v7651
        %v7653 = vpop.f32.mrb[0].mxu0
        %v7654 = vpop.f32.mrb[0].mxu0
        %v7655 = vadd.f32 0.0, %v7654
        %v7656 = vpop.f32.mrb[0].mxu0
        %7657 = vmatprep.mubr.bf16.mxu0 0
        %7658 = vmatmul.mubr.bf16.gmra.mrb[0].mxu0 %v2806
        %v7659 = vpop.f32.mrb[0].mxu0
        %v7660 = vadd.f32 0.0, %v7659
        %v7661 = vpop.f32.mrb[0].mxu0
        %v7662 = vpop.f32.mrb[0].mxu0
        %v7663 = vadd.f32 0.0, %v7662
        %v7664 = vpop.f32.mrb[0].mxu0
        %7665 = vmatprep.mubr.bf16.mxu0 0
        %7666 = vmatmul.mubr.bf16.gmra.mrb[0].mxu0 %v2809
        %v7667 = vpop.f32.mrb[0].mxu0
        %v7668 = vadd.f32 0.0, %v7667
        %v7669 = vpop.f32.mrb[0].mxu0
        %v7670 = vpop.f32.mrb[0].mxu0
        %v7671 = vadd.f32 0.0, %v7670
        %v7672 = vpop.f32.mrb[0].mxu0
        %7673 = vmatprep.mubr.bf16.mxu0 0
        %7674 = vmatmul.mubr.bf16.gmra.mrb[0].mxu0 %v2812
        %v7675 = vpop.f32.mrb[0].mxu0
        %v7676 = vadd.f32 0.0, %v7675
        %v7677 = vpop.f32.mrb[0].mxu0
        %v7678 = vpop.f32.mrb[0].mxu0
        %v7679 = vadd.f32 0.0, %v7678
        %v7680 = vpop.f32.mrb[0].mxu0
        %7681 = vmatprep.mubr.bf16.mxu0 0
        %7682 = vmatmul.mubr.bf16.gmra.mrb[0].mxu0 %v2815
        %v7683 = vpop.f32.mrb[0].mxu0
        %v7684 = vadd.f32 0.0, %v7683
        %v7685 = vpop.f32.mrb[0].mxu0
        %v7686 = vpop.f32.mrb[0].mxu0
        %v7687 = vadd.f32 0.0, %v7686
        %v7688 = vpop.f32.mrb[0].mxu0
        %7689 = vmatprep.mubr.bf16.mxu0 0
        %7690 = vmatmul.mubr.bf16.gmra.mrb[0].mxu0 %v2818
        %v7691 = vpop.f32.mrb[0].mxu0
        %v7692 = vadd.f32 0.0, %v7691
        %v7693 = vpop.f32.mrb[0].mxu0
        %v7694 = vpop.f32.mrb[0].mxu0
        %v7695 = vadd.f32 0.0, %v7694
        %v7696 = vpop.f32.mrb[0].mxu0
        %7697 = vmatprep.mubr.bf16.mxu0 0
        %7698 = vmatmul.mubr.bf16.gmra.mrb[0].mxu0 %v2821
        %v7699 = vpop.f32.mrb[0].mxu0
        %v7700 = vadd.f32 0.0, %v7699
        %v7701 = vpop.f32.mrb[0].mxu0
        %v7702 = vpop.f32.mrb[0].mxu0
        %v7703 = vadd.f32 0.0, %v7702
        %v7704 = vpop.f32.mrb[0].mxu0
        %7705 = vdwg.mxu0
        %v7707 = vand.u32 %v7513, %v2826
        %7709 = vmatprep.subr.bf16.mxu0 0
        %7710 = vmatpush1.bf16.msra.mxu0 %v7707
        %7711 = vmatprep.subr.bf16.mxu0 0
        %7712 = vmatpush1.bf16.msra.mxu0 0
        %7713 = vmatprep.subr.bf16.mxu0 0
        %7714 = vmatpush1.bf16.msra.mxu0 0
        %7715 = vmatprep.subr.bf16.mxu0 0
        %7716 = vmatpush1.bf16.msra.mxu0 0
        %7717 = vmatprep.subr.bf16.mxu0 0
        %7718 = vmatpush1.bf16.msra.mxu0 0
        %7719 = vmatprep.subr.bf16.mxu0 0
        %7720 = vmatpush1.bf16.msra.mxu0 0
        %7721 = vmatprep.subr.bf16.mxu0 0
        %7722 = vmatpush1.bf16.msra.mxu0 0
        %7723 = vmatprep.subr.bf16.mxu0 0
        %7724 = vmatpush1.bf16.msra.mxu0 0
        %7725 = vmatprep.subr.bf16.mxu0 0
        %7726 = vmatpush1.bf16.msra.mxu0 0
        %7727 = vmatprep.subr.bf16.mxu0 0
        %7728 = vmatpush1.bf16.msra.mxu0 0
        %7729 = vmatprep.subr.bf16.mxu0 0
        %7730 = vmatpush1.bf16.msra.mxu0 0
        %7731 = vmatprep.subr.bf16.mxu0 0
        %7732 = vmatpush1.bf16.msra.mxu0 0
        %7733 = vmatprep.subr.bf16.mxu0 0
        %7734 = vmatpush1.bf16.msra.mxu0 0
        %7735 = vmatprep.subr.bf16.mxu0 0
        %7736 = vmatpush1.bf16.msra.mxu0 0
        %7737 = vmatprep.subr.bf16.mxu0 0
        %7738 = vmatpush1.bf16.msra.mxu0 0
        %7739 = vmatprep.subr.bf16.mxu0 0
        %7740 = vmatpush1.bf16.msra.mxu0 0
        %7741 = vmatprep.mubr.bf16.mxu0 0
        %7742 = vmatmul.mubr.bf16.gmra.mrb[0].mxu0 %v3890
        %v7743 = vpop.f32.mrb[0].mxu0
        %v7744 = vadd.f32 %v7564, %v7743
        %v7745 = vpop.f32.mrb[0].mxu0
        %v7746 = vpop.f32.mrb[0].mxu0
        %v7747 = vadd.f32 %v7567, %v7746
        %v7748 = vpop.f32.mrb[0].mxu0
        %7749 = vmatprep.mubr.bf16.mxu0 0
        %7750 = vmatmul.mubr.bf16.gmra.mrb[0].mxu0 %v3893
        %v7751 = vpop.f32.mrb[0].mxu0
        %v7752 = vadd.f32 %v7572, %v7751
        %v7753 = vpop.f32.mrb[0].mxu0
        %v7754 = vpop.f32.mrb[0].mxu0
        %v7755 = vadd.f32 %v7575, %v7754
        %v7756 = vpop.f32.mrb[0].mxu0
        %7757 = vmatprep.mubr.bf16.mxu0 0
        %7758 = vmatmul.mubr.bf16.gmra.mrb[0].mxu0 %v3896
        %v7759 = vpop.f32.mrb[0].mxu0
        %v7760 = vadd.f32 %v7580, %v7759
        %v7761 = vpop.f32.mrb[0].mxu0
        %v7762 = vpop.f32.mrb[0].mxu0
        %v7763 = vadd.f32 %v7583, %v7762
        %v7764 = vpop.f32.mrb[0].mxu0
        %7765 = vmatprep.mubr.bf16.mxu0 0
        %7766 = vmatmul.mubr.bf16.gmra.mrb[0].mxu0 %v3899
        %v7767 = vpop.f32.mrb[0].mxu0
        %v7768 = vadd.f32 %v7588, %v7767
        %v7769 = vpop.f32.mrb[0].mxu0
        %v7770 = vpop.f32.mrb[0].mxu0
        %v7771 = vadd.f32 %v7591, %v7770
        %v7772 = vpop.f32.mrb[0].mxu0
        %7773 = vmatprep.mubr.bf16.mxu0 0
        %7774 = vmatmul.mubr.bf16.gmra.mrb[0].mxu0 %v3902
        %v7775 = vpop.f32.mrb[0].mxu0
        %v7776 = vadd.f32 %v7596, %v7775
        %v7777 = vpop.f32.mrb[0].mxu0
        %v7778 = vpop.f32.mrb[0].mxu0
        %v7779 = vadd.f32 %v7599, %v7778
        %v7780 = vpop.f32.mrb[0].mxu0
        %7781 = vmatprep.mubr.bf16.mxu0 0
        %7782 = vmatmul.mubr.bf16.gmra.mrb[0].mxu0 %v3905
        %v7783 = vpop.f32.mrb[0].mxu0
        %v7784 = vadd.f32 %v7604, %v7783
        %v7785 = vpop.f32.mrb[0].mxu0
        %v7786 = vpop.f32.mrb[0].mxu0
        %v7787 = vadd.f32 %v7607, %v7786
        %v7788 = vpop.f32.mrb[0].mxu0
        %7789 = vmatprep.mubr.bf16.mxu0 0
        %7790 = vmatmul.mubr.bf16.gmra.mrb[0].mxu0 %v3908
        %v7791 = vpop.f32.mrb[0].mxu0
        %v7792 = vadd.f32 %v7612, %v7791
        %v7793 = vpop.f32.mrb[0].mxu0
        %v7794 = vpop.f32.mrb[0].mxu0
        %v7795 = vadd.f32 %v7615, %v7794
        %v7796 = vpop.f32.mrb[0].mxu0
        %7797 = vmatprep.mubr.bf16.mxu0 0
        %7798 = vmatmul.mubr.bf16.gmra.mrb[0].mxu0 %v3911
        %v7799 = vpop.f32.mrb[0].mxu0
        %v7800 = vadd.f32 %v7620, %v7799
        %v7801 = vpop.f32.mrb[0].mxu0
        %v7802 = vpop.f32.mrb[0].mxu0
        %v7803 = vadd.f32 %v7623, %v7802
        %v7804 = vpop.f32.mrb[0].mxu0
        %7805 = vmatprep.mubr.bf16.mxu0 0
        %7806 = vmatmul.mubr.bf16.gmra.mrb[0].mxu0 %v3914
        %v7807 = vpop.f32.mrb[0].mxu0
        %v7808 = vadd.f32 %v7628, %v7807
        %v7809 = vpop.f32.mrb[0].mxu0
        %v7810 = vpop.f32.mrb[0].mxu0
        %v7811 = vadd.f32 %v7631, %v7810
        %v7812 = vpop.f32.mrb[0].mxu0
        %7813 = vmatprep.mubr.bf16.mxu0 0
        %7814 = vmatmul.mubr.bf16.gmra.mrb[0].mxu0 %v3917
        %v7815 = vpop.f32.mrb[0].mxu0
        %v7816 = vadd.f32 %v7636, %v7815
        %v7817 = vpop.f32.mrb[0].mxu0
        %v7818 = vpop.f32.mrb[0].mxu0
        %v7819 = vadd.f32 %v7639, %v7818
        %v7820 = vpop.f32.mrb[0].mxu0
        %7821 = vmatprep.mubr.bf16.mxu0 0
        %7822 = vmatmul.mubr.bf16.gmra.mrb[0].mxu0 %v3920
        %v7823 = vpop.f32.mrb[0].mxu0
        %v7824 = vadd.f32 %v7644, %v7823
        %v7825 = vpop.f32.mrb[0].mxu0
        %v7826 = vpop.f32.mrb[0].mxu0
        %v7827 = vadd.f32 %v7647, %v7826
        %v7828 = vpop.f32.mrb[0].mxu0
        %7829 = vmatprep.mubr.bf16.mxu0 0
        %7830 = vmatmul.mubr.bf16.gmra.mrb[0].mxu0 %v3923
        %v7831 = vpop.f32.mrb[0].mxu0
        %v7832 = vadd.f32 %v7652, %v7831
        %v7833 = vpop.f32.mrb[0].mxu0
        %v7834 = vpop.f32.mrb[0].mxu0
        %v7835 = vadd.f32 %v7655, %v7834
        %v7836 = vpop.f32.mrb[0].mxu0
        %7837 = vmatprep.mubr.bf16.mxu0 0
        %7838 = vmatmul.mubr.bf16.gmra.mrb[0].mxu0 %v3926
        %v7839 = vpop.f32.mrb[0].mxu0
        %v7840 = vadd.f32 %v7660, %v7839
        %v7841 = vpop.f32.mrb[0].mxu0
        %v7842 = vpop.f32.mrb[0].mxu0
        %v7843 = vadd.f32 %v7663, %v7842
        %v7844 = vpop.f32.mrb[0].mxu0
        %7845 = vmatprep.mubr.bf16.mxu0 0
        %7846 = vmatmul.mubr.bf16.gmra.mrb[0].mxu0 %v3929
        %v7847 = vpop.f32.mrb[0].mxu0
        %v7848 = vadd.f32 %v7668, %v7847
        %v7849 = vpop.f32.mrb[0].mxu0
        %v7850 = vpop.f32.mrb[0].mxu0
        %v7851 = vadd.f32 %v7671, %v7850
        %v7852 = vpop.f32.mrb[0].mxu0
        %7853 = vmatprep.mubr.bf16.mxu0 0
        %7854 = vmatmul.mubr.bf16.gmra.mrb[0].mxu0 %v3932
        %v7855 = vpop.f32.mrb[0].mxu0
        %v7856 = vadd.f32 %v7676, %v7855
        %v7857 = vpop.f32.mrb[0].mxu0
        %v7858 = vpop.f32.mrb[0].mxu0
        %v7859 = vadd.f32 %v7679, %v7858
        %v7860 = vpop.f32.mrb[0].mxu0
        %7861 = vmatprep.mubr.bf16.mxu0 0
        %7862 = vmatmul.mubr.bf16.gmra.mrb[0].mxu0 %v3935
        %v7863 = vpop.f32.mrb[0].mxu0
        %v7864 = vadd.f32 %v7684, %v7863
        %v7865 = vpop.f32.mrb[0].mxu0
        %v7866 = vpop.f32.mrb[0].mxu0
        %v7867 = vadd.f32 %v7687, %v7866
        %v7868 = vpop.f32.mrb[0].mxu0
        %7869 = vmatprep.mubr.bf16.mxu0 0
        %7870 = vmatmul.mubr.bf16.gmra.mrb[0].mxu0 %v3938
        %v7871 = vpop.f32.mrb[0].mxu0
        %v7872 = vadd.f32 %v7692, %v7871
        %v7873 = vpop.f32.mrb[0].mxu0
        %v7874 = vpop.f32.mrb[0].mxu0
        %v7875 = vadd.f32 %v7695, %v7874
        %v7876 = vpop.f32.mrb[0].mxu0
        %7877 = vmatprep.mubr.bf16.mxu0 0
        %7878 = vmatmul.mubr.bf16.gmra.mrb[0].mxu0 %v3941
        %v7879 = vpop.f32.mrb[0].mxu0
        %v7880 = vadd.f32 %v7700, %v7879
        %v7881 = vpop.f32.mrb[0].mxu0
        %v7882 = vpop.f32.mrb[0].mxu0
        %v7883 = vadd.f32 %v7703, %v7882
        %v7884 = vpop.f32.mrb[0].mxu0
        %7885 = vdwg.mxu0
        %v7887 = vunpack.c.l.b16 %v7514
        %v7888 = vpack.c.b16 %v7887, %v7516
        %v7889 = vrot.slane %v7888, 3
        %v7891 = vand.u32 %v7889, %v2826
        %7893 = vmatprep.subr.bf16.mxu0 0
        %7894 = vmatpush1.bf16.msra.mxu0 %v7891
        %7895 = vmatprep.subr.bf16.mxu0 0
        %7896 = vmatpush1.bf16.msra.mxu0 0
        %7897 = vmatprep.subr.bf16.mxu0 0
        %7898 = vmatpush1.bf16.msra.mxu0 0
        %7899 = vmatprep.subr.bf16.mxu0 0
        %7900 = vmatpush1.bf16.msra.mxu0 0
        %7901 = vmatprep.subr.bf16.mxu0 0
        %7902 = vmatpush1.bf16.msra.mxu0 0
        %7903 = vmatprep.subr.bf16.mxu0 0
        %7904 = vmatpush1.bf16.msra.mxu0 0
        %7905 = vmatprep.subr.bf16.mxu0 0
        %7906 = vmatpush1.bf16.msra.mxu0 0
        %7907 = vmatprep.subr.bf16.mxu0 0
        %7908 = vmatpush1.bf16.msra.mxu0 0
        %7909 = vmatprep.subr.bf16.mxu0 0
        %7910 = vmatpush1.bf16.msra.mxu0 0
        %7911 = vmatprep.subr.bf16.mxu0 0
        %7912 = vmatpush1.bf16.msra.mxu0 0
        %7913 = vmatprep.subr.bf16.mxu0 0
        %7914 = vmatpush1.bf16.msra.mxu0 0
        %7915 = vmatprep.subr.bf16.mxu0 0
        %7916 = vmatpush1.bf16.msra.mxu0 0
        %7917 = vmatprep.subr.bf16.mxu0 0
        %7918 = vmatpush1.bf16.msra.mxu0 0
        %7919 = vmatprep.subr.bf16.mxu0 0
        %7920 = vmatpush1.bf16.msra.mxu0 0
        %7921 = vmatprep.subr.bf16.mxu0 0
        %7922 = vmatpush1.bf16.msra.mxu0 0
        %7923 = vmatprep.subr.bf16.mxu0 0
        %7924 = vmatpush1.bf16.msra.mxu0 0
        %7925 = vmatprep.mubr.bf16.mxu0 0
        %7926 = vmatmul.mubr.bf16.gmra.mrb[0].mxu0 %v4571
        %v7927 = vpop.f32.mrb[0].mxu0
        %v7928 = vadd.f32 0.0, %v7927
        %v7929 = vpop.f32.mrb[0].mxu0
        %v7930 = vpop.f32.mrb[0].mxu0
        %v7931 = vadd.f32 0.0, %v7930
        %v7932 = vpop.f32.mrb[0].mxu0
        %7933 = vmatprep.mubr.bf16.mxu0 0
        %7934 = vmatmul.mubr.bf16.gmra.mrb[0].mxu0 %v4574
        %v7935 = vpop.f32.mrb[0].mxu0
        %v7936 = vadd.f32 0.0, %v7935
        %v7937 = vpop.f32.mrb[0].mxu0
        %v7938 = vpop.f32.mrb[0].mxu0
        %v7939 = vadd.f32 0.0, %v7938
        %v7940 = vpop.f32.mrb[0].mxu0
        %7941 = vmatprep.mubr.bf16.mxu0 0
        %7942 = vmatmul.mubr.bf16.gmra.mrb[0].mxu0 %v4577
        %v7943 = vpop.f32.mrb[0].mxu0
        %v7944 = vadd.f32 0.0, %v7943
        %v7945 = vpop.f32.mrb[0].mxu0
        %v7946 = vpop.f32.mrb[0].mxu0
        %v7947 = vadd.f32 0.0, %v7946
        %v7948 = vpop.f32.mrb[0].mxu0
        %7949 = vmatprep.mubr.bf16.mxu0 0
        %7950 = vmatmul.mubr.bf16.gmra.mrb[0].mxu0 %v4580
        %v7951 = vpop.f32.mrb[0].mxu0
        %v7952 = vadd.f32 0.0, %v7951
        %v7953 = vpop.f32.mrb[0].mxu0
        %v7954 = vpop.f32.mrb[0].mxu0
        %v7955 = vadd.f32 0.0, %v7954
        %v7956 = vpop.f32.mrb[0].mxu0
        %7957 = vmatprep.mubr.bf16.mxu0 0
        %7958 = vmatmul.mubr.bf16.gmra.mrb[0].mxu0 %v4583
        %v7959 = vpop.f32.mrb[0].mxu0
        %v7960 = vadd.f32 0.0, %v7959
        %v7961 = vpop.f32.mrb[0].mxu0
        %v7962 = vpop.f32.mrb[0].mxu0
        %v7963 = vadd.f32 0.0, %v7962
        %v7964 = vpop.f32.mrb[0].mxu0
        %7965 = vmatprep.mubr.bf16.mxu0 0
        %7966 = vmatmul.mubr.bf16.gmra.mrb[0].mxu0 %v4586
        %v7967 = vpop.f32.mrb[0].mxu0
        %v7968 = vadd.f32 0.0, %v7967
        %v7969 = vpop.f32.mrb[0].mxu0
        %v7970 = vpop.f32.mrb[0].mxu0
        %v7971 = vadd.f32 0.0, %v7970
        %v7972 = vpop.f32.mrb[0].mxu0
        %7973 = vmatprep.mubr.bf16.mxu0 0
        %7974 = vmatmul.mubr.bf16.gmra.mrb[0].mxu0 %v4589
        %v7975 = vpop.f32.mrb[0].mxu0
        %v7976 = vadd.f32 0.0, %v7975
        %v7977 = vpop.f32.mrb[0].mxu0
        %v7978 = vpop.f32.mrb[0].mxu0
        %v7979 = vadd.f32 0.0, %v7978
        %v7980 = vpop.f32.mrb[0].mxu0
        %7981 = vmatprep.mubr.bf16.mxu0 0
        %7982 = vmatmul.mubr.bf16.gmra.mrb[0].mxu0 %v4592
        %v7983 = vpop.f32.mrb[0].mxu0
        %v7984 = vadd.f32 0.0, %v7983
        %v7985 = vpop.f32.mrb[0].mxu0
        %v7986 = vpop.f32.mrb[0].mxu0
        %v7987 = vadd.f32 0.0, %v7986
        %v7988 = vpop.f32.mrb[0].mxu0
        %7989 = vmatprep.mubr.bf16.mxu0 0
        %7990 = vmatmul.mubr.bf16.gmra.mrb[0].mxu0 %v4595
        %v7991 = vpop.f32.mrb[0].mxu0
        %v7992 = vadd.f32 0.0, %v7991
        %v7993 = vpop.f32.mrb[0].mxu0
        %v7994 = vpop.f32.mrb[0].mxu0
        %v7995 = vadd.f32 0.0, %v7994
        %v7996 = vpop.f32.mrb[0].mxu0
        %7997 = vmatprep.mubr.bf16.mxu0 0
        %7998 = vmatmul.mubr.bf16.gmra.mrb[0].mxu0 %v4598
        %v7999 = vpop.f32.mrb[0].mxu0
        %v8000 = vadd.f32 0.0, %v7999
        %v8001 = vpop.f32.mrb[0].mxu0
        %v8002 = vpop.f32.mrb[0].mxu0
        %v8003 = vadd.f32 0.0, %v8002
        %v8004 = vpop.f32.mrb[0].mxu0
        %8005 = vmatprep.mubr.bf16.mxu0 0
        %8006 = vmatmul.mubr.bf16.gmra.mrb[0].mxu0 %v4601
        %v8007 = vpop.f32.mrb[0].mxu0
        %v8008 = vadd.f32 0.0, %v8007
        %v8009 = vpop.f32.mrb[0].mxu0
        %v8010 = vpop.f32.mrb[0].mxu0
        %v8011 = vadd.f32 0.0, %v8010
        %v8012 = vpop.f32.mrb[0].mxu0
        %8013 = vmatprep.mubr.bf16.mxu0 0
        %8014 = vmatmul.mubr.bf16.gmra.mrb[0].mxu0 %v4604
        %v8015 = vpop.f32.mrb[0].mxu0
        %v8016 = vadd.f32 0.0, %v8015
        %v8017 = vpop.f32.mrb[0].mxu0
        %v8018 = vpop.f32.mrb[0].mxu0
        %v8019 = vadd.f32 0.0, %v8018
        %v8020 = vpop.f32.mrb[0].mxu0
        %8021 = vmatprep.mubr.bf16.mxu0 0
        %8022 = vmatmul.mubr.bf16.gmra.mrb[0].mxu0 %v4607
        %v8023 = vpop.f32.mrb[0].mxu0
        %v8024 = vadd.f32 0.0, %v8023
        %v8025 = vpop.f32.mrb[0].mxu0
        %v8026 = vpop.f32.mrb[0].mxu0
        %v8027 = vadd.f32 0.0, %v8026
        %v8028 = vpop.f32.mrb[0].mxu0
        %8029 = vmatprep.mubr.bf16.mxu0 0
        %8030 = vmatmul.mubr.bf16.gmra.mrb[0].mxu0 %v4610
        %v8031 = vpop.f32.mrb[0].mxu0
        %v8032 = vadd.f32 0.0, %v8031
        %v8033 = vpop.f32.mrb[0].mxu0
        %v8034 = vpop.f32.mrb[0].mxu0
        %v8035 = vadd.f32 0.0, %v8034
        %v8036 = vpop.f32.mrb[0].mxu0
        %8037 = vmatprep.mubr.bf16.mxu0 0
        %8038 = vmatmul.mubr.bf16.gmra.mrb[0].mxu0 %v4613
        %v8039 = vpop.f32.mrb[0].mxu0
        %v8040 = vadd.f32 0.0, %v8039
        %v8041 = vpop.f32.mrb[0].mxu0
        %v8042 = vpop.f32.mrb[0].mxu0
        %v8043 = vadd.f32 0.0, %v8042
        %v8044 = vpop.f32.mrb[0].mxu0
        %8045 = vmatprep.mubr.bf16.mxu0 0
        %8046 = vmatmul.mubr.bf16.gmra.mrb[0].mxu0 %v4616
        %v8047 = vpop.f32.mrb[0].mxu0
        %v8048 = vadd.f32 0.0, %v8047
        %v8049 = vpop.f32.mrb[0].mxu0
        %v8050 = vpop.f32.mrb[0].mxu0
        %v8051 = vadd.f32 0.0, %v8050
        %v8052 = vpop.f32.mrb[0].mxu0
        %8053 = vmatprep.mubr.bf16.mxu0 0
        %8054 = vmatmul.mubr.bf16.gmra.mrb[0].mxu0 %v4619
        %v8055 = vpop.f32.mrb[0].mxu0
        %v8056 = vadd.f32 0.0, %v8055
        %v8057 = vpop.f32.mrb[0].mxu0
        %v8058 = vpop.f32.mrb[0].mxu0
        %v8059 = vadd.f32 0.0, %v8058
        %v8060 = vpop.f32.mrb[0].mxu0
        %8061 = vmatprep.mubr.bf16.mxu0 0
        %8062 = vmatmul.mubr.bf16.gmra.mrb[0].mxu0 %v4622
        %v8063 = vpop.f32.mrb[0].mxu0
        %v8064 = vadd.f32 0.0, %v8063
        %v8065 = vpop.f32.mrb[0].mxu0
        %v8066 = vpop.f32.mrb[0].mxu0
        %v8067 = vadd.f32 0.0, %v8066
        %v8068 = vpop.f32.mrb[0].mxu0
        %8069 = vdwg.mxu0
        %v8070 = vadd.f32 %v7744, %v7928
        %v8071 = vadd.f32 %v7747, %v7931
        %v8072 = vadd.f32 %v7752, %v7936
        %v8073 = vadd.f32 %v7755, %v7939
        %v8074 = vadd.f32 %v7760, %v7944
        %v8075 = vadd.f32 %v7763, %v7947
        %v8076 = vadd.f32 %v7768, %v7952
        %v8077 = vadd.f32 %v7771, %v7955
        %v8078 = vadd.f32 %v7776, %v7960
        %v8079 = vadd.f32 %v7779, %v7963
        %v8080 = vadd.f32 %v7784, %v7968
        %v8081 = vadd.f32 %v7787, %v7971
        %v8082 = vadd.f32 %v7792, %v7976
        %v8083 = vadd.f32 %v7795, %v7979
        %v8084 = vadd.f32 %v7800, %v7984
        %v8085 = vadd.f32 %v7803, %v7987
        %v8086 = vadd.f32 %v7808, %v7992
        %v8087 = vadd.f32 %v7811, %v7995
        %v8088 = vadd.f32 %v7816, %v8000
        %v8089 = vadd.f32 %v7819, %v8003
        %v8090 = vadd.f32 %v7824, %v8008
        %v8091 = vadd.f32 %v7827, %v8011
        %v8092 = vadd.f32 %v7832, %v8016
        %v8093 = vadd.f32 %v7835, %v8019
        %v8094 = vadd.f32 %v7840, %v8024
        %v8095 = vadd.f32 %v7843, %v8027
        %v8096 = vadd.f32 %v7848, %v8032
        %v8097 = vadd.f32 %v7851, %v8035
        %v8098 = vadd.f32 %v7856, %v8040
        %v8099 = vadd.f32 %v7859, %v8043
        %v8100 = vadd.f32 %v7864, %v8048
        %v8101 = vadd.f32 %v7867, %v8051
        %v8102 = vadd.f32 %v7872, %v8056
        %v8103 = vadd.f32 %v7875, %v8059
        %v8104 = vadd.f32 %v7880, %v8064
        %v8105 = vadd.f32 %v7883, %v8067
        %v8142 = vcombine.high %v8070, %v8070
        %v8144 = vunpack.c.l.s4 1983009808
        %v8145 = vunpack.c.0.s8 %v8144
        %v8146 = vlaneseq
        %v8147 = vshrl.u32 %v8146, 7
        %v8148 = vsub.s32 %v8145, %v8147
        %v8149 = vrot.slane %v8070, %v8148
        %v8151 = vunpack.c.l.s4 1983009808
        %v8152 = vunpack.c.0.s8 %v8151
        %v8153 = vlaneseq
        %v8154 = vshrl.u32 %v8153, 7
        %v8155 = vsub.s32 %v8152, %v8154
        %v8156 = vrot.slane %v8142, %v8155
        %v8157 = vcombine.high %v8149, %v8149
        %v8158 = vcombine.high %v8156, %v8156
        %v8159 = vcombine.high %v8071, %v8071
        %v8161 = vunpack.c.l.s4 1983009808
        %v8162 = vunpack.c.0.s8 %v8161
        %v8163 = vlaneseq
        %v8164 = vshrl.u32 %v8163, 7
        %v8165 = vsub.s32 %v8162, %v8164
        %v8166 = vrot.slane %v8071, %v8165
        %v8168 = vunpack.c.l.s4 1983009808
        %v8169 = vunpack.c.0.s8 %v8168
        %v8170 = vlaneseq
        %v8171 = vshrl.u32 %v8170, 7
        %v8172 = vsub.s32 %v8169, %v8171
        %v8173 = vrot.slane %v8159, %v8172
        %v8174 = vcombine.high %v8166, %v8166
        %v8175 = vcombine.high %v8173, %v8173
        %v8176 = vcombine.high %v8072, %v8072
        %v8178 = vunpack.c.l.s4 1983009808
        %v8179 = vunpack.c.0.s8 %v8178
        %v8180 = vlaneseq
        %v8181 = vshrl.u32 %v8180, 7
        %v8182 = vsub.s32 %v8179, %v8181
        %v8183 = vrot.slane %v8072, %v8182
        %v8185 = vunpack.c.l.s4 1983009808
        %v8186 = vunpack.c.0.s8 %v8185
        %v8187 = vlaneseq
        %v8188 = vshrl.u32 %v8187, 7
        %v8189 = vsub.s32 %v8186, %v8188
        %v8190 = vrot.slane %v8176, %v8189
        %v8191 = vcombine.high %v8190, %v8190
        %v8192 = vcombine.high %v8073, %v8073
        %v8194 = vunpack.c.l.s4 1983009808
        %v8195 = vunpack.c.0.s8 %v8194
        %v8196 = vlaneseq
        %v8197 = vshrl.u32 %v8196, 7
        %v8198 = vsub.s32 %v8195, %v8197
        %v8199 = vrot.slane %v8073, %v8198
        %v8201 = vunpack.c.l.s4 1983009808
        %v8202 = vunpack.c.0.s8 %v8201
        %v8203 = vlaneseq
        %v8204 = vshrl.u32 %v8203, 7
        %v8205 = vsub.s32 %v8202, %v8204
        %v8206 = vrot.slane %v8192, %v8205
        %v8207 = vcombine.high %v8199, %v8199
        %v8208 = vcombine.high %v8206, %v8206
        %v8209 = vcombine.high %v8074, %v8074
        %v8211 = vunpack.c.l.s4 1983009808
        %v8212 = vunpack.c.0.s8 %v8211
        %v8213 = vlaneseq
        %v8214 = vshrl.u32 %v8213, 7
        %v8215 = vsub.s32 %v8212, %v8214
        %v8216 = vrot.slane %v8074, %v8215
        %v8218 = vunpack.c.l.s4 1983009808
        %v8219 = vunpack.c.0.s8 %v8218
        %v8220 = vlaneseq
        %v8221 = vshrl.u32 %v8220, 7
        %v8222 = vsub.s32 %v8219, %v8221
        %v8223 = vrot.slane %v8209, %v8222
        %v8224 = vcombine.high %v8216, %v8216
        %v8225 = vcombine.high %v8223, %v8223
        %v8226 = vcombine.high %v8075, %v8075
        %v8228 = vunpack.c.l.s4 1983009808
        %v8229 = vunpack.c.0.s8 %v8228
        %v8230 = vlaneseq
        %v8231 = vshrl.u32 %v8230, 7
        %v8232 = vsub.s32 %v8229, %v8231
        %v8233 = vrot.slane %v8075, %v8232
        %v8235 = vunpack.c.l.s4 1983009808
        %v8236 = vunpack.c.0.s8 %v8235
        %v8237 = vlaneseq
        %v8238 = vshrl.u32 %v8237, 7
        %v8239 = vsub.s32 %v8236, %v8238
        %v8240 = vrot.slane %v8226, %v8239
        %v8241 = vcombine.high %v8233, %v8233
        %v8242 = vcombine.high %v8240, %v8240
        %v8243 = vcombine.high %v8076, %v8076
        %v8245 = vunpack.c.l.s4 1983009808
        %v8246 = vunpack.c.0.s8 %v8245
        %v8247 = vlaneseq
        %v8248 = vshrl.u32 %v8247, 7
        %v8249 = vsub.s32 %v8246, %v8248
        %v8250 = vrot.slane %v8076, %v8249
        %v8252 = vunpack.c.l.s4 1983009808
        %v8253 = vunpack.c.0.s8 %v8252
        %v8254 = vlaneseq
        %v8255 = vshrl.u32 %v8254, 7
        %v8256 = vsub.s32 %v8253, %v8255
        %v8257 = vrot.slane %v8243, %v8256
        %v8258 = vcombine.high %v8250, %v8250
        %v8259 = vcombine.high %v8077, %v8077
        %v8261 = vunpack.c.l.s4 1983009808
        %v8262 = vunpack.c.0.s8 %v8261
        %v8263 = vlaneseq
        %v8264 = vshrl.u32 %v8263, 7
        %v8265 = vsub.s32 %v8262, %v8264
        %v8266 = vrot.slane %v8077, %v8265
        %v8268 = vunpack.c.l.s4 1983009808
        %v8269 = vunpack.c.0.s8 %v8268
        %v8270 = vlaneseq
        %v8271 = vshrl.u32 %v8270, 7
        %v8272 = vsub.s32 %v8269, %v8271
        %v8273 = vrot.slane %v8259, %v8272
        %v8274 = vcombine.high %v8266, %v8266
        %v8275 = vcombine.high %v8273, %v8273
        %v8276 = vcombine.high %v8078, %v8078
        %v8278 = vunpack.c.l.s4 1983009808
        %v8279 = vunpack.c.0.s8 %v8278
        %v8280 = vlaneseq
        %v8281 = vshrl.u32 %v8280, 7
        %v8282 = vsub.s32 %v8279, %v8281
        %v8283 = vrot.slane %v8078, %v8282
        %v8285 = vunpack.c.l.s4 1983009808
        %v8286 = vunpack.c.0.s8 %v8285
        %v8287 = vlaneseq
        %v8288 = vshrl.u32 %v8287, 7
        %v8289 = vsub.s32 %v8286, %v8288
        %v8290 = vrot.slane %v8276, %v8289
        %v8291 = vcombine.high %v8283, %v8283
        %v8292 = vcombine.high %v8290, %v8290
        %v8293 = vcombine.high %v8079, %v8079
        %v8295 = vunpack.c.l.s4 1983009808
        %v8296 = vunpack.c.0.s8 %v8295
        %v8297 = vlaneseq
        %v8298 = vshrl.u32 %v8297, 7
        %v8299 = vsub.s32 %v8296, %v8298
        %v8300 = vrot.slane %v8079, %v8299
        %v8302 = vunpack.c.l.s4 1983009808
        %v8303 = vunpack.c.0.s8 %v8302
        %v8304 = vlaneseq
        %v8305 = vshrl.u32 %v8304, 7
        %v8306 = vsub.s32 %v8303, %v8305
        %v8307 = vrot.slane %v8293, %v8306
        %v8308 = vcombine.high %v8300, %v8300
        %v8309 = vcombine.high %v8307, %v8307
        %v8310 = vcombine.high %v8080, %v8080
        %v8312 = vunpack.c.l.s4 1983009808
        %v8313 = vunpack.c.0.s8 %v8312
        %v8314 = vlaneseq
        %v8315 = vshrl.u32 %v8314, 7
        %v8316 = vsub.s32 %v8313, %v8315
        %v8317 = vrot.slane %v8080, %v8316
        %v8319 = vunpack.c.l.s4 1983009808
        %v8320 = vunpack.c.0.s8 %v8319
        %v8321 = vlaneseq
        %v8322 = vshrl.u32 %v8321, 7
        %v8323 = vsub.s32 %v8320, %v8322
        %v8324 = vrot.slane %v8310, %v8323
        %v8325 = vcombine.high %v8317, %v8317
        %v8326 = vcombine.high %v8324, %v8324
        %v8327 = vcombine.high %v8081, %v8081
        %v8329 = vunpack.c.l.s4 1983009808
        %v8330 = vunpack.c.0.s8 %v8329
        %v8331 = vlaneseq
        %v8332 = vshrl.u32 %v8331, 7
        %v8333 = vsub.s32 %v8330, %v8332
        %v8334 = vrot.slane %v8081, %v8333
        %v8336 = vunpack.c.l.s4 1983009808
        %v8337 = vunpack.c.0.s8 %v8336
        %v8338 = vlaneseq
        %v8339 = vshrl.u32 %v8338, 7
        %v8340 = vsub.s32 %v8337, %v8339
        %v8341 = vrot.slane %v8327, %v8340
        %v8342 = vcombine.high %v8341, %v8341
        %v8343 = vcombine.high %v8082, %v8082
        %v8345 = vunpack.c.l.s4 1983009808
        %v8346 = vunpack.c.0.s8 %v8345
        %v8347 = vlaneseq
        %v8348 = vshrl.u32 %v8347, 7
        %v8349 = vsub.s32 %v8346, %v8348
        %v8350 = vrot.slane %v8082, %v8349
        %v8352 = vunpack.c.l.s4 1983009808
        %v8353 = vunpack.c.0.s8 %v8352
        %v8354 = vlaneseq
        %v8355 = vshrl.u32 %v8354, 7
        %v8356 = vsub.s32 %v8353, %v8355
        %v8357 = vrot.slane %v8343, %v8356
        %v8358 = vcombine.high %v8350, %v8350
        %v8359 = vcombine.high %v8357, %v8357
        %v8360 = vcombine.high %v8083, %v8083
        %v8362 = vunpack.c.l.s4 1983009808
        %v8363 = vunpack.c.0.s8 %v8362
        %v8364 = vlaneseq
        %v8365 = vshrl.u32 %v8364, 7
        %v8366 = vsub.s32 %v8363, %v8365
        %v8367 = vrot.slane %v8083, %v8366
        %v8369 = vunpack.c.l.s4 1983009808
        %v8370 = vunpack.c.0.s8 %v8369
        %v8371 = vlaneseq
        %v8372 = vshrl.u32 %v8371, 7
        %v8373 = vsub.s32 %v8370, %v8372
        %v8374 = vrot.slane %v8360, %v8373
        %v8375 = vcombine.high %v8367, %v8367
        %v8376 = vcombine.high %v8374, %v8374
        %v8377 = vcombine.high %v8084, %v8084
        %v8379 = vunpack.c.l.s4 1983009808
        %v8380 = vunpack.c.0.s8 %v8379
        %v8381 = vlaneseq
        %v8382 = vshrl.u32 %v8381, 7
        %v8383 = vsub.s32 %v8380, %v8382
        %v8384 = vrot.slane %v8084, %v8383
        %v8386 = vunpack.c.l.s4 1983009808
        %v8387 = vunpack.c.0.s8 %v8386
        %v8388 = vlaneseq
        %v8389 = vshrl.u32 %v8388, 7
        %v8390 = vsub.s32 %v8387, %v8389
        %v8391 = vrot.slane %v8377, %v8390
        %v8392 = vcombine.high %v8384, %v8384
        %v8393 = vcombine.high %v8391, %v8391
        %v8394 = vcombine.high %v8085, %v8085
        %v8396 = vunpack.c.l.s4 1983009808
        %v8397 = vunpack.c.0.s8 %v8396
        %v8398 = vlaneseq
        %v8399 = vshrl.u32 %v8398, 7
        %v8400 = vsub.s32 %v8397, %v8399
        %v8401 = vrot.slane %v8085, %v8400
        %v8403 = vunpack.c.l.s4 1983009808
        %v8404 = vunpack.c.0.s8 %v8403
        %v8405 = vlaneseq
        %v8406 = vshrl.u32 %v8405, 7
        %v8407 = vsub.s32 %v8404, %v8406
        %v8408 = vrot.slane %v8394, %v8407
        %v8409 = vcombine.high %v8401, %v8401
        %v8410 = vcombine.high %v8086, %v8086
        %v8412 = vunpack.c.l.s4 1983009808
        %v8413 = vunpack.c.0.s8 %v8412
        %v8414 = vlaneseq
        %v8415 = vshrl.u32 %v8414, 7
        %v8416 = vsub.s32 %v8413, %v8415
        %v8417 = vrot.slane %v8086, %v8416
        %v8419 = vunpack.c.l.s4 1983009808
        %v8420 = vunpack.c.0.s8 %v8419
        %v8421 = vlaneseq
        %v8422 = vshrl.u32 %v8421, 7
        %v8423 = vsub.s32 %v8420, %v8422
        %v8424 = vrot.slane %v8410, %v8423
        %v8425 = vcombine.high %v8417, %v8417
        %v8426 = vcombine.high %v8424, %v8424
        %v8427 = vcombine.high %v8087, %v8087
        %v8429 = vunpack.c.l.s4 1983009808
        %v8430 = vunpack.c.0.s8 %v8429
        %v8431 = vlaneseq
        %v8432 = vshrl.u32 %v8431, 7
        %v8433 = vsub.s32 %v8430, %v8432
        %v8434 = vrot.slane %v8087, %v8433
        %v8436 = vunpack.c.l.s4 1983009808
        %v8437 = vunpack.c.0.s8 %v8436
        %v8438 = vlaneseq
        %v8439 = vshrl.u32 %v8438, 7
        %v8440 = vsub.s32 %v8437, %v8439
        %v8441 = vrot.slane %v8427, %v8440
        %v8442 = vcombine.high %v8434, %v8434
        %v8443 = vcombine.high %v8441, %v8441
        %v8444 = vcombine.high %v8088, %v8088
        %v8446 = vunpack.c.l.s4 1983009808
        %v8447 = vunpack.c.0.s8 %v8446
        %v8448 = vlaneseq
        %v8449 = vshrl.u32 %v8448, 7
        %v8450 = vsub.s32 %v8447, %v8449
        %v8451 = vrot.slane %v8088, %v8450
        %v8453 = vunpack.c.l.s4 1983009808
        %v8454 = vunpack.c.0.s8 %v8453
        %v8455 = vlaneseq
        %v8456 = vshrl.u32 %v8455, 7
        %v8457 = vsub.s32 %v8454, %v8456
        %v8458 = vrot.slane %v8444, %v8457
        %v8459 = vcombine.high %v8451, %v8451
        %v8460 = vcombine.high %v8458, %v8458
        %v8461 = vcombine.high %v8089, %v8089
        %v8463 = vunpack.c.l.s4 1983009808
        %v8464 = vunpack.c.0.s8 %v8463
        %v8465 = vlaneseq
        %v8466 = vshrl.u32 %v8465, 7
        %v8467 = vsub.s32 %v8464, %v8466
        %v8468 = vrot.slane %v8089, %v8467
        %v8470 = vunpack.c.l.s4 1983009808
        %v8471 = vunpack.c.0.s8 %v8470
        %v8472 = vlaneseq
        %v8473 = vshrl.u32 %v8472, 7
        %v8474 = vsub.s32 %v8471, %v8473
        %v8475 = vrot.slane %v8461, %v8474
        %v8476 = vcombine.high %v8468, %v8468
        %v8477 = vcombine.high %v8475, %v8475
        %v8478 = vcombine.high %v8090, %v8090
        %v8480 = vunpack.c.l.s4 1983009808
        %v8481 = vunpack.c.0.s8 %v8480
        %v8482 = vlaneseq
        %v8483 = vshrl.u32 %v8482, 7
        %v8484 = vsub.s32 %v8481, %v8483
        %v8485 = vrot.slane %v8090, %v8484
        %v8487 = vunpack.c.l.s4 1983009808
        %v8488 = vunpack.c.0.s8 %v8487
        %v8489 = vlaneseq
        %v8490 = vshrl.u32 %v8489, 7
        %v8491 = vsub.s32 %v8488, %v8490
        %v8492 = vrot.slane %v8478, %v8491
        %v8493 = vcombine.high %v8492, %v8492
        %v8494 = vcombine.high %v8091, %v8091
        %v8496 = vunpack.c.l.s4 1983009808
        %v8497 = vunpack.c.0.s8 %v8496
        %v8498 = vlaneseq
        %v8499 = vshrl.u32 %v8498, 7
        %v8500 = vsub.s32 %v8497, %v8499
        %v8501 = vrot.slane %v8091, %v8500
        %v8503 = vunpack.c.l.s4 1983009808
        %v8504 = vunpack.c.0.s8 %v8503
        %v8505 = vlaneseq
        %v8506 = vshrl.u32 %v8505, 7
        %v8507 = vsub.s32 %v8504, %v8506
        %v8508 = vrot.slane %v8494, %v8507
        %v8509 = vcombine.high %v8501, %v8501
        %v8510 = vcombine.high %v8508, %v8508
        %v8511 = vcombine.high %v8092, %v8092
        %v8513 = vunpack.c.l.s4 1983009808
        %v8514 = vunpack.c.0.s8 %v8513
        %v8515 = vlaneseq
        %v8516 = vshrl.u32 %v8515, 7
        %v8517 = vsub.s32 %v8514, %v8516
        %v8518 = vrot.slane %v8092, %v8517
        %v8520 = vunpack.c.l.s4 1983009808
        %v8521 = vunpack.c.0.s8 %v8520
        %v8522 = vlaneseq
        %v8523 = vshrl.u32 %v8522, 7
        %v8524 = vsub.s32 %v8521, %v8523
        %v8525 = vrot.slane %v8511, %v8524
        %v8526 = vcombine.high %v8518, %v8518
        %v8527 = vcombine.high %v8525, %v8525
        %v8528 = vcombine.high %v8093, %v8093
        %v8530 = vunpack.c.l.s4 1983009808
        %v8531 = vunpack.c.0.s8 %v8530
        %v8532 = vlaneseq
        %v8533 = vshrl.u32 %v8532, 7
        %v8534 = vsub.s32 %v8531, %v8533
        %v8535 = vrot.slane %v8093, %v8534
        %v8537 = vunpack.c.l.s4 1983009808
        %v8538 = vunpack.c.0.s8 %v8537
        %v8539 = vlaneseq
        %v8540 = vshrl.u32 %v8539, 7
        %v8541 = vsub.s32 %v8538, %v8540
        %v8542 = vrot.slane %v8528, %v8541
        %v8543 = vcombine.high %v8535, %v8535
        %v8544 = vcombine.high %v8542, %v8542
        %v8545 = vcombine.high %v8094, %v8094
        %v8547 = vunpack.c.l.s4 1983009808
        %v8548 = vunpack.c.0.s8 %v8547
        %v8549 = vlaneseq
        %v8550 = vshrl.u32 %v8549, 7
        %v8551 = vsub.s32 %v8548, %v8550
        %v8552 = vrot.slane %v8094, %v8551
        %v8554 = vunpack.c.l.s4 1983009808
        %v8555 = vunpack.c.0.s8 %v8554
        %v8556 = vlaneseq
        %v8557 = vshrl.u32 %v8556, 7
        %v8558 = vsub.s32 %v8555, %v8557
        %v8559 = vrot.slane %v8545, %v8558
        %v8560 = vcombine.high %v8552, %v8552
        %v8561 = vcombine.high %v8095, %v8095
        %v8563 = vunpack.c.l.s4 1983009808
        %v8564 = vunpack.c.0.s8 %v8563
        %v8565 = vlaneseq
        %v8566 = vshrl.u32 %v8565, 7
        %v8567 = vsub.s32 %v8564, %v8566
        %v8568 = vrot.slane %v8095, %v8567
        %v8570 = vunpack.c.l.s4 1983009808
        %v8571 = vunpack.c.0.s8 %v8570
        %v8572 = vlaneseq
        %v8573 = vshrl.u32 %v8572, 7
        %v8574 = vsub.s32 %v8571, %v8573
        %v8575 = vrot.slane %v8561, %v8574
        %v8576 = vcombine.high %v8568, %v8568
        %v8577 = vcombine.high %v8575, %v8575
        %v8578 = vcombine.high %v8096, %v8096
        %v8580 = vunpack.c.l.s4 1983009808
        %v8581 = vunpack.c.0.s8 %v8580
        %v8582 = vlaneseq
        %v8583 = vshrl.u32 %v8582, 7
        %v8584 = vsub.s32 %v8581, %v8583
        %v8585 = vrot.slane %v8096, %v8584
        %v8587 = vunpack.c.l.s4 1983009808
        %v8588 = vunpack.c.0.s8 %v8587
        %v8589 = vlaneseq
        %v8590 = vshrl.u32 %v8589, 7
        %v8591 = vsub.s32 %v8588, %v8590
        %v8592 = vrot.slane %v8578, %v8591
        %v8593 = vcombine.high %v8585, %v8585
        %v8594 = vcombine.high %v8592, %v8592
        %v8595 = vcombine.high %v8097, %v8097
        %v8597 = vunpack.c.l.s4 1983009808
        %v8598 = vunpack.c.0.s8 %v8597
        %v8599 = vlaneseq
        %v8600 = vshrl.u32 %v8599, 7
        %v8601 = vsub.s32 %v8598, %v8600
        %v8602 = vrot.slane %v8097, %v8601
        %v8604 = vunpack.c.l.s4 1983009808
        %v8605 = vunpack.c.0.s8 %v8604
        %v8606 = vlaneseq
        %v8607 = vshrl.u32 %v8606, 7
        %v8608 = vsub.s32 %v8605, %v8607
        %v8609 = vrot.slane %v8595, %v8608
        %v8610 = vcombine.high %v8602, %v8602
        %v8611 = vcombine.high %v8609, %v8609
        %v8612 = vcombine.high %v8098, %v8098
        %v8614 = vunpack.c.l.s4 1983009808
        %v8615 = vunpack.c.0.s8 %v8614
        %v8616 = vlaneseq
        %v8617 = vshrl.u32 %v8616, 7
        %v8618 = vsub.s32 %v8615, %v8617
        %v8619 = vrot.slane %v8098, %v8618
        %v8621 = vunpack.c.l.s4 1983009808
        %v8622 = vunpack.c.0.s8 %v8621
        %v8623 = vlaneseq
        %v8624 = vshrl.u32 %v8623, 7
        %v8625 = vsub.s32 %v8622, %v8624
        %v8626 = vrot.slane %v8612, %v8625
        %v8627 = vcombine.high %v8619, %v8619
        %v8628 = vcombine.high %v8626, %v8626
        %v8629 = vcombine.high %v8099, %v8099
        %v8631 = vunpack.c.l.s4 1983009808
        %v8632 = vunpack.c.0.s8 %v8631
        %v8633 = vlaneseq
        %v8634 = vshrl.u32 %v8633, 7
        %v8635 = vsub.s32 %v8632, %v8634
        %v8636 = vrot.slane %v8099, %v8635
        %v8638 = vunpack.c.l.s4 1983009808
        %v8639 = vunpack.c.0.s8 %v8638
        %v8640 = vlaneseq
        %v8641 = vshrl.u32 %v8640, 7
        %v8642 = vsub.s32 %v8639, %v8641
        %v8643 = vrot.slane %v8629, %v8642
        %v8644 = vcombine.high %v8643, %v8643
        %v8645 = vcombine.high %v8100, %v8100
        %v8647 = vunpack.c.l.s4 1983009808
        %v8648 = vunpack.c.0.s8 %v8647
        %v8649 = vlaneseq
        %v8650 = vshrl.u32 %v8649, 7
        %v8651 = vsub.s32 %v8648, %v8650
        %v8652 = vrot.slane %v8100, %v8651
        %v8654 = vunpack.c.l.s4 1983009808
        %v8655 = vunpack.c.0.s8 %v8654
        %v8656 = vlaneseq
        %v8657 = vshrl.u32 %v8656, 7
        %v8658 = vsub.s32 %v8655, %v8657
        %v8659 = vrot.slane %v8645, %v8658
        %v8660 = vcombine.high %v8652, %v8652
        %v8661 = vcombine.high %v8659, %v8659
        %v8662 = vcombine.high %v8101, %v8101
        %v8664 = vunpack.c.l.s4 1983009808
        %v8665 = vunpack.c.0.s8 %v8664
        %v8666 = vlaneseq
        %v8667 = vshrl.u32 %v8666, 7
        %v8668 = vsub.s32 %v8665, %v8667
        %v8669 = vrot.slane %v8101, %v8668
        %v8671 = vunpack.c.l.s4 1983009808
        %v8672 = vunpack.c.0.s8 %v8671
        %v8673 = vlaneseq
        %v8674 = vshrl.u32 %v8673, 7
        %v8675 = vsub.s32 %v8672, %v8674
        %v8676 = vrot.slane %v8662, %v8675
        %v8677 = vcombine.high %v8669, %v8669
        %v8678 = vcombine.high %v8676, %v8676
        %v8679 = vcombine.high %v8102, %v8102
        %v8681 = vunpack.c.l.s4 1983009808
        %v8682 = vunpack.c.0.s8 %v8681
        %v8683 = vlaneseq
        %v8684 = vshrl.u32 %v8683, 7
        %v8685 = vsub.s32 %v8682, %v8684
        %v8686 = vrot.slane %v8102, %v8685
        %v8688 = vunpack.c.l.s4 1983009808
        %v8689 = vunpack.c.0.s8 %v8688
        %v8690 = vlaneseq
        %v8691 = vshrl.u32 %v8690, 7
        %v8692 = vsub.s32 %v8689, %v8691
        %v8693 = vrot.slane %v8679, %v8692
        %v8694 = vcombine.high %v8686, %v8686
        %v8695 = vcombine.high %v8693, %v8693
        %v8696 = vcombine.high %v8103, %v8103
        %v8698 = vunpack.c.l.s4 1983009808
        %v8699 = vunpack.c.0.s8 %v8698
        %v8700 = vlaneseq
        %v8701 = vshrl.u32 %v8700, 7
        %v8702 = vsub.s32 %v8699, %v8701
        %v8703 = vrot.slane %v8103, %v8702
        %v8705 = vunpack.c.l.s4 1983009808
        %v8706 = vunpack.c.0.s8 %v8705
        %v8707 = vlaneseq
        %v8708 = vshrl.u32 %v8707, 7
        %v8709 = vsub.s32 %v8706, %v8708
        %v8710 = vrot.slane %v8696, %v8709
        %v8711 = vcombine.high %v8703, %v8703
        %v8712 = vcombine.high %v8104, %v8104
        %v8714 = vunpack.c.l.s4 1983009808
        %v8715 = vunpack.c.0.s8 %v8714
        %v8716 = vlaneseq
        %v8717 = vshrl.u32 %v8716, 7
        %v8718 = vsub.s32 %v8715, %v8717
        %v8719 = vrot.slane %v8104, %v8718
        %v8721 = vunpack.c.l.s4 1983009808
        %v8722 = vunpack.c.0.s8 %v8721
        %v8723 = vlaneseq
        %v8724 = vshrl.u32 %v8723, 7
        %v8725 = vsub.s32 %v8722, %v8724
        %v8726 = vrot.slane %v8712, %v8725
        %v8727 = vcombine.high %v8719, %v8719
        %v8728 = vcombine.high %v8726, %v8726
        %v8729 = vcombine.high %v8105, %v8105
        %v8731 = vunpack.c.l.s4 1983009808
        %v8732 = vunpack.c.0.s8 %v8731
        %v8733 = vlaneseq
        %v8734 = vshrl.u32 %v8733, 7
        %v8735 = vsub.s32 %v8732, %v8734
        %v8736 = vrot.slane %v8105, %v8735
        %v8738 = vunpack.c.l.s4 1983009808
        %v8739 = vunpack.c.0.s8 %v8738
        %v8740 = vlaneseq
        %v8741 = vshrl.u32 %v8740, 7
        %v8742 = vsub.s32 %v8739, %v8741
        %v8743 = vrot.slane %v8729, %v8742
        %v8744 = vcombine.high %v8736, %v8736
        %v8745 = vcombine.high %v8743, %v8743
        %v8874 = vadd.f32 %v7384, %v8157
        %v8875 = vadd.f32 %v7385, %v8156
        %v8876 = vadd.f32 %v7386, %v8158
        %v8877 = vadd.f32 %v7387, %v8166
        %v8878 = vadd.f32 %v7388, %v8174
        %v8879 = vadd.f32 %v7389, %v8173
        %v8880 = vadd.f32 %v7390, %v8175
        %v8881 = vadd.f32 %v7391, %v8183
        %v8882 = vadd.f32 %v7392, %v8190
        %v8883 = vadd.f32 %v7393, %v8191
        %v8884 = vadd.f32 %v7394, %v8199
        %v8885 = vadd.f32 %v7395, %v8207
        %v8886 = vadd.f32 %v7396, %v8206
        %v8887 = vadd.f32 %v7397, %v8208
        %v8888 = vadd.f32 %v7398, %v8216
        %v8889 = vadd.f32 %v7399, %v8224
        %v8890 = vadd.f32 %v7400, %v8225
        %v8891 = vadd.f32 %v7401, %v8233
        %v8892 = vadd.f32 %v7402, %v8241
        %v8893 = vadd.f32 %v7403, %v8240
        %v8894 = vadd.f32 %v7404, %v8242
        %v8895 = vadd.f32 %v7405, %v8250
        %v8896 = vadd.f32 %v7406, %v8258
        %v8897 = vadd.f32 %v7407, %v8257
        %v8898 = vadd.f32 %v7408, %v8266
        %v8899 = vadd.f32 %v7409, %v8274
        %v8900 = vadd.f32 %v7410, %v8273
        %v8901 = vadd.f32 %v7411, %v8275
        %v8902 = vadd.f32 %v7412, %v8283
        %v8903 = vadd.f32 %v7413, %v8291
        %v8904 = vadd.f32 %v7414, %v8290
        %v8905 = vadd.f32 %v7415, %v8292
        %v8906 = vadd.f32 %v7416, %v8308
        %v8907 = vadd.f32 %v7417, %v8307
        %v8908 = vadd.f32 %v7418, %v8309
        %v8909 = vadd.f32 %v7419, %v8317
        %v8910 = vadd.f32 %v7420, %v8325
        %v8911 = vadd.f32 %v7421, %v8324
        %v8912 = vadd.f32 %v7422, %v8326
        %v8913 = vadd.f32 %v7423, %v8334
        %v8914 = vadd.f32 %v7424, %v8341
        %v8915 = vadd.f32 %v7425, %v8342
        %v8916 = vadd.f32 %v7426, %v8350
        %v8917 = vadd.f32 %v7427, %v8358
        %v8918 = vadd.f32 %v7428, %v8357
        %v8919 = vadd.f32 %v7429, %v8359
        %v8920 = vadd.f32 %v7430, %v8367
        %v8921 = vadd.f32 %v7431, %v8375
        %v8922 = vadd.f32 %v7432, %v8376
        %v8923 = vadd.f32 %v7433, %v8384
        %v8924 = vadd.f32 %v7434, %v8392
        %v8925 = vadd.f32 %v7435, %v8391
        %v8926 = vadd.f32 %v7436, %v8393
        %v8927 = vadd.f32 %v7437, %v8401
        %v8928 = vadd.f32 %v7438, %v8409
        %v8929 = vadd.f32 %v7439, %v8408
        %v8930 = vadd.f32 %v7440, %v8417
        %v8931 = vadd.f32 %v7441, %v8425
        %v8932 = vadd.f32 %v7442, %v8424
        %v8933 = vadd.f32 %v7443, %v8426
        %v8934 = vadd.f32 %v7444, %v8434
        %v8935 = vadd.f32 %v7445, %v8442
        %v8936 = vadd.f32 %v7446, %v8441
        %v8937 = vadd.f32 %v7447, %v8443
        %v8938 = vadd.f32 %v7448, %v8459
        %v8939 = vadd.f32 %v7449, %v8458
        %v8940 = vadd.f32 %v7450, %v8460
        %v8941 = vadd.f32 %v7451, %v8468
        %v8942 = vadd.f32 %v7452, %v8476
        %v8943 = vadd.f32 %v7453, %v8475
        %v8944 = vadd.f32 %v7454, %v8477
        %v8945 = vadd.f32 %v7455, %v8485
        %v8946 = vadd.f32 %v7456, %v8492
        %v8947 = vadd.f32 %v7457, %v8493
        %v8948 = vadd.f32 %v7458, %v8501
        %v8949 = vadd.f32 %v7459, %v8509
        %v8950 = vadd.f32 %v7460, %v8508
        %v8951 = vadd.f32 %v7461, %v8510
        %v8952 = vadd.f32 %v7462, %v8518
        %v8953 = vadd.f32 %v7463, %v8526
        %v8954 = vadd.f32 %v7464, %v8527
        %v8955 = vadd.f32 %v7465, %v8535
        %v8956 = vadd.f32 %v7466, %v8543
        %v8957 = vadd.f32 %v7467, %v8542
        %v8958 = vadd.f32 %v7468, %v8544
        %v8959 = vadd.f32 %v7469, %v8552
        %v8960 = vadd.f32 %v7470, %v8560
        %v8961 = vadd.f32 %v7471, %v8559
        %v8962 = vadd.f32 %v7472, %v8568
        %v8963 = vadd.f32 %v7473, %v8576
        %v8964 = vadd.f32 %v7474, %v8575
        %v8965 = vadd.f32 %v7475, %v8577
        %v8966 = vadd.f32 %v7476, %v8585
        %v8967 = vadd.f32 %v7477, %v8593
        %v8968 = vadd.f32 %v7478, %v8592
        %v8969 = vadd.f32 %v7479, %v8594
        %v8970 = vadd.f32 %v7480, %v8610
        %v8971 = vadd.f32 %v7481, %v8609
        %v8972 = vadd.f32 %v7482, %v8611
        %v8973 = vadd.f32 %v7483, %v8619
        %v8974 = vadd.f32 %v7484, %v8627
        %v8975 = vadd.f32 %v7485, %v8626
        %v8976 = vadd.f32 %v7486, %v8628
        %v8977 = vadd.f32 %v7487, %v8636
        %v8978 = vadd.f32 %v7488, %v8643
        %v8979 = vadd.f32 %v7489, %v8644
        %v8980 = vadd.f32 %v7490, %v8652
        %v8981 = vadd.f32 %v7491, %v8660
        %v8982 = vadd.f32 %v7492, %v8659
        %v8983 = vadd.f32 %v7493, %v8661
        %v8984 = vadd.f32 %v7494, %v8669
        %v8985 = vadd.f32 %v7495, %v8677
        %v8986 = vadd.f32 %v7496, %v8678
        %v8987 = vadd.f32 %v7497, %v8686
        %v8988 = vadd.f32 %v7498, %v8694
        %v8989 = vadd.f32 %v7499, %v8693
        %v8990 = vadd.f32 %v7500, %v8695
        %v8991 = vadd.f32 %v7501, %v8703
        %v8992 = vadd.f32 %v7502, %v8711
        %v8993 = vadd.f32 %v7503, %v8710
        %v8994 = vadd.f32 %v7504, %v8719
        %v8995 = vadd.f32 %v7505, %v8727
        %v8996 = vadd.f32 %v7506, %v8726
        %v8997 = vadd.f32 %v7507, %v8728
        %v8998 = vadd.f32 %v7508, %v8736
        %v8999 = vadd.f32 %v7509, %v8744
        %v9000 = vadd.f32 %v7510, %v8743
        %v9001 = vadd.f32 %v7511, %v8745
        %v9002 = vld [vmem:[%s2] sm:$0x1]
        %v9004 = vlaneseq
        %v9005 = vshrl.u32 %v9004, 7
        %v9006 = vsub.s32 0, %v9005
        %v9007 = vrot.slane %v9002, %v9006
        %v9008 = vcombine.high %v9007, %v9007
        %v9010 = vunpack.c.l.s4 1983009808
        %v9011 = vunpack.c.0.s8 %v9010
        %v9012 = vlaneseq
        %v9013 = vshrl.u32 %v9012, 7
        %v9014 = vsub.s32 %v9011, %v9013
        %v9015 = vrot.slane %v9007, %v9014
        %v9017 = vunpack.c.l.s4 1983009808
        %v9018 = vunpack.c.0.s8 %v9017
        %v9019 = vlaneseq
        %v9020 = vshrl.u32 %v9019, 7
        %v9021 = vsub.s32 %v9018, %v9020
        %v9022 = vrot.slane %v9008, %v9021
        %v9023 = vcombine.high %v9015, %v9015
        %v9024 = vcombine.high %v9022, %v9022
        %v9029 = vadd.f32 %v8874, %v9015
        %v9030 = vadd.f32 %v8875, %v9023
        %v9031 = vadd.f32 %v8876, %v9022
        %v9032 = vadd.f32 %v8877, %v9024
        %v9033 = vadd.f32 %v8878, %v9015
        %v9034 = vadd.f32 %v8879, %v9023
        %v9035 = vadd.f32 %v8880, %v9022
        %v9036 = vadd.f32 %v8881, %v9024
        %v9037 = vadd.f32 %v8882, %v9015
        %v9038 = vadd.f32 %v8883, %v9023
        %v9039 = vadd.f32 %v8884, %v9022
        %v9040 = vadd.f32 %v8885, %v9024
        %v9041 = vadd.f32 %v8886, %v9015
        %v9042 = vadd.f32 %v8887, %v9023
        %v9043 = vadd.f32 %v8888, %v9022
        %v9044 = vadd.f32 %v8889, %v9024
        %v9045 = vadd.f32 %v8890, %v9015
        %v9046 = vadd.f32 %v8891, %v9023
        %v9047 = vadd.f32 %v8892, %v9022
        %v9048 = vadd.f32 %v8893, %v9024
        %v9049 = vadd.f32 %v8894, %v9015
        %v9050 = vadd.f32 %v8895, %v9023
        %v9051 = vadd.f32 %v8896, %v9022
        %v9052 = vadd.f32 %v8897, %v9024
        %v9053 = vadd.f32 %v8898, %v9015
        %v9054 = vadd.f32 %v8899, %v9023
        %v9055 = vadd.f32 %v8900, %v9022
        %v9056 = vadd.f32 %v8901, %v9024
        %v9057 = vadd.f32 %v8902, %v9015
        %v9058 = vadd.f32 %v8903, %v9023
        %v9059 = vadd.f32 %v8904, %v9022
        %v9060 = vadd.f32 %v8905, %v9024
        %v9061 = vadd.f32 %v8906, %v9015
        %v9062 = vadd.f32 %v8907, %v9023
        %v9063 = vadd.f32 %v8908, %v9022
        %v9064 = vadd.f32 %v8909, %v9024
        %v9065 = vadd.f32 %v8910, %v9015
        %v9066 = vadd.f32 %v8911, %v9023
        %v9067 = vadd.f32 %v8912, %v9022
        %v9068 = vadd.f32 %v8913, %v9024
        %v9069 = vadd.f32 %v8914, %v9015
        %v9070 = vadd.f32 %v8915, %v9023
        %v9071 = vadd.f32 %v8916, %v9022
        %v9072 = vadd.f32 %v8917, %v9024
        %v9073 = vadd.f32 %v8918, %v9015
        %v9074 = vadd.f32 %v8919, %v9023
        %v9075 = vadd.f32 %v8920, %v9022
        %v9076 = vadd.f32 %v8921, %v9024
        %v9077 = vadd.f32 %v8922, %v9015
        %v9078 = vadd.f32 %v8923, %v9023
        %v9079 = vadd.f32 %v8924, %v9022
        %v9080 = vadd.f32 %v8925, %v9024
        %v9081 = vadd.f32 %v8926, %v9015
        %v9082 = vadd.f32 %v8927, %v9023
        %v9083 = vadd.f32 %v8928, %v9022
        %v9084 = vadd.f32 %v8929, %v9024
        %v9085 = vadd.f32 %v8930, %v9015
        %v9086 = vadd.f32 %v8931, %v9023
        %v9087 = vadd.f32 %v8932, %v9022
        %v9088 = vadd.f32 %v8933, %v9024
        %v9089 = vadd.f32 %v8934, %v9015
        %v9090 = vadd.f32 %v8935, %v9023
        %v9091 = vadd.f32 %v8936, %v9022
        %v9092 = vadd.f32 %v8937, %v9024
        %v9093 = vadd.f32 %v8938, %v9015
        %v9094 = vadd.f32 %v8939, %v9023
        %v9095 = vadd.f32 %v8940, %v9022
        %v9096 = vadd.f32 %v8941, %v9024
        %v9097 = vadd.f32 %v8942, %v9015
        %v9098 = vadd.f32 %v8943, %v9023
        %v9099 = vadd.f32 %v8944, %v9022
        %v9100 = vadd.f32 %v8945, %v9024
        %v9101 = vadd.f32 %v8946, %v9015
        %v9102 = vadd.f32 %v8947, %v9023
        %v9103 = vadd.f32 %v8948, %v9022
        %v9104 = vadd.f32 %v8949, %v9024
        %v9105 = vadd.f32 %v8950, %v9015
        %v9106 = vadd.f32 %v8951, %v9023
        %v9107 = vadd.f32 %v8952, %v9022
        %v9108 = vadd.f32 %v8953, %v9024
        %v9109 = vadd.f32 %v8954, %v9015
        %v9110 = vadd.f32 %v8955, %v9023
        %v9111 = vadd.f32 %v8956, %v9022
        %v9112 = vadd.f32 %v8957, %v9024
        %v9113 = vadd.f32 %v8958, %v9015
        %v9114 = vadd.f32 %v8959, %v9023
        %v9115 = vadd.f32 %v8960, %v9022
        %v9116 = vadd.f32 %v8961, %v9024
        %v9117 = vadd.f32 %v8962, %v9015
        %v9118 = vadd.f32 %v8963, %v9023
        %v9119 = vadd.f32 %v8964, %v9022
        %v9120 = vadd.f32 %v8965, %v9024
        %v9121 = vadd.f32 %v8966, %v9015
        %v9122 = vadd.f32 %v8967, %v9023
        %v9123 = vadd.f32 %v8968, %v9022
        %v9124 = vadd.f32 %v8969, %v9024
        %v9125 = vadd.f32 %v8970, %v9015
        %v9126 = vadd.f32 %v8971, %v9023
        %v9127 = vadd.f32 %v8972, %v9022
        %v9128 = vadd.f32 %v8973, %v9024
        %v9129 = vadd.f32 %v8974, %v9015
        %v9130 = vadd.f32 %v8975, %v9023
        %v9131 = vadd.f32 %v8976, %v9022
        %v9132 = vadd.f32 %v8977, %v9024
        %v9133 = vadd.f32 %v8978, %v9015
        %v9134 = vadd.f32 %v8979, %v9023
        %v9135 = vadd.f32 %v8980, %v9022
        %v9136 = vadd.f32 %v8981, %v9024
        %v9137 = vadd.f32 %v8982, %v9015
        %v9138 = vadd.f32 %v8983, %v9023
        %v9139 = vadd.f32 %v8984, %v9022
        %v9140 = vadd.f32 %v8985, %v9024
        %v9141 = vadd.f32 %v8986, %v9015
        %v9142 = vadd.f32 %v8987, %v9023
        %v9143 = vadd.f32 %v8988, %v9022
        %v9144 = vadd.f32 %v8989, %v9024
        %v9145 = vadd.f32 %v8990, %v9015
        %v9146 = vadd.f32 %v8991, %v9023
        %v9147 = vadd.f32 %v8992, %v9022
        %v9148 = vadd.f32 %v8993, %v9024
        %v9149 = vadd.f32 %v8994, %v9015
        %v9150 = vadd.f32 %v8995, %v9023
        %v9151 = vadd.f32 %v8996, %v9022
        %v9152 = vadd.f32 %v8997, %v9024
        %v9153 = vadd.f32 %v8998, %v9015
        %v9154 = vadd.f32 %v8999, %v9023
        %v9155 = vadd.f32 %v9000, %v9022
        %v9156 = vadd.f32 %v9001, %v9024
        %v9285 = vcombine.low %v9029, %v9030
        %v9286 = vcombine.low %v9031, %v9032
        %v9288 = vunpack.c.l.s4 1983009808
        %v9289 = vunpack.c.0.s8 %v9288
        %v9290 = vlaneseq
        %v9291 = vshrl.u32 %v9290, 7
        %v9292 = vsub.s32 %v9289, %v9291
        %v9293 = vrot.slane %v9285, %v9292
        %v9295 = vunpack.c.l.s4 1983009808
        %v9296 = vunpack.c.0.s8 %v9295
        %v9297 = vlaneseq
        %v9298 = vshrl.u32 %v9297, 7
        %v9299 = vsub.s32 %v9296, %v9298
        %v9300 = vrot.slane %v9286, %v9299
        %v9301 = vcombine.low %v9293, %v9300
        %v9302 = vcombine.low %v9033, %v9034
        %v9303 = vcombine.low %v9035, %v9036
        %v9305 = vunpack.c.l.s4 1983009808
        %v9306 = vunpack.c.0.s8 %v9305
        %v9307 = vlaneseq
        %v9308 = vshrl.u32 %v9307, 7
        %v9309 = vsub.s32 %v9306, %v9308
        %v9310 = vrot.slane %v9302, %v9309
        %v9312 = vunpack.c.l.s4 1983009808
        %v9313 = vunpack.c.0.s8 %v9312
        %v9314 = vlaneseq
        %v9315 = vshrl.u32 %v9314, 7
        %v9316 = vsub.s32 %v9313, %v9315
        %v9317 = vrot.slane %v9303, %v9316
        %v9318 = vcombine.low %v9310, %v9317
        %v9319 = vcombine.low %v9037, %v9038
        %v9320 = vcombine.low %v9039, %v9040
        %v9322 = vunpack.c.l.s4 1983009808
        %v9323 = vunpack.c.0.s8 %v9322
        %v9324 = vlaneseq
        %v9325 = vshrl.u32 %v9324, 7
        %v9326 = vsub.s32 %v9323, %v9325
        %v9327 = vrot.slane %v9319, %v9326
        %v9329 = vunpack.c.l.s4 1983009808
        %v9330 = vunpack.c.0.s8 %v9329
        %v9331 = vlaneseq
        %v9332 = vshrl.u32 %v9331, 7
        %v9333 = vsub.s32 %v9330, %v9332
        %v9334 = vrot.slane %v9320, %v9333
        %v9335 = vcombine.low %v9327, %v9334
        %v9336 = vcombine.low %v9041, %v9042
        %v9337 = vcombine.low %v9043, %v9044
        %v9339 = vunpack.c.l.s4 1983009808
        %v9340 = vunpack.c.0.s8 %v9339
        %v9341 = vlaneseq
        %v9342 = vshrl.u32 %v9341, 7
        %v9343 = vsub.s32 %v9340, %v9342
        %v9344 = vrot.slane %v9336, %v9343
        %v9346 = vunpack.c.l.s4 1983009808
        %v9347 = vunpack.c.0.s8 %v9346
        %v9348 = vlaneseq
        %v9349 = vshrl.u32 %v9348, 7
        %v9350 = vsub.s32 %v9347, %v9349
        %v9351 = vrot.slane %v9337, %v9350
        %v9352 = vcombine.low %v9344, %v9351
        %v9353 = vcombine.low %v9045, %v9046
        %v9354 = vcombine.low %v9047, %v9048
        %v9356 = vunpack.c.l.s4 1983009808
        %v9357 = vunpack.c.0.s8 %v9356
        %v9358 = vlaneseq
        %v9359 = vshrl.u32 %v9358, 7
        %v9360 = vsub.s32 %v9357, %v9359
        %v9361 = vrot.slane %v9353, %v9360
        %v9363 = vunpack.c.l.s4 1983009808
        %v9364 = vunpack.c.0.s8 %v9363
        %v9365 = vlaneseq
        %v9366 = vshrl.u32 %v9365, 7
        %v9367 = vsub.s32 %v9364, %v9366
        %v9368 = vrot.slane %v9354, %v9367
        %v9369 = vcombine.low %v9361, %v9368
        %v9370 = vcombine.low %v9049, %v9050
        %v9371 = vcombine.low %v9051, %v9052
        %v9373 = vunpack.c.l.s4 1983009808
        %v9374 = vunpack.c.0.s8 %v9373
        %v9375 = vlaneseq
        %v9376 = vshrl.u32 %v9375, 7
        %v9377 = vsub.s32 %v9374, %v9376
        %v9378 = vrot.slane %v9370, %v9377
        %v9380 = vunpack.c.l.s4 1983009808
        %v9381 = vunpack.c.0.s8 %v9380
        %v9382 = vlaneseq
        %v9383 = vshrl.u32 %v9382, 7
        %v9384 = vsub.s32 %v9381, %v9383
        %v9385 = vrot.slane %v9371, %v9384
        %v9386 = vcombine.low %v9378, %v9385
        %v9387 = vcombine.low %v9053, %v9054
        %v9388 = vcombine.low %v9055, %v9056
        %v9390 = vunpack.c.l.s4 1983009808
        %v9391 = vunpack.c.0.s8 %v9390
        %v9392 = vlaneseq
        %v9393 = vshrl.u32 %v9392, 7
        %v9394 = vsub.s32 %v9391, %v9393
        %v9395 = vrot.slane %v9387, %v9394
        %v9397 = vunpack.c.l.s4 1983009808
        %v9398 = vunpack.c.0.s8 %v9397
        %v9399 = vlaneseq
        %v9400 = vshrl.u32 %v9399, 7
        %v9401 = vsub.s32 %v9398, %v9400
        %v9402 = vrot.slane %v9388, %v9401
        %v9403 = vcombine.low %v9395, %v9402
        %v9404 = vcombine.low %v9057, %v9058
        %v9405 = vcombine.low %v9059, %v9060
        %v9407 = vunpack.c.l.s4 1983009808
        %v9408 = vunpack.c.0.s8 %v9407
        %v9409 = vlaneseq
        %v9410 = vshrl.u32 %v9409, 7
        %v9411 = vsub.s32 %v9408, %v9410
        %v9412 = vrot.slane %v9404, %v9411
        %v9414 = vunpack.c.l.s4 1983009808
        %v9415 = vunpack.c.0.s8 %v9414
        %v9416 = vlaneseq
        %v9417 = vshrl.u32 %v9416, 7
        %v9418 = vsub.s32 %v9415, %v9417
        %v9419 = vrot.slane %v9405, %v9418
        %v9420 = vcombine.low %v9412, %v9419
        %v9421 = vcombine.low %v9061, %v9062
        %v9422 = vcombine.low %v9063, %v9064
        %v9424 = vunpack.c.l.s4 1983009808
        %v9425 = vunpack.c.0.s8 %v9424
        %v9426 = vlaneseq
        %v9427 = vshrl.u32 %v9426, 7
        %v9428 = vsub.s32 %v9425, %v9427
        %v9429 = vrot.slane %v9421, %v9428
        %v9431 = vunpack.c.l.s4 1983009808
        %v9432 = vunpack.c.0.s8 %v9431
        %v9433 = vlaneseq
        %v9434 = vshrl.u32 %v9433, 7
        %v9435 = vsub.s32 %v9432, %v9434
        %v9436 = vrot.slane %v9422, %v9435
        %v9437 = vcombine.low %v9429, %v9436
        %v9438 = vcombine.low %v9065, %v9066
        %v9439 = vcombine.low %v9067, %v9068
        %v9441 = vunpack.c.l.s4 1983009808
        %v9442 = vunpack.c.0.s8 %v9441
        %v9443 = vlaneseq
        %v9444 = vshrl.u32 %v9443, 7
        %v9445 = vsub.s32 %v9442, %v9444
        %v9446 = vrot.slane %v9438, %v9445
        %v9448 = vunpack.c.l.s4 1983009808
        %v9449 = vunpack.c.0.s8 %v9448
        %v9450 = vlaneseq
        %v9451 = vshrl.u32 %v9450, 7
        %v9452 = vsub.s32 %v9449, %v9451
        %v9453 = vrot.slane %v9439, %v9452
        %v9454 = vcombine.low %v9446, %v9453
        %v9455 = vcombine.low %v9069, %v9070
        %v9456 = vcombine.low %v9071, %v9072
        %v9458 = vunpack.c.l.s4 1983009808
        %v9459 = vunpack.c.0.s8 %v9458
        %v9460 = vlaneseq
        %v9461 = vshrl.u32 %v9460, 7
        %v9462 = vsub.s32 %v9459, %v9461
        %v9463 = vrot.slane %v9455, %v9462
        %v9465 = vunpack.c.l.s4 1983009808
        %v9466 = vunpack.c.0.s8 %v9465
        %v9467 = vlaneseq
        %v9468 = vshrl.u32 %v9467, 7
        %v9469 = vsub.s32 %v9466, %v9468
        %v9470 = vrot.slane %v9456, %v9469
        %v9471 = vcombine.low %v9463, %v9470
        %v9472 = vcombine.low %v9073, %v9074
        %v9473 = vcombine.low %v9075, %v9076
        %v9475 = vunpack.c.l.s4 1983009808
        %v9476 = vunpack.c.0.s8 %v9475
        %v9477 = vlaneseq
        %v9478 = vshrl.u32 %v9477, 7
        %v9479 = vsub.s32 %v9476, %v9478
        %v9480 = vrot.slane %v9472, %v9479
        %v9482 = vunpack.c.l.s4 1983009808
        %v9483 = vunpack.c.0.s8 %v9482
        %v9484 = vlaneseq
        %v9485 = vshrl.u32 %v9484, 7
        %v9486 = vsub.s32 %v9483, %v9485
        %v9487 = vrot.slane %v9473, %v9486
        %v9488 = vcombine.low %v9480, %v9487
        %v9489 = vcombine.low %v9077, %v9078
        %v9490 = vcombine.low %v9079, %v9080
        %v9492 = vunpack.c.l.s4 1983009808
        %v9493 = vunpack.c.0.s8 %v9492
        %v9494 = vlaneseq
        %v9495 = vshrl.u32 %v9494, 7
        %v9496 = vsub.s32 %v9493, %v9495
        %v9497 = vrot.slane %v9489, %v9496
        %v9499 = vunpack.c.l.s4 1983009808
        %v9500 = vunpack.c.0.s8 %v9499
        %v9501 = vlaneseq
        %v9502 = vshrl.u32 %v9501, 7
        %v9503 = vsub.s32 %v9500, %v9502
        %v9504 = vrot.slane %v9490, %v9503
        %v9505 = vcombine.low %v9497, %v9504
        %v9506 = vcombine.low %v9081, %v9082
        %v9507 = vcombine.low %v9083, %v9084
        %v9509 = vunpack.c.l.s4 1983009808
        %v9510 = vunpack.c.0.s8 %v9509
        %v9511 = vlaneseq
        %v9512 = vshrl.u32 %v9511, 7
        %v9513 = vsub.s32 %v9510, %v9512
        %v9514 = vrot.slane %v9506, %v9513
        %v9516 = vunpack.c.l.s4 1983009808
        %v9517 = vunpack.c.0.s8 %v9516
        %v9518 = vlaneseq
        %v9519 = vshrl.u32 %v9518, 7
        %v9520 = vsub.s32 %v9517, %v9519
        %v9521 = vrot.slane %v9507, %v9520
        %v9522 = vcombine.low %v9514, %v9521
        %v9523 = vcombine.low %v9085, %v9086
        %v9524 = vcombine.low %v9087, %v9088
        %v9526 = vunpack.c.l.s4 1983009808
        %v9527 = vunpack.c.0.s8 %v9526
        %v9528 = vlaneseq
        %v9529 = vshrl.u32 %v9528, 7
        %v9530 = vsub.s32 %v9527, %v9529
        %v9531 = vrot.slane %v9523, %v9530
        %v9533 = vunpack.c.l.s4 1983009808
        %v9534 = vunpack.c.0.s8 %v9533
        %v9535 = vlaneseq
        %v9536 = vshrl.u32 %v9535, 7
        %v9537 = vsub.s32 %v9534, %v9536
        %v9538 = vrot.slane %v9524, %v9537
        %v9539 = vcombine.low %v9531, %v9538
        %v9540 = vcombine.low %v9089, %v9090
        %v9541 = vcombine.low %v9091, %v9092
        %v9543 = vunpack.c.l.s4 1983009808
        %v9544 = vunpack.c.0.s8 %v9543
        %v9545 = vlaneseq
        %v9546 = vshrl.u32 %v9545, 7
        %v9547 = vsub.s32 %v9544, %v9546
        %v9548 = vrot.slane %v9540, %v9547
        %v9550 = vunpack.c.l.s4 1983009808
        %v9551 = vunpack.c.0.s8 %v9550
        %v9552 = vlaneseq
        %v9553 = vshrl.u32 %v9552, 7
        %v9554 = vsub.s32 %v9551, %v9553
        %v9555 = vrot.slane %v9541, %v9554
        %v9556 = vcombine.low %v9548, %v9555
        %v9557 = vcombine.low %v9093, %v9094
        %v9558 = vcombine.low %v9095, %v9096
        %v9560 = vunpack.c.l.s4 1983009808
        %v9561 = vunpack.c.0.s8 %v9560
        %v9562 = vlaneseq
        %v9563 = vshrl.u32 %v9562, 7
        %v9564 = vsub.s32 %v9561, %v9563
        %v9565 = vrot.slane %v9557, %v9564
        %v9567 = vunpack.c.l.s4 1983009808
        %v9568 = vunpack.c.0.s8 %v9567
        %v9569 = vlaneseq
        %v9570 = vshrl.u32 %v9569, 7
        %v9571 = vsub.s32 %v9568, %v9570
        %v9572 = vrot.slane %v9558, %v9571
        %v9573 = vcombine.low %v9565, %v9572
        %v9574 = vcombine.low %v9097, %v9098
        %v9575 = vcombine.low %v9099, %v9100
        %v9577 = vunpack.c.l.s4 1983009808
        %v9578 = vunpack.c.0.s8 %v9577
        %v9579 = vlaneseq
        %v9580 = vshrl.u32 %v9579, 7
        %v9581 = vsub.s32 %v9578, %v9580
        %v9582 = vrot.slane %v9574, %v9581
        %v9584 = vunpack.c.l.s4 1983009808
        %v9585 = vunpack.c.0.s8 %v9584
        %v9586 = vlaneseq
        %v9587 = vshrl.u32 %v9586, 7
        %v9588 = vsub.s32 %v9585, %v9587
        %v9589 = vrot.slane %v9575, %v9588
        %v9590 = vcombine.low %v9582, %v9589
        %v9591 = vcombine.low %v9101, %v9102
        %v9592 = vcombine.low %v9103, %v9104
        %v9594 = vunpack.c.l.s4 1983009808
        %v9595 = vunpack.c.0.s8 %v9594
        %v9596 = vlaneseq
        %v9597 = vshrl.u32 %v9596, 7
        %v9598 = vsub.s32 %v9595, %v9597
        %v9599 = vrot.slane %v9591, %v9598
        %v9601 = vunpack.c.l.s4 1983009808
        %v9602 = vunpack.c.0.s8 %v9601
        %v9603 = vlaneseq
        %v9604 = vshrl.u32 %v9603, 7
        %v9605 = vsub.s32 %v9602, %v9604
        %v9606 = vrot.slane %v9592, %v9605
        %v9607 = vcombine.low %v9599, %v9606
        %v9608 = vcombine.low %v9105, %v9106
        %v9609 = vcombine.low %v9107, %v9108
        %v9611 = vunpack.c.l.s4 1983009808
        %v9612 = vunpack.c.0.s8 %v9611
        %v9613 = vlaneseq
        %v9614 = vshrl.u32 %v9613, 7
        %v9615 = vsub.s32 %v9612, %v9614
        %v9616 = vrot.slane %v9608, %v9615
        %v9618 = vunpack.c.l.s4 1983009808
        %v9619 = vunpack.c.0.s8 %v9618
        %v9620 = vlaneseq
        %v9621 = vshrl.u32 %v9620, 7
        %v9622 = vsub.s32 %v9619, %v9621
        %v9623 = vrot.slane %v9609, %v9622
        %v9624 = vcombine.low %v9616, %v9623
        %v9625 = vcombine.low %v9109, %v9110
        %v9626 = vcombine.low %v9111, %v9112
        %v9628 = vunpack.c.l.s4 1983009808
        %v9629 = vunpack.c.0.s8 %v9628
        %v9630 = vlaneseq
        %v9631 = vshrl.u32 %v9630, 7
        %v9632 = vsub.s32 %v9629, %v9631
        %v9633 = vrot.slane %v9625, %v9632
        %v9635 = vunpack.c.l.s4 1983009808
        %v9636 = vunpack.c.0.s8 %v9635
        %v9637 = vlaneseq
        %v9638 = vshrl.u32 %v9637, 7
        %v9639 = vsub.s32 %v9636, %v9638
        %v9640 = vrot.slane %v9626, %v9639
        %v9641 = vcombine.low %v9633, %v9640
        %v9642 = vcombine.low %v9113, %v9114
        %v9643 = vcombine.low %v9115, %v9116
        %v9645 = vunpack.c.l.s4 1983009808
        %v9646 = vunpack.c.0.s8 %v9645
        %v9647 = vlaneseq
        %v9648 = vshrl.u32 %v9647, 7
        %v9649 = vsub.s32 %v9646, %v9648
        %v9650 = vrot.slane %v9642, %v9649
        %v9652 = vunpack.c.l.s4 1983009808
        %v9653 = vunpack.c.0.s8 %v9652
        %v9654 = vlaneseq
        %v9655 = vshrl.u32 %v9654, 7
        %v9656 = vsub.s32 %v9653, %v9655
        %v9657 = vrot.slane %v9643, %v9656
        %v9658 = vcombine.low %v9650, %v9657
        %v9659 = vcombine.low %v9117, %v9118
        %v9660 = vcombine.low %v9119, %v9120
        %v9662 = vunpack.c.l.s4 1983009808
        %v9663 = vunpack.c.0.s8 %v9662
        %v9664 = vlaneseq
        %v9665 = vshrl.u32 %v9664, 7
        %v9666 = vsub.s32 %v9663, %v9665
        %v9667 = vrot.slane %v9659, %v9666
        %v9669 = vunpack.c.l.s4 1983009808
        %v9670 = vunpack.c.0.s8 %v9669
        %v9671 = vlaneseq
        %v9672 = vshrl.u32 %v9671, 7
        %v9673 = vsub.s32 %v9670, %v9672
        %v9674 = vrot.slane %v9660, %v9673
        %v9675 = vcombine.low %v9667, %v9674
        %v9676 = vcombine.low %v9121, %v9122
        %v9677 = vcombine.low %v9123, %v9124
        %v9679 = vunpack.c.l.s4 1983009808
        %v9680 = vunpack.c.0.s8 %v9679
        %v9681 = vlaneseq
        %v9682 = vshrl.u32 %v9681, 7
        %v9683 = vsub.s32 %v9680, %v9682
        %v9684 = vrot.slane %v9676, %v9683
        %v9686 = vunpack.c.l.s4 1983009808
        %v9687 = vunpack.c.0.s8 %v9686
        %v9688 = vlaneseq
        %v9689 = vshrl.u32 %v9688, 7
        %v9690 = vsub.s32 %v9687, %v9689
        %v9691 = vrot.slane %v9677, %v9690
        %v9692 = vcombine.low %v9684, %v9691
        %v9693 = vcombine.low %v9125, %v9126
        %v9694 = vcombine.low %v9127, %v9128
        %v9696 = vunpack.c.l.s4 1983009808
        %v9697 = vunpack.c.0.s8 %v9696
        %v9698 = vlaneseq
        %v9699 = vshrl.u32 %v9698, 7
        %v9700 = vsub.s32 %v9697, %v9699
        %v9701 = vrot.slane %v9693, %v9700
        %v9703 = vunpack.c.l.s4 1983009808
        %v9704 = vunpack.c.0.s8 %v9703
        %v9705 = vlaneseq
        %v9706 = vshrl.u32 %v9705, 7
        %v9707 = vsub.s32 %v9704, %v9706
        %v9708 = vrot.slane %v9694, %v9707
        %v9709 = vcombine.low %v9701, %v9708
        %v9710 = vcombine.low %v9129, %v9130
        %v9711 = vcombine.low %v9131, %v9132
        %v9713 = vunpack.c.l.s4 1983009808
        %v9714 = vunpack.c.0.s8 %v9713
        %v9715 = vlaneseq
        %v9716 = vshrl.u32 %v9715, 7
        %v9717 = vsub.s32 %v9714, %v9716
        %v9718 = vrot.slane %v9710, %v9717
        %v9720 = vunpack.c.l.s4 1983009808
        %v9721 = vunpack.c.0.s8 %v9720
        %v9722 = vlaneseq
        %v9723 = vshrl.u32 %v9722, 7
        %v9724 = vsub.s32 %v9721, %v9723
        %v9725 = vrot.slane %v9711, %v9724
        %v9726 = vcombine.low %v9718, %v9725
        %v9727 = vcombine.low %v9133, %v9134
        %v9728 = vcombine.low %v9135, %v9136
        %v9730 = vunpack.c.l.s4 1983009808
        %v9731 = vunpack.c.0.s8 %v9730
        %v9732 = vlaneseq
        %v9733 = vshrl.u32 %v9732, 7
        %v9734 = vsub.s32 %v9731, %v9733
        %v9735 = vrot.slane %v9727, %v9734
        %v9737 = vunpack.c.l.s4 1983009808
        %v9738 = vunpack.c.0.s8 %v9737
        %v9739 = vlaneseq
        %v9740 = vshrl.u32 %v9739, 7
        %v9741 = vsub.s32 %v9738, %v9740
        %v9742 = vrot.slane %v9728, %v9741
        %v9743 = vcombine.low %v9735, %v9742
        %v9744 = vcombine.low %v9137, %v9138
        %v9745 = vcombine.low %v9139, %v9140
        %v9747 = vunpack.c.l.s4 1983009808
        %v9748 = vunpack.c.0.s8 %v9747
        %v9749 = vlaneseq
        %v9750 = vshrl.u32 %v9749, 7
        %v9751 = vsub.s32 %v9748, %v9750
        %v9752 = vrot.slane %v9744, %v9751
        %v9754 = vunpack.c.l.s4 1983009808
        %v9755 = vunpack.c.0.s8 %v9754
        %v9756 = vlaneseq
        %v9757 = vshrl.u32 %v9756, 7
        %v9758 = vsub.s32 %v9755, %v9757
        %v9759 = vrot.slane %v9745, %v9758
        %v9760 = vcombine.low %v9752, %v9759
        %v9761 = vcombine.low %v9141, %v9142
        %v9762 = vcombine.low %v9143, %v9144
        %v9764 = vunpack.c.l.s4 1983009808
        %v9765 = vunpack.c.0.s8 %v9764
        %v9766 = vlaneseq
        %v9767 = vshrl.u32 %v9766, 7
        %v9768 = vsub.s32 %v9765, %v9767
        %v9769 = vrot.slane %v9761, %v9768
        %v9771 = vunpack.c.l.s4 1983009808
        %v9772 = vunpack.c.0.s8 %v9771
        %v9773 = vlaneseq
        %v9774 = vshrl.u32 %v9773, 7
        %v9775 = vsub.s32 %v9772, %v9774
        %v9776 = vrot.slane %v9762, %v9775
        %v9777 = vcombine.low %v9769, %v9776
        %v9778 = vcombine.low %v9145, %v9146
        %v9779 = vcombine.low %v9147, %v9148
        %v9781 = vunpack.c.l.s4 1983009808
        %v9782 = vunpack.c.0.s8 %v9781
        %v9783 = vlaneseq
        %v9784 = vshrl.u32 %v9783, 7
        %v9785 = vsub.s32 %v9782, %v9784
        %v9786 = vrot.slane %v9778, %v9785
        %v9788 = vunpack.c.l.s4 1983009808
        %v9789 = vunpack.c.0.s8 %v9788
        %v9790 = vlaneseq
        %v9791 = vshrl.u32 %v9790, 7
        %v9792 = vsub.s32 %v9789, %v9791
        %v9793 = vrot.slane %v9779, %v9792
        %v9794 = vcombine.low %v9786, %v9793
        %v9795 = vcombine.low %v9149, %v9150
        %v9796 = vcombine.low %v9151, %v9152
        %v9798 = vunpack.c.l.s4 1983009808
        %v9799 = vunpack.c.0.s8 %v9798
        %v9800 = vlaneseq
        %v9801 = vshrl.u32 %v9800, 7
        %v9802 = vsub.s32 %v9799, %v9801
        %v9803 = vrot.slane %v9795, %v9802
        %v9805 = vunpack.c.l.s4 1983009808
        %v9806 = vunpack.c.0.s8 %v9805
        %v9807 = vlaneseq
        %v9808 = vshrl.u32 %v9807, 7
        %v9809 = vsub.s32 %v9806, %v9808
        %v9810 = vrot.slane %v9796, %v9809
        %v9811 = vcombine.low %v9803, %v9810
        %v9812 = vcombine.low %v9153, %v9154
        %v9813 = vcombine.low %v9155, %v9156
        %v9815 = vunpack.c.l.s4 1983009808
        %v9816 = vunpack.c.0.s8 %v9815
        %v9817 = vlaneseq
        %v9818 = vshrl.u32 %v9817, 7
        %v9819 = vsub.s32 %v9816, %v9818
        %v9820 = vrot.slane %v9812, %v9819
        %v9822 = vunpack.c.l.s4 1983009808
        %v9823 = vunpack.c.0.s8 %v9822
        %v9824 = vlaneseq
        %v9825 = vshrl.u32 %v9824, 7
        %v9826 = vsub.s32 %v9823, %v9825
        %v9827 = vrot.slane %v9813, %v9826
        %v9828 = vcombine.low %v9820, %v9827
        %v9861 = vpack.c.bf16 %v9318, %v9301
        %v9862 = vpack.c.bf16 %v9352, %v9335
        %v9863 = vpack.c.bf16 %v9386, %v9369
        %v9864 = vpack.c.bf16 %v9420, %v9403
        %v9865 = vpack.c.bf16 %v9454, %v9437
        %v9866 = vpack.c.bf16 %v9488, %v9471
        %v9867 = vpack.c.bf16 %v9522, %v9505
        %v9868 = vpack.c.bf16 %v9556, %v9539
        %v9869 = vpack.c.bf16 %v9590, %v9573
        %v9870 = vpack.c.bf16 %v9624, %v9607
        %v9871 = vpack.c.bf16 %v9658, %v9641
        %v9872 = vpack.c.bf16 %v9692, %v9675
        %v9873 = vpack.c.bf16 %v9726, %v9709
        %v9874 = vpack.c.bf16 %v9760, %v9743
        %v9875 = vpack.c.bf16 %v9794, %v9777
        %v9876 = vpack.c.bf16 %v9828, %v9811
        %v9893 = vunpack.c.l.b16 %v9861
        %v9894 = vunpack.c.h.b16 %v9861
        %v9895 = vunpack.c.l.b16 %v9862
        %v9896 = vunpack.c.h.b16 %v9862
        %v9897 = vunpack.c.l.b16 %v9863
        %v9898 = vunpack.c.h.b16 %v9863
        %v9899 = vunpack.c.l.b16 %v9864
        %v9900 = vunpack.c.h.b16 %v9864
        %v9901 = vunpack.c.l.b16 %v9865
        %v9902 = vunpack.c.h.b16 %v9865
        %v9903 = vunpack.c.l.b16 %v9866
        %v9904 = vunpack.c.h.b16 %v9866
        %v9905 = vunpack.c.l.b16 %v9867
        %v9906 = vunpack.c.h.b16 %v9867
        %v9907 = vunpack.c.l.b16 %v9868
        %v9908 = vunpack.c.h.b16 %v9868
        %v9909 = vunpack.c.l.b16 %v9869
        %v9910 = vunpack.c.h.b16 %v9869
        %v9911 = vunpack.c.l.b16 %v9870
        %v9912 = vunpack.c.h.b16 %v9870
        %v9913 = vunpack.c.l.b16 %v9871
        %v9914 = vunpack.c.h.b16 %v9871
        %v9915 = vunpack.c.l.b16 %v9872
        %v9916 = vunpack.c.h.b16 %v9872
        %v9917 = vunpack.c.l.b16 %v9873
        %v9918 = vunpack.c.h.b16 %v9873
        %v9919 = vunpack.c.l.b16 %v9874
        %v9920 = vunpack.c.h.b16 %v9874
        %v9921 = vunpack.c.l.b16 %v9875
        %v9922 = vunpack.c.h.b16 %v9875
        %v9923 = vunpack.c.l.b16 %v9876
        %v9924 = vunpack.c.h.b16 %v9876
        %v9925 = vpack.c.b16 %v9893, %v9893
        %v9926 = vpack.c.b16 %v9894, %v9894
        %v9927 = vpack.c.b16 %v9895, %v9895
        %v9928 = vpack.c.b16 %v9896, %v9896
        %v9929 = vpack.c.b16 %v9897, %v9897
        %v9930 = vpack.c.b16 %v9898, %v9898
        %v9931 = vpack.c.b16 %v9899, %v9899
        %v9932 = vpack.c.b16 %v9900, %v9900
        %v9933 = vpack.c.b16 %v9901, %v9901
        %v9934 = vpack.c.b16 %v9902, %v9902
        %v9935 = vpack.c.b16 %v9903, %v9903
        %v9936 = vpack.c.b16 %v9904, %v9904
        %v9937 = vpack.c.b16 %v9905, %v9905
        %v9938 = vpack.c.b16 %v9906, %v9906
        %v9939 = vpack.c.b16 %v9907, %v9907
        %v9940 = vpack.c.b16 %v9908, %v9908
        %v9941 = vpack.c.b16 %v9909, %v9909
        %v9942 = vpack.c.b16 %v9910, %v9910
        %v9943 = vpack.c.b16 %v9911, %v9911
        %v9944 = vpack.c.b16 %v9912, %v9912
        %v9945 = vpack.c.b16 %v9913, %v9913
        %v9946 = vpack.c.b16 %v9914, %v9914
        %v9947 = vpack.c.b16 %v9915, %v9915
        %v9948 = vpack.c.b16 %v9916, %v9916
        %v9949 = vpack.c.b16 %v9917, %v9917
        %v9950 = vpack.c.b16 %v9918, %v9918
        %v9951 = vpack.c.b16 %v9919, %v9919
        %v9952 = vpack.c.b16 %v9920, %v9920
        %v9953 = vpack.c.b16 %v9921, %v9921
        %v9954 = vpack.c.b16 %v9922, %v9922
        %v9955 = vpack.c.b16 %v9923, %v9923
        %v9956 = vpack.c.b16 %v9924, %v9924
        %vm9989 = vcmask 519168
        %9990 = vst.msk [vmem:[%s177] sm:$0xf] %vm9989, %v9925
        %9991 = vst.msk [vmem:[%s177 + $0x4] sm:$0xf] %vm9989, %v9926
        %9992 = vst.msk [vmem:[%s177 + $0x8] sm:$0xf] %vm9989, %v9927
        %9993 = vst.msk [vmem:[%s177 + $0xc] sm:$0xf] %vm9989, %v9928
        %9994 = vst.msk [vmem:[%s177 + $0x10] sm:$0xf] %vm9989, %v9929
        %9995 = vst.msk [vmem:[%s177 + $0x14] sm:$0xf] %vm9989, %v9930
        %9996 = vst.msk [vmem:[%s177 + $0x18] sm:$0xf] %vm9989, %v9931
        %9997 = vst.msk [vmem:[%s177 + $0x1c] sm:$0xf] %vm9989, %v9932
        %9998 = vst.msk [vmem:[%s177 + $0x20] sm:$0xf] %vm9989, %v9933
        %9999 = vst.msk [vmem:[%s177 + $0x24] sm:$0xf] %vm9989, %v9934
        %10000 = vst.msk [vmem:[%s177 + $0x28] sm:$0xf] %vm9989, %v9935
        %10001 = vst.msk [vmem:[%s177 + $0x2c] sm:$0xf] %vm9989, %v9936
        %10002 = vst.msk [vmem:[%s177 + $0x30] sm:$0xf] %vm9989, %v9937
        %10003 = vst.msk [vmem:[%s177 + $0x34] sm:$0xf] %vm9989, %v9938
        %10004 = vst.msk [vmem:[%s177 + $0x38] sm:$0xf] %vm9989, %v9939
        %10005 = vst.msk [vmem:[%s177 + $0x3c] sm:$0xf] %vm9989, %v9940
        %10006 = vst.msk [vmem:[%s177 + $0x40] sm:$0xf] %vm9989, %v9941
        %10007 = vst.msk [vmem:[%s177 + $0x44] sm:$0xf] %vm9989, %v9942
        %10008 = vst.msk [vmem:[%s177 + $0x48] sm:$0xf] %vm9989, %v9943
        %10009 = vst.msk [vmem:[%s177 + $0x4c] sm:$0xf] %vm9989, %v9944
        %10010 = vst.msk [vmem:[%s177 + $0x50] sm:$0xf] %vm9989, %v9945
        %10011 = vst.msk [vmem:[%s177 + $0x54] sm:$0xf] %vm9989, %v9946
        %10012 = vst.msk [vmem:[%s177 + $0x58] sm:$0xf] %vm9989, %v9947
        %10013 = vst.msk [vmem:[%s177 + $0x5c] sm:$0xf] %vm9989, %v9948
        %10014 = vst.msk [vmem:[%s177 + $0x60] sm:$0xf] %vm9989, %v9949
        %10015 = vst.msk [vmem:[%s177 + $0x64] sm:$0xf] %vm9989, %v9950
        %10016 = vst.msk [vmem:[%s177 + $0x68] sm:$0xf] %vm9989, %v9951
        %10017 = vst.msk [vmem:[%s177 + $0x6c] sm:$0xf] %vm9989, %v9952
        %10018 = vst.msk [vmem:[%s177 + $0x70] sm:$0xf] %vm9989, %v9953
        %10019 = vst.msk [vmem:[%s177 + $0x74] sm:$0xf] %vm9989, %v9954
        %10020 = vst.msk [vmem:[%s177 + $0x78] sm:$0xf] %vm9989, %v9955
        %10021 = vst.msk [vmem:[%s177 + $0x7c] sm:$0xf] %vm9989, %v9956
        %s10022 = sand.u32 %s107, 1
        %s10023 = scalar_lea.sflag [#allocation4], %s10022
        %s10024 = sand.u32 %s107, 1
        %s10025 = smul.addr %s10024, 128
        %s10026 = scalar_lea.vmem [#allocation3], %s10025
        // Predicated region
        $region33: #{conv.1} parent=31 // pred_check
          %p10027 = pneg %p117
        $region34: #{conv.1} parent=31 // pred_check_branch
          %10029 = sbr.rel (%p10027) target = $region36
        $region35: #{conv.1} parent=31 // pred_region
          %s10030 = smul.u32 16, %s22
          %s10032 = ssub.s32 2048, 2048
          %10033 = vsyncadd %s10023, %s10032
          %s10034 = smul.addr %s10030, 2
          %s10035 = smul.addr %s21, 32
          %s10036 = sadd.s32 %s10034, %s10035
          %s10037 = smul.addr %s10036, 64
          %s10038 = scalar_lea.hbm %s3, %s10037
          %s10039 = sshll.u32 %s10026, 4
          %s10040 = int_to_ptr.vmem [resolvable:$true] %s10039
          %10045 = dma.vmem_to_hbm [thread:$0]  %s10040, 2048, %s10038, %s10023, 64, 64, 4
        $region36: #{conv.1} parent=31 // pred_fallthru
          _
      $region32: #{conv.1} parent=5 // pred_fallthru
        _
      %p10046 = scmp.le.s32.totalorder 2, %s12
      // Predicated region
      $region37: #{conv.1} parent=5 // pred_check
        %p10047 = pneg %p10046
      $region38: #{conv.1} parent=5 // pred_check_branch
        %10049 = sbr.rel (%p10047) target = $region40
      $region39: #{conv.1} parent=5 // pred_region
        %s10050 = ssub.s32 %s12, 2
        // Predicated region
        $region41: #{conv.1} parent=39 // pred_check
          %p10051 = pneg %p123
        $region42: #{conv.1} parent=39 // pred_check_branch
          %10053 = sbr.rel (%p10051) target = $region44
        $region43: #{conv.1} parent=39 // pred_region
          %s10054 = sand.u32 %s108, 1
          %s10055 = scalar_lea.sflag [#allocation4], %s10054
          %s10056 = sand.u32 %s108, 1
          %s10057 = smul.addr %s10056, 128
          %s10058 = scalar_lea.vmem [#allocation3], %s10057
          %10059 = dma.done %s10055, 2048
        $region44: #{conv.1} parent=39 // pred_fallthru
          _
      $region40: #{conv.1} parent=5 // pred_fallthru
        _
    $region6: #{conv.1} parent=1 // loop_footer
      %s16 = sadd.s32 1, %s12
    $region7: #{conv.1} parent=1 // loop_footer_branch
      %11 = sbr.rel target = $region3
    $region8: #{conv.1} parent=1 // loop_exit
      _
    %10060 = vsyncpa [#allocation4], 1
    %s10061 = scalar_lea.sflag [#allocation4], 1
    %10062 = vsyncpa %s10061, 1

</llo_original>
